<compile_context>
chip_gen: v7x
topology: tpu7x:2x2x1
jax: 0.10.0
libtpu: 0.0.40
codegen_flags: <defaults>
</compile_context>

<pallas_src>
import numpy as np

import jax
import jax.numpy as jnp
from jax import lax
from jax.experimental import pallas as pl
from jax.experimental.pallas import tpu as pltpu

LRELU_SLOPE = 0.2
PN_EPS = 1e-8
LANE = 128


def _round_up(x, m):
    return (x + m - 1) // m * m


def _full_spec(shape):
    nd = len(shape)
    return pl.BlockSpec(shape, lambda *_: (0,) * nd)


# ------------------------- host-built constant matrices ---------------------- #
# All of these depend only on static shapes (N, H, W) and become jit constants.


def _slab_dims(n, h, w):
    hp, wp = h + 2, w + 2
    rp = n * hp * wp
    return hp, wp, rp, _round_up(rp, LANE)


def _np_interior_mask(n, h, w):
    hp, wp, rp, rpp = _slab_dims(n, h, w)
    m = np.zeros((1, rpp), np.float32)
    for b in range(n):
        for iy in range(h):
            s = b * hp * wp + (iy + 1) * wp + 1
            m[0, s:s + w] = 1.0
    return m


def _np_upsample_matrix(n, h, w):
    """0/1 matrix mapping a (h,w) padded slab to the (2h,2w) padded slab (NN upsample)."""
    hp, wp, _, rpp_s = _slab_dims(n, h, w)
    Hp, Wp, _, rpp_b = _slab_dims(n, 2 * h, 2 * w)
    U = np.zeros((rpp_s, rpp_b), np.float32)
    for b in range(n):
        for iy in range(h):
            for ix in range(w):
                ls = b * hp * wp + (iy + 1) * wp + (ix + 1)
                for dy in range(2):
                    for dx in range(2):
                        lb = b * Hp * Wp + (2 * iy + dy + 1) * Wp + (2 * ix + dx + 1)
                        U[ls, lb] = 1.0
    return U


def _np_init_scatter(n):
    """(16*N, RPp0) 0/1 matrix scattering the tconv columns (pixel, batch) into the 4x4 slab."""
    hp, wp, _, rpp = _slab_dims(n, 4, 4)
    S = np.zeros((16 * n, rpp), np.float32)
    for p in range(16):
        py, px = divmod(p, 4)
        for b in range(n):
            S[p * n + b, b * hp * wp + (py + 1) * wp + (px + 1)] = 1.0
    return S


# ------------------------------- fused kernel -------------------------------- #


def _make_fused_kernel(steps, wps, rpps):
    """Single fused generator kernel.

    Input ref order: [alpha(SMEM) if steps>0], xbd, w_tconv, b_tconv, scatter,
                     w_init, b_init, mask0,
                     then per step: U, w1, b1, w2, b2, mask,
                     then rgb: (w, b) if steps==0 else (wu, bu, wx, bx).
    Last ref is the output slab (8, RPp_final) f32.
    """

    def conv3x3_pn(x, w, b, mask, wp, rpp):
        # x: (Cin, rpp) f32 slab (pad & dead lanes are zero); w: (Cout, 9*Cin).
        cin = x.shape[0]
        xc = x.astype(w.dtype)
        z = jnp.zeros((cin, LANE), w.dtype)
        xp = jnp.concatenate([z, xc, z], axis=1)                 # zero margin in VMEM
        taps = []
        for ky in (-1, 0, 1):
            for kx in (-1, 0, 1):
                s = ky * wp + kx
                taps.append(xp[:, LANE + s:LANE + s + rpp])      # static lane slice
        patches = jnp.concatenate(taps, axis=0)                  # (9*Cin, rpp) im2col
        acc = jnp.dot(w, patches, preferred_element_type=jnp.float32)
        acc = acc + b
        acc = jnp.where(acc > 0, acc, LRELU_SLOPE * acc)
        cout = acc.shape[0]
        ms = jnp.dot(jnp.full((1, cout), 1.0 / cout, jnp.float32), acc * acc,
                     preferred_element_type=jnp.float32)         # per-pixel channel mean (MXU)
        acc = acc * lax.rsqrt(ms + PN_EPS)
        return acc * mask                                        # re-zero pad & dead lanes

    def kernel(*refs):
        it = iter(refs)
        nxt = lambda: next(it)

        if steps > 0:
            alpha = nxt()[0, 0]
        xbd = nxt()[...]
        wt = nxt()[...]
        bt = nxt()[...]
        sc = nxt()[...]
        wi = nxt()[...]
        bi = nxt()[...]
        m0 = nxt()[...]

        # init: ConvTranspose2d(4x4) on 1x1 latent + bias + LeakyReLU + PixelNorm,
        # then scattered straight into the channel-major padded slab (all MXU dots).
        acc = jnp.dot(wt, xbd, preferred_element_type=jnp.float32) + bt   # (C0, 16*N)
        acc = jnp.where(acc > 0, acc, LRELU_SLOPE * acc)
        c0 = acc.shape[0]
        ms = jnp.dot(jnp.full((1, c0), 1.0 / c0, jnp.float32), acc * acc,
                     preferred_element_type=jnp.float32)
        acc = acc * lax.rsqrt(ms + PN_EPS)
        slab = jnp.dot(acc, sc, preferred_element_type=jnp.float32)       # (C0, rpp0)

        # init 3x3 conv
        slab = conv3x3_pn(slab, wi, bi, m0, wps[0], rpps[0])

        up = None
        for s in range(steps):
            U = nxt()[...]
            w1 = nxt()[...]
            b1 = nxt()[...]
            w2 = nxt()[...]
            b2 = nxt()[...]
            m = nxt()[...]
            # 2x nearest-neighbour upsample as one matmul; result is already in the
            # next-resolution padded slab layout with zero pad/dead lanes.
            up = jnp.dot(slab, U, preferred_element_type=jnp.float32)
            slab = conv3x3_pn(up, w1, b1, m, wps[s + 1], rpps[s + 1])
            slab = conv3x3_pn(slab, w2, b2, m, wps[s + 1], rpps[s + 1])

        if steps == 0:
            wr = nxt()[...]
            br = nxt()[...]
            out = jnp.dot(wr, slab.astype(wr.dtype),
                          preferred_element_type=jnp.float32) + br
        else:
            wu = nxt()[...]
            bu = nxt()[...]
            wx = nxt()[...]
            bx = nxt()[...]
            up_rgb = jnp.dot(wu, up.astype(wu.dtype),
                             preferred_element_type=jnp.float32) + bu
            fin_rgb = jnp.dot(wx, slab.astype(wx.dtype),
                              preferred_element_type=jnp.float32) + bx
            out = jnp.tanh(alpha * fin_rgb + (1.0 - alpha) * up_rgb)

        out_ref = nxt()
        out_ref[...] = out.astype(out_ref.dtype)

    return kernel


# -------------------------------- parameters --------------------------------- #


def init_generator_params(key, img_channels=3, latent=32, factors=(1, 2)):
    keys = iter(jax.random.split(key, 4 + 4 * len(factors)))

    def normal(shape):
        return jax.random.normal(next(keys), shape, jnp.float32)

    params = {
        "init_tconv": dict(W=normal((latent, latent, 4, 4)), b=jnp.zeros((latent,), jnp.float32),
                           scale=(2.0 / (latent * 16)) ** 0.5),
        "init_conv": dict(W=normal((latent, latent, 3, 3)), b=jnp.zeros((latent,), jnp.float32),
                          scale=(2.0 / (latent * 9)) ** 0.5),
        "rgb": [dict(W=normal((img_channels, latent, 1, 1)), b=jnp.zeros((img_channels,), jnp.float32),
                     scale=(2.0 / latent) ** 0.5)],
        "main": [],
    }
    cin = latent
    for f in factors:
        cout = cin // f
        params["main"].append(dict(
            conv1=dict(W=normal((cout, cin, 3, 3)), b=jnp.zeros((cout,), jnp.float32),
                       scale=(2.0 / (cin * 9)) ** 0.5),
            conv2=dict(W=normal((cout, cout, 3, 3)), b=jnp.zeros((cout,), jnp.float32),
                       scale=(2.0 / (cout * 9)) ** 0.5),
        ))
        params["rgb"].append(dict(W=normal((img_channels, cout, 1, 1)),
                                  b=jnp.zeros((img_channels,), jnp.float32),
                                  scale=(2.0 / cout) ** 0.5))
        cin = cout
    return params


def prepare_generator_params(params, compute_dtype=jnp.bfloat16):
    """Fold WSConv scales into the weights once and lay them out kernel-ready."""

    def prep_conv3(p):
        cout, cin = p["W"].shape[0], p["W"].shape[1]
        # im2col weights (Cout, 9*Cin), column order (tap=ky*3+kx, ci)
        w = (p["W"] * p["scale"]).transpose(0, 2, 3, 1).reshape(cout, 9 * cin)
        return dict(w=w.astype(compute_dtype),
                    b=p["b"].reshape(cout, 1).astype(jnp.float32))

    def prep_rgb(p):
        crgb, cin = p["W"].shape[0], p["W"].shape[1]
        w = p["W"].reshape(crgb, cin) * p["scale"]
        w8 = jnp.zeros((8, cin), jnp.float32).at[:crgb].set(w).astype(compute_dtype)
        b8 = jnp.zeros((8, 1), jnp.float32).at[:crgb, 0].set(p["b"])
        return dict(w=w8, b=b8)

    pt = params["init_tconv"]
    cin, cout = pt["W"].shape[0], pt["W"].shape[1]
    # (Cout, 16*Cin) with columns (pixel p = h*4+w, ci)
    wm2 = (pt["W"] * pt["scale"]).transpose(1, 2, 3, 0).reshape(cout, 16 * cin)
    return {
        "init_tconv": dict(w=wm2.astype(compute_dtype),
                           b=pt["b"].reshape(cout, 1).astype(jnp.float32)),
        "init_conv": prep_conv3(params["init_conv"]),
        "rgb": [prep_rgb(p) for p in params["rgb"]],
        "main": [dict(conv1=prep_conv3(b["conv1"]), conv2=prep_conv3(b["conv2"]))
                 for b in params["main"]],
    }


# ------------------------------- forward pass --------------------------------- #


def generator_forward(prep, x, steps, alpha, img_channels=3):
    """Progressive GAN generator.  x: (N, latent, 1, 1) NCHW; returns NCHW RGB."""
    steps = int(steps)
    assert steps <= len(prep["main"])
    n = x.shape[0]
    cdt = prep["init_conv"]["w"].dtype

    sizes = [4 * (1 << s) for s in range(steps + 1)]
    wps, rpps, rps = [], [], []
    for hw in sizes:
        _, wp, rp, rpp = _slab_dims(n, hw, hw)
        wps.append(wp)
        rpps.append(rpp)
        rps.append(rp)

    # constant matrices (static shapes -> jit constants)
    sc = jnp.asarray(_np_init_scatter(n))
    masks = [jnp.asarray(_np_interior_mask(n, hw, hw)) for hw in sizes]
    ups = [jnp.asarray(_np_upsample_matrix(n, hw, hw)) for hw in sizes[:-1]]

    # block-diagonal replication of the latent: lets the whole ConvTranspose2d be one
    # in-kernel MXU dot that lands directly in the slab layout (via `sc`).
    xt = x.reshape(n, -1).T.astype(jnp.float32)                        # (Cin, N)
    xbd = jnp.kron(jnp.eye(16, dtype=jnp.float32), xt).astype(cdt)     # (16*Cin, 16*N)

    operands, in_specs = [], []
    macs = 0

    def add(arr, spec=None):
        operands.append(arr)
        in_specs.append(spec if spec is not None else _full_spec(arr.shape))

    if steps > 0:
        add(jnp.asarray(alpha, jnp.float32).reshape(1, 1),
            pl.BlockSpec(memory_space=pltpu.MemorySpace.SMEM))

    pt = prep["init_tconv"]
    add(xbd)
    add(pt["w"])
    add(pt["b"])
    add(sc)
    macs += pt["w"].shape[0] * pt["w"].shape[1] * xbd.shape[1]
    macs += pt["w"].shape[0] * xbd.shape[1] * sc.shape[1]

    pi = prep["init_conv"]
    add(pi["w"])
    add(pi["b"])
    add(masks[0])
    macs += pi["w"].shape[0] * pi["w"].shape[1] * rpps[0]

    for s in range(steps):
        blk = prep["main"][s]
        add(ups[s])
        add(blk["conv1"]["w"])
        add(blk["conv1"]["b"])
        add(blk["conv2"]["w"])
        add(blk["conv2"]["b"])
        add(masks[s + 1])
        macs += ups[s].shape[0] * ups[s].shape[1] * (blk["conv1"]["w"].shape[1] // 9)
        macs += blk["conv1"]["w"].shape[0] * blk["conv1"]["w"].shape[1] * rpps[s + 1]
        macs += blk["conv2"]["w"].shape[0] * blk["conv2"]["w"].shape[1] * rpps[s + 1]

    if steps == 0:
        pr = prep["rgb"][0]
        add(pr["w"])
        add(pr["b"])
        macs += 8 * pr["w"].shape[1] * rpps[0]
    else:
        pu, pf = prep["rgb"][steps - 1], prep["rgb"][steps]
        add(pu["w"])
        add(pu["b"])
        add(pf["w"])
        add(pf["b"])
        macs += 8 * (pu["w"].shape[1] + pf["w"].shape[1]) * rpps[-1]

    in_bytes = sum(int(np.prod(a.shape)) * a.dtype.itemsize for a in operands)
    cost = pl.CostEstimate(
        flops=int(2 * macs),
        transcendentals=int(2 * sum(rpps) + 8 * rpps[-1]),
        bytes_accessed=int(in_bytes + 8 * rpps[-1] * 4),
    )

    kernel = _make_fused_kernel(steps, wps, rpps)
    rgb_slab = pl.pallas_call(
        kernel,
        out_shape=jax.ShapeDtypeStruct((8, rpps[-1]), jnp.float32),
        grid=(1,),
        in_specs=in_specs,
        out_specs=_full_spec((8, rpps[-1])),
        compiler_params=pltpu.CompilerParams(dimension_semantics=("arbitrary",)),
        cost_estimate=cost,
    )(*operands)

    # slab -> NCHW (only the final RGB image crosses HBM)
    hw = sizes[-1]
    hp = wp = hw + 2
    t = rgb_slab[:img_channels, :rps[-1]].reshape(img_channels, n, hp, wp)
    t = t[:, :, 1:hw + 1, 1:hw + 1]
    return t.transpose(1, 0, 2, 3)


# ------------------------------ pure-JAX reference ---------------------------- #


def ref_forward(params, x, steps, alpha):
    def lrelu(v):
        return jnp.where(v > 0, v, LRELU_SLOPE * v)

    def pnorm(v):
        return v / jnp.sqrt(jnp.mean(v * v, axis=1, keepdims=True) + PN_EPS)

    def conv(v, W, b, scale, pad):
        y = jax.lax.conv_general_dilated(v * scale, W, (1, 1), [(pad, pad), (pad, pad)],
                                         dimension_numbers=("NCHW", "OIHW", "NCHW"))
        return y + b.reshape(1, -1, 1, 1)

    def tconv(v, W, b, scale):
        y = jnp.einsum("nc,cohw->nohw", (v * scale).reshape(v.shape[0], -1), W)
        return y + b.reshape(1, -1, 1, 1)

    p = params["init_tconv"]; x = pnorm(lrelu(tconv(x, p["W"], p["b"], p["scale"])))
    p = params["init_conv"]; x = pnorm(lrelu(conv(x, p["W"], p["b"], p["scale"], 1)))
    if steps == 0:
        p = params["rgb"][0]
        return conv(x, p["W"], p["b"], p["scale"], 0)
    up = None
    for step in range(steps):
        up = jnp.repeat(jnp.repeat(x, 2, 2), 2, 3)
        blk = params["main"][step]
        h = pnorm(lrelu(conv(up, blk["conv1"]["W"], blk["conv1"]["b"], blk["conv1"]["scale"], 1)))
        x = pnorm(lrelu(conv(h, blk["conv2"]["W"], blk["conv2"]["b"], blk["conv2"]["scale"], 1)))
    pu, pf = params["rgb"][steps - 1], params["rgb"][steps]
    ur = conv(up, pu["W"], pu["b"], pu["scale"], 0)
    fr = conv(x, pf["W"], pf["b"], pf["scale"], 0)
    return jnp.tanh(alpha * fr + (1.0 - alpha) * ur)


if __name__ == "__main__":
    key = jax.random.PRNGKey(0)
    pkey, xkey = jax.random.split(key)

    latent, img_channels, N = 32, 3, 2
    factors = (1, 2)
    steps, alpha = 2, 0.5

    params = init_generator_params(pkey, img_channels=img_channels, latent=latent, factors=factors)
    x = jax.random.normal(xkey, (N, latent, 1, 1), jnp.float32)

    gen_fwd = jax.jit(generator_forward, static_argnames=("steps", "img_channels"))

    # Strict correctness path: f32 MXU operands throughout.
    prep_f32 = prepare_generator_params(params, compute_dtype=jnp.float32)
    out_f32 = jax.block_until_ready(gen_fwd(prep_f32, x, steps=steps, alpha=alpha))
    out_f32_s0 = jax.block_until_ready(gen_fwd(prep_f32, x, steps=0, alpha=alpha))

    # Fast path: bf16 MXU operands for conv/rgb dots, f32 activations/epilogues.
    prep_bf16 = prepare_generator_params(params, compute_dtype=jnp.bfloat16)
    out_bf16 = jax.block_until_ready(gen_fwd(prep_bf16, x, steps=steps, alpha=alpha))

    ref = jax.block_until_ready(ref_forward(params, x, steps, alpha))
    ref_s0 = jax.block_until_ready(ref_forward(params, x, 0, alpha))

    assert out_f32.shape == (N, img_channels, 16, 16), out_f32.shape
    assert out_bf16.shape == (N, img_channels, 16, 16), out_bf16.shape
    assert out_f32_s0.shape == (N, img_channels, 4, 4), out_f32_s0.shape

    np.testing.assert_allclose(np.asarray(out_f32), np.asarray(ref), atol=2e-3, rtol=2e-3)
    np.testing.assert_allclose(np.asarray(out_f32_s0), np.asarray(ref_s0), atol=2e-3, rtol=2e-3)
    # bf16 operand path: loose sanity bound (MXU input precision), not the strict check.
    np.testing.assert_allclose(np.asarray(out_bf16), np.asarray(ref), atol=1e-1, rtol=1e-1)
    assert np.isfinite(np.asarray(out_bf16)).all()

    print("KERNEL_OK")
</pallas_src>

<mosaic_0001>
module attributes {stable_mosaic.version = 11 : i64} {
  func.func @kernel(%arg0: i32, %arg1: memref<1x1xf32, #tpu.memory_space<smem>>, %arg2: memref<512x32xf32, #tpu.memory_space<vmem>>, %arg3: memref<32x512xf32, #tpu.memory_space<vmem>>, %arg4: memref<32x1xf32, #tpu.memory_space<vmem>>, %arg5: memref<32x128xf32, #tpu.memory_space<vmem>>, %arg6: memref<32x288xf32, #tpu.memory_space<vmem>>, %arg7: memref<32x1xf32, #tpu.memory_space<vmem>>, %arg8: memref<1x128xf32, #tpu.memory_space<vmem>>, %arg9: memref<128x256xf32, #tpu.memory_space<vmem>>, %arg10: memref<32x288xf32, #tpu.memory_space<vmem>>, %arg11: memref<32x1xf32, #tpu.memory_space<vmem>>, %arg12: memref<32x288xf32, #tpu.memory_space<vmem>>, %arg13: memref<32x1xf32, #tpu.memory_space<vmem>>, %arg14: memref<1x256xf32, #tpu.memory_space<vmem>>, %arg15: memref<256x768xf32, #tpu.memory_space<vmem>>, %arg16: memref<16x288xf32, #tpu.memory_space<vmem>>, %arg17: memref<16x1xf32, #tpu.memory_space<vmem>>, %arg18: memref<16x144xf32, #tpu.memory_space<vmem>>, %arg19: memref<16x1xf32, #tpu.memory_space<vmem>>, %arg20: memref<1x768xf32, #tpu.memory_space<vmem>>, %arg21: memref<8x32xf32, #tpu.memory_space<vmem>>, %arg22: memref<8x1xf32, #tpu.memory_space<vmem>>, %arg23: memref<8x16xf32, #tpu.memory_space<vmem>>, %arg24: memref<8x1xf32, #tpu.memory_space<vmem>>, %arg25: memref<8x768xf32, #tpu.memory_space<vmem>>) attributes {dimension_semantics = [#tpu.dimension_semantics<arbitrary>], iteration_bounds = array<i64: 1>, scalar_prefetch = 0 : i64, scratch_operands = 0 : i64, tpu.core_type = #tpu.core_type<tc>, window_params = [{transform_indices = @transform_0, window_bounds = array<i64: 1, 1>}, {pipeline_mode = #tpu.pipeline_mode<synchronous>, transform_indices = @transform_1, window_bounds = array<i64: 512, 32>}, {pipeline_mode = #tpu.pipeline_mode<synchronous>, transform_indices = @transform_2, window_bounds = array<i64: 32, 512>}, {pipeline_mode = #tpu.pipeline_mode<synchronous>, transform_indices = @transform_3, window_bounds = array<i64: 32, 1>}, {pipeline_mode = #tpu.pipeline_mode<synchronous>, transform_indices = @transform_4, window_bounds = array<i64: 32, 128>}, {pipeline_mode = #tpu.pipeline_mode<synchronous>, transform_indices = @transform_5, window_bounds = array<i64: 32, 288>}, {pipeline_mode = #tpu.pipeline_mode<synchronous>, transform_indices = @transform_6, window_bounds = array<i64: 32, 1>}, {pipeline_mode = #tpu.pipeline_mode<synchronous>, transform_indices = @transform_7, window_bounds = array<i64: 1, 128>}, {pipeline_mode = #tpu.pipeline_mode<synchronous>, transform_indices = @transform_8, window_bounds = array<i64: 128, 256>}, {pipeline_mode = #tpu.pipeline_mode<synchronous>, transform_indices = @transform_9, window_bounds = array<i64: 32, 288>}, {pipeline_mode = #tpu.pipeline_mode<synchronous>, transform_indices = @transform_10, window_bounds = array<i64: 32, 1>}, {pipeline_mode = #tpu.pipeline_mode<synchronous>, transform_indices = @transform_11, window_bounds = array<i64: 32, 288>}, {pipeline_mode = #tpu.pipeline_mode<synchronous>, transform_indices = @transform_12, window_bounds = array<i64: 32, 1>}, {pipeline_mode = #tpu.pipeline_mode<synchronous>, transform_indices = @transform_13, window_bounds = array<i64: 1, 256>}, {pipeline_mode = #tpu.pipeline_mode<synchronous>, transform_indices = @transform_14, window_bounds = array<i64: 256, 768>}, {pipeline_mode = #tpu.pipeline_mode<synchronous>, transform_indices = @transform_15, window_bounds = array<i64: 16, 288>}, {pipeline_mode = #tpu.pipeline_mode<synchronous>, transform_indices = @transform_16, window_bounds = array<i64: 16, 1>}, {pipeline_mode = #tpu.pipeline_mode<synchronous>, transform_indices = @transform_17, window_bounds = array<i64: 16, 144>}, {pipeline_mode = #tpu.pipeline_mode<synchronous>, transform_indices = @transform_18, window_bounds = array<i64: 16, 1>}, {pipeline_mode = #tpu.pipeline_mode<synchronous>, transform_indices = @transform_19, window_bounds = array<i64: 1, 768>}, {pipeline_mode = #tpu.pipeline_mode<synchronous>, transform_indices = @transform_20, window_bounds = array<i64: 8, 32>}, {pipeline_mode = #tpu.pipeline_mode<synchronous>, transform_indices = @transform_21, window_bounds = array<i64: 8, 1>}, {pipeline_mode = #tpu.pipeline_mode<synchronous>, transform_indices = @transform_22, window_bounds = array<i64: 8, 16>}, {pipeline_mode = #tpu.pipeline_mode<synchronous>, transform_indices = @transform_23, window_bounds = array<i64: 8, 1>}, {pipeline_mode = #tpu.pipeline_mode<synchronous>, transform_indices = @transform_24, window_bounds = array<i64: 8, 768>}]} {
    %c0 = arith.constant 0 : index
    %c0_0 = arith.constant 0 : index
    %0 = memref.load %arg1[%c0, %c0_0] : memref<1x1xf32, #tpu.memory_space<smem>>
    %c0_1 = arith.constant 0 : index
    %c0_2 = arith.constant 0 : index
    %1 = vector.load %arg2[%c0_1, %c0_2] : memref<512x32xf32, #tpu.memory_space<vmem>>, vector<512x32xf32>
    %c0_3 = arith.constant 0 : index
    %c0_4 = arith.constant 0 : index
    %2 = vector.load %arg3[%c0_3, %c0_4] : memref<32x512xf32, #tpu.memory_space<vmem>>, vector<32x512xf32>
    %c0_5 = arith.constant 0 : index
    %c0_6 = arith.constant 0 : index
    %3 = vector.load %arg4[%c0_5, %c0_6] : memref<32x1xf32, #tpu.memory_space<vmem>>, vector<32x1xf32>
    %c0_7 = arith.constant 0 : index
    %c0_8 = arith.constant 0 : index
    %4 = vector.load %arg5[%c0_7, %c0_8] : memref<32x128xf32, #tpu.memory_space<vmem>>, vector<32x128xf32>
    %c0_9 = arith.constant 0 : index
    %c0_10 = arith.constant 0 : index
    %5 = vector.load %arg6[%c0_9, %c0_10] : memref<32x288xf32, #tpu.memory_space<vmem>>, vector<32x288xf32>
    %c0_11 = arith.constant 0 : index
    %c0_12 = arith.constant 0 : index
    %6 = vector.load %arg7[%c0_11, %c0_12] : memref<32x1xf32, #tpu.memory_space<vmem>>, vector<32x1xf32>
    %c0_13 = arith.constant 0 : index
    %c0_14 = arith.constant 0 : index
    %7 = vector.load %arg8[%c0_13, %c0_14] : memref<1x128xf32, #tpu.memory_space<vmem>>, vector<1x128xf32>
    %cst = arith.constant dense<0.000000e+00> : vector<32x32xf32>
    %8 = tpu.matmul %2, %1, %cst {dimension_numbers = #tpu.dot_dimension_numbers<[1], [0], [0], [1], [0, 0, 1, 1], [], []>} : vector<32x512xf32>, vector<512x32xf32>, vector<32x32xf32> -> vector<32x32xf32>
    %9 = vector.broadcast %3 : vector<32x1xf32> to vector<32x32xf32>
    %10 = arith.addf %8, %9 : vector<32x32xf32>
    %cst_15 = arith.constant 0.000000e+00 : f32
    %11 = vector.broadcast %cst_15 : f32 to vector<32x32xf32>
    %12 = arith.cmpf ogt, %10, %11 : vector<32x32xf32>
    %cst_16 = arith.constant 2.000000e-01 : f32
    %13 = vector.broadcast %cst_16 : f32 to vector<32x32xf32>
    %14 = arith.mulf %13, %10 : vector<32x32xf32>
    %15 = arith.select %12, %10, %14 : vector<32x32xi1>, vector<32x32xf32>
    %cst_17 = arith.constant 3.125000e-02 : f32
    %16 = vector.broadcast %cst_17 : f32 to vector<1x32xf32>
    %17 = arith.mulf %15, %15 : vector<32x32xf32>
    %cst_18 = arith.constant dense<0.000000e+00> : vector<1x32xf32>
    %18 = tpu.matmul %16, %17, %cst_18 {dimension_numbers = #tpu.dot_dimension_numbers<[1], [0], [0], [1], [0, 0, 1, 1], [], []>} : vector<1x32xf32>, vector<32x32xf32>, vector<1x32xf32> -> vector<1x32xf32>
    %cst_19 = arith.constant 9.99999993E-9 : f32
    %19 = vector.broadcast %cst_19 : f32 to vector<1x32xf32>
    %20 = arith.addf %18, %19 : vector<1x32xf32>
    %21 = math.rsqrt %20 : vector<1x32xf32>
    %22 = vector.broadcast %21 : vector<1x32xf32> to vector<32x32xf32>
    %23 = arith.mulf %15, %22 : vector<32x32xf32>
    %cst_20 = arith.constant dense<0.000000e+00> : vector<32x128xf32>
    %24 = tpu.matmul %23, %4, %cst_20 {dimension_numbers = #tpu.dot_dimension_numbers<[1], [0], [0], [1], [0, 0, 1, 1], [], []>} : vector<32x32xf32>, vector<32x128xf32>, vector<32x128xf32> -> vector<32x128xf32>
    %cst_21 = arith.constant 0.000000e+00 : f32
    %25 = vector.broadcast %cst_21 : f32 to vector<32x128xf32>
    %26 = tpu.concatenate %25, %24, %25 in 1 : vector<32x128xf32>, vector<32x128xf32>, vector<32x128xf32> -> vector<32x384xf32>
    %27 = vector.extract_strided_slice %26 {offsets = [0, 121], sizes = [32, 128], strides = [1, 1]} : vector<32x384xf32> to vector<32x128xf32>
    %28 = vector.extract_strided_slice %26 {offsets = [0, 122], sizes = [32, 128], strides = [1, 1]} : vector<32x384xf32> to vector<32x128xf32>
    %29 = vector.extract_strided_slice %26 {offsets = [0, 123], sizes = [32, 128], strides = [1, 1]} : vector<32x384xf32> to vector<32x128xf32>
    %30 = vector.extract_strided_slice %26 {offsets = [0, 127], sizes = [32, 128], strides = [1, 1]} : vector<32x384xf32> to vector<32x128xf32>
    %31 = vector.extract_strided_slice %26 {offsets = [0, 128], sizes = [32, 128], strides = [1, 1]} : vector<32x384xf32> to vector<32x128xf32>
    %32 = vector.extract_strided_slice %26 {offsets = [0, 129], sizes = [32, 128], strides = [1, 1]} : vector<32x384xf32> to vector<32x128xf32>
    %33 = vector.extract_strided_slice %26 {offsets = [0, 133], sizes = [32, 128], strides = [1, 1]} : vector<32x384xf32> to vector<32x128xf32>
    %34 = vector.extract_strided_slice %26 {offsets = [0, 134], sizes = [32, 128], strides = [1, 1]} : vector<32x384xf32> to vector<32x128xf32>
    %35 = vector.extract_strided_slice %26 {offsets = [0, 135], sizes = [32, 128], strides = [1, 1]} : vector<32x384xf32> to vector<32x128xf32>
    %36 = tpu.concatenate %27, %28, %29, %30, %31, %32, %33, %34, %35 in 0 : vector<32x128xf32>, vector<32x128xf32>, vector<32x128xf32>, vector<32x128xf32>, vector<32x128xf32>, vector<32x128xf32>, vector<32x128xf32>, vector<32x128xf32>, vector<32x128xf32> -> vector<288x128xf32>
    %cst_22 = arith.constant dense<0.000000e+00> : vector<32x128xf32>
    %37 = tpu.matmul %5, %36, %cst_22 {dimension_numbers = #tpu.dot_dimension_numbers<[1], [0], [0], [1], [0, 0, 1, 1], [], []>} : vector<32x288xf32>, vector<288x128xf32>, vector<32x128xf32> -> vector<32x128xf32>
    %38 = vector.broadcast %6 : vector<32x1xf32> to vector<32x128xf32>
    %39 = arith.addf %37, %38 : vector<32x128xf32>
    %cst_23 = arith.constant 0.000000e+00 : f32
    %40 = vector.broadcast %cst_23 : f32 to vector<32x128xf32>
    %41 = arith.cmpf ogt, %39, %40 : vector<32x128xf32>
    %cst_24 = arith.constant 2.000000e-01 : f32
    %42 = vector.broadcast %cst_24 : f32 to vector<32x128xf32>
    %43 = arith.mulf %42, %39 : vector<32x128xf32>
    %44 = arith.select %41, %39, %43 : vector<32x128xi1>, vector<32x128xf32>
    %cst_25 = arith.constant 3.125000e-02 : f32
    %45 = vector.broadcast %cst_25 : f32 to vector<1x32xf32>
    %46 = arith.mulf %44, %44 : vector<32x128xf32>
    %cst_26 = arith.constant dense<0.000000e+00> : vector<1x128xf32>
    %47 = tpu.matmul %45, %46, %cst_26 {dimension_numbers = #tpu.dot_dimension_numbers<[1], [0], [0], [1], [0, 0, 1, 1], [], []>} : vector<1x32xf32>, vector<32x128xf32>, vector<1x128xf32> -> vector<1x128xf32>
    %cst_27 = arith.constant 9.99999993E-9 : f32
    %48 = vector.broadcast %cst_27 : f32 to vector<1x128xf32>
    %49 = arith.addf %47, %48 : vector<1x128xf32>
    %50 = math.rsqrt %49 : vector<1x128xf32>
    %51 = vector.broadcast %50 : vector<1x128xf32> to vector<32x128xf32>
    %52 = arith.mulf %44, %51 : vector<32x128xf32>
    %53 = vector.broadcast %7 : vector<1x128xf32> to vector<32x128xf32>
    %54 = arith.mulf %52, %53 : vector<32x128xf32>
    %c0_28 = arith.constant 0 : index
    %c0_29 = arith.constant 0 : index
    %55 = vector.load %arg9[%c0_28, %c0_29] : memref<128x256xf32, #tpu.memory_space<vmem>>, vector<128x256xf32>
    %c0_30 = arith.constant 0 : index
    %c0_31 = arith.constant 0 : index
    %56 = vector.load %arg10[%c0_30, %c0_31] : memref<32x288xf32, #tpu.memory_space<vmem>>, vector<32x288xf32>
    %c0_32 = arith.constant 0 : index
    %c0_33 = arith.constant 0 : index
    %57 = vector.load %arg11[%c0_32, %c0_33] : memref<32x1xf32, #tpu.memory_space<vmem>>, vector<32x1xf32>
    %c0_34 = arith.constant 0 : index
    %c0_35 = arith.constant 0 : index
    %58 = vector.load %arg12[%c0_34, %c0_35] : memref<32x288xf32, #tpu.memory_space<vmem>>, vector<32x288xf32>
    %c0_36 = arith.constant 0 : index
    %c0_37 = arith.constant 0 : index
    %59 = vector.load %arg13[%c0_36, %c0_37] : memref<32x1xf32, #tpu.memory_space<vmem>>, vector<32x1xf32>
    %c0_38 = arith.constant 0 : index
    %c0_39 = arith.constant 0 : index
    %60 = vector.load %arg14[%c0_38, %c0_39] : memref<1x256xf32, #tpu.memory_space<vmem>>, vector<1x256xf32>
    %cst_40 = arith.constant dense<0.000000e+00> : vector<32x256xf32>
    %61 = tpu.matmul %54, %55, %cst_40 {dimension_numbers = #tpu.dot_dimension_numbers<[1], [0], [0], [1], [0, 0, 1, 1], [], []>} : vector<32x128xf32>, vector<128x256xf32>, vector<32x256xf32> -> vector<32x256xf32>
    %cst_41 = arith.constant 0.000000e+00 : f32
    %62 = vector.broadcast %cst_41 : f32 to vector<32x128xf32>
    %63 = tpu.concatenate %62, %61, %62 in 1 : vector<32x128xf32>, vector<32x256xf32>, vector<32x128xf32> -> vector<32x512xf32>
    %64 = vector.extract_strided_slice %63 {offsets = [0, 117], sizes = [32, 256], strides = [1, 1]} : vector<32x512xf32> to vector<32x256xf32>
    %65 = vector.extract_strided_slice %63 {offsets = [0, 118], sizes = [32, 256], strides = [1, 1]} : vector<32x512xf32> to vector<32x256xf32>
    %66 = vector.extract_strided_slice %63 {offsets = [0, 119], sizes = [32, 256], strides = [1, 1]} : vector<32x512xf32> to vector<32x256xf32>
    %67 = vector.extract_strided_slice %63 {offsets = [0, 127], sizes = [32, 256], strides = [1, 1]} : vector<32x512xf32> to vector<32x256xf32>
    %68 = vector.extract_strided_slice %63 {offsets = [0, 128], sizes = [32, 256], strides = [1, 1]} : vector<32x512xf32> to vector<32x256xf32>
    %69 = vector.extract_strided_slice %63 {offsets = [0, 129], sizes = [32, 256], strides = [1, 1]} : vector<32x512xf32> to vector<32x256xf32>
    %70 = vector.extract_strided_slice %63 {offsets = [0, 137], sizes = [32, 256], strides = [1, 1]} : vector<32x512xf32> to vector<32x256xf32>
    %71 = vector.extract_strided_slice %63 {offsets = [0, 138], sizes = [32, 256], strides = [1, 1]} : vector<32x512xf32> to vector<32x256xf32>
    %72 = vector.extract_strided_slice %63 {offsets = [0, 139], sizes = [32, 256], strides = [1, 1]} : vector<32x512xf32> to vector<32x256xf32>
    %73 = tpu.concatenate %64, %65, %66, %67, %68, %69, %70, %71, %72 in 0 : vector<32x256xf32>, vector<32x256xf32>, vector<32x256xf32>, vector<32x256xf32>, vector<32x256xf32>, vector<32x256xf32>, vector<32x256xf32>, vector<32x256xf32>, vector<32x256xf32> -> vector<288x256xf32>
    %cst_42 = arith.constant dense<0.000000e+00> : vector<32x256xf32>
    %74 = tpu.matmul %56, %73, %cst_42 {dimension_numbers = #tpu.dot_dimension_numbers<[1], [0], [0], [1], [0, 0, 1, 1], [], []>} : vector<32x288xf32>, vector<288x256xf32>, vector<32x256xf32> -> vector<32x256xf32>
    %75 = vector.broadcast %57 : vector<32x1xf32> to vector<32x256xf32>
    %76 = arith.addf %74, %75 : vector<32x256xf32>
    %cst_43 = arith.constant 0.000000e+00 : f32
    %77 = vector.broadcast %cst_43 : f32 to vector<32x256xf32>
    %78 = arith.cmpf ogt, %76, %77 : vector<32x256xf32>
    %cst_44 = arith.constant 2.000000e-01 : f32
    %79 = vector.broadcast %cst_44 : f32 to vector<32x256xf32>
    %80 = arith.mulf %79, %76 : vector<32x256xf32>
    %81 = arith.select %78, %76, %80 : vector<32x256xi1>, vector<32x256xf32>
    %cst_45 = arith.constant 3.125000e-02 : f32
    %82 = vector.broadcast %cst_45 : f32 to vector<1x32xf32>
    %83 = arith.mulf %81, %81 : vector<32x256xf32>
    %cst_46 = arith.constant dense<0.000000e+00> : vector<1x256xf32>
    %84 = tpu.matmul %82, %83, %cst_46 {dimension_numbers = #tpu.dot_dimension_numbers<[1], [0], [0], [1], [0, 0, 1, 1], [], []>} : vector<1x32xf32>, vector<32x256xf32>, vector<1x256xf32> -> vector<1x256xf32>
    %cst_47 = arith.constant 9.99999993E-9 : f32
    %85 = vector.broadcast %cst_47 : f32 to vector<1x256xf32>
    %86 = arith.addf %84, %85 : vector<1x256xf32>
    %87 = math.rsqrt %86 : vector<1x256xf32>
    %88 = vector.broadcast %87 : vector<1x256xf32> to vector<32x256xf32>
    %89 = arith.mulf %81, %88 : vector<32x256xf32>
    %90 = vector.broadcast %60 : vector<1x256xf32> to vector<32x256xf32>
    %91 = arith.mulf %89, %90 : vector<32x256xf32>
    %cst_48 = arith.constant 0.000000e+00 : f32
    %92 = vector.broadcast %cst_48 : f32 to vector<32x128xf32>
    %93 = tpu.concatenate %92, %91, %92 in 1 : vector<32x128xf32>, vector<32x256xf32>, vector<32x128xf32> -> vector<32x512xf32>
    %94 = vector.extract_strided_slice %93 {offsets = [0, 117], sizes = [32, 256], strides = [1, 1]} : vector<32x512xf32> to vector<32x256xf32>
    %95 = vector.extract_strided_slice %93 {offsets = [0, 118], sizes = [32, 256], strides = [1, 1]} : vector<32x512xf32> to vector<32x256xf32>
    %96 = vector.extract_strided_slice %93 {offsets = [0, 119], sizes = [32, 256], strides = [1, 1]} : vector<32x512xf32> to vector<32x256xf32>
    %97 = vector.extract_strided_slice %93 {offsets = [0, 127], sizes = [32, 256], strides = [1, 1]} : vector<32x512xf32> to vector<32x256xf32>
    %98 = vector.extract_strided_slice %93 {offsets = [0, 128], sizes = [32, 256], strides = [1, 1]} : vector<32x512xf32> to vector<32x256xf32>
    %99 = vector.extract_strided_slice %93 {offsets = [0, 129], sizes = [32, 256], strides = [1, 1]} : vector<32x512xf32> to vector<32x256xf32>
    %100 = vector.extract_strided_slice %93 {offsets = [0, 137], sizes = [32, 256], strides = [1, 1]} : vector<32x512xf32> to vector<32x256xf32>
    %101 = vector.extract_strided_slice %93 {offsets = [0, 138], sizes = [32, 256], strides = [1, 1]} : vector<32x512xf32> to vector<32x256xf32>
    %102 = vector.extract_strided_slice %93 {offsets = [0, 139], sizes = [32, 256], strides = [1, 1]} : vector<32x512xf32> to vector<32x256xf32>
    %103 = tpu.concatenate %94, %95, %96, %97, %98, %99, %100, %101, %102 in 0 : vector<32x256xf32>, vector<32x256xf32>, vector<32x256xf32>, vector<32x256xf32>, vector<32x256xf32>, vector<32x256xf32>, vector<32x256xf32>, vector<32x256xf32>, vector<32x256xf32> -> vector<288x256xf32>
    %cst_49 = arith.constant dense<0.000000e+00> : vector<32x256xf32>
    %104 = tpu.matmul %58, %103, %cst_49 {dimension_numbers = #tpu.dot_dimension_numbers<[1], [0], [0], [1], [0, 0, 1, 1], [], []>} : vector<32x288xf32>, vector<288x256xf32>, vector<32x256xf32> -> vector<32x256xf32>
    %105 = vector.broadcast %59 : vector<32x1xf32> to vector<32x256xf32>
    %106 = arith.addf %104, %105 : vector<32x256xf32>
    %cst_50 = arith.constant 0.000000e+00 : f32
    %107 = vector.broadcast %cst_50 : f32 to vector<32x256xf32>
    %108 = arith.cmpf ogt, %106, %107 : vector<32x256xf32>
    %cst_51 = arith.constant 2.000000e-01 : f32
    %109 = vector.broadcast %cst_51 : f32 to vector<32x256xf32>
    %110 = arith.mulf %109, %106 : vector<32x256xf32>
    %111 = arith.select %108, %106, %110 : vector<32x256xi1>, vector<32x256xf32>
    %cst_52 = arith.constant 3.125000e-02 : f32
    %112 = vector.broadcast %cst_52 : f32 to vector<1x32xf32>
    %113 = arith.mulf %111, %111 : vector<32x256xf32>
    %cst_53 = arith.constant dense<0.000000e+00> : vector<1x256xf32>
    %114 = tpu.matmul %112, %113, %cst_53 {dimension_numbers = #tpu.dot_dimension_numbers<[1], [0], [0], [1], [0, 0, 1, 1], [], []>} : vector<1x32xf32>, vector<32x256xf32>, vector<1x256xf32> -> vector<1x256xf32>
    %cst_54 = arith.constant 9.99999993E-9 : f32
    %115 = vector.broadcast %cst_54 : f32 to vector<1x256xf32>
    %116 = arith.addf %114, %115 : vector<1x256xf32>
    %117 = math.rsqrt %116 : vector<1x256xf32>
    %118 = vector.broadcast %117 : vector<1x256xf32> to vector<32x256xf32>
    %119 = arith.mulf %111, %118 : vector<32x256xf32>
    %120 = vector.broadcast %60 : vector<1x256xf32> to vector<32x256xf32>
    %121 = arith.mulf %119, %120 : vector<32x256xf32>
    %c0_55 = arith.constant 0 : index
    %c0_56 = arith.constant 0 : index
    %122 = vector.load %arg15[%c0_55, %c0_56] : memref<256x768xf32, #tpu.memory_space<vmem>>, vector<256x768xf32>
    %c0_57 = arith.constant 0 : index
    %c0_58 = arith.constant 0 : index
    %123 = vector.load %arg16[%c0_57, %c0_58] : memref<16x288xf32, #tpu.memory_space<vmem>>, vector<16x288xf32>
    %c0_59 = arith.constant 0 : index
    %c0_60 = arith.constant 0 : index
    %124 = vector.load %arg17[%c0_59, %c0_60] : memref<16x1xf32, #tpu.memory_space<vmem>>, vector<16x1xf32>
    %c0_61 = arith.constant 0 : index
    %c0_62 = arith.constant 0 : index
    %125 = vector.load %arg18[%c0_61, %c0_62] : memref<16x144xf32, #tpu.memory_space<vmem>>, vector<16x144xf32>
    %c0_63 = arith.constant 0 : index
    %c0_64 = arith.constant 0 : index
    %126 = vector.load %arg19[%c0_63, %c0_64] : memref<16x1xf32, #tpu.memory_space<vmem>>, vector<16x1xf32>
    %c0_65 = arith.constant 0 : index
    %c0_66 = arith.constant 0 : index
    %127 = vector.load %arg20[%c0_65, %c0_66] : memref<1x768xf32, #tpu.memory_space<vmem>>, vector<1x768xf32>
    %cst_67 = arith.constant dense<0.000000e+00> : vector<32x768xf32>
    %128 = tpu.matmul %121, %122, %cst_67 {dimension_numbers = #tpu.dot_dimension_numbers<[1], [0], [0], [1], [0, 0, 1, 1], [], []>} : vector<32x256xf32>, vector<256x768xf32>, vector<32x768xf32> -> vector<32x768xf32>
    %cst_68 = arith.constant 0.000000e+00 : f32
    %129 = vector.broadcast %cst_68 : f32 to vector<32x128xf32>
    %130 = tpu.concatenate %129, %128, %129 in 1 : vector<32x128xf32>, vector<32x768xf32>, vector<32x128xf32> -> vector<32x1024xf32>
    %131 = vector.extract_strided_slice %130 {offsets = [0, 109], sizes = [32, 768], strides = [1, 1]} : vector<32x1024xf32> to vector<32x768xf32>
    %132 = vector.extract_strided_slice %130 {offsets = [0, 110], sizes = [32, 768], strides = [1, 1]} : vector<32x1024xf32> to vector<32x768xf32>
    %133 = vector.extract_strided_slice %130 {offsets = [0, 111], sizes = [32, 768], strides = [1, 1]} : vector<32x1024xf32> to vector<32x768xf32>
    %134 = vector.extract_strided_slice %130 {offsets = [0, 127], sizes = [32, 768], strides = [1, 1]} : vector<32x1024xf32> to vector<32x768xf32>
    %135 = vector.extract_strided_slice %130 {offsets = [0, 128], sizes = [32, 768], strides = [1, 1]} : vector<32x1024xf32> to vector<32x768xf32>
    %136 = vector.extract_strided_slice %130 {offsets = [0, 129], sizes = [32, 768], strides = [1, 1]} : vector<32x1024xf32> to vector<32x768xf32>
    %137 = vector.extract_strided_slice %130 {offsets = [0, 145], sizes = [32, 768], strides = [1, 1]} : vector<32x1024xf32> to vector<32x768xf32>
    %138 = vector.extract_strided_slice %130 {offsets = [0, 146], sizes = [32, 768], strides = [1, 1]} : vector<32x1024xf32> to vector<32x768xf32>
    %139 = vector.extract_strided_slice %130 {offsets = [0, 147], sizes = [32, 768], strides = [1, 1]} : vector<32x1024xf32> to vector<32x768xf32>
    %140 = tpu.concatenate %131, %132, %133, %134, %135, %136, %137, %138, %139 in 0 : vector<32x768xf32>, vector<32x768xf32>, vector<32x768xf32>, vector<32x768xf32>, vector<32x768xf32>, vector<32x768xf32>, vector<32x768xf32>, vector<32x768xf32>, vector<32x768xf32> -> vector<288x768xf32>
    %cst_69 = arith.constant dense<0.000000e+00> : vector<16x768xf32>
    %141 = tpu.matmul %123, %140, %cst_69 {dimension_numbers = #tpu.dot_dimension_numbers<[1], [0], [0], [1], [0, 0, 1, 1], [], []>} : vector<16x288xf32>, vector<288x768xf32>, vector<16x768xf32> -> vector<16x768xf32>
    %142 = vector.broadcast %124 : vector<16x1xf32> to vector<16x768xf32>
    %143 = arith.addf %141, %142 : vector<16x768xf32>
    %cst_70 = arith.constant 0.000000e+00 : f32
    %144 = vector.broadcast %cst_70 : f32 to vector<16x768xf32>
    %145 = arith.cmpf ogt, %143, %144 : vector<16x768xf32>
    %cst_71 = arith.constant 2.000000e-01 : f32
    %146 = vector.broadcast %cst_71 : f32 to vector<16x768xf32>
    %147 = arith.mulf %146, %143 : vector<16x768xf32>
    %148 = arith.select %145, %143, %147 : vector<16x768xi1>, vector<16x768xf32>
    %cst_72 = arith.constant 6.250000e-02 : f32
    %149 = vector.broadcast %cst_72 : f32 to vector<1x16xf32>
    %150 = arith.mulf %148, %148 : vector<16x768xf32>
    %cst_73 = arith.constant dense<0.000000e+00> : vector<1x768xf32>
    %151 = tpu.matmul %149, %150, %cst_73 {dimension_numbers = #tpu.dot_dimension_numbers<[1], [0], [0], [1], [0, 0, 1, 1], [], []>} : vector<1x16xf32>, vector<16x768xf32>, vector<1x768xf32> -> vector<1x768xf32>
    %cst_74 = arith.constant 9.99999993E-9 : f32
    %152 = vector.broadcast %cst_74 : f32 to vector<1x768xf32>
    %153 = arith.addf %151, %152 : vector<1x768xf32>
    %154 = math.rsqrt %153 : vector<1x768xf32>
    %155 = vector.broadcast %154 : vector<1x768xf32> to vector<16x768xf32>
    %156 = arith.mulf %148, %155 : vector<16x768xf32>
    %157 = vector.broadcast %127 : vector<1x768xf32> to vector<16x768xf32>
    %158 = arith.mulf %156, %157 : vector<16x768xf32>
    %cst_75 = arith.constant 0.000000e+00 : f32
    %159 = vector.broadcast %cst_75 : f32 to vector<16x128xf32>
    %160 = tpu.concatenate %159, %158, %159 in 1 : vector<16x128xf32>, vector<16x768xf32>, vector<16x128xf32> -> vector<16x1024xf32>
    %161 = vector.extract_strided_slice %160 {offsets = [0, 109], sizes = [16, 768], strides = [1, 1]} : vector<16x1024xf32> to vector<16x768xf32>
    %162 = vector.extract_strided_slice %160 {offsets = [0, 110], sizes = [16, 768], strides = [1, 1]} : vector<16x1024xf32> to vector<16x768xf32>
    %163 = vector.extract_strided_slice %160 {offsets = [0, 111], sizes = [16, 768], strides = [1, 1]} : vector<16x1024xf32> to vector<16x768xf32>
    %164 = vector.extract_strided_slice %160 {offsets = [0, 127], sizes = [16, 768], strides = [1, 1]} : vector<16x1024xf32> to vector<16x768xf32>
    %165 = vector.extract_strided_slice %160 {offsets = [0, 128], sizes = [16, 768], strides = [1, 1]} : vector<16x1024xf32> to vector<16x768xf32>
    %166 = vector.extract_strided_slice %160 {offsets = [0, 129], sizes = [16, 768], strides = [1, 1]} : vector<16x1024xf32> to vector<16x768xf32>
    %167 = vector.extract_strided_slice %160 {offsets = [0, 145], sizes = [16, 768], strides = [1, 1]} : vector<16x1024xf32> to vector<16x768xf32>
    %168 = vector.extract_strided_slice %160 {offsets = [0, 146], sizes = [16, 768], strides = [1, 1]} : vector<16x1024xf32> to vector<16x768xf32>
    %169 = vector.extract_strided_slice %160 {offsets = [0, 147], sizes = [16, 768], strides = [1, 1]} : vector<16x1024xf32> to vector<16x768xf32>
    %170 = tpu.concatenate %161, %162, %163, %164, %165, %166, %167, %168, %169 in 0 : vector<16x768xf32>, vector<16x768xf32>, vector<16x768xf32>, vector<16x768xf32>, vector<16x768xf32>, vector<16x768xf32>, vector<16x768xf32>, vector<16x768xf32>, vector<16x768xf32> -> vector<144x768xf32>
    %cst_76 = arith.constant dense<0.000000e+00> : vector<16x768xf32>
    %171 = tpu.matmul %125, %170, %cst_76 {dimension_numbers = #tpu.dot_dimension_numbers<[1], [0], [0], [1], [0, 0, 1, 1], [], []>} : vector<16x144xf32>, vector<144x768xf32>, vector<16x768xf32> -> vector<16x768xf32>
    %172 = vector.broadcast %126 : vector<16x1xf32> to vector<16x768xf32>
    %173 = arith.addf %171, %172 : vector<16x768xf32>
    %cst_77 = arith.constant 0.000000e+00 : f32
    %174 = vector.broadcast %cst_77 : f32 to vector<16x768xf32>
    %175 = arith.cmpf ogt, %173, %174 : vector<16x768xf32>
    %cst_78 = arith.constant 2.000000e-01 : f32
    %176 = vector.broadcast %cst_78 : f32 to vector<16x768xf32>
    %177 = arith.mulf %176, %173 : vector<16x768xf32>
    %178 = arith.select %175, %173, %177 : vector<16x768xi1>, vector<16x768xf32>
    %cst_79 = arith.constant 6.250000e-02 : f32
    %179 = vector.broadcast %cst_79 : f32 to vector<1x16xf32>
    %180 = arith.mulf %178, %178 : vector<16x768xf32>
    %cst_80 = arith.constant dense<0.000000e+00> : vector<1x768xf32>
    %181 = tpu.matmul %179, %180, %cst_80 {dimension_numbers = #tpu.dot_dimension_numbers<[1], [0], [0], [1], [0, 0, 1, 1], [], []>} : vector<1x16xf32>, vector<16x768xf32>, vector<1x768xf32> -> vector<1x768xf32>
    %cst_81 = arith.constant 9.99999993E-9 : f32
    %182 = vector.broadcast %cst_81 : f32 to vector<1x768xf32>
    %183 = arith.addf %181, %182 : vector<1x768xf32>
    %184 = math.rsqrt %183 : vector<1x768xf32>
    %185 = vector.broadcast %184 : vector<1x768xf32> to vector<16x768xf32>
    %186 = arith.mulf %178, %185 : vector<16x768xf32>
    %187 = vector.broadcast %127 : vector<1x768xf32> to vector<16x768xf32>
    %188 = arith.mulf %186, %187 : vector<16x768xf32>
    %c0_82 = arith.constant 0 : index
    %c0_83 = arith.constant 0 : index
    %189 = vector.load %arg21[%c0_82, %c0_83] : memref<8x32xf32, #tpu.memory_space<vmem>>, vector<8x32xf32>
    %c0_84 = arith.constant 0 : index
    %c0_85 = arith.constant 0 : index
    %190 = vector.load %arg22[%c0_84, %c0_85] : memref<8x1xf32, #tpu.memory_space<vmem>>, vector<8x1xf32>
    %c0_86 = arith.constant 0 : index
    %c0_87 = arith.constant 0 : index
    %191 = vector.load %arg23[%c0_86, %c0_87] : memref<8x16xf32, #tpu.memory_space<vmem>>, vector<8x16xf32>
    %c0_88 = arith.constant 0 : index
    %c0_89 = arith.constant 0 : index
    %192 = vector.load %arg24[%c0_88, %c0_89] : memref<8x1xf32, #tpu.memory_space<vmem>>, vector<8x1xf32>
    %cst_90 = arith.constant dense<0.000000e+00> : vector<8x768xf32>
    %193 = tpu.matmul %189, %128, %cst_90 {dimension_numbers = #tpu.dot_dimension_numbers<[1], [0], [0], [1], [0, 0, 1, 1], [], []>} : vector<8x32xf32>, vector<32x768xf32>, vector<8x768xf32> -> vector<8x768xf32>
    %194 = vector.broadcast %190 : vector<8x1xf32> to vector<8x768xf32>
    %195 = arith.addf %193, %194 : vector<8x768xf32>
    %cst_91 = arith.constant dense<0.000000e+00> : vector<8x768xf32>
    %196 = tpu.matmul %191, %188, %cst_91 {dimension_numbers = #tpu.dot_dimension_numbers<[1], [0], [0], [1], [0, 0, 1, 1], [], []>} : vector<8x16xf32>, vector<16x768xf32>, vector<8x768xf32> -> vector<8x768xf32>
    %197 = vector.broadcast %192 : vector<8x1xf32> to vector<8x768xf32>
    %198 = arith.addf %196, %197 : vector<8x768xf32>
    %199 = vector.broadcast %0 : f32 to vector<8x768xf32>
    %200 = arith.mulf %199, %198 : vector<8x768xf32>
    %cst_92 = arith.constant 1.000000e+00 : f32
    %201 = arith.subf %cst_92, %0 : f32
    %202 = vector.broadcast %201 : f32 to vector<8x768xf32>
    %203 = arith.mulf %202, %195 : vector<8x768xf32>
    %204 = arith.addf %200, %203 : vector<8x768xf32>
    %205 = math.tanh %204 : vector<8x768xf32>
    %c0_93 = arith.constant 0 : index
    %c0_94 = arith.constant 0 : index
    %206 = vector.load %arg25[%c0_93, %c0_94] : memref<8x768xf32, #tpu.memory_space<vmem>>, vector<8x768xf32>
    tpu.vector_store %arg25[%c0_93, %c0_94], %205 {strides = array<i32>} : memref<8x768xf32, #tpu.memory_space<vmem>>, vector<8x768xf32>,
    return
  }
  func.func @transform_0(%arg0: i32) -> (i32, i32) {
    %c0_i32 = arith.constant 0 : i32
    %c0_i32_0 = arith.constant 0 : i32
    %c0_i32_1 = arith.constant 0 : i32
    return %c0_i32, %c0_i32_0 : i32, i32
  }
  func.func @transform_1(%arg0: i32) -> (i32, i32) {
    %c0_i32 = arith.constant 0 : i32
    %c0_i32_0 = arith.constant 0 : i32
    %c0_i32_1 = arith.constant 0 : i32
    return %c0_i32, %c0_i32_0 : i32, i32
  }
  func.func @transform_2(%arg0: i32) -> (i32, i32) {
    %c0_i32 = arith.constant 0 : i32
    %c0_i32_0 = arith.constant 0 : i32
    %c0_i32_1 = arith.constant 0 : i32
    return %c0_i32, %c0_i32_0 : i32, i32
  }
  func.func @transform_3(%arg0: i32) -> (i32, i32) {
    %c0_i32 = arith.constant 0 : i32
    %c0_i32_0 = arith.constant 0 : i32
    %c0_i32_1 = arith.constant 0 : i32
    return %c0_i32, %c0_i32_0 : i32, i32
  }
  func.func @transform_4(%arg0: i32) -> (i32, i32) {
    %c0_i32 = arith.constant 0 : i32
    %c0_i32_0 = arith.constant 0 : i32
    %c0_i32_1 = arith.constant 0 : i32
    return %c0_i32, %c0_i32_0 : i32, i32
  }
  func.func @transform_5(%arg0: i32) -> (i32, i32) {
    %c0_i32 = arith.constant 0 : i32
    %c0_i32_0 = arith.constant 0 : i32
    %c0_i32_1 = arith.constant 0 : i32
    return %c0_i32, %c0_i32_0 : i32, i32
  }
  func.func @transform_6(%arg0: i32) -> (i32, i32) {
    %c0_i32 = arith.constant 0 : i32
    %c0_i32_0 = arith.constant 0 : i32
    %c0_i32_1 = arith.constant 0 : i32
    return %c0_i32, %c0_i32_0 : i32, i32
  }
  func.func @transform_7(%arg0: i32) -> (i32, i32) {
    %c0_i32 = arith.constant 0 : i32
    %c0_i32_0 = arith.constant 0 : i32
    %c0_i32_1 = arith.constant 0 : i32
    return %c0_i32, %c0_i32_0 : i32, i32
  }
  func.func @transform_8(%arg0: i32) -> (i32, i32) {
    %c0_i32 = arith.constant 0 : i32
    %c0_i32_0 = arith.constant 0 : i32
    %c0_i32_1 = arith.constant 0 : i32
    return %c0_i32, %c0_i32_0 : i32, i32
  }
  func.func @transform_9(%arg0: i32) -> (i32, i32) {
    %c0_i32 = arith.constant 0 : i32
    %c0_i32_0 = arith.constant 0 : i32
    %c0_i32_1 = arith.constant 0 : i32
    return %c0_i32, %c0_i32_0 : i32, i32
  }
  func.func @transform_10(%arg0: i32) -> (i32, i32) {
    %c0_i32 = arith.constant 0 : i32
    %c0_i32_0 = arith.constant 0 : i32
    %c0_i32_1 = arith.constant 0 : i32
    return %c0_i32, %c0_i32_0 : i32, i32
  }
  func.func @transform_11(%arg0: i32) -> (i32, i32) {
    %c0_i32 = arith.constant 0 : i32
    %c0_i32_0 = arith.constant 0 : i32
    %c0_i32_1 = arith.constant 0 : i32
    return %c0_i32, %c0_i32_0 : i32, i32
  }
  func.func @transform_12(%arg0: i32) -> (i32, i32) {
    %c0_i32 = arith.constant 0 : i32
    %c0_i32_0 = arith.constant 0 : i32
    %c0_i32_1 = arith.constant 0 : i32
    return %c0_i32, %c0_i32_0 : i32, i32
  }
  func.func @transform_13(%arg0: i32) -> (i32, i32) {
    %c0_i32 = arith.constant 0 : i32
    %c0_i32_0 = arith.constant 0 : i32
    %c0_i32_1 = arith.constant 0 : i32
    return %c0_i32, %c0_i32_0 : i32, i32
  }
  func.func @transform_14(%arg0: i32) -> (i32, i32) {
    %c0_i32 = arith.constant 0 : i32
    %c0_i32_0 = arith.constant 0 : i32
    %c0_i32_1 = arith.constant 0 : i32
    return %c0_i32, %c0_i32_0 : i32, i32
  }
  func.func @transform_15(%arg0: i32) -> (i32, i32) {
    %c0_i32 = arith.constant 0 : i32
    %c0_i32_0 = arith.constant 0 : i32
    %c0_i32_1 = arith.constant 0 : i32
    return %c0_i32, %c0_i32_0 : i32, i32
  }
  func.func @transform_16(%arg0: i32) -> (i32, i32) {
    %c0_i32 = arith.constant 0 : i32
    %c0_i32_0 = arith.constant 0 : i32
    %c0_i32_1 = arith.constant 0 : i32
    return %c0_i32, %c0_i32_0 : i32, i32
  }
  func.func @transform_17(%arg0: i32) -> (i32, i32) {
    %c0_i32 = arith.constant 0 : i32
    %c0_i32_0 = arith.constant 0 : i32
    %c0_i32_1 = arith.constant 0 : i32
    return %c0_i32, %c0_i32_0 : i32, i32
  }
  func.func @transform_18(%arg0: i32) -> (i32, i32) {
    %c0_i32 = arith.constant 0 : i32
    %c0_i32_0 = arith.constant 0 : i32
    %c0_i32_1 = arith.constant 0 : i32
    return %c0_i32, %c0_i32_0 : i32, i32
  }
  func.func @transform_19(%arg0: i32) -> (i32, i32) {
    %c0_i32 = arith.constant 0 : i32
    %c0_i32_0 = arith.constant 0 : i32
    %c0_i32_1 = arith.constant 0 : i32
    return %c0_i32, %c0_i32_0 : i32, i32
  }
  func.func @transform_20(%arg0: i32) -> (i32, i32) {
    %c0_i32 = arith.constant 0 : i32
    %c0_i32_0 = arith.constant 0 : i32
    %c0_i32_1 = arith.constant 0 : i32
    return %c0_i32, %c0_i32_0 : i32, i32
  }
  func.func @transform_21(%arg0: i32) -> (i32, i32) {
    %c0_i32 = arith.constant 0 : i32
    %c0_i32_0 = arith.constant 0 : i32
    %c0_i32_1 = arith.constant 0 : i32
    return %c0_i32, %c0_i32_0 : i32, i32
  }
  func.func @transform_22(%arg0: i32) -> (i32, i32) {
    %c0_i32 = arith.constant 0 : i32
    %c0_i32_0 = arith.constant 0 : i32
    %c0_i32_1 = arith.constant 0 : i32
    return %c0_i32, %c0_i32_0 : i32, i32
  }
  func.func @transform_23(%arg0: i32) -> (i32, i32) {
    %c0_i32 = arith.constant 0 : i32
    %c0_i32_0 = arith.constant 0 : i32
    %c0_i32_1 = arith.constant 0 : i32
    return %c0_i32, %c0_i32_0 : i32, i32
  }
  func.func @transform_24(%arg0: i32) -> (i32, i32) {
    %c0_i32 = arith.constant 0 : i32
    %c0_i32_0 = arith.constant 0 : i32
    %c0_i32_1 = arith.constant 0 : i32
    return %c0_i32, %c0_i32_0 : i32, i32
  }
}

</mosaic_0001>

<llo_original>
// kernel: generator_forward.1
$region0: #{generator_forward.1}
  #allocation0 [shape = 'u32[]', space=smem, size = 0x4, offset = 0x4, fixed_abs, tag = 'smem constant byte address 0x4 - core index']
  #allocation1 [shape = 'u32[144,128]{1,0:T(1,128)}', space=vmem, size = 0x12000, scoped, tag = 'internal scratch']
  #allocation2 [shape = 'f32[1,1]{1,0:T(1,128)S(6)}', space=smem, size = 0x200, scoped, tag = 'scoped memory for generator_forward.1']
  %s0 = inlined_call_operand.<no memory space> [shape: f32[1,1], index: 0, kind: input, shape index: {}]
  %s1 = inlined_call_operand.vmem [shape: f32[512,32], index: 1, kind: input, shape index: {}]
  %s2 = inlined_call_operand.vmem [shape: f32[32,512], index: 2, kind: input, shape index: {}]
  %s3 = inlined_call_operand.vmem [shape: f32[32,1], index: 3, kind: input, shape index: {}]
  %s4 = inlined_call_operand.hbm [shape: f32[32,128], index: 4, kind: input, shape index: {}]
  %s5 = inlined_call_operand.vmem [shape: f32[32,288], index: 5, kind: input, shape index: {}]
  %s6 = inlined_call_operand.vmem [shape: f32[32,1], index: 6, kind: input, shape index: {}]
  %s7 = inlined_call_operand.hbm [shape: f32[1,128], index: 7, kind: input, shape index: {}]
  %s8 = inlined_call_operand.vmem [shape: f32[128,256], index: 8, kind: input, shape index: {}]
  %s9 = inlined_call_operand.hbm [shape: f32[32,288], index: 9, kind: input, shape index: {}]
  %s10 = inlined_call_operand.vmem [shape: f32[32,1], index: 10, kind: input, shape index: {}]
  %s11 = inlined_call_operand.hbm [shape: f32[32,288], index: 11, kind: input, shape index: {}]
  %s12 = inlined_call_operand.vmem [shape: f32[32,1], index: 12, kind: input, shape index: {}]
  %s13 = inlined_call_operand.hbm [shape: f32[1,256], index: 13, kind: input, shape index: {}]
  %s14 = inlined_call_operand.vmem [shape: f32[256,768], index: 14, kind: input, shape index: {}]
  %s15 = inlined_call_operand.vmem [shape: f32[16,288], index: 15, kind: input, shape index: {}]
  %s16 = inlined_call_operand.vmem [shape: f32[16,1], index: 16, kind: input, shape index: {}]
  %s17 = inlined_call_operand.vmem [shape: f32[16,144], index: 17, kind: input, shape index: {}]
  %s18 = inlined_call_operand.vmem [shape: f32[16,1], index: 18, kind: input, shape index: {}]
  %s19 = inlined_call_operand.hbm [shape: f32[1,768], index: 19, kind: input, shape index: {}]
  %s20 = inlined_call_operand.vmem [shape: f32[8,32], index: 20, kind: input, shape index: {}]
  %s21 = inlined_call_operand.vmem [shape: f32[8,1], index: 21, kind: input, shape index: {}]
  %s22 = inlined_call_operand.hbm [shape: f32[8,16], index: 22, kind: input, shape index: {}]
  %s23 = inlined_call_operand.vmem [shape: f32[8,1], index: 23, kind: input, shape index: {}]
  %s24 = inlined_call_operand.vmem [shape: f32[8,768], index: 24, kind: output, shape index: {}]
  %s25 = sld [smem:[#allocation0]]
  $region134: #{generator_forward.1} parent=0
    _
  %s27 = ssub.s32 1, %s25
  %s28 = scalar_select 0, %s27, %s25
  %29 = sst [smem:[#allocation2]] %s0
  $region1: #{generator_forward.1} parent=0
    #allocation3 [shape = 'u8[16384]{0}', space=vmem, size = 0x4000, scoped, tag = 'input window, operand 4, single buffered']
    #allocation4 [shape = 's32[1]{0}', space=sflag, size = 0x4, scoped, tag = 'scoped memory for generator_forward.1']
    #allocation5 [shape = 'u8[512]{0}', space=vmem, size = 0x400, scoped, tag = 'input window, operand 7, single buffered']
    #allocation6 [shape = 's32[1]{0}', space=sflag, size = 0x4, scoped, tag = 'scoped memory for generator_forward.1']
    #allocation7 [shape = 'u8[49152]{0}', space=vmem, size = 0xc000, scoped, tag = 'input window, operand 9, single buffered']
    #allocation8 [shape = 'u8[49152]{0}', space=vmem, size = 0xc000, scoped, tag = 'input window, operand 11, single buffered']
    #allocation9 [shape = 's32[1]{0}', space=sflag, size = 0x4, scoped, tag = 'scoped memory for generator_forward.1']
    #allocation10 [shape = 'u8[1024]{0}', space=vmem, size = 0x400, scoped, tag = 'input window, operand 13, single buffered']
    #allocation11 [shape = 'u8[3072]{0}', space=vmem, size = 0xc00, scoped, tag = 'input window, operand 19, single buffered']
    #allocation12 [shape = 's32[1]{0}', space=sflag, size = 0x4, scoped, tag = 'scoped memory for generator_forward.1']
    #allocation13 [shape = 'u8[4096]{0}', space=vmem, size = 0x1000, scoped, tag = 'input window, operand 22, single buffered']
    %30 = vsyncpa [#allocation4], 0
    %31 = vsyncpa [#allocation6], 0
    %32 = vsyncpa [#allocation9], 0
    %33 = vsyncpa [#allocation12], 0
    // Predicated region
    $region2: #{generator_forward.1} parent=1 // pred_check
      _
    $region3: #{generator_forward.1} parent=1 // pred_check_branch
      %35 = sbr.rel (0) target = $region5
    $region4: #{generator_forward.1} parent=1 // pred_region
      _
    $region5: #{generator_forward.1} parent=1 // pred_fallthru
      _
    // Predicated region
    $region6: #{generator_forward.1} parent=1 // pred_check
      _
    $region7: #{generator_forward.1} parent=1 // pred_check_branch
      %37 = sbr.rel (0) target = $region9
    $region8: #{generator_forward.1} parent=1 // pred_region
      _
    $region9: #{generator_forward.1} parent=1 // pred_fallthru
      _
    // Predicated region
    $region10: #{generator_forward.1} parent=1 // pred_check
      _
    $region11: #{generator_forward.1} parent=1 // pred_check_branch
      %39 = sbr.rel (0) target = $region13
    $region12: #{generator_forward.1} parent=1 // pred_region
      _
    $region13: #{generator_forward.1} parent=1 // pred_fallthru
      _
    // Predicated region
    $region14: #{generator_forward.1} parent=1 // pred_check
      _
    $region15: #{generator_forward.1} parent=1 // pred_check_branch
      %41 = sbr.rel (0) target = $region17
    $region16: #{generator_forward.1} parent=1 // pred_region
      _
    $region17: #{generator_forward.1} parent=1 // pred_fallthru
      _
    // Predicated region
    $region18: #{generator_forward.1} parent=1 // pred_check
      _
    $region19: #{generator_forward.1} parent=1 // pred_check_branch
      %43 = sbr.rel (0) target = $region21
    $region20: #{generator_forward.1} parent=1 // pred_region
      %s45 = ssub.s32 512, 512
      %46 = vsyncadd [#allocation4], %s45
      %s47 = sshll.u32 [#allocation3], 4
      %s48 = int_to_ptr.vmem [resolvable:$true] %s47
      %53 = dma.hbm_to_vmem [thread:$0]  %s4, 512, %s48, [#allocation4], 128, 128, 8
    $region21: #{generator_forward.1} parent=1 // pred_fallthru
      _
    // Predicated region
    $region22: #{generator_forward.1} parent=1 // pred_check
      _
    $region23: #{generator_forward.1} parent=1 // pred_check_branch
      %55 = sbr.rel (0) target = $region25
    $region24: #{generator_forward.1} parent=1 // pred_region
      _
    $region25: #{generator_forward.1} parent=1 // pred_fallthru
      _
    // Predicated region
    $region26: #{generator_forward.1} parent=1 // pred_check
      _
    $region27: #{generator_forward.1} parent=1 // pred_check_branch
      %57 = sbr.rel (0) target = $region29
    $region28: #{generator_forward.1} parent=1 // pred_region
      _
    $region29: #{generator_forward.1} parent=1 // pred_fallthru
      _
    // Predicated region
    $region30: #{generator_forward.1} parent=1 // pred_check
      _
    $region31: #{generator_forward.1} parent=1 // pred_check_branch
      %59 = sbr.rel (0) target = $region33
    $region32: #{generator_forward.1} parent=1 // pred_region
      %s61 = ssub.s32 16, 16
      %62 = vsyncadd [#allocation6], %s61
      %s64 = sshll.u32 [#allocation5], 4
      %s65 = int_to_ptr.vmem [resolvable:$true] %s64
      %67 = dma.hbm_to_vmem [thread:$0]  %s7, 16, %s65, [#allocation6]
    $region33: #{generator_forward.1} parent=1 // pred_fallthru
      _
    // Predicated region
    $region34: #{generator_forward.1} parent=1 // pred_check
      _
    $region35: #{generator_forward.1} parent=1 // pred_check_branch
      %69 = sbr.rel (0) target = $region37
    $region36: #{generator_forward.1} parent=1 // pred_region
      _
    $region37: #{generator_forward.1} parent=1 // pred_fallthru
      _
    // Predicated region
    $region38: #{generator_forward.1} parent=1 // pred_check
      _
    $region39: #{generator_forward.1} parent=1 // pred_check_branch
      %71 = sbr.rel (0) target = $region41
    $region40: #{generator_forward.1} parent=1 // pred_region
      %s73 = ssub.s32 1536, 1536
      %74 = vsyncadd [#allocation6], %s73
      %s75 = sshll.u32 [#allocation7], 4
      %s76 = int_to_ptr.vmem [resolvable:$true] %s75
      %81 = dma.hbm_to_vmem [thread:$0]  %s9, 1536, %s76, [#allocation6], 384, 384, 24
    $region41: #{generator_forward.1} parent=1 // pred_fallthru
      _
    // Predicated region
    $region42: #{generator_forward.1} parent=1 // pred_check
      _
    $region43: #{generator_forward.1} parent=1 // pred_check_branch
      %83 = sbr.rel (0) target = $region45
    $region44: #{generator_forward.1} parent=1 // pred_region
      _
    $region45: #{generator_forward.1} parent=1 // pred_fallthru
      _
    // Predicated region
    $region46: #{generator_forward.1} parent=1 // pred_check
      _
    $region47: #{generator_forward.1} parent=1 // pred_check_branch
      %85 = sbr.rel (0) target = $region49
    $region48: #{generator_forward.1} parent=1 // pred_region
      %s87 = ssub.s32 1536, 1536
      %88 = vsyncadd [#allocation9], %s87
      %s89 = sshll.u32 [#allocation8], 4
      %s90 = int_to_ptr.vmem [resolvable:$true] %s89
      %95 = dma.hbm_to_vmem [thread:$0]  %s11, 1536, %s90, [#allocation9], 384, 384, 24
    $region49: #{generator_forward.1} parent=1 // pred_fallthru
      _
    // Predicated region
    $region50: #{generator_forward.1} parent=1 // pred_check
      _
    $region51: #{generator_forward.1} parent=1 // pred_check_branch
      %97 = sbr.rel (0) target = $region53
    $region52: #{generator_forward.1} parent=1 // pred_region
      _
    $region53: #{generator_forward.1} parent=1 // pred_fallthru
      _
    // Predicated region
    $region54: #{generator_forward.1} parent=1 // pred_check
      _
    $region55: #{generator_forward.1} parent=1 // pred_check_branch
      %99 = sbr.rel (0) target = $region57
    $region56: #{generator_forward.1} parent=1 // pred_region
      %s101 = ssub.s32 32, 32
      %102 = vsyncadd [#allocation9], %s101
      %s104 = sshll.u32 [#allocation10], 4
      %s105 = int_to_ptr.vmem [resolvable:$true] %s104
      %107 = dma.hbm_to_vmem [thread:$0]  %s13, 32, %s105, [#allocation9]
    $region57: #{generator_forward.1} parent=1 // pred_fallthru
      _
    // Predicated region
    $region58: #{generator_forward.1} parent=1 // pred_check
      _
    $region59: #{generator_forward.1} parent=1 // pred_check_branch
      %109 = sbr.rel (0) target = $region61
    $region60: #{generator_forward.1} parent=1 // pred_region
      _
    $region61: #{generator_forward.1} parent=1 // pred_fallthru
      _
    // Predicated region
    $region62: #{generator_forward.1} parent=1 // pred_check
      _
    $region63: #{generator_forward.1} parent=1 // pred_check_branch
      %111 = sbr.rel (0) target = $region65
    $region64: #{generator_forward.1} parent=1 // pred_region
      _
    $region65: #{generator_forward.1} parent=1 // pred_fallthru
      _
    // Predicated region
    $region66: #{generator_forward.1} parent=1 // pred_check
      _
    $region67: #{generator_forward.1} parent=1 // pred_check_branch
      %113 = sbr.rel (0) target = $region69
    $region68: #{generator_forward.1} parent=1 // pred_region
      _
    $region69: #{generator_forward.1} parent=1 // pred_fallthru
      _
    // Predicated region
    $region70: #{generator_forward.1} parent=1 // pred_check
      _
    $region71: #{generator_forward.1} parent=1 // pred_check_branch
      %115 = sbr.rel (0) target = $region73
    $region72: #{generator_forward.1} parent=1 // pred_region
      _
    $region73: #{generator_forward.1} parent=1 // pred_fallthru
      _
    // Predicated region
    $region74: #{generator_forward.1} parent=1 // pred_check
      _
    $region75: #{generator_forward.1} parent=1 // pred_check_branch
      %117 = sbr.rel (0) target = $region77
    $region76: #{generator_forward.1} parent=1 // pred_region
      _
    $region77: #{generator_forward.1} parent=1 // pred_fallthru
      _
    // Predicated region
    $region78: #{generator_forward.1} parent=1 // pred_check
      _
    $region79: #{generator_forward.1} parent=1 // pred_check_branch
      %119 = sbr.rel (0) target = $region81
    $region80: #{generator_forward.1} parent=1 // pred_region
      %s121 = ssub.s32 96, 96
      %122 = vsyncadd [#allocation12], %s121
      %s124 = sshll.u32 [#allocation11], 4
      %s125 = int_to_ptr.vmem [resolvable:$true] %s124
      %127 = dma.hbm_to_vmem [thread:$0]  %s19, 96, %s125, [#allocation12]
    $region81: #{generator_forward.1} parent=1 // pred_fallthru
      _
    // Predicated region
    $region82: #{generator_forward.1} parent=1 // pred_check
      _
    $region83: #{generator_forward.1} parent=1 // pred_check_branch
      %129 = sbr.rel (0) target = $region85
    $region84: #{generator_forward.1} parent=1 // pred_region
      _
    $region85: #{generator_forward.1} parent=1 // pred_fallthru
      _
    // Predicated region
    $region86: #{generator_forward.1} parent=1 // pred_check
      _
    $region87: #{generator_forward.1} parent=1 // pred_check_branch
      %131 = sbr.rel (0) target = $region89
    $region88: #{generator_forward.1} parent=1 // pred_region
      _
    $region89: #{generator_forward.1} parent=1 // pred_fallthru
      _
    // Predicated region
    $region90: #{generator_forward.1} parent=1 // pred_check
      _
    $region91: #{generator_forward.1} parent=1 // pred_check_branch
      %133 = sbr.rel (0) target = $region93
    $region92: #{generator_forward.1} parent=1 // pred_region
      %s135 = ssub.s32 128, 128
      %136 = vsyncadd [#allocation12], %s135
      %s138 = sshll.u32 [#allocation13], 4
      %s139 = int_to_ptr.vmem [resolvable:$true] %s138
      %141 = dma.hbm_to_vmem [thread:$0]  %s22, 128, %s139, [#allocation12]
    $region93: #{generator_forward.1} parent=1 // pred_fallthru
      _
    // Predicated region
    $region94: #{generator_forward.1} parent=1 // pred_check
      _
    $region95: #{generator_forward.1} parent=1 // pred_check_branch
      %143 = sbr.rel (0) target = $region97
    $region96: #{generator_forward.1} parent=1 // pred_region
      _
    $region97: #{generator_forward.1} parent=1 // pred_fallthru
      _
    // Predicated region
    $region98: #{generator_forward.1} parent=1 // pred_check
      _
    $region99: #{generator_forward.1} parent=1 // pred_check_branch
      %145 = sbr.rel (0) target = $region101
    $region100: #{generator_forward.1} parent=1 // pred_region
      %146 = dma.done [#allocation4], 512
    $region101: #{generator_forward.1} parent=1 // pred_fallthru
      _
    // Predicated region
    $region102: #{generator_forward.1} parent=1 // pred_check
      _
    $region103: #{generator_forward.1} parent=1 // pred_check_branch
      %148 = sbr.rel (0) target = $region105
    $region104: #{generator_forward.1} parent=1 // pred_region
      %149 = dma.done [#allocation6], 16
    $region105: #{generator_forward.1} parent=1 // pred_fallthru
      _
    // Predicated region
    $region106: #{generator_forward.1} parent=1 // pred_check
      _
    $region107: #{generator_forward.1} parent=1 // pred_check_branch
      %151 = sbr.rel (0) target = $region109
    $region108: #{generator_forward.1} parent=1 // pred_region
      %152 = dma.done [#allocation6], 1536
    $region109: #{generator_forward.1} parent=1 // pred_fallthru
      _
    // Predicated region
    $region110: #{generator_forward.1} parent=1 // pred_check
      _
    $region111: #{generator_forward.1} parent=1 // pred_check_branch
      %154 = sbr.rel (0) target = $region113
    $region112: #{generator_forward.1} parent=1 // pred_region
      %155 = dma.done [#allocation9], 1536
    $region113: #{generator_forward.1} parent=1 // pred_fallthru
      _
    // Predicated region
    $region114: #{generator_forward.1} parent=1 // pred_check
      _
    $region115: #{generator_forward.1} parent=1 // pred_check_branch
      %157 = sbr.rel (0) target = $region117
    $region116: #{generator_forward.1} parent=1 // pred_region
      %158 = dma.done [#allocation9], 32
    $region117: #{generator_forward.1} parent=1 // pred_fallthru
      _
    // Predicated region
    $region118: #{generator_forward.1} parent=1 // pred_check
      _
    $region119: #{generator_forward.1} parent=1 // pred_check_branch
      %160 = sbr.rel (0) target = $region121
    $region120: #{generator_forward.1} parent=1 // pred_region
      %161 = dma.done [#allocation12], 96
    $region121: #{generator_forward.1} parent=1 // pred_fallthru
      _
    // Predicated region
    $region122: #{generator_forward.1} parent=1 // pred_check
      _
    $region123: #{generator_forward.1} parent=1 // pred_check_branch
      %163 = sbr.rel (0) target = $region125
    $region124: #{generator_forward.1} parent=1 // pred_region
      %164 = dma.done [#allocation12], 128
    $region125: #{generator_forward.1} parent=1 // pred_fallthru
      _
    %s165 = sld [smem:[#allocation2]]
    %v166 = vld [vmem:[%s1] sm:$0xff]
    %v167 = vld [vmem:[%s1 + $0x8] sm:$0xff]
    %v168 = vld [vmem:[%s1 + $0x10] sm:$0xff]
    %v169 = vld [vmem:[%s1 + $0x18] sm:$0xff]
    %v170 = vld [vmem:[%s1 + $0x20] sm:$0xff]
    %v171 = vld [vmem:[%s1 + $0x28] sm:$0xff]
    %v172 = vld [vmem:[%s1 + $0x30] sm:$0xff]
    %v173 = vld [vmem:[%s1 + $0x38] sm:$0xff]
    %v174 = vld [vmem:[%s1 + $0x40] sm:$0xff]
    %v175 = vld [vmem:[%s1 + $0x48] sm:$0xff]
    %v176 = vld [vmem:[%s1 + $0x50] sm:$0xff]
    %v177 = vld [vmem:[%s1 + $0x58] sm:$0xff]
    %v178 = vld [vmem:[%s1 + $0x60] sm:$0xff]
    %v179 = vld [vmem:[%s1 + $0x68] sm:$0xff]
    %v180 = vld [vmem:[%s1 + $0x70] sm:$0xff]
    %v181 = vld [vmem:[%s1 + $0x78] sm:$0xff]
    %v182 = vld [vmem:[%s1 + $0x80] sm:$0xff]
    %v183 = vld [vmem:[%s1 + $0x88] sm:$0xff]
    %v184 = vld [vmem:[%s1 + $0x90] sm:$0xff]
    %v185 = vld [vmem:[%s1 + $0x98] sm:$0xff]
    %v186 = vld [vmem:[%s1 + $0xa0] sm:$0xff]
    %v187 = vld [vmem:[%s1 + $0xa8] sm:$0xff]
    %v188 = vld [vmem:[%s1 + $0xb0] sm:$0xff]
    %v189 = vld [vmem:[%s1 + $0xb8] sm:$0xff]
    %v190 = vld [vmem:[%s1 + $0xc0] sm:$0xff]
    %v191 = vld [vmem:[%s1 + $0xc8] sm:$0xff]
    %v192 = vld [vmem:[%s1 + $0xd0] sm:$0xff]
    %v193 = vld [vmem:[%s1 + $0xd8] sm:$0xff]
    %v194 = vld [vmem:[%s1 + $0xe0] sm:$0xff]
    %v195 = vld [vmem:[%s1 + $0xe8] sm:$0xff]
    %v196 = vld [vmem:[%s1 + $0xf0] sm:$0xff]
    %v197 = vld [vmem:[%s1 + $0xf8] sm:$0xff]
    %v198 = vld [vmem:[%s1 + $0x100] sm:$0xff]
    %v199 = vld [vmem:[%s1 + $0x108] sm:$0xff]
    %v200 = vld [vmem:[%s1 + $0x110] sm:$0xff]
    %v201 = vld [vmem:[%s1 + $0x118] sm:$0xff]
    %v202 = vld [vmem:[%s1 + $0x120] sm:$0xff]
    %v203 = vld [vmem:[%s1 + $0x128] sm:$0xff]
    %v204 = vld [vmem:[%s1 + $0x130] sm:$0xff]
    %v205 = vld [vmem:[%s1 + $0x138] sm:$0xff]
    %v206 = vld [vmem:[%s1 + $0x140] sm:$0xff]
    %v207 = vld [vmem:[%s1 + $0x148] sm:$0xff]
    %v208 = vld [vmem:[%s1 + $0x150] sm:$0xff]
    %v209 = vld [vmem:[%s1 + $0x158] sm:$0xff]
    %v210 = vld [vmem:[%s1 + $0x160] sm:$0xff]
    %v211 = vld [vmem:[%s1 + $0x168] sm:$0xff]
    %v212 = vld [vmem:[%s1 + $0x170] sm:$0xff]
    %v213 = vld [vmem:[%s1 + $0x178] sm:$0xff]
    %v214 = vld [vmem:[%s1 + $0x180] sm:$0xff]
    %v215 = vld [vmem:[%s1 + $0x188] sm:$0xff]
    %v216 = vld [vmem:[%s1 + $0x190] sm:$0xff]
    %v217 = vld [vmem:[%s1 + $0x198] sm:$0xff]
    %v218 = vld [vmem:[%s1 + $0x1a0] sm:$0xff]
    %v219 = vld [vmem:[%s1 + $0x1a8] sm:$0xff]
    %v220 = vld [vmem:[%s1 + $0x1b0] sm:$0xff]
    %v221 = vld [vmem:[%s1 + $0x1b8] sm:$0xff]
    %v222 = vld [vmem:[%s1 + $0x1c0] sm:$0xff]
    %v223 = vld [vmem:[%s1 + $0x1c8] sm:$0xff]
    %v224 = vld [vmem:[%s1 + $0x1d0] sm:$0xff]
    %v225 = vld [vmem:[%s1 + $0x1d8] sm:$0xff]
    %v226 = vld [vmem:[%s1 + $0x1e0] sm:$0xff]
    %v227 = vld [vmem:[%s1 + $0x1e8] sm:$0xff]
    %v228 = vld [vmem:[%s1 + $0x1f0] sm:$0xff]
    %v229 = vld [vmem:[%s1 + $0x1f8] sm:$0xff]
    %v230 = vld [vmem:[%s2] sm:$0xff]
    %v231 = vld [vmem:[%s2 + $0x8] sm:$0xff]
    %v232 = vld [vmem:[%s2 + $0x10] sm:$0xff]
    %v233 = vld [vmem:[%s2 + $0x18] sm:$0xff]
    %v234 = vld [vmem:[%s2 + $0x20] sm:$0xff]
    %v235 = vld [vmem:[%s2 + $0x28] sm:$0xff]
    %v236 = vld [vmem:[%s2 + $0x30] sm:$0xff]
    %v237 = vld [vmem:[%s2 + $0x38] sm:$0xff]
    %v238 = vld [vmem:[%s2 + $0x40] sm:$0xff]
    %v239 = vld [vmem:[%s2 + $0x48] sm:$0xff]
    %v240 = vld [vmem:[%s2 + $0x50] sm:$0xff]
    %v241 = vld [vmem:[%s2 + $0x58] sm:$0xff]
    %v242 = vld [vmem:[%s2 + $0x60] sm:$0xff]
    %v243 = vld [vmem:[%s2 + $0x68] sm:$0xff]
    %v244 = vld [vmem:[%s2 + $0x70] sm:$0xff]
    %v245 = vld [vmem:[%s2 + $0x78] sm:$0xff]
    %v246 = vld [vmem:[%s3] sm:$0xff]
    %v247 = vld [vmem:[%s3 + $0x8] sm:$0xff]
    %v248 = vld [vmem:[%s3 + $0x10] sm:$0xff]
    %v249 = vld [vmem:[%s3 + $0x18] sm:$0xff]
    %v250 = vld [vmem:[#allocation3] sm:$0xff]
    %v251 = vld [vmem:[#allocation3 + $0x8] sm:$0xff]
    %v252 = vld [vmem:[#allocation3 + $0x10] sm:$0xff]
    %v253 = vld [vmem:[#allocation3 + $0x18] sm:$0xff]
    %v254 = vld [vmem:[%s5] sm:$0xff]
    %v255 = vld [vmem:[%s5 + $0x8] sm:$0xff]
    %v256 = vld [vmem:[%s5 + $0x10] sm:$0xff]
    %v257 = vld [vmem:[%s5 + $0x18] sm:$0xff]
    %v258 = vld [vmem:[%s5 + $0x20] sm:$0xff]
    %v259 = vld [vmem:[%s5 + $0x28] sm:$0xff]
    %v260 = vld [vmem:[%s5 + $0x30] sm:$0xff]
    %v261 = vld [vmem:[%s5 + $0x38] sm:$0xff]
    %v262 = vld [vmem:[%s5 + $0x40] sm:$0xff]
    %v263 = vld [vmem:[%s5 + $0x48] sm:$0xff]
    %v264 = vld [vmem:[%s5 + $0x50] sm:$0xff]
    %v265 = vld [vmem:[%s5 + $0x58] sm:$0xff]
    %v266 = vld [vmem:[%s6] sm:$0xff]
    %v267 = vld [vmem:[%s6 + $0x8] sm:$0xff]
    %v268 = vld [vmem:[%s6 + $0x10] sm:$0xff]
    %v269 = vld [vmem:[%s6 + $0x18] sm:$0xff]
    %v270 = vld [vmem:[#allocation5] sm:$0x1]
    %272 = vset.pattern.permute.xlu0 0
    %273 = vperm.xlu0 %272, %v246
    %v274 = vpop.permute.xlu0 %273
    %277 = vset.pattern.permute.xlu0 0
    %278 = vperm.xlu0 %277, %v247
    %v279 = vpop.permute.xlu0 %278
    %282 = vset.pattern.permute.xlu0 0
    %283 = vperm.xlu0 %282, %v248
    %v284 = vpop.permute.xlu0 %283
    %287 = vset.pattern.permute.xlu0 0
    %288 = vperm.xlu0 %287, %v249
    %v289 = vpop.permute.xlu0 %288
    %291 = vmatprep.subr.mxu0 0.0
    %292 = vmatpush1.msra.mxu0 %v166
    %293 = vmatprep.subr.mxu0 0.0
    %294 = vmatpush1.msra.mxu0 %v167
    %295 = vmatprep.subr.mxu0 0.0
    %296 = vmatpush1.msra.mxu0 %v168
    %297 = vmatprep.subr.mxu0 0.0
    %298 = vmatpush1.msra.mxu0 %v169
    %299 = vmatprep.subr.mxu0 0.0
    %300 = vmatpush1.msra.mxu0 %v170
    %301 = vmatprep.subr.mxu0 0.0
    %302 = vmatpush1.msra.mxu0 %v171
    %303 = vmatprep.subr.mxu0 0.0
    %304 = vmatpush1.msra.mxu0 %v172
    %305 = vmatprep.subr.mxu0 0.0
    %306 = vmatpush1.msra.mxu0 %v173
    %307 = vmatprep.subr.mxu0 0.0
    %308 = vmatpush1.msra.mxu0 %v174
    %309 = vmatprep.subr.mxu0 0.0
    %310 = vmatpush1.msra.mxu0 %v175
    %311 = vmatprep.subr.mxu0 0.0
    %312 = vmatpush1.msra.mxu0 %v176
    %313 = vmatprep.subr.mxu0 0.0
    %314 = vmatpush1.msra.mxu0 %v177
    %315 = vmatprep.subr.mxu0 0.0
    %316 = vmatpush1.msra.mxu0 %v178
    %317 = vmatprep.subr.mxu0 0.0
    %318 = vmatpush1.msra.mxu0 %v179
    %319 = vmatprep.subr.mxu0 0.0
    %320 = vmatpush1.msra.mxu0 %v180
    %321 = vmatprep.subr.mxu0 0.0
    %322 = vmatpush1.msra.mxu0 %v181
    %323 = vmatprep.subr.mxu0 0.0
    %324 = vmatpush1.msra.mxu0 %v182
    %325 = vmatprep.subr.mxu0 0.0
    %326 = vmatpush1.msra.mxu0 %v183
    %327 = vmatprep.subr.mxu0 0.0
    %328 = vmatpush1.msra.mxu0 %v184
    %329 = vmatprep.subr.mxu0 0.0
    %330 = vmatpush1.msra.mxu0 %v185
    %331 = vmatprep.subr.mxu0 0.0
    %332 = vmatpush1.msra.mxu0 %v186
    %333 = vmatprep.subr.mxu0 0.0
    %334 = vmatpush1.msra.mxu0 %v187
    %335 = vmatprep.subr.mxu0 0.0
    %336 = vmatpush1.msra.mxu0 %v188
    %337 = vmatprep.subr.mxu0 0.0
    %338 = vmatpush1.msra.mxu0 %v189
    %339 = vmatprep.subr.mxu0 0.0
    %340 = vmatpush1.msra.mxu0 %v190
    %341 = vmatprep.subr.mxu0 0.0
    %342 = vmatpush1.msra.mxu0 %v191
    %343 = vmatprep.subr.mxu0 0.0
    %344 = vmatpush1.msra.mxu0 %v192
    %345 = vmatprep.subr.mxu0 0.0
    %346 = vmatpush1.msra.mxu0 %v193
    %347 = vmatprep.subr.mxu0 0.0
    %348 = vmatpush1.msra.mxu0 %v194
    %349 = vmatprep.subr.mxu0 0.0
    %350 = vmatpush1.msra.mxu0 %v195
    %351 = vmatprep.subr.mxu0 0.0
    %352 = vmatpush1.msra.mxu0 %v196
    %353 = vmatprep.subr.mxu0 0.0
    %354 = vmatpush1.msra.mxu0 %v197
    %355 = vmatprep.mubr.f32.mxu0 %v231
    %356 = vmatmul.mubr.f32.gmra.mrb[0].mxu0 %v230
    %v357 = vpop.f32.mrb[0].mxu0
    %v358 = vadd.f32 %v274, %v357
    %v359 = vpop.f32.mrb[0].mxu0
    %360 = vmatprep.mubr.f32.mxu0 %v235
    %361 = vmatmul.mubr.f32.gmra.mrb[0].mxu0 %v234
    %v362 = vpop.f32.mrb[0].mxu0
    %v363 = vadd.f32 %v279, %v362
    %v364 = vpop.f32.mrb[0].mxu0
    %365 = vmatprep.mubr.f32.mxu0 %v239
    %366 = vmatmul.mubr.f32.gmra.mrb[0].mxu0 %v238
    %v367 = vpop.f32.mrb[0].mxu0
    %v368 = vadd.f32 %v284, %v367
    %v369 = vpop.f32.mrb[0].mxu0
    %370 = vmatprep.mubr.f32.mxu0 %v243
    %371 = vmatmul.mubr.f32.gmra.mrb[0].mxu0 %v242
    %v372 = vpop.f32.mrb[0].mxu0
    %v373 = vadd.f32 %v289, %v372
    %v374 = vpop.f32.mrb[0].mxu0
    %375 = vdwg.mxu0
    %376 = vmatprep.subr.mxu0 0.0
    %377 = vmatpush1.msra.mxu0 %v198
    %378 = vmatprep.subr.mxu0 0.0
    %379 = vmatpush1.msra.mxu0 %v199
    %380 = vmatprep.subr.mxu0 0.0
    %381 = vmatpush1.msra.mxu0 %v200
    %382 = vmatprep.subr.mxu0 0.0
    %383 = vmatpush1.msra.mxu0 %v201
    %384 = vmatprep.subr.mxu0 0.0
    %385 = vmatpush1.msra.mxu0 %v202
    %386 = vmatprep.subr.mxu0 0.0
    %387 = vmatpush1.msra.mxu0 %v203
    %388 = vmatprep.subr.mxu0 0.0
    %389 = vmatpush1.msra.mxu0 %v204
    %390 = vmatprep.subr.mxu0 0.0
    %391 = vmatpush1.msra.mxu0 %v205
    %392 = vmatprep.subr.mxu0 0.0
    %393 = vmatpush1.msra.mxu0 %v206
    %394 = vmatprep.subr.mxu0 0.0
    %395 = vmatpush1.msra.mxu0 %v207
    %396 = vmatprep.subr.mxu0 0.0
    %397 = vmatpush1.msra.mxu0 %v208
    %398 = vmatprep.subr.mxu0 0.0
    %399 = vmatpush1.msra.mxu0 %v209
    %400 = vmatprep.subr.mxu0 0.0
    %401 = vmatpush1.msra.mxu0 %v210
    %402 = vmatprep.subr.mxu0 0.0
    %403 = vmatpush1.msra.mxu0 %v211
    %404 = vmatprep.subr.mxu0 0.0
    %405 = vmatpush1.msra.mxu0 %v212
    %406 = vmatprep.subr.mxu0 0.0
    %407 = vmatpush1.msra.mxu0 %v213
    %408 = vmatprep.subr.mxu0 0.0
    %409 = vmatpush1.msra.mxu0 %v214
    %410 = vmatprep.subr.mxu0 0.0
    %411 = vmatpush1.msra.mxu0 %v215
    %412 = vmatprep.subr.mxu0 0.0
    %413 = vmatpush1.msra.mxu0 %v216
    %414 = vmatprep.subr.mxu0 0.0
    %415 = vmatpush1.msra.mxu0 %v217
    %416 = vmatprep.subr.mxu0 0.0
    %417 = vmatpush1.msra.mxu0 %v218
    %418 = vmatprep.subr.mxu0 0.0
    %419 = vmatpush1.msra.mxu0 %v219
    %420 = vmatprep.subr.mxu0 0.0
    %421 = vmatpush1.msra.mxu0 %v220
    %422 = vmatprep.subr.mxu0 0.0
    %423 = vmatpush1.msra.mxu0 %v221
    %424 = vmatprep.subr.mxu0 0.0
    %425 = vmatpush1.msra.mxu0 %v222
    %426 = vmatprep.subr.mxu0 0.0
    %427 = vmatpush1.msra.mxu0 %v223
    %428 = vmatprep.subr.mxu0 0.0
    %429 = vmatpush1.msra.mxu0 %v224
    %430 = vmatprep.subr.mxu0 0.0
    %431 = vmatpush1.msra.mxu0 %v225
    %432 = vmatprep.subr.mxu0 0.0
    %433 = vmatpush1.msra.mxu0 %v226
    %434 = vmatprep.subr.mxu0 0.0
    %435 = vmatpush1.msra.mxu0 %v227
    %436 = vmatprep.subr.mxu0 0.0
    %437 = vmatpush1.msra.mxu0 %v228
    %438 = vmatprep.subr.mxu0 0.0
    %439 = vmatpush1.msra.mxu0 %v229
    %440 = vmatprep.mubr.f32.mxu0 %v233
    %441 = vmatmul.mubr.f32.gmra.mrb[0].mxu0 %v232
    %v442 = vpop.f32.mrb[0].mxu0
    %v443 = vadd.f32 %v358, %v442
    %v444 = vpop.f32.mrb[0].mxu0
    %445 = vmatprep.mubr.f32.mxu0 %v237
    %446 = vmatmul.mubr.f32.gmra.mrb[0].mxu0 %v236
    %v447 = vpop.f32.mrb[0].mxu0
    %v448 = vadd.f32 %v363, %v447
    %v449 = vpop.f32.mrb[0].mxu0
    %450 = vmatprep.mubr.f32.mxu0 %v241
    %451 = vmatmul.mubr.f32.gmra.mrb[0].mxu0 %v240
    %v452 = vpop.f32.mrb[0].mxu0
    %v453 = vadd.f32 %v368, %v452
    %v454 = vpop.f32.mrb[0].mxu0
    %455 = vmatprep.mubr.f32.mxu0 %v245
    %456 = vmatmul.mubr.f32.gmra.mrb[0].mxu0 %v244
    %v457 = vpop.f32.mrb[0].mxu0
    %v458 = vadd.f32 %v373, %v457
    %v459 = vpop.f32.mrb[0].mxu0
    %460 = vdwg.mxu0
    %vm461 = vcmp.gt.f32.partialorder %v443, 0.0
    %vm462 = vcmp.gt.f32.partialorder %v448, 0.0
    %vm463 = vcmp.gt.f32.partialorder %v453, 0.0
    %vm464 = vcmp.gt.f32.partialorder %v458, 0.0
    %v465 = vmul.f32 %v443, 0.2
    %v466 = vmul.f32 %v448, 0.2
    %v467 = vmul.f32 %v453, 0.2
    %v468 = vmul.f32 %v458, 0.2
    %v469 = vsel %vm461, %v443, %v465
    %v470 = vsel %vm462, %v448, %v466
    %v471 = vsel %vm463, %v453, %v467
    %v472 = vsel %vm464, %v458, %v468
    %v473 = vmul.f32 %v469, %v469
    %v474 = vmul.f32 %v470, %v470
    %v475 = vmul.f32 %v471, %v471
    %v476 = vmul.f32 %v472, %v472
    %vm477 = vcmask 261120
    %v479 = vsel %vm477, 0.03125, 0
    %481 = vmatprep.subr.mxu0 0.0
    %482 = vmatpush1.msra.mxu0 %v473
    %483 = vmatprep.subr.mxu0 0.0
    %484 = vmatpush1.msra.mxu0 %v474
    %485 = vmatprep.subr.mxu0 0.0
    %486 = vmatpush1.msra.mxu0 %v475
    %487 = vmatprep.subr.mxu0 0.0
    %488 = vmatpush1.msra.mxu0 %v476
    %489 = vmatprep.subr.mxu0 0.0
    %490 = vmatpush1.msra.mxu0 0.0
    %491 = vmatprep.subr.mxu0 0.0
    %492 = vmatpush1.msra.mxu0 0.0
    %493 = vmatprep.subr.mxu0 0.0
    %494 = vmatpush1.msra.mxu0 0.0
    %495 = vmatprep.subr.mxu0 0.0
    %496 = vmatpush1.msra.mxu0 0.0
    %497 = vmatprep.subr.mxu0 0.0
    %498 = vmatpush1.msra.mxu0 0.0
    %499 = vmatprep.subr.mxu0 0.0
    %500 = vmatpush1.msra.mxu0 0.0
    %501 = vmatprep.subr.mxu0 0.0
    %502 = vmatpush1.msra.mxu0 0.0
    %503 = vmatprep.subr.mxu0 0.0
    %504 = vmatpush1.msra.mxu0 0.0
    %505 = vmatprep.subr.mxu0 0.0
    %506 = vmatpush1.msra.mxu0 0.0
    %507 = vmatprep.subr.mxu0 0.0
    %508 = vmatpush1.msra.mxu0 0.0
    %509 = vmatprep.subr.mxu0 0.0
    %510 = vmatpush1.msra.mxu0 0.0
    %511 = vmatprep.subr.mxu0 0.0
    %512 = vmatpush1.msra.mxu0 0.0
    %513 = vmatprep.subr.mxu0 0.0
    %514 = vmatpush1.msra.mxu0 0.0
    %515 = vmatprep.subr.mxu0 0.0
    %516 = vmatpush1.msra.mxu0 0.0
    %517 = vmatprep.subr.mxu0 0.0
    %518 = vmatpush1.msra.mxu0 0.0
    %519 = vmatprep.subr.mxu0 0.0
    %520 = vmatpush1.msra.mxu0 0.0
    %521 = vmatprep.subr.mxu0 0.0
    %522 = vmatpush1.msra.mxu0 0.0
    %523 = vmatprep.subr.mxu0 0.0
    %524 = vmatpush1.msra.mxu0 0.0
    %525 = vmatprep.subr.mxu0 0.0
    %526 = vmatpush1.msra.mxu0 0.0
    %527 = vmatprep.subr.mxu0 0.0
    %528 = vmatpush1.msra.mxu0 0.0
    %529 = vmatprep.subr.mxu0 0.0
    %530 = vmatpush1.msra.mxu0 0.0
    %531 = vmatprep.subr.mxu0 0.0
    %532 = vmatpush1.msra.mxu0 0.0
    %533 = vmatprep.subr.mxu0 0.0
    %534 = vmatpush1.msra.mxu0 0.0
    %535 = vmatprep.subr.mxu0 0.0
    %536 = vmatpush1.msra.mxu0 0.0
    %537 = vmatprep.subr.mxu0 0.0
    %538 = vmatpush1.msra.mxu0 0.0
    %539 = vmatprep.subr.mxu0 0.0
    %540 = vmatpush1.msra.mxu0 0.0
    %541 = vmatprep.subr.mxu0 0.0
    %542 = vmatpush1.msra.mxu0 0.0
    %543 = vmatprep.subr.mxu0 0.0
    %544 = vmatpush1.msra.mxu0 0.0
    %545 = vmatprep.mubr.f32.mxu0 0.0
    %546 = vmatmul.mubr.f32.gmra.mrb[0].mxu0 %v479
    %v547 = vpop.f32.mrb[0].mxu0
    %v548 = vadd.f32 1e-08, %v547
    %v549 = vpop.f32.mrb[0].mxu0
    %550 = vdwg.mxu0
    %v551 = vrsqrt.pop %v548
    %v552 = vlaneseq
    %v553 = vshrl.u32 %v552, 7
    %v554 = vsub.s32 0, %v553
    %v555 = vrot.slane %v551, %v554
    %v556 = vmul.f32 %v469, %v555
    %v557 = vmul.f32 %v470, %v555
    %v558 = vmul.f32 %v471, %v555
    %v559 = vmul.f32 %v472, %v555
    %v561 = vsel %vm477, %v556, 0
    %v564 = vsel %vm477, %v557, 0
    %v567 = vsel %vm477, %v558, 0
    %v570 = vsel %vm477, %v559, 0
    %572 = vmatprep.subr.mxu0 0.0
    %573 = vmatpush1.msra.mxu0 %v250
    %574 = vmatprep.subr.mxu0 0.0
    %575 = vmatpush1.msra.mxu0 %v251
    %576 = vmatprep.subr.mxu0 0.0
    %577 = vmatpush1.msra.mxu0 %v252
    %578 = vmatprep.subr.mxu0 0.0
    %579 = vmatpush1.msra.mxu0 %v253
    %580 = vmatprep.subr.mxu0 0.0
    %581 = vmatpush1.msra.mxu0 0.0
    %582 = vmatprep.subr.mxu0 0.0
    %583 = vmatpush1.msra.mxu0 0.0
    %584 = vmatprep.subr.mxu0 0.0
    %585 = vmatpush1.msra.mxu0 0.0
    %586 = vmatprep.subr.mxu0 0.0
    %587 = vmatpush1.msra.mxu0 0.0
    %588 = vmatprep.subr.mxu0 0.0
    %589 = vmatpush1.msra.mxu0 0.0
    %590 = vmatprep.subr.mxu0 0.0
    %591 = vmatpush1.msra.mxu0 0.0
    %592 = vmatprep.subr.mxu0 0.0
    %593 = vmatpush1.msra.mxu0 0.0
    %594 = vmatprep.subr.mxu0 0.0
    %595 = vmatpush1.msra.mxu0 0.0
    %596 = vmatprep.subr.mxu0 0.0
    %597 = vmatpush1.msra.mxu0 0.0
    %598 = vmatprep.subr.mxu0 0.0
    %599 = vmatpush1.msra.mxu0 0.0
    %600 = vmatprep.subr.mxu0 0.0
    %601 = vmatpush1.msra.mxu0 0.0
    %602 = vmatprep.subr.mxu0 0.0
    %603 = vmatpush1.msra.mxu0 0.0
    %604 = vmatprep.subr.mxu0 0.0
    %605 = vmatpush1.msra.mxu0 0.0
    %606 = vmatprep.subr.mxu0 0.0
    %607 = vmatpush1.msra.mxu0 0.0
    %608 = vmatprep.subr.mxu0 0.0
    %609 = vmatpush1.msra.mxu0 0.0
    %610 = vmatprep.subr.mxu0 0.0
    %611 = vmatpush1.msra.mxu0 0.0
    %612 = vmatprep.subr.mxu0 0.0
    %613 = vmatpush1.msra.mxu0 0.0
    %614 = vmatprep.subr.mxu0 0.0
    %615 = vmatpush1.msra.mxu0 0.0
    %616 = vmatprep.subr.mxu0 0.0
    %617 = vmatpush1.msra.mxu0 0.0
    %618 = vmatprep.subr.mxu0 0.0
    %619 = vmatpush1.msra.mxu0 0.0
    %620 = vmatprep.subr.mxu0 0.0
    %621 = vmatpush1.msra.mxu0 0.0
    %622 = vmatprep.subr.mxu0 0.0
    %623 = vmatpush1.msra.mxu0 0.0
    %624 = vmatprep.subr.mxu0 0.0
    %625 = vmatpush1.msra.mxu0 0.0
    %626 = vmatprep.subr.mxu0 0.0
    %627 = vmatpush1.msra.mxu0 0.0
    %628 = vmatprep.subr.mxu0 0.0
    %629 = vmatpush1.msra.mxu0 0.0
    %630 = vmatprep.subr.mxu0 0.0
    %631 = vmatpush1.msra.mxu0 0.0
    %632 = vmatprep.subr.mxu0 0.0
    %633 = vmatpush1.msra.mxu0 0.0
    %634 = vmatprep.subr.mxu0 0.0
    %635 = vmatpush1.msra.mxu0 0.0
    %636 = vmatprep.mubr.f32.mxu0 0.0
    %637 = vmatmul.mubr.f32.gmra.mrb[0].mxu0 %v561
    %v638 = vpop.f32.mrb[0].mxu0
    %v639 = vadd.f32 0.0, %v638
    %v640 = vpop.f32.mrb[0].mxu0
    %641 = vmatprep.mubr.f32.mxu0 0.0
    %642 = vmatmul.mubr.f32.gmra.mrb[0].mxu0 %v564
    %v643 = vpop.f32.mrb[0].mxu0
    %v644 = vadd.f32 0.0, %v643
    %v645 = vpop.f32.mrb[0].mxu0
    %646 = vmatprep.mubr.f32.mxu0 0.0
    %647 = vmatmul.mubr.f32.gmra.mrb[0].mxu0 %v567
    %v648 = vpop.f32.mrb[0].mxu0
    %v649 = vadd.f32 0.0, %v648
    %v650 = vpop.f32.mrb[0].mxu0
    %651 = vmatprep.mubr.f32.mxu0 0.0
    %652 = vmatmul.mubr.f32.gmra.mrb[0].mxu0 %v570
    %v653 = vpop.f32.mrb[0].mxu0
    %v654 = vadd.f32 0.0, %v653
    %v655 = vpop.f32.mrb[0].mxu0
    %656 = vdwg.mxu0
    %662 = vrot.lane.b32.xlu0 0.0, 127
    %v663 = vpop.permute.xlu0 %662
    %664 = vrot.lane.b32.xlu0 %v639, 127
    %v665 = vpop.permute.xlu0 %664
    %666 = vrot.lane.b32.xlu0 %v644, 127
    %v667 = vpop.permute.xlu0 %666
    %668 = vrot.lane.b32.xlu0 %v649, 127
    %v669 = vpop.permute.xlu0 %668
    %670 = vrot.lane.b32.xlu0 %v654, 127
    %v671 = vpop.permute.xlu0 %670
    %vm672 = vcmask 1039360
    %v673 = vsel %vm672, %v663, %v665
    %v674 = vsel %vm672, %v663, %v667
    %v675 = vsel %vm672, %v663, %v669
    %v676 = vsel %vm672, %v663, %v671
    %677 = vrot.lane.b32.xlu0 0.0, 126
    %v678 = vpop.permute.xlu0 %677
    %679 = vrot.lane.b32.xlu0 %v639, 126
    %v680 = vpop.permute.xlu0 %679
    %681 = vrot.lane.b32.xlu0 %v644, 126
    %v682 = vpop.permute.xlu0 %681
    %683 = vrot.lane.b32.xlu0 %v649, 126
    %v684 = vpop.permute.xlu0 %683
    %685 = vrot.lane.b32.xlu0 %v654, 126
    %v686 = vpop.permute.xlu0 %685
    %vm687 = vcmask 1031168
    %v688 = vsel %vm687, %v678, %v680
    %v689 = vsel %vm687, %v678, %v682
    %v690 = vsel %vm687, %v678, %v684
    %v691 = vsel %vm687, %v678, %v686
    %692 = vrot.lane.b32.xlu0 0.0, 122
    %v693 = vpop.permute.xlu0 %692
    %694 = vrot.lane.b32.xlu0 %v639, 122
    %v695 = vpop.permute.xlu0 %694
    %696 = vrot.lane.b32.xlu0 %v644, 122
    %v697 = vpop.permute.xlu0 %696
    %698 = vrot.lane.b32.xlu0 %v649, 122
    %v699 = vpop.permute.xlu0 %698
    %700 = vrot.lane.b32.xlu0 %v654, 122
    %v701 = vpop.permute.xlu0 %700
    %vm702 = vcmask 998400
    %v703 = vsel %vm702, %v693, %v695
    %v704 = vsel %vm702, %v693, %v697
    %v705 = vsel %vm702, %v693, %v699
    %v706 = vsel %vm702, %v693, %v701
    %707 = vrot.lane.b32.xlu0 %v639, 121
    %v708 = vpop.permute.xlu0 %707
    %709 = vrot.lane.b32.xlu0 %v644, 121
    %v710 = vpop.permute.xlu0 %709
    %711 = vrot.lane.b32.xlu0 %v649, 121
    %v712 = vpop.permute.xlu0 %711
    %713 = vrot.lane.b32.xlu0 %v654, 121
    %v714 = vpop.permute.xlu0 %713
    %715 = vrot.lane.b32.xlu0 %v639, 120
    %v716 = vpop.permute.xlu0 %715
    %717 = vrot.lane.b32.xlu0 0.0, 120
    %v718 = vpop.permute.xlu0 %717
    %719 = vrot.lane.b32.xlu0 %v644, 120
    %v720 = vpop.permute.xlu0 %719
    %721 = vrot.lane.b32.xlu0 %v649, 120
    %v722 = vpop.permute.xlu0 %721
    %723 = vrot.lane.b32.xlu0 %v654, 120
    %v724 = vpop.permute.xlu0 %723
    %vm725 = vcmask 982016
    %v726 = vsel %vm725, %v716, %v718
    %v727 = vsel %vm725, %v720, %v718
    %v728 = vsel %vm725, %v722, %v718
    %v729 = vsel %vm725, %v724, %v718
    %730 = vrot.lane.b32.xlu0 %v639, 116
    %v731 = vpop.permute.xlu0 %730
    %732 = vrot.lane.b32.xlu0 0.0, 116
    %v733 = vpop.permute.xlu0 %732
    %734 = vrot.lane.b32.xlu0 %v644, 116
    %v735 = vpop.permute.xlu0 %734
    %736 = vrot.lane.b32.xlu0 %v649, 116
    %v737 = vpop.permute.xlu0 %736
    %738 = vrot.lane.b32.xlu0 %v654, 116
    %v739 = vpop.permute.xlu0 %738
    %vm740 = vcmask 949248
    %v741 = vsel %vm740, %v731, %v733
    %v742 = vsel %vm740, %v735, %v733
    %v743 = vsel %vm740, %v737, %v733
    %v744 = vsel %vm740, %v739, %v733
    %745 = vrot.lane.b32.xlu0 %v639, 115
    %v746 = vpop.permute.xlu0 %745
    %747 = vrot.lane.b32.xlu0 0.0, 115
    %v748 = vpop.permute.xlu0 %747
    %749 = vrot.lane.b32.xlu0 %v644, 115
    %v750 = vpop.permute.xlu0 %749
    %751 = vrot.lane.b32.xlu0 %v649, 115
    %v752 = vpop.permute.xlu0 %751
    %753 = vrot.lane.b32.xlu0 %v654, 115
    %v754 = vpop.permute.xlu0 %753
    %vm755 = vcmask 941056
    %v756 = vsel %vm755, %v746, %v748
    %v757 = vsel %vm755, %v750, %v748
    %v758 = vsel %vm755, %v752, %v748
    %v759 = vsel %vm755, %v754, %v748
    %760 = vrot.lane.b32.xlu0 %v639, 114
    %v761 = vpop.permute.xlu0 %760
    %762 = vrot.lane.b32.xlu0 0.0, 114
    %v763 = vpop.permute.xlu0 %762
    %764 = vrot.lane.b32.xlu0 %v644, 114
    %v765 = vpop.permute.xlu0 %764
    %766 = vrot.lane.b32.xlu0 %v649, 114
    %v767 = vpop.permute.xlu0 %766
    %768 = vrot.lane.b32.xlu0 %v654, 114
    %v769 = vpop.permute.xlu0 %768
    %vm770 = vcmask 932864
    %v771 = vsel %vm770, %v761, %v763
    %v772 = vsel %vm770, %v765, %v763
    %v773 = vsel %vm770, %v767, %v763
    %v774 = vsel %vm770, %v769, %v763
    %776 = vset.pattern.permute.xlu0 0
    %777 = vperm.xlu0 %776, %v266
    %v778 = vpop.permute.xlu0 %777
    %781 = vset.pattern.permute.xlu0 0
    %782 = vperm.xlu0 %781, %v267
    %v783 = vpop.permute.xlu0 %782
    %786 = vset.pattern.permute.xlu0 0
    %787 = vperm.xlu0 %786, %v268
    %v788 = vpop.permute.xlu0 %787
    %791 = vset.pattern.permute.xlu0 0
    %792 = vperm.xlu0 %791, %v269
    %v793 = vpop.permute.xlu0 %792
    %795 = vrot.lane.b32.xlu0 0.0, 7
    %v796 = vpop.permute.xlu0 %795
    %797 = vrot.lane.b32.xlu0 %v639, 7
    %v798 = vpop.permute.xlu0 %797
    %799 = vrot.lane.b32.xlu0 %v644, 7
    %v800 = vpop.permute.xlu0 %799
    %801 = vrot.lane.b32.xlu0 %v649, 7
    %v802 = vpop.permute.xlu0 %801
    %803 = vrot.lane.b32.xlu0 %v654, 7
    %v804 = vpop.permute.xlu0 %803
    %805 = vrot.lane.b32.xlu0 %v673, 7
    %v806 = vpop.permute.xlu0 %805
    %807 = vrot.lane.b32.xlu0 %v665, 7
    %v808 = vpop.permute.xlu0 %807
    %809 = vrot.lane.b32.xlu0 %v674, 7
    %v810 = vpop.permute.xlu0 %809
    %811 = vrot.lane.b32.xlu0 %v667, 7
    %v812 = vpop.permute.xlu0 %811
    %813 = vrot.lane.b32.xlu0 %v675, 7
    %v814 = vpop.permute.xlu0 %813
    %815 = vrot.lane.b32.xlu0 %v669, 7
    %v816 = vpop.permute.xlu0 %815
    %817 = vrot.lane.b32.xlu0 %v676, 7
    %v818 = vpop.permute.xlu0 %817
    %819 = vrot.lane.b32.xlu0 %v671, 7
    %v820 = vpop.permute.xlu0 %819
    %821 = vrot.lane.b32.xlu0 %v688, 7
    %v822 = vpop.permute.xlu0 %821
    %823 = vrot.lane.b32.xlu0 %v680, 7
    %v824 = vpop.permute.xlu0 %823
    %825 = vrot.lane.b32.xlu0 %v689, 7
    %v826 = vpop.permute.xlu0 %825
    %827 = vrot.lane.b32.xlu0 %v682, 7
    %v828 = vpop.permute.xlu0 %827
    %829 = vrot.lane.b32.xlu0 %v690, 7
    %v830 = vpop.permute.xlu0 %829
    %831 = vrot.lane.b32.xlu0 %v684, 7
    %v832 = vpop.permute.xlu0 %831
    %833 = vrot.lane.b32.xlu0 %v691, 7
    %v834 = vpop.permute.xlu0 %833
    %835 = vrot.lane.b32.xlu0 %v686, 7
    %v836 = vpop.permute.xlu0 %835
    %837 = vrot.lane.b32.xlu0 %v703, 7
    %v838 = vpop.permute.xlu0 %837
    %839 = vrot.lane.b32.xlu0 %v695, 7
    %v840 = vpop.permute.xlu0 %839
    %841 = vrot.lane.b32.xlu0 %v704, 7
    %v842 = vpop.permute.xlu0 %841
    %843 = vrot.lane.b32.xlu0 %v697, 7
    %v844 = vpop.permute.xlu0 %843
    %845 = vrot.lane.b32.xlu0 %v705, 7
    %v846 = vpop.permute.xlu0 %845
    %847 = vrot.lane.b32.xlu0 %v699, 7
    %v848 = vpop.permute.xlu0 %847
    %849 = vrot.lane.b32.xlu0 %v706, 7
    %v850 = vpop.permute.xlu0 %849
    %851 = vrot.lane.b32.xlu0 %v701, 7
    %v852 = vpop.permute.xlu0 %851
    %853 = vrot.lane.b32.xlu0 %v708, 7
    %v854 = vpop.permute.xlu0 %853
    %855 = vrot.lane.b32.xlu0 %v710, 7
    %v856 = vpop.permute.xlu0 %855
    %857 = vrot.lane.b32.xlu0 %v712, 7
    %v858 = vpop.permute.xlu0 %857
    %859 = vrot.lane.b32.xlu0 %v714, 7
    %v860 = vpop.permute.xlu0 %859
    %861 = vrot.lane.b32.xlu0 %v716, 7
    %v862 = vpop.permute.xlu0 %861
    %863 = vrot.lane.b32.xlu0 %v726, 7
    %v864 = vpop.permute.xlu0 %863
    %865 = vrot.lane.b32.xlu0 %v720, 7
    %v866 = vpop.permute.xlu0 %865
    %867 = vrot.lane.b32.xlu0 %v727, 7
    %v868 = vpop.permute.xlu0 %867
    %869 = vrot.lane.b32.xlu0 %v722, 7
    %v870 = vpop.permute.xlu0 %869
    %871 = vrot.lane.b32.xlu0 %v728, 7
    %v872 = vpop.permute.xlu0 %871
    %873 = vrot.lane.b32.xlu0 %v724, 7
    %v874 = vpop.permute.xlu0 %873
    %875 = vrot.lane.b32.xlu0 %v729, 7
    %v876 = vpop.permute.xlu0 %875
    %877 = vrot.lane.b32.xlu0 %v731, 7
    %v878 = vpop.permute.xlu0 %877
    %879 = vrot.lane.b32.xlu0 %v741, 7
    %v880 = vpop.permute.xlu0 %879
    %881 = vrot.lane.b32.xlu0 %v735, 7
    %v882 = vpop.permute.xlu0 %881
    %883 = vrot.lane.b32.xlu0 %v742, 7
    %v884 = vpop.permute.xlu0 %883
    %885 = vrot.lane.b32.xlu0 %v737, 7
    %v886 = vpop.permute.xlu0 %885
    %887 = vrot.lane.b32.xlu0 %v743, 7
    %v888 = vpop.permute.xlu0 %887
    %889 = vrot.lane.b32.xlu0 %v739, 7
    %v890 = vpop.permute.xlu0 %889
    %891 = vrot.lane.b32.xlu0 %v744, 7
    %v892 = vpop.permute.xlu0 %891
    %893 = vrot.lane.b32.xlu0 %v746, 7
    %v894 = vpop.permute.xlu0 %893
    %895 = vrot.lane.b32.xlu0 %v756, 7
    %v896 = vpop.permute.xlu0 %895
    %897 = vrot.lane.b32.xlu0 %v750, 7
    %v898 = vpop.permute.xlu0 %897
    %899 = vrot.lane.b32.xlu0 %v757, 7
    %v900 = vpop.permute.xlu0 %899
    %901 = vrot.lane.b32.xlu0 %v752, 7
    %v902 = vpop.permute.xlu0 %901
    %903 = vrot.lane.b32.xlu0 %v758, 7
    %v904 = vpop.permute.xlu0 %903
    %905 = vrot.lane.b32.xlu0 %v754, 7
    %v906 = vpop.permute.xlu0 %905
    %907 = vrot.lane.b32.xlu0 %v759, 7
    %v908 = vpop.permute.xlu0 %907
    %909 = vrot.lane.b32.xlu0 %v761, 7
    %v910 = vpop.permute.xlu0 %909
    %911 = vrot.lane.b32.xlu0 %v771, 7
    %v912 = vpop.permute.xlu0 %911
    %913 = vrot.lane.b32.xlu0 %v765, 7
    %v914 = vpop.permute.xlu0 %913
    %915 = vrot.lane.b32.xlu0 %v772, 7
    %v916 = vpop.permute.xlu0 %915
    %917 = vrot.lane.b32.xlu0 %v767, 7
    %v918 = vpop.permute.xlu0 %917
    %919 = vrot.lane.b32.xlu0 %v773, 7
    %v920 = vpop.permute.xlu0 %919
    %921 = vrot.lane.b32.xlu0 %v769, 7
    %v922 = vpop.permute.xlu0 %921
    %923 = vrot.lane.b32.xlu0 %v774, 7
    %v924 = vpop.permute.xlu0 %923
    %vm925 = vcmask 56320
    %v926 = vsel %vm925, %v796, %v798
    %v927 = vsel %vm925, %v796, %v800
    %v928 = vsel %vm925, %v796, %v802
    %v929 = vsel %vm925, %v796, %v804
    %v930 = vsel %vm925, %v806, %v808
    %v931 = vsel %vm925, %v810, %v812
    %v932 = vsel %vm925, %v814, %v816
    %v933 = vsel %vm925, %v818, %v820
    %v934 = vsel %vm925, %v822, %v824
    %v935 = vsel %vm925, %v826, %v828
    %v936 = vsel %vm925, %v830, %v832
    %v937 = vsel %vm925, %v834, %v836
    %v938 = vsel %vm925, %v838, %v840
    %v939 = vsel %vm925, %v842, %v844
    %v940 = vsel %vm925, %v846, %v848
    %v941 = vsel %vm925, %v850, %v852
    %v942 = vsel %vm925, %v862, %v864
    %v943 = vsel %vm925, %v866, %v868
    %v944 = vsel %vm925, %v870, %v872
    %v945 = vsel %vm925, %v874, %v876
    %v946 = vsel %vm925, %v878, %v880
    %v947 = vsel %vm925, %v882, %v884
    %v948 = vsel %vm925, %v886, %v888
    %v949 = vsel %vm925, %v890, %v892
    %v950 = vsel %vm925, %v894, %v896
    %v951 = vsel %vm925, %v898, %v900
    %v952 = vsel %vm925, %v902, %v904
    %v953 = vsel %vm925, %v906, %v908
    %v954 = vsel %vm925, %v910, %v912
    %v955 = vsel %vm925, %v914, %v916
    %v956 = vsel %vm925, %v918, %v920
    %v957 = vsel %vm925, %v922, %v924
    %v995 = vsel %vm477, %v256, 0
    %v998 = vsel %vm477, %v259, 0
    %v1001 = vsel %vm477, %v262, 0
    %v1004 = vsel %vm477, %v265, 0
    %1006 = vmatprep.subr.mxu0 0.0
    %1007 = vmatpush1.msra.mxu0 %v926
    %1008 = vmatprep.subr.mxu0 0.0
    %1009 = vmatpush1.msra.mxu0 %v927
    %1010 = vmatprep.subr.mxu0 0.0
    %1011 = vmatpush1.msra.mxu0 %v928
    %1012 = vmatprep.subr.mxu0 0.0
    %1013 = vmatpush1.msra.mxu0 %v929
    %1014 = vmatprep.subr.mxu0 0.0
    %1015 = vmatpush1.msra.mxu0 %v930
    %1016 = vmatprep.subr.mxu0 0.0
    %1017 = vmatpush1.msra.mxu0 %v931
    %1018 = vmatprep.subr.mxu0 0.0
    %1019 = vmatpush1.msra.mxu0 %v932
    %1020 = vmatprep.subr.mxu0 0.0
    %1021 = vmatpush1.msra.mxu0 %v933
    %1022 = vmatprep.subr.mxu0 0.0
    %1023 = vmatpush1.msra.mxu0 %v934
    %1024 = vmatprep.subr.mxu0 0.0
    %1025 = vmatpush1.msra.mxu0 %v935
    %1026 = vmatprep.subr.mxu0 0.0
    %1027 = vmatpush1.msra.mxu0 %v936
    %1028 = vmatprep.subr.mxu0 0.0
    %1029 = vmatpush1.msra.mxu0 %v937
    %1030 = vmatprep.subr.mxu0 0.0
    %1031 = vmatpush1.msra.mxu0 %v938
    %1032 = vmatprep.subr.mxu0 0.0
    %1033 = vmatpush1.msra.mxu0 %v939
    %1034 = vmatprep.subr.mxu0 0.0
    %1035 = vmatpush1.msra.mxu0 %v940
    %1036 = vmatprep.subr.mxu0 0.0
    %1037 = vmatpush1.msra.mxu0 %v941
    %1038 = vmatprep.subr.mxu0 0.0
    %1039 = vmatpush1.msra.mxu0 %v854
    %1040 = vmatprep.subr.mxu0 0.0
    %1041 = vmatpush1.msra.mxu0 %v856
    %1042 = vmatprep.subr.mxu0 0.0
    %1043 = vmatpush1.msra.mxu0 %v858
    %1044 = vmatprep.subr.mxu0 0.0
    %1045 = vmatpush1.msra.mxu0 %v860
    %1046 = vmatprep.subr.mxu0 0.0
    %1047 = vmatpush1.msra.mxu0 %v942
    %1048 = vmatprep.subr.mxu0 0.0
    %1049 = vmatpush1.msra.mxu0 %v943
    %1050 = vmatprep.subr.mxu0 0.0
    %1051 = vmatpush1.msra.mxu0 %v944
    %1052 = vmatprep.subr.mxu0 0.0
    %1053 = vmatpush1.msra.mxu0 %v945
    %1054 = vmatprep.subr.mxu0 0.0
    %1055 = vmatpush1.msra.mxu0 %v946
    %1056 = vmatprep.subr.mxu0 0.0
    %1057 = vmatpush1.msra.mxu0 %v947
    %1058 = vmatprep.subr.mxu0 0.0
    %1059 = vmatpush1.msra.mxu0 %v948
    %1060 = vmatprep.subr.mxu0 0.0
    %1061 = vmatpush1.msra.mxu0 %v949
    %1062 = vmatprep.subr.mxu0 0.0
    %1063 = vmatpush1.msra.mxu0 %v950
    %1064 = vmatprep.subr.mxu0 0.0
    %1065 = vmatpush1.msra.mxu0 %v951
    %1066 = vmatprep.subr.mxu0 0.0
    %1067 = vmatpush1.msra.mxu0 %v952
    %1068 = vmatprep.subr.mxu0 0.0
    %1069 = vmatpush1.msra.mxu0 %v953
    %1070 = vmatprep.mubr.f32.mxu0 %v255
    %1071 = vmatmul.mubr.f32.gmra.mrb[0].mxu0 %v254
    %v1072 = vpop.f32.mrb[0].mxu0
    %v1073 = vadd.f32 %v778, %v1072
    %v1074 = vpop.f32.mrb[0].mxu0
    %1075 = vmatprep.mubr.f32.mxu0 %v258
    %1076 = vmatmul.mubr.f32.gmra.mrb[0].mxu0 %v257
    %v1077 = vpop.f32.mrb[0].mxu0
    %v1078 = vadd.f32 %v783, %v1077
    %v1079 = vpop.f32.mrb[0].mxu0
    %1080 = vmatprep.mubr.f32.mxu0 %v261
    %1081 = vmatmul.mubr.f32.gmra.mrb[0].mxu0 %v260
    %v1082 = vpop.f32.mrb[0].mxu0
    %v1083 = vadd.f32 %v788, %v1082
    %v1084 = vpop.f32.mrb[0].mxu0
    %1085 = vmatprep.mubr.f32.mxu0 %v264
    %1086 = vmatmul.mubr.f32.gmra.mrb[0].mxu0 %v263
    %v1087 = vpop.f32.mrb[0].mxu0
    %v1088 = vadd.f32 %v793, %v1087
    %v1089 = vpop.f32.mrb[0].mxu0
    %1090 = vdwg.mxu0
    %1091 = vmatprep.subr.mxu0 0.0
    %1092 = vmatpush1.msra.mxu0 %v954
    %1093 = vmatprep.subr.mxu0 0.0
    %1094 = vmatpush1.msra.mxu0 %v955
    %1095 = vmatprep.subr.mxu0 0.0
    %1096 = vmatpush1.msra.mxu0 %v956
    %1097 = vmatprep.subr.mxu0 0.0
    %1098 = vmatpush1.msra.mxu0 %v957
    %1099 = vmatprep.subr.mxu0 0.0
    %1100 = vmatpush1.msra.mxu0 0.0
    %1101 = vmatprep.subr.mxu0 0.0
    %1102 = vmatpush1.msra.mxu0 0.0
    %1103 = vmatprep.subr.mxu0 0.0
    %1104 = vmatpush1.msra.mxu0 0.0
    %1105 = vmatprep.subr.mxu0 0.0
    %1106 = vmatpush1.msra.mxu0 0.0
    %1107 = vmatprep.subr.mxu0 0.0
    %1108 = vmatpush1.msra.mxu0 0.0
    %1109 = vmatprep.subr.mxu0 0.0
    %1110 = vmatpush1.msra.mxu0 0.0
    %1111 = vmatprep.subr.mxu0 0.0
    %1112 = vmatpush1.msra.mxu0 0.0
    %1113 = vmatprep.subr.mxu0 0.0
    %1114 = vmatpush1.msra.mxu0 0.0
    %1115 = vmatprep.subr.mxu0 0.0
    %1116 = vmatpush1.msra.mxu0 0.0
    %1117 = vmatprep.subr.mxu0 0.0
    %1118 = vmatpush1.msra.mxu0 0.0
    %1119 = vmatprep.subr.mxu0 0.0
    %1120 = vmatpush1.msra.mxu0 0.0
    %1121 = vmatprep.subr.mxu0 0.0
    %1122 = vmatpush1.msra.mxu0 0.0
    %1123 = vmatprep.subr.mxu0 0.0
    %1124 = vmatpush1.msra.mxu0 0.0
    %1125 = vmatprep.subr.mxu0 0.0
    %1126 = vmatpush1.msra.mxu0 0.0
    %1127 = vmatprep.subr.mxu0 0.0
    %1128 = vmatpush1.msra.mxu0 0.0
    %1129 = vmatprep.subr.mxu0 0.0
    %1130 = vmatpush1.msra.mxu0 0.0
    %1131 = vmatprep.subr.mxu0 0.0
    %1132 = vmatpush1.msra.mxu0 0.0
    %1133 = vmatprep.subr.mxu0 0.0
    %1134 = vmatpush1.msra.mxu0 0.0
    %1135 = vmatprep.subr.mxu0 0.0
    %1136 = vmatpush1.msra.mxu0 0.0
    %1137 = vmatprep.subr.mxu0 0.0
    %1138 = vmatpush1.msra.mxu0 0.0
    %1139 = vmatprep.subr.mxu0 0.0
    %1140 = vmatpush1.msra.mxu0 0.0
    %1141 = vmatprep.subr.mxu0 0.0
    %1142 = vmatpush1.msra.mxu0 0.0
    %1143 = vmatprep.subr.mxu0 0.0
    %1144 = vmatpush1.msra.mxu0 0.0
    %1145 = vmatprep.subr.mxu0 0.0
    %1146 = vmatpush1.msra.mxu0 0.0
    %1147 = vmatprep.subr.mxu0 0.0
    %1148 = vmatpush1.msra.mxu0 0.0
    %1149 = vmatprep.subr.mxu0 0.0
    %1150 = vmatpush1.msra.mxu0 0.0
    %1151 = vmatprep.subr.mxu0 0.0
    %1152 = vmatpush1.msra.mxu0 0.0
    %1153 = vmatprep.subr.mxu0 0.0
    %1154 = vmatpush1.msra.mxu0 0.0
    %1155 = vmatprep.mubr.f32.mxu0 0.0
    %1156 = vmatmul.mubr.f32.gmra.mrb[0].mxu0 %v995
    %v1157 = vpop.f32.mrb[0].mxu0
    %v1158 = vadd.f32 %v1073, %v1157
    %v1159 = vpop.f32.mrb[0].mxu0
    %1160 = vmatprep.mubr.f32.mxu0 0.0
    %1161 = vmatmul.mubr.f32.gmra.mrb[0].mxu0 %v998
    %v1162 = vpop.f32.mrb[0].mxu0
    %v1163 = vadd.f32 %v1078, %v1162
    %v1164 = vpop.f32.mrb[0].mxu0
    %1165 = vmatprep.mubr.f32.mxu0 0.0
    %1166 = vmatmul.mubr.f32.gmra.mrb[0].mxu0 %v1001
    %v1167 = vpop.f32.mrb[0].mxu0
    %v1168 = vadd.f32 %v1083, %v1167
    %v1169 = vpop.f32.mrb[0].mxu0
    %1170 = vmatprep.mubr.f32.mxu0 0.0
    %1171 = vmatmul.mubr.f32.gmra.mrb[0].mxu0 %v1004
    %v1172 = vpop.f32.mrb[0].mxu0
    %v1173 = vadd.f32 %v1088, %v1172
    %v1174 = vpop.f32.mrb[0].mxu0
    %1175 = vdwg.mxu0
    %vm1176 = vcmp.gt.f32.partialorder %v1158, 0.0
    %vm1177 = vcmp.gt.f32.partialorder %v1163, 0.0
    %vm1178 = vcmp.gt.f32.partialorder %v1168, 0.0
    %vm1179 = vcmp.gt.f32.partialorder %v1173, 0.0
    %v1180 = vmul.f32 %v1158, 0.2
    %v1181 = vmul.f32 %v1163, 0.2
    %v1182 = vmul.f32 %v1168, 0.2
    %v1183 = vmul.f32 %v1173, 0.2
    %v1184 = vsel %vm1176, %v1158, %v1180
    %v1185 = vsel %vm1177, %v1163, %v1181
    %v1186 = vsel %vm1178, %v1168, %v1182
    %v1187 = vsel %vm1179, %v1173, %v1183
    %v1188 = vmul.f32 %v1184, %v1184
    %v1189 = vmul.f32 %v1185, %v1185
    %v1190 = vmul.f32 %v1186, %v1186
    %v1191 = vmul.f32 %v1187, %v1187
    %1192 = vmatprep.subr.mxu0 0.0
    %1193 = vmatpush1.msra.mxu0 %v1188
    %1194 = vmatprep.subr.mxu0 0.0
    %1195 = vmatpush1.msra.mxu0 %v1189
    %1196 = vmatprep.subr.mxu0 0.0
    %1197 = vmatpush1.msra.mxu0 %v1190
    %1198 = vmatprep.subr.mxu0 0.0
    %1199 = vmatpush1.msra.mxu0 %v1191
    %1200 = vmatprep.subr.mxu0 0.0
    %1201 = vmatpush1.msra.mxu0 0.0
    %1202 = vmatprep.subr.mxu0 0.0
    %1203 = vmatpush1.msra.mxu0 0.0
    %1204 = vmatprep.subr.mxu0 0.0
    %1205 = vmatpush1.msra.mxu0 0.0
    %1206 = vmatprep.subr.mxu0 0.0
    %1207 = vmatpush1.msra.mxu0 0.0
    %1208 = vmatprep.subr.mxu0 0.0
    %1209 = vmatpush1.msra.mxu0 0.0
    %1210 = vmatprep.subr.mxu0 0.0
    %1211 = vmatpush1.msra.mxu0 0.0
    %1212 = vmatprep.subr.mxu0 0.0
    %1213 = vmatpush1.msra.mxu0 0.0
    %1214 = vmatprep.subr.mxu0 0.0
    %1215 = vmatpush1.msra.mxu0 0.0
    %1216 = vmatprep.subr.mxu0 0.0
    %1217 = vmatpush1.msra.mxu0 0.0
    %1218 = vmatprep.subr.mxu0 0.0
    %1219 = vmatpush1.msra.mxu0 0.0
    %1220 = vmatprep.subr.mxu0 0.0
    %1221 = vmatpush1.msra.mxu0 0.0
    %1222 = vmatprep.subr.mxu0 0.0
    %1223 = vmatpush1.msra.mxu0 0.0
    %1224 = vmatprep.subr.mxu0 0.0
    %1225 = vmatpush1.msra.mxu0 0.0
    %1226 = vmatprep.subr.mxu0 0.0
    %1227 = vmatpush1.msra.mxu0 0.0
    %1228 = vmatprep.subr.mxu0 0.0
    %1229 = vmatpush1.msra.mxu0 0.0
    %1230 = vmatprep.subr.mxu0 0.0
    %1231 = vmatpush1.msra.mxu0 0.0
    %1232 = vmatprep.subr.mxu0 0.0
    %1233 = vmatpush1.msra.mxu0 0.0
    %1234 = vmatprep.subr.mxu0 0.0
    %1235 = vmatpush1.msra.mxu0 0.0
    %1236 = vmatprep.subr.mxu0 0.0
    %1237 = vmatpush1.msra.mxu0 0.0
    %1238 = vmatprep.subr.mxu0 0.0
    %1239 = vmatpush1.msra.mxu0 0.0
    %1240 = vmatprep.subr.mxu0 0.0
    %1241 = vmatpush1.msra.mxu0 0.0
    %1242 = vmatprep.subr.mxu0 0.0
    %1243 = vmatpush1.msra.mxu0 0.0
    %1244 = vmatprep.subr.mxu0 0.0
    %1245 = vmatpush1.msra.mxu0 0.0
    %1246 = vmatprep.subr.mxu0 0.0
    %1247 = vmatpush1.msra.mxu0 0.0
    %1248 = vmatprep.subr.mxu0 0.0
    %1249 = vmatpush1.msra.mxu0 0.0
    %1250 = vmatprep.subr.mxu0 0.0
    %1251 = vmatpush1.msra.mxu0 0.0
    %1252 = vmatprep.subr.mxu0 0.0
    %1253 = vmatpush1.msra.mxu0 0.0
    %1254 = vmatprep.subr.mxu0 0.0
    %1255 = vmatpush1.msra.mxu0 0.0
    %1256 = vmatprep.mubr.f32.mxu0 0.0
    %1257 = vmatmul.mubr.f32.gmra.mrb[0].mxu0 %v479
    %v1258 = vpop.f32.mrb[0].mxu0
    %v1259 = vadd.f32 1e-08, %v1258
    %v1260 = vpop.f32.mrb[0].mxu0
    %1261 = vdwg.mxu0
    %v1262 = vrsqrt.pop %v1259
    %v1263 = vlaneseq
    %v1264 = vshrl.u32 %v1263, 7
    %v1265 = vsub.s32 0, %v1264
    %v1266 = vrot.slane %v1262, %v1265
    %v1267 = vmul.f32 %v1184, %v1266
    %v1268 = vmul.f32 %v1185, %v1266
    %v1269 = vmul.f32 %v1186, %v1266
    %v1270 = vmul.f32 %v1187, %v1266
    %v1272 = vlaneseq
    %v1273 = vshrl.u32 %v1272, 7
    %v1274 = vsub.s32 0, %v1273
    %v1275 = vrot.slane %v270, %v1274
    %v1277 = vmul.f32 %v1267, %v1275
    %v1278 = vmul.f32 %v1268, %v1275
    %v1279 = vmul.f32 %v1269, %v1275
    %v1280 = vmul.f32 %v1270, %v1275
    %v1281 = vld [vmem:[%s8] sm:$0xff]
    %v1282 = vld [vmem:[%s8 + $0x8] sm:$0xff]
    %v1283 = vld [vmem:[%s8 + $0x10] sm:$0xff]
    %v1284 = vld [vmem:[%s8 + $0x18] sm:$0xff]
    %v1285 = vld [vmem:[%s8 + $0x20] sm:$0xff]
    %v1286 = vld [vmem:[%s8 + $0x28] sm:$0xff]
    %v1287 = vld [vmem:[%s8 + $0x30] sm:$0xff]
    %v1288 = vld [vmem:[%s8 + $0x38] sm:$0xff]
    %v1289 = vld [vmem:[%s8 + $0x40] sm:$0xff]
    %v1290 = vld [vmem:[%s8 + $0x48] sm:$0xff]
    %v1291 = vld [vmem:[%s8 + $0x50] sm:$0xff]
    %v1292 = vld [vmem:[%s8 + $0x58] sm:$0xff]
    %v1293 = vld [vmem:[%s8 + $0x60] sm:$0xff]
    %v1294 = vld [vmem:[%s8 + $0x68] sm:$0xff]
    %v1295 = vld [vmem:[%s8 + $0x70] sm:$0xff]
    %v1296 = vld [vmem:[%s8 + $0x78] sm:$0xff]
    %v1297 = vld [vmem:[%s8 + $0x80] sm:$0xff]
    %v1298 = vld [vmem:[%s8 + $0x88] sm:$0xff]
    %v1299 = vld [vmem:[%s8 + $0x90] sm:$0xff]
    %v1300 = vld [vmem:[%s8 + $0x98] sm:$0xff]
    %v1301 = vld [vmem:[%s8 + $0xa0] sm:$0xff]
    %v1302 = vld [vmem:[%s8 + $0xa8] sm:$0xff]
    %v1303 = vld [vmem:[%s8 + $0xb0] sm:$0xff]
    %v1304 = vld [vmem:[%s8 + $0xb8] sm:$0xff]
    %v1305 = vld [vmem:[%s8 + $0xc0] sm:$0xff]
    %v1306 = vld [vmem:[%s8 + $0xc8] sm:$0xff]
    %v1307 = vld [vmem:[%s8 + $0xd0] sm:$0xff]
    %v1308 = vld [vmem:[%s8 + $0xd8] sm:$0xff]
    %v1309 = vld [vmem:[%s8 + $0xe0] sm:$0xff]
    %v1310 = vld [vmem:[%s8 + $0xe8] sm:$0xff]
    %v1311 = vld [vmem:[%s8 + $0xf0] sm:$0xff]
    %v1312 = vld [vmem:[%s8 + $0xf8] sm:$0xff]
    %v1313 = vld [vmem:[#allocation7] sm:$0xff]
    %v1314 = vld [vmem:[#allocation7 + $0x8] sm:$0xff]
    %v1315 = vld [vmem:[#allocation7 + $0x10] sm:$0xff]
    %v1316 = vld [vmem:[#allocation7 + $0x18] sm:$0xff]
    %v1317 = vld [vmem:[#allocation7 + $0x20] sm:$0xff]
    %v1318 = vld [vmem:[#allocation7 + $0x28] sm:$0xff]
    %v1319 = vld [vmem:[#allocation7 + $0x30] sm:$0xff]
    %v1320 = vld [vmem:[#allocation7 + $0x38] sm:$0xff]
    %v1321 = vld [vmem:[#allocation7 + $0x40] sm:$0xff]
    %v1322 = vld [vmem:[#allocation7 + $0x48] sm:$0xff]
    %v1323 = vld [vmem:[#allocation7 + $0x50] sm:$0xff]
    %v1324 = vld [vmem:[#allocation7 + $0x58] sm:$0xff]
    %v1325 = vld [vmem:[%s10] sm:$0xff]
    %v1326 = vld [vmem:[%s10 + $0x8] sm:$0xff]
    %v1327 = vld [vmem:[%s10 + $0x10] sm:$0xff]
    %v1328 = vld [vmem:[%s10 + $0x18] sm:$0xff]
    %v1329 = vld [vmem:[#allocation8] sm:$0xff]
    %v1330 = vld [vmem:[#allocation8 + $0x8] sm:$0xff]
    %v1331 = vld [vmem:[#allocation8 + $0x10] sm:$0xff]
    %v1332 = vld [vmem:[#allocation8 + $0x18] sm:$0xff]
    %v1333 = vld [vmem:[#allocation8 + $0x20] sm:$0xff]
    %v1334 = vld [vmem:[#allocation8 + $0x28] sm:$0xff]
    %v1335 = vld [vmem:[#allocation8 + $0x30] sm:$0xff]
    %v1336 = vld [vmem:[#allocation8 + $0x38] sm:$0xff]
    %v1337 = vld [vmem:[#allocation8 + $0x40] sm:$0xff]
    %v1338 = vld [vmem:[#allocation8 + $0x48] sm:$0xff]
    %v1339 = vld [vmem:[#allocation8 + $0x50] sm:$0xff]
    %v1340 = vld [vmem:[#allocation8 + $0x58] sm:$0xff]
    %v1341 = vld [vmem:[%s12] sm:$0xff]
    %v1342 = vld [vmem:[%s12 + $0x8] sm:$0xff]
    %v1343 = vld [vmem:[%s12 + $0x10] sm:$0xff]
    %v1344 = vld [vmem:[%s12 + $0x18] sm:$0xff]
    %v1345 = vld [vmem:[#allocation10] sm:$0x3]
    %1346 = vmatprep.subr.mxu0 %v1282
    %1347 = vmatpush1.msra.mxu0 %v1281
    %1348 = vmatprep.subr.mxu0 %v1284
    %1349 = vmatpush1.msra.mxu0 %v1283
    %1350 = vmatprep.subr.mxu0 %v1286
    %1351 = vmatpush1.msra.mxu0 %v1285
    %1352 = vmatprep.subr.mxu0 %v1288
    %1353 = vmatpush1.msra.mxu0 %v1287
    %1354 = vmatprep.subr.mxu0 %v1290
    %1355 = vmatpush1.msra.mxu0 %v1289
    %1356 = vmatprep.subr.mxu0 %v1292
    %1357 = vmatpush1.msra.mxu0 %v1291
    %1358 = vmatprep.subr.mxu0 %v1294
    %1359 = vmatpush1.msra.mxu0 %v1293
    %1360 = vmatprep.subr.mxu0 %v1296
    %1361 = vmatpush1.msra.mxu0 %v1295
    %1362 = vmatprep.subr.mxu0 %v1298
    %1363 = vmatpush1.msra.mxu0 %v1297
    %1364 = vmatprep.subr.mxu0 %v1300
    %1365 = vmatpush1.msra.mxu0 %v1299
    %1366 = vmatprep.subr.mxu0 %v1302
    %1367 = vmatpush1.msra.mxu0 %v1301
    %1368 = vmatprep.subr.mxu0 %v1304
    %1369 = vmatpush1.msra.mxu0 %v1303
    %1370 = vmatprep.subr.mxu0 %v1306
    %1371 = vmatpush1.msra.mxu0 %v1305
    %1372 = vmatprep.subr.mxu0 %v1308
    %1373 = vmatpush1.msra.mxu0 %v1307
    %1374 = vmatprep.subr.mxu0 %v1310
    %1375 = vmatpush1.msra.mxu0 %v1309
    %1376 = vmatprep.subr.mxu0 %v1312
    %1377 = vmatpush1.msra.mxu0 %v1311
    %1378 = vmatprep.subr.mxu0 0.0
    %1379 = vmatpush1.msra.mxu0 0.0
    %1380 = vmatprep.subr.mxu0 0.0
    %1381 = vmatpush1.msra.mxu0 0.0
    %1382 = vmatprep.subr.mxu0 0.0
    %1383 = vmatpush1.msra.mxu0 0.0
    %1384 = vmatprep.subr.mxu0 0.0
    %1385 = vmatpush1.msra.mxu0 0.0
    %1386 = vmatprep.subr.mxu0 0.0
    %1387 = vmatpush1.msra.mxu0 0.0
    %1388 = vmatprep.subr.mxu0 0.0
    %1389 = vmatpush1.msra.mxu0 0.0
    %1390 = vmatprep.subr.mxu0 0.0
    %1391 = vmatpush1.msra.mxu0 0.0
    %1392 = vmatprep.subr.mxu0 0.0
    %1393 = vmatpush1.msra.mxu0 0.0
    %1394 = vmatprep.subr.mxu0 0.0
    %1395 = vmatpush1.msra.mxu0 0.0
    %1396 = vmatprep.subr.mxu0 0.0
    %1397 = vmatpush1.msra.mxu0 0.0
    %1398 = vmatprep.subr.mxu0 0.0
    %1399 = vmatpush1.msra.mxu0 0.0
    %1400 = vmatprep.subr.mxu0 0.0
    %1401 = vmatpush1.msra.mxu0 0.0
    %1402 = vmatprep.subr.mxu0 0.0
    %1403 = vmatpush1.msra.mxu0 0.0
    %1404 = vmatprep.subr.mxu0 0.0
    %1405 = vmatpush1.msra.mxu0 0.0
    %1406 = vmatprep.subr.mxu0 0.0
    %1407 = vmatpush1.msra.mxu0 0.0
    %1408 = vmatprep.subr.mxu0 0.0
    %1409 = vmatpush1.msra.mxu0 0.0
    %1410 = vmatprep.mubr.f32.mxu0 0.0
    %1411 = vmatmul.mubr.f32.gmra.mrb[0].mxu0 %v1277
    %v1412 = vpop.f32.mrb[0].mxu0
    %v1413 = vadd.f32 0.0, %v1412
    %v1414 = vpop.f32.mrb[0].mxu0
    %v1415 = vadd.f32 0.0, %v1414
    %1416 = vmatprep.mubr.f32.mxu0 0.0
    %1417 = vmatmul.mubr.f32.gmra.mrb[0].mxu0 %v1278
    %v1418 = vpop.f32.mrb[0].mxu0
    %v1419 = vadd.f32 0.0, %v1418
    %v1420 = vpop.f32.mrb[0].mxu0
    %v1421 = vadd.f32 0.0, %v1420
    %1422 = vmatprep.mubr.f32.mxu0 0.0
    %1423 = vmatmul.mubr.f32.gmra.mrb[0].mxu0 %v1279
    %v1424 = vpop.f32.mrb[0].mxu0
    %v1425 = vadd.f32 0.0, %v1424
    %v1426 = vpop.f32.mrb[0].mxu0
    %v1427 = vadd.f32 0.0, %v1426
    %1428 = vmatprep.mubr.f32.mxu0 0.0
    %1429 = vmatmul.mubr.f32.gmra.mrb[0].mxu0 %v1280
    %v1430 = vpop.f32.mrb[0].mxu0
    %v1431 = vadd.f32 0.0, %v1430
    %v1432 = vpop.f32.mrb[0].mxu0
    %v1433 = vadd.f32 0.0, %v1432
    %1434 = vdwg.mxu0
    %1443 = vrot.lane.b32.xlu0 %v1413, 127
    %v1444 = vpop.permute.xlu0 %1443
    %1445 = vrot.lane.b32.xlu0 %v1415, 127
    %v1446 = vpop.permute.xlu0 %1445
    %1447 = vrot.lane.b32.xlu0 %v1419, 127
    %v1448 = vpop.permute.xlu0 %1447
    %1449 = vrot.lane.b32.xlu0 %v1421, 127
    %v1450 = vpop.permute.xlu0 %1449
    %1451 = vrot.lane.b32.xlu0 %v1425, 127
    %v1452 = vpop.permute.xlu0 %1451
    %1453 = vrot.lane.b32.xlu0 %v1427, 127
    %v1454 = vpop.permute.xlu0 %1453
    %1455 = vrot.lane.b32.xlu0 %v1431, 127
    %v1456 = vpop.permute.xlu0 %1455
    %1457 = vrot.lane.b32.xlu0 %v1433, 127
    %v1458 = vpop.permute.xlu0 %1457
    %v1459 = vsel %vm672, %v663, %v1444
    %v1460 = vsel %vm672, %v1444, %v1446
    %v1461 = vsel %vm672, %v663, %v1448
    %v1462 = vsel %vm672, %v1448, %v1450
    %v1463 = vsel %vm672, %v663, %v1452
    %v1464 = vsel %vm672, %v1452, %v1454
    %v1465 = vsel %vm672, %v663, %v1456
    %v1466 = vsel %vm672, %v1456, %v1458
    %1467 = vrot.lane.b32.xlu0 %v1413, 126
    %v1468 = vpop.permute.xlu0 %1467
    %1469 = vrot.lane.b32.xlu0 %v1415, 126
    %v1470 = vpop.permute.xlu0 %1469
    %1471 = vrot.lane.b32.xlu0 %v1419, 126
    %v1472 = vpop.permute.xlu0 %1471
    %1473 = vrot.lane.b32.xlu0 %v1421, 126
    %v1474 = vpop.permute.xlu0 %1473
    %1475 = vrot.lane.b32.xlu0 %v1425, 126
    %v1476 = vpop.permute.xlu0 %1475
    %1477 = vrot.lane.b32.xlu0 %v1427, 126
    %v1478 = vpop.permute.xlu0 %1477
    %1479 = vrot.lane.b32.xlu0 %v1431, 126
    %v1480 = vpop.permute.xlu0 %1479
    %1481 = vrot.lane.b32.xlu0 %v1433, 126
    %v1482 = vpop.permute.xlu0 %1481
    %v1483 = vsel %vm687, %v678, %v1468
    %v1484 = vsel %vm687, %v1468, %v1470
    %v1485 = vsel %vm687, %v678, %v1472
    %v1486 = vsel %vm687, %v1472, %v1474
    %v1487 = vsel %vm687, %v678, %v1476
    %v1488 = vsel %vm687, %v1476, %v1478
    %v1489 = vsel %vm687, %v678, %v1480
    %v1490 = vsel %vm687, %v1480, %v1482
    %1491 = vrot.lane.b32.xlu0 0.0, 118
    %v1492 = vpop.permute.xlu0 %1491
    %1493 = vrot.lane.b32.xlu0 %v1413, 118
    %v1494 = vpop.permute.xlu0 %1493
    %1495 = vrot.lane.b32.xlu0 %v1415, 118
    %v1496 = vpop.permute.xlu0 %1495
    %1497 = vrot.lane.b32.xlu0 %v1419, 118
    %v1498 = vpop.permute.xlu0 %1497
    %1499 = vrot.lane.b32.xlu0 %v1421, 118
    %v1500 = vpop.permute.xlu0 %1499
    %1501 = vrot.lane.b32.xlu0 %v1425, 118
    %v1502 = vpop.permute.xlu0 %1501
    %1503 = vrot.lane.b32.xlu0 %v1427, 118
    %v1504 = vpop.permute.xlu0 %1503
    %1505 = vrot.lane.b32.xlu0 %v1431, 118
    %v1506 = vpop.permute.xlu0 %1505
    %1507 = vrot.lane.b32.xlu0 %v1433, 118
    %v1508 = vpop.permute.xlu0 %1507
    %vm1509 = vcmask 965632
    %v1510 = vsel %vm1509, %v1492, %v1494
    %v1511 = vsel %vm1509, %v1494, %v1496
    %v1512 = vsel %vm1509, %v1492, %v1498
    %v1513 = vsel %vm1509, %v1498, %v1500
    %v1514 = vsel %vm1509, %v1492, %v1502
    %v1515 = vsel %vm1509, %v1502, %v1504
    %v1516 = vsel %vm1509, %v1492, %v1506
    %v1517 = vsel %vm1509, %v1506, %v1508
    %1518 = vrot.lane.b32.xlu0 %v1413, 117
    %v1519 = vpop.permute.xlu0 %1518
    %1520 = vrot.lane.b32.xlu0 %v1415, 117
    %v1521 = vpop.permute.xlu0 %1520
    %1522 = vrot.lane.b32.xlu0 %v1419, 117
    %v1523 = vpop.permute.xlu0 %1522
    %1524 = vrot.lane.b32.xlu0 %v1421, 117
    %v1525 = vpop.permute.xlu0 %1524
    %1526 = vrot.lane.b32.xlu0 %v1425, 117
    %v1527 = vpop.permute.xlu0 %1526
    %1528 = vrot.lane.b32.xlu0 %v1427, 117
    %v1529 = vpop.permute.xlu0 %1528
    %1530 = vrot.lane.b32.xlu0 %v1431, 117
    %v1531 = vpop.permute.xlu0 %1530
    %1532 = vrot.lane.b32.xlu0 %v1433, 117
    %v1533 = vpop.permute.xlu0 %1532
    %vm1534 = vcmask 957440
    %v1535 = vsel %vm1534, %v1519, %v1521
    %v1536 = vsel %vm1534, %v1523, %v1525
    %v1537 = vsel %vm1534, %v1527, %v1529
    %v1538 = vsel %vm1534, %v1531, %v1533
    %1539 = vrot.lane.b32.xlu0 %v1413, 116
    %v1540 = vpop.permute.xlu0 %1539
    %1541 = vrot.lane.b32.xlu0 %v1415, 116
    %v1542 = vpop.permute.xlu0 %1541
    %1543 = vrot.lane.b32.xlu0 %v1419, 116
    %v1544 = vpop.permute.xlu0 %1543
    %1545 = vrot.lane.b32.xlu0 %v1421, 116
    %v1546 = vpop.permute.xlu0 %1545
    %1547 = vrot.lane.b32.xlu0 %v1425, 116
    %v1548 = vpop.permute.xlu0 %1547
    %1549 = vrot.lane.b32.xlu0 %v1427, 116
    %v1550 = vpop.permute.xlu0 %1549
    %1551 = vrot.lane.b32.xlu0 %v1431, 116
    %v1552 = vpop.permute.xlu0 %1551
    %1553 = vrot.lane.b32.xlu0 %v1433, 116
    %v1554 = vpop.permute.xlu0 %1553
    %v1555 = vsel %vm740, %v1540, %v1542
    %v1556 = vsel %vm740, %v1542, %v733
    %v1557 = vsel %vm740, %v1544, %v1546
    %v1558 = vsel %vm740, %v1546, %v733
    %v1559 = vsel %vm740, %v1548, %v1550
    %v1560 = vsel %vm740, %v1550, %v733
    %v1561 = vsel %vm740, %v1552, %v1554
    %v1562 = vsel %vm740, %v1554, %v733
    %1563 = vrot.lane.b32.xlu0 %v1413, 108
    %v1564 = vpop.permute.xlu0 %1563
    %1565 = vrot.lane.b32.xlu0 %v1415, 108
    %v1566 = vpop.permute.xlu0 %1565
    %1567 = vrot.lane.b32.xlu0 0.0, 108
    %v1568 = vpop.permute.xlu0 %1567
    %1569 = vrot.lane.b32.xlu0 %v1419, 108
    %v1570 = vpop.permute.xlu0 %1569
    %1571 = vrot.lane.b32.xlu0 %v1421, 108
    %v1572 = vpop.permute.xlu0 %1571
    %1573 = vrot.lane.b32.xlu0 %v1425, 108
    %v1574 = vpop.permute.xlu0 %1573
    %1575 = vrot.lane.b32.xlu0 %v1427, 108
    %v1576 = vpop.permute.xlu0 %1575
    %1577 = vrot.lane.b32.xlu0 %v1431, 108
    %v1578 = vpop.permute.xlu0 %1577
    %1579 = vrot.lane.b32.xlu0 %v1433, 108
    %v1580 = vpop.permute.xlu0 %1579
    %vm1581 = vcmask 883712
    %v1582 = vsel %vm1581, %v1564, %v1566
    %v1583 = vsel %vm1581, %v1566, %v1568
    %v1584 = vsel %vm1581, %v1570, %v1572
    %v1585 = vsel %vm1581, %v1572, %v1568
    %v1586 = vsel %vm1581, %v1574, %v1576
    %v1587 = vsel %vm1581, %v1576, %v1568
    %v1588 = vsel %vm1581, %v1578, %v1580
    %v1589 = vsel %vm1581, %v1580, %v1568
    %1590 = vrot.lane.b32.xlu0 %v1413, 107
    %v1591 = vpop.permute.xlu0 %1590
    %1592 = vrot.lane.b32.xlu0 %v1415, 107
    %v1593 = vpop.permute.xlu0 %1592
    %1594 = vrot.lane.b32.xlu0 0.0, 107
    %v1595 = vpop.permute.xlu0 %1594
    %1596 = vrot.lane.b32.xlu0 %v1419, 107
    %v1597 = vpop.permute.xlu0 %1596
    %1598 = vrot.lane.b32.xlu0 %v1421, 107
    %v1599 = vpop.permute.xlu0 %1598
    %1600 = vrot.lane.b32.xlu0 %v1425, 107
    %v1601 = vpop.permute.xlu0 %1600
    %1602 = vrot.lane.b32.xlu0 %v1427, 107
    %v1603 = vpop.permute.xlu0 %1602
    %1604 = vrot.lane.b32.xlu0 %v1431, 107
    %v1605 = vpop.permute.xlu0 %1604
    %1606 = vrot.lane.b32.xlu0 %v1433, 107
    %v1607 = vpop.permute.xlu0 %1606
    %vm1608 = vcmask 875520
    %v1609 = vsel %vm1608, %v1591, %v1593
    %v1610 = vsel %vm1608, %v1593, %v1595
    %v1611 = vsel %vm1608, %v1597, %v1599
    %v1612 = vsel %vm1608, %v1599, %v1595
    %v1613 = vsel %vm1608, %v1601, %v1603
    %v1614 = vsel %vm1608, %v1603, %v1595
    %v1615 = vsel %vm1608, %v1605, %v1607
    %v1616 = vsel %vm1608, %v1607, %v1595
    %1617 = vrot.lane.b32.xlu0 %v1413, 106
    %v1618 = vpop.permute.xlu0 %1617
    %1619 = vrot.lane.b32.xlu0 %v1415, 106
    %v1620 = vpop.permute.xlu0 %1619
    %1621 = vrot.lane.b32.xlu0 0.0, 106
    %v1622 = vpop.permute.xlu0 %1621
    %1623 = vrot.lane.b32.xlu0 %v1419, 106
    %v1624 = vpop.permute.xlu0 %1623
    %1625 = vrot.lane.b32.xlu0 %v1421, 106
    %v1626 = vpop.permute.xlu0 %1625
    %1627 = vrot.lane.b32.xlu0 %v1425, 106
    %v1628 = vpop.permute.xlu0 %1627
    %1629 = vrot.lane.b32.xlu0 %v1427, 106
    %v1630 = vpop.permute.xlu0 %1629
    %1631 = vrot.lane.b32.xlu0 %v1431, 106
    %v1632 = vpop.permute.xlu0 %1631
    %1633 = vrot.lane.b32.xlu0 %v1433, 106
    %v1634 = vpop.permute.xlu0 %1633
    %vm1635 = vcmask 867328
    %v1636 = vsel %vm1635, %v1618, %v1620
    %v1637 = vsel %vm1635, %v1620, %v1622
    %v1638 = vsel %vm1635, %v1624, %v1626
    %v1639 = vsel %vm1635, %v1626, %v1622
    %v1640 = vsel %vm1635, %v1628, %v1630
    %v1641 = vsel %vm1635, %v1630, %v1622
    %v1642 = vsel %vm1635, %v1632, %v1634
    %v1643 = vsel %vm1635, %v1634, %v1622
    %1645 = vset.pattern.permute.xlu0 0
    %1646 = vperm.xlu0 %1645, %v1325
    %v1647 = vpop.permute.xlu0 %1646
    %1650 = vset.pattern.permute.xlu0 0
    %1651 = vperm.xlu0 %1650, %v1326
    %v1652 = vpop.permute.xlu0 %1651
    %1655 = vset.pattern.permute.xlu0 0
    %1656 = vperm.xlu0 %1655, %v1327
    %v1657 = vpop.permute.xlu0 %1656
    %1660 = vset.pattern.permute.xlu0 0
    %1661 = vperm.xlu0 %1660, %v1328
    %v1662 = vpop.permute.xlu0 %1661
    %1664 = vrot.lane.b32.xlu0 0.0, 11
    %v1665 = vpop.permute.xlu0 %1664
    %1666 = vrot.lane.b32.xlu0 %v1413, 11
    %v1667 = vpop.permute.xlu0 %1666
    %1668 = vrot.lane.b32.xlu0 %v1415, 11
    %v1669 = vpop.permute.xlu0 %1668
    %1670 = vrot.lane.b32.xlu0 %v1419, 11
    %v1671 = vpop.permute.xlu0 %1670
    %1672 = vrot.lane.b32.xlu0 %v1421, 11
    %v1673 = vpop.permute.xlu0 %1672
    %1674 = vrot.lane.b32.xlu0 %v1425, 11
    %v1675 = vpop.permute.xlu0 %1674
    %1676 = vrot.lane.b32.xlu0 %v1427, 11
    %v1677 = vpop.permute.xlu0 %1676
    %1678 = vrot.lane.b32.xlu0 %v1431, 11
    %v1679 = vpop.permute.xlu0 %1678
    %1680 = vrot.lane.b32.xlu0 %v1433, 11
    %v1681 = vpop.permute.xlu0 %1680
    %1682 = vrot.lane.b32.xlu0 %v1459, 11
    %v1683 = vpop.permute.xlu0 %1682
    %1684 = vrot.lane.b32.xlu0 %v1460, 11
    %v1685 = vpop.permute.xlu0 %1684
    %1686 = vrot.lane.b32.xlu0 %v1446, 11
    %v1687 = vpop.permute.xlu0 %1686
    %1688 = vrot.lane.b32.xlu0 %v1461, 11
    %v1689 = vpop.permute.xlu0 %1688
    %1690 = vrot.lane.b32.xlu0 %v1462, 11
    %v1691 = vpop.permute.xlu0 %1690
    %1692 = vrot.lane.b32.xlu0 %v1450, 11
    %v1693 = vpop.permute.xlu0 %1692
    %1694 = vrot.lane.b32.xlu0 %v1463, 11
    %v1695 = vpop.permute.xlu0 %1694
    %1696 = vrot.lane.b32.xlu0 %v1464, 11
    %v1697 = vpop.permute.xlu0 %1696
    %1698 = vrot.lane.b32.xlu0 %v1454, 11
    %v1699 = vpop.permute.xlu0 %1698
    %1700 = vrot.lane.b32.xlu0 %v1465, 11
    %v1701 = vpop.permute.xlu0 %1700
    %1702 = vrot.lane.b32.xlu0 %v1466, 11
    %v1703 = vpop.permute.xlu0 %1702
    %1704 = vrot.lane.b32.xlu0 %v1458, 11
    %v1705 = vpop.permute.xlu0 %1704
    %1706 = vrot.lane.b32.xlu0 %v1483, 11
    %v1707 = vpop.permute.xlu0 %1706
    %1708 = vrot.lane.b32.xlu0 %v1484, 11
    %v1709 = vpop.permute.xlu0 %1708
    %1710 = vrot.lane.b32.xlu0 %v1470, 11
    %v1711 = vpop.permute.xlu0 %1710
    %1712 = vrot.lane.b32.xlu0 %v1485, 11
    %v1713 = vpop.permute.xlu0 %1712
    %1714 = vrot.lane.b32.xlu0 %v1486, 11
    %v1715 = vpop.permute.xlu0 %1714
    %1716 = vrot.lane.b32.xlu0 %v1474, 11
    %v1717 = vpop.permute.xlu0 %1716
    %1718 = vrot.lane.b32.xlu0 %v1487, 11
    %v1719 = vpop.permute.xlu0 %1718
    %1720 = vrot.lane.b32.xlu0 %v1488, 11
    %v1721 = vpop.permute.xlu0 %1720
    %1722 = vrot.lane.b32.xlu0 %v1478, 11
    %v1723 = vpop.permute.xlu0 %1722
    %1724 = vrot.lane.b32.xlu0 %v1489, 11
    %v1725 = vpop.permute.xlu0 %1724
    %1726 = vrot.lane.b32.xlu0 %v1490, 11
    %v1727 = vpop.permute.xlu0 %1726
    %1728 = vrot.lane.b32.xlu0 %v1482, 11
    %v1729 = vpop.permute.xlu0 %1728
    %1730 = vrot.lane.b32.xlu0 %v1510, 11
    %v1731 = vpop.permute.xlu0 %1730
    %1732 = vrot.lane.b32.xlu0 %v1511, 11
    %v1733 = vpop.permute.xlu0 %1732
    %1734 = vrot.lane.b32.xlu0 %v1496, 11
    %v1735 = vpop.permute.xlu0 %1734
    %1736 = vrot.lane.b32.xlu0 %v1512, 11
    %v1737 = vpop.permute.xlu0 %1736
    %1738 = vrot.lane.b32.xlu0 %v1513, 11
    %v1739 = vpop.permute.xlu0 %1738
    %1740 = vrot.lane.b32.xlu0 %v1500, 11
    %v1741 = vpop.permute.xlu0 %1740
    %1742 = vrot.lane.b32.xlu0 %v1514, 11
    %v1743 = vpop.permute.xlu0 %1742
    %1744 = vrot.lane.b32.xlu0 %v1515, 11
    %v1745 = vpop.permute.xlu0 %1744
    %1746 = vrot.lane.b32.xlu0 %v1504, 11
    %v1747 = vpop.permute.xlu0 %1746
    %1748 = vrot.lane.b32.xlu0 %v1516, 11
    %v1749 = vpop.permute.xlu0 %1748
    %1750 = vrot.lane.b32.xlu0 %v1517, 11
    %v1751 = vpop.permute.xlu0 %1750
    %1752 = vrot.lane.b32.xlu0 %v1508, 11
    %v1753 = vpop.permute.xlu0 %1752
    %1754 = vrot.lane.b32.xlu0 %v1519, 11
    %v1755 = vpop.permute.xlu0 %1754
    %1756 = vrot.lane.b32.xlu0 %v1535, 11
    %v1757 = vpop.permute.xlu0 %1756
    %1758 = vrot.lane.b32.xlu0 %v1521, 11
    %v1759 = vpop.permute.xlu0 %1758
    %1760 = vrot.lane.b32.xlu0 %v1523, 11
    %v1761 = vpop.permute.xlu0 %1760
    %1762 = vrot.lane.b32.xlu0 %v1536, 11
    %v1763 = vpop.permute.xlu0 %1762
    %1764 = vrot.lane.b32.xlu0 %v1525, 11
    %v1765 = vpop.permute.xlu0 %1764
    %1766 = vrot.lane.b32.xlu0 %v1527, 11
    %v1767 = vpop.permute.xlu0 %1766
    %1768 = vrot.lane.b32.xlu0 %v1537, 11
    %v1769 = vpop.permute.xlu0 %1768
    %1770 = vrot.lane.b32.xlu0 %v1529, 11
    %v1771 = vpop.permute.xlu0 %1770
    %1772 = vrot.lane.b32.xlu0 %v1531, 11
    %v1773 = vpop.permute.xlu0 %1772
    %1774 = vrot.lane.b32.xlu0 %v1538, 11
    %v1775 = vpop.permute.xlu0 %1774
    %1776 = vrot.lane.b32.xlu0 %v1533, 11
    %v1777 = vpop.permute.xlu0 %1776
    %1778 = vrot.lane.b32.xlu0 %v1540, 11
    %v1779 = vpop.permute.xlu0 %1778
    %1780 = vrot.lane.b32.xlu0 %v1555, 11
    %v1781 = vpop.permute.xlu0 %1780
    %1782 = vrot.lane.b32.xlu0 %v1556, 11
    %v1783 = vpop.permute.xlu0 %1782
    %1784 = vrot.lane.b32.xlu0 %v1544, 11
    %v1785 = vpop.permute.xlu0 %1784
    %1786 = vrot.lane.b32.xlu0 %v1557, 11
    %v1787 = vpop.permute.xlu0 %1786
    %1788 = vrot.lane.b32.xlu0 %v1558, 11
    %v1789 = vpop.permute.xlu0 %1788
    %1790 = vrot.lane.b32.xlu0 %v1548, 11
    %v1791 = vpop.permute.xlu0 %1790
    %1792 = vrot.lane.b32.xlu0 %v1559, 11
    %v1793 = vpop.permute.xlu0 %1792
    %1794 = vrot.lane.b32.xlu0 %v1560, 11
    %v1795 = vpop.permute.xlu0 %1794
    %1796 = vrot.lane.b32.xlu0 %v1552, 11
    %v1797 = vpop.permute.xlu0 %1796
    %1798 = vrot.lane.b32.xlu0 %v1561, 11
    %v1799 = vpop.permute.xlu0 %1798
    %1800 = vrot.lane.b32.xlu0 %v1562, 11
    %v1801 = vpop.permute.xlu0 %1800
    %1802 = vrot.lane.b32.xlu0 %v1564, 11
    %v1803 = vpop.permute.xlu0 %1802
    %1804 = vrot.lane.b32.xlu0 %v1582, 11
    %v1805 = vpop.permute.xlu0 %1804
    %1806 = vrot.lane.b32.xlu0 %v1583, 11
    %v1807 = vpop.permute.xlu0 %1806
    %1808 = vrot.lane.b32.xlu0 %v1570, 11
    %v1809 = vpop.permute.xlu0 %1808
    %1810 = vrot.lane.b32.xlu0 %v1584, 11
    %v1811 = vpop.permute.xlu0 %1810
    %1812 = vrot.lane.b32.xlu0 %v1585, 11
    %v1813 = vpop.permute.xlu0 %1812
    %1814 = vrot.lane.b32.xlu0 %v1574, 11
    %v1815 = vpop.permute.xlu0 %1814
    %1816 = vrot.lane.b32.xlu0 %v1586, 11
    %v1817 = vpop.permute.xlu0 %1816
    %1818 = vrot.lane.b32.xlu0 %v1587, 11
    %v1819 = vpop.permute.xlu0 %1818
    %1820 = vrot.lane.b32.xlu0 %v1578, 11
    %v1821 = vpop.permute.xlu0 %1820
    %1822 = vrot.lane.b32.xlu0 %v1588, 11
    %v1823 = vpop.permute.xlu0 %1822
    %1824 = vrot.lane.b32.xlu0 %v1589, 11
    %v1825 = vpop.permute.xlu0 %1824
    %1826 = vrot.lane.b32.xlu0 %v1591, 11
    %v1827 = vpop.permute.xlu0 %1826
    %1828 = vrot.lane.b32.xlu0 %v1609, 11
    %v1829 = vpop.permute.xlu0 %1828
    %1830 = vrot.lane.b32.xlu0 %v1610, 11
    %v1831 = vpop.permute.xlu0 %1830
    %1832 = vrot.lane.b32.xlu0 %v1597, 11
    %v1833 = vpop.permute.xlu0 %1832
    %1834 = vrot.lane.b32.xlu0 %v1611, 11
    %v1835 = vpop.permute.xlu0 %1834
    %1836 = vrot.lane.b32.xlu0 %v1612, 11
    %v1837 = vpop.permute.xlu0 %1836
    %1838 = vrot.lane.b32.xlu0 %v1601, 11
    %v1839 = vpop.permute.xlu0 %1838
    %1840 = vrot.lane.b32.xlu0 %v1613, 11
    %v1841 = vpop.permute.xlu0 %1840
    %1842 = vrot.lane.b32.xlu0 %v1614, 11
    %v1843 = vpop.permute.xlu0 %1842
    %1844 = vrot.lane.b32.xlu0 %v1605, 11
    %v1845 = vpop.permute.xlu0 %1844
    %1846 = vrot.lane.b32.xlu0 %v1615, 11
    %v1847 = vpop.permute.xlu0 %1846
    %1848 = vrot.lane.b32.xlu0 %v1616, 11
    %v1849 = vpop.permute.xlu0 %1848
    %1850 = vrot.lane.b32.xlu0 %v1618, 11
    %v1851 = vpop.permute.xlu0 %1850
    %1852 = vrot.lane.b32.xlu0 %v1636, 11
    %v1853 = vpop.permute.xlu0 %1852
    %1854 = vrot.lane.b32.xlu0 %v1637, 11
    %v1855 = vpop.permute.xlu0 %1854
    %1856 = vrot.lane.b32.xlu0 %v1624, 11
    %v1857 = vpop.permute.xlu0 %1856
    %1858 = vrot.lane.b32.xlu0 %v1638, 11
    %v1859 = vpop.permute.xlu0 %1858
    %1860 = vrot.lane.b32.xlu0 %v1639, 11
    %v1861 = vpop.permute.xlu0 %1860
    %1862 = vrot.lane.b32.xlu0 %v1628, 11
    %v1863 = vpop.permute.xlu0 %1862
    %1864 = vrot.lane.b32.xlu0 %v1640, 11
    %v1865 = vpop.permute.xlu0 %1864
    %1866 = vrot.lane.b32.xlu0 %v1641, 11
    %v1867 = vpop.permute.xlu0 %1866
    %1868 = vrot.lane.b32.xlu0 %v1632, 11
    %v1869 = vpop.permute.xlu0 %1868
    %1870 = vrot.lane.b32.xlu0 %v1642, 11
    %v1871 = vpop.permute.xlu0 %1870
    %1872 = vrot.lane.b32.xlu0 %v1643, 11
    %v1873 = vpop.permute.xlu0 %1872
    %vm1874 = vcmask 89088
    %v1875 = vsel %vm1874, %v1665, %v1667
    %v1876 = vsel %vm1874, %v1667, %v1669
    %v1877 = vsel %vm1874, %v1665, %v1671
    %v1878 = vsel %vm1874, %v1671, %v1673
    %v1879 = vsel %vm1874, %v1665, %v1675
    %v1880 = vsel %vm1874, %v1675, %v1677
    %v1881 = vsel %vm1874, %v1665, %v1679
    %v1882 = vsel %vm1874, %v1679, %v1681
    %v1883 = vsel %vm1874, %v1683, %v1685
    %v1884 = vsel %vm1874, %v1685, %v1687
    %v1885 = vsel %vm1874, %v1689, %v1691
    %v1886 = vsel %vm1874, %v1691, %v1693
    %v1887 = vsel %vm1874, %v1695, %v1697
    %v1888 = vsel %vm1874, %v1697, %v1699
    %v1889 = vsel %vm1874, %v1701, %v1703
    %v1890 = vsel %vm1874, %v1703, %v1705
    %v1891 = vsel %vm1874, %v1707, %v1709
    %v1892 = vsel %vm1874, %v1709, %v1711
    %v1893 = vsel %vm1874, %v1713, %v1715
    %v1894 = vsel %vm1874, %v1715, %v1717
    %v1895 = vsel %vm1874, %v1719, %v1721
    %v1896 = vsel %vm1874, %v1721, %v1723
    %v1897 = vsel %vm1874, %v1725, %v1727
    %v1898 = vsel %vm1874, %v1727, %v1729
    %v1899 = vsel %vm1874, %v1731, %v1733
    %v1900 = vsel %vm1874, %v1733, %v1735
    %v1901 = vsel %vm1874, %v1737, %v1739
    %v1902 = vsel %vm1874, %v1739, %v1741
    %v1903 = vsel %vm1874, %v1743, %v1745
    %v1904 = vsel %vm1874, %v1745, %v1747
    %v1905 = vsel %vm1874, %v1749, %v1751
    %v1906 = vsel %vm1874, %v1751, %v1753
    %v1907 = vsel %vm1874, %v1755, %v1757
    %v1908 = vsel %vm1874, %v1757, %v1759
    %v1909 = vsel %vm1874, %v1761, %v1763
    %v1910 = vsel %vm1874, %v1763, %v1765
    %v1911 = vsel %vm1874, %v1767, %v1769
    %v1912 = vsel %vm1874, %v1769, %v1771
    %v1913 = vsel %vm1874, %v1773, %v1775
    %v1914 = vsel %vm1874, %v1775, %v1777
    %v1915 = vsel %vm1874, %v1779, %v1781
    %v1916 = vsel %vm1874, %v1781, %v1783
    %v1917 = vsel %vm1874, %v1785, %v1787
    %v1918 = vsel %vm1874, %v1787, %v1789
    %v1919 = vsel %vm1874, %v1791, %v1793
    %v1920 = vsel %vm1874, %v1793, %v1795
    %v1921 = vsel %vm1874, %v1797, %v1799
    %v1922 = vsel %vm1874, %v1799, %v1801
    %v1923 = vsel %vm1874, %v1803, %v1805
    %v1924 = vsel %vm1874, %v1805, %v1807
    %v1925 = vsel %vm1874, %v1809, %v1811
    %v1926 = vsel %vm1874, %v1811, %v1813
    %v1927 = vsel %vm1874, %v1815, %v1817
    %v1928 = vsel %vm1874, %v1817, %v1819
    %v1929 = vsel %vm1874, %v1821, %v1823
    %v1930 = vsel %vm1874, %v1823, %v1825
    %v1931 = vsel %vm1874, %v1827, %v1829
    %v1932 = vsel %vm1874, %v1829, %v1831
    %v1933 = vsel %vm1874, %v1833, %v1835
    %v1934 = vsel %vm1874, %v1835, %v1837
    %v1935 = vsel %vm1874, %v1839, %v1841
    %v1936 = vsel %vm1874, %v1841, %v1843
    %v1937 = vsel %vm1874, %v1845, %v1847
    %v1938 = vsel %vm1874, %v1847, %v1849
    %v1939 = vsel %vm1874, %v1851, %v1853
    %v1940 = vsel %vm1874, %v1853, %v1855
    %v1941 = vsel %vm1874, %v1857, %v1859
    %v1942 = vsel %vm1874, %v1859, %v1861
    %v1943 = vsel %vm1874, %v1863, %v1865
    %v1944 = vsel %vm1874, %v1865, %v1867
    %v1945 = vsel %vm1874, %v1869, %v1871
    %v1946 = vsel %vm1874, %v1871, %v1873
    %v2020 = vsel %vm477, %v1315, 0
    %v2023 = vsel %vm477, %v1318, 0
    %v2026 = vsel %vm477, %v1321, 0
    %v2029 = vsel %vm477, %v1324, 0
    %2031 = vmatprep.subr.mxu0 %v1876
    %2032 = vmatpush1.msra.mxu0 %v1875
    %2033 = vmatprep.subr.mxu0 %v1878
    %2034 = vmatpush1.msra.mxu0 %v1877
    %2035 = vmatprep.subr.mxu0 %v1880
    %2036 = vmatpush1.msra.mxu0 %v1879
    %2037 = vmatprep.subr.mxu0 %v1882
    %2038 = vmatpush1.msra.mxu0 %v1881
    %2039 = vmatprep.subr.mxu0 %v1884
    %2040 = vmatpush1.msra.mxu0 %v1883
    %2041 = vmatprep.subr.mxu0 %v1886
    %2042 = vmatpush1.msra.mxu0 %v1885
    %2043 = vmatprep.subr.mxu0 %v1888
    %2044 = vmatpush1.msra.mxu0 %v1887
    %2045 = vmatprep.subr.mxu0 %v1890
    %2046 = vmatpush1.msra.mxu0 %v1889
    %2047 = vmatprep.subr.mxu0 %v1892
    %2048 = vmatpush1.msra.mxu0 %v1891
    %2049 = vmatprep.subr.mxu0 %v1894
    %2050 = vmatpush1.msra.mxu0 %v1893
    %2051 = vmatprep.subr.mxu0 %v1896
    %2052 = vmatpush1.msra.mxu0 %v1895
    %2053 = vmatprep.subr.mxu0 %v1898
    %2054 = vmatpush1.msra.mxu0 %v1897
    %2055 = vmatprep.subr.mxu0 %v1900
    %2056 = vmatpush1.msra.mxu0 %v1899
    %2057 = vmatprep.subr.mxu0 %v1902
    %2058 = vmatpush1.msra.mxu0 %v1901
    %2059 = vmatprep.subr.mxu0 %v1904
    %2060 = vmatpush1.msra.mxu0 %v1903
    %2061 = vmatprep.subr.mxu0 %v1906
    %2062 = vmatpush1.msra.mxu0 %v1905
    %2063 = vmatprep.subr.mxu0 %v1908
    %2064 = vmatpush1.msra.mxu0 %v1907
    %2065 = vmatprep.subr.mxu0 %v1910
    %2066 = vmatpush1.msra.mxu0 %v1909
    %2067 = vmatprep.subr.mxu0 %v1912
    %2068 = vmatpush1.msra.mxu0 %v1911
    %2069 = vmatprep.subr.mxu0 %v1914
    %2070 = vmatpush1.msra.mxu0 %v1913
    %2071 = vmatprep.subr.mxu0 %v1916
    %2072 = vmatpush1.msra.mxu0 %v1915
    %2073 = vmatprep.subr.mxu0 %v1918
    %2074 = vmatpush1.msra.mxu0 %v1917
    %2075 = vmatprep.subr.mxu0 %v1920
    %2076 = vmatpush1.msra.mxu0 %v1919
    %2077 = vmatprep.subr.mxu0 %v1922
    %2078 = vmatpush1.msra.mxu0 %v1921
    %2079 = vmatprep.subr.mxu0 %v1924
    %2080 = vmatpush1.msra.mxu0 %v1923
    %2081 = vmatprep.subr.mxu0 %v1926
    %2082 = vmatpush1.msra.mxu0 %v1925
    %2083 = vmatprep.subr.mxu0 %v1928
    %2084 = vmatpush1.msra.mxu0 %v1927
    %2085 = vmatprep.subr.mxu0 %v1930
    %2086 = vmatpush1.msra.mxu0 %v1929
    %2087 = vmatprep.subr.mxu0 %v1932
    %2088 = vmatpush1.msra.mxu0 %v1931
    %2089 = vmatprep.subr.mxu0 %v1934
    %2090 = vmatpush1.msra.mxu0 %v1933
    %2091 = vmatprep.subr.mxu0 %v1936
    %2092 = vmatpush1.msra.mxu0 %v1935
    %2093 = vmatprep.subr.mxu0 %v1938
    %2094 = vmatpush1.msra.mxu0 %v1937
    %2095 = vmatprep.mubr.f32.mxu0 %v1314
    %2096 = vmatmul.mubr.f32.gmra.mrb[0].mxu0 %v1313
    %v2097 = vpop.f32.mrb[0].mxu0
    %v2098 = vadd.f32 %v1647, %v2097
    %v2099 = vpop.f32.mrb[0].mxu0
    %v2100 = vadd.f32 %v1647, %v2099
    %2101 = vmatprep.mubr.f32.mxu0 %v1317
    %2102 = vmatmul.mubr.f32.gmra.mrb[0].mxu0 %v1316
    %v2103 = vpop.f32.mrb[0].mxu0
    %v2104 = vadd.f32 %v1652, %v2103
    %v2105 = vpop.f32.mrb[0].mxu0
    %v2106 = vadd.f32 %v1652, %v2105
    %2107 = vmatprep.mubr.f32.mxu0 %v1320
    %2108 = vmatmul.mubr.f32.gmra.mrb[0].mxu0 %v1319
    %v2109 = vpop.f32.mrb[0].mxu0
    %v2110 = vadd.f32 %v1657, %v2109
    %v2111 = vpop.f32.mrb[0].mxu0
    %v2112 = vadd.f32 %v1657, %v2111
    %2113 = vmatprep.mubr.f32.mxu0 %v1323
    %2114 = vmatmul.mubr.f32.gmra.mrb[0].mxu0 %v1322
    %v2115 = vpop.f32.mrb[0].mxu0
    %v2116 = vadd.f32 %v1662, %v2115
    %v2117 = vpop.f32.mrb[0].mxu0
    %v2118 = vadd.f32 %v1662, %v2117
    %2119 = vdwg.mxu0
    %2120 = vmatprep.subr.mxu0 %v1940
    %2121 = vmatpush1.msra.mxu0 %v1939
    %2122 = vmatprep.subr.mxu0 %v1942
    %2123 = vmatpush1.msra.mxu0 %v1941
    %2124 = vmatprep.subr.mxu0 %v1944
    %2125 = vmatpush1.msra.mxu0 %v1943
    %2126 = vmatprep.subr.mxu0 %v1946
    %2127 = vmatpush1.msra.mxu0 %v1945
    %2128 = vmatprep.subr.mxu0 0.0
    %2129 = vmatpush1.msra.mxu0 0.0
    %2130 = vmatprep.subr.mxu0 0.0
    %2131 = vmatpush1.msra.mxu0 0.0
    %2132 = vmatprep.subr.mxu0 0.0
    %2133 = vmatpush1.msra.mxu0 0.0
    %2134 = vmatprep.subr.mxu0 0.0
    %2135 = vmatpush1.msra.mxu0 0.0
    %2136 = vmatprep.subr.mxu0 0.0
    %2137 = vmatpush1.msra.mxu0 0.0
    %2138 = vmatprep.subr.mxu0 0.0
    %2139 = vmatpush1.msra.mxu0 0.0
    %2140 = vmatprep.subr.mxu0 0.0
    %2141 = vmatpush1.msra.mxu0 0.0
    %2142 = vmatprep.subr.mxu0 0.0
    %2143 = vmatpush1.msra.mxu0 0.0
    %2144 = vmatprep.subr.mxu0 0.0
    %2145 = vmatpush1.msra.mxu0 0.0
    %2146 = vmatprep.subr.mxu0 0.0
    %2147 = vmatpush1.msra.mxu0 0.0
    %2148 = vmatprep.subr.mxu0 0.0
    %2149 = vmatpush1.msra.mxu0 0.0
    %2150 = vmatprep.subr.mxu0 0.0
    %2151 = vmatpush1.msra.mxu0 0.0
    %2152 = vmatprep.subr.mxu0 0.0
    %2153 = vmatpush1.msra.mxu0 0.0
    %2154 = vmatprep.subr.mxu0 0.0
    %2155 = vmatpush1.msra.mxu0 0.0
    %2156 = vmatprep.subr.mxu0 0.0
    %2157 = vmatpush1.msra.mxu0 0.0
    %2158 = vmatprep.subr.mxu0 0.0
    %2159 = vmatpush1.msra.mxu0 0.0
    %2160 = vmatprep.subr.mxu0 0.0
    %2161 = vmatpush1.msra.mxu0 0.0
    %2162 = vmatprep.subr.mxu0 0.0
    %2163 = vmatpush1.msra.mxu0 0.0
    %2164 = vmatprep.subr.mxu0 0.0
    %2165 = vmatpush1.msra.mxu0 0.0
    %2166 = vmatprep.subr.mxu0 0.0
    %2167 = vmatpush1.msra.mxu0 0.0
    %2168 = vmatprep.subr.mxu0 0.0
    %2169 = vmatpush1.msra.mxu0 0.0
    %2170 = vmatprep.subr.mxu0 0.0
    %2171 = vmatpush1.msra.mxu0 0.0
    %2172 = vmatprep.subr.mxu0 0.0
    %2173 = vmatpush1.msra.mxu0 0.0
    %2174 = vmatprep.subr.mxu0 0.0
    %2175 = vmatpush1.msra.mxu0 0.0
    %2176 = vmatprep.subr.mxu0 0.0
    %2177 = vmatpush1.msra.mxu0 0.0
    %2178 = vmatprep.subr.mxu0 0.0
    %2179 = vmatpush1.msra.mxu0 0.0
    %2180 = vmatprep.subr.mxu0 0.0
    %2181 = vmatpush1.msra.mxu0 0.0
    %2182 = vmatprep.subr.mxu0 0.0
    %2183 = vmatpush1.msra.mxu0 0.0
    %2184 = vmatprep.mubr.f32.mxu0 0.0
    %2185 = vmatmul.mubr.f32.gmra.mrb[0].mxu0 %v2020
    %v2186 = vpop.f32.mrb[0].mxu0
    %v2187 = vadd.f32 %v2098, %v2186
    %v2188 = vpop.f32.mrb[0].mxu0
    %v2189 = vadd.f32 %v2100, %v2188
    %2190 = vmatprep.mubr.f32.mxu0 0.0
    %2191 = vmatmul.mubr.f32.gmra.mrb[0].mxu0 %v2023
    %v2192 = vpop.f32.mrb[0].mxu0
    %v2193 = vadd.f32 %v2104, %v2192
    %v2194 = vpop.f32.mrb[0].mxu0
    %v2195 = vadd.f32 %v2106, %v2194
    %2196 = vmatprep.mubr.f32.mxu0 0.0
    %2197 = vmatmul.mubr.f32.gmra.mrb[0].mxu0 %v2026
    %v2198 = vpop.f32.mrb[0].mxu0
    %v2199 = vadd.f32 %v2110, %v2198
    %v2200 = vpop.f32.mrb[0].mxu0
    %v2201 = vadd.f32 %v2112, %v2200
    %2202 = vmatprep.mubr.f32.mxu0 0.0
    %2203 = vmatmul.mubr.f32.gmra.mrb[0].mxu0 %v2029
    %v2204 = vpop.f32.mrb[0].mxu0
    %v2205 = vadd.f32 %v2116, %v2204
    %v2206 = vpop.f32.mrb[0].mxu0
    %v2207 = vadd.f32 %v2118, %v2206
    %2208 = vdwg.mxu0
    %vm2209 = vcmp.gt.f32.partialorder %v2187, 0.0
    %vm2210 = vcmp.gt.f32.partialorder %v2189, 0.0
    %vm2211 = vcmp.gt.f32.partialorder %v2193, 0.0
    %vm2212 = vcmp.gt.f32.partialorder %v2195, 0.0
    %vm2213 = vcmp.gt.f32.partialorder %v2199, 0.0
    %vm2214 = vcmp.gt.f32.partialorder %v2201, 0.0
    %vm2215 = vcmp.gt.f32.partialorder %v2205, 0.0
    %vm2216 = vcmp.gt.f32.partialorder %v2207, 0.0
    %v2217 = vmul.f32 %v2187, 0.2
    %v2218 = vmul.f32 %v2189, 0.2
    %v2219 = vmul.f32 %v2193, 0.2
    %v2220 = vmul.f32 %v2195, 0.2
    %v2221 = vmul.f32 %v2199, 0.2
    %v2222 = vmul.f32 %v2201, 0.2
    %v2223 = vmul.f32 %v2205, 0.2
    %v2224 = vmul.f32 %v2207, 0.2
    %v2225 = vsel %vm2209, %v2187, %v2217
    %v2226 = vsel %vm2210, %v2189, %v2218
    %v2227 = vsel %vm2211, %v2193, %v2219
    %v2228 = vsel %vm2212, %v2195, %v2220
    %v2229 = vsel %vm2213, %v2199, %v2221
    %v2230 = vsel %vm2214, %v2201, %v2222
    %v2231 = vsel %vm2215, %v2205, %v2223
    %v2232 = vsel %vm2216, %v2207, %v2224
    %v2233 = vmul.f32 %v2225, %v2225
    %v2234 = vmul.f32 %v2226, %v2226
    %v2235 = vmul.f32 %v2227, %v2227
    %v2236 = vmul.f32 %v2228, %v2228
    %v2237 = vmul.f32 %v2229, %v2229
    %v2238 = vmul.f32 %v2230, %v2230
    %v2239 = vmul.f32 %v2231, %v2231
    %v2240 = vmul.f32 %v2232, %v2232
    %2241 = vmatprep.subr.mxu0 %v2234
    %2242 = vmatpush1.msra.mxu0 %v2233
    %2243 = vmatprep.subr.mxu0 %v2236
    %2244 = vmatpush1.msra.mxu0 %v2235
    %2245 = vmatprep.subr.mxu0 %v2238
    %2246 = vmatpush1.msra.mxu0 %v2237
    %2247 = vmatprep.subr.mxu0 %v2240
    %2248 = vmatpush1.msra.mxu0 %v2239
    %2249 = vmatprep.subr.mxu0 0.0
    %2250 = vmatpush1.msra.mxu0 0.0
    %2251 = vmatprep.subr.mxu0 0.0
    %2252 = vmatpush1.msra.mxu0 0.0
    %2253 = vmatprep.subr.mxu0 0.0
    %2254 = vmatpush1.msra.mxu0 0.0
    %2255 = vmatprep.subr.mxu0 0.0
    %2256 = vmatpush1.msra.mxu0 0.0
    %2257 = vmatprep.subr.mxu0 0.0
    %2258 = vmatpush1.msra.mxu0 0.0
    %2259 = vmatprep.subr.mxu0 0.0
    %2260 = vmatpush1.msra.mxu0 0.0
    %2261 = vmatprep.subr.mxu0 0.0
    %2262 = vmatpush1.msra.mxu0 0.0
    %2263 = vmatprep.subr.mxu0 0.0
    %2264 = vmatpush1.msra.mxu0 0.0
    %2265 = vmatprep.subr.mxu0 0.0
    %2266 = vmatpush1.msra.mxu0 0.0
    %2267 = vmatprep.subr.mxu0 0.0
    %2268 = vmatpush1.msra.mxu0 0.0
    %2269 = vmatprep.subr.mxu0 0.0
    %2270 = vmatpush1.msra.mxu0 0.0
    %2271 = vmatprep.subr.mxu0 0.0
    %2272 = vmatpush1.msra.mxu0 0.0
    %2273 = vmatprep.subr.mxu0 0.0
    %2274 = vmatpush1.msra.mxu0 0.0
    %2275 = vmatprep.subr.mxu0 0.0
    %2276 = vmatpush1.msra.mxu0 0.0
    %2277 = vmatprep.subr.mxu0 0.0
    %2278 = vmatpush1.msra.mxu0 0.0
    %2279 = vmatprep.subr.mxu0 0.0
    %2280 = vmatpush1.msra.mxu0 0.0
    %2281 = vmatprep.subr.mxu0 0.0
    %2282 = vmatpush1.msra.mxu0 0.0
    %2283 = vmatprep.subr.mxu0 0.0
    %2284 = vmatpush1.msra.mxu0 0.0
    %2285 = vmatprep.subr.mxu0 0.0
    %2286 = vmatpush1.msra.mxu0 0.0
    %2287 = vmatprep.subr.mxu0 0.0
    %2288 = vmatpush1.msra.mxu0 0.0
    %2289 = vmatprep.subr.mxu0 0.0
    %2290 = vmatpush1.msra.mxu0 0.0
    %2291 = vmatprep.subr.mxu0 0.0
    %2292 = vmatpush1.msra.mxu0 0.0
    %2293 = vmatprep.subr.mxu0 0.0
    %2294 = vmatpush1.msra.mxu0 0.0
    %2295 = vmatprep.subr.mxu0 0.0
    %2296 = vmatpush1.msra.mxu0 0.0
    %2297 = vmatprep.subr.mxu0 0.0
    %2298 = vmatpush1.msra.mxu0 0.0
    %2299 = vmatprep.subr.mxu0 0.0
    %2300 = vmatpush1.msra.mxu0 0.0
    %2301 = vmatprep.subr.mxu0 0.0
    %2302 = vmatpush1.msra.mxu0 0.0
    %2303 = vmatprep.subr.mxu0 0.0
    %2304 = vmatpush1.msra.mxu0 0.0
    %2305 = vmatprep.mubr.f32.mxu0 0.0
    %2306 = vmatmul.mubr.f32.gmra.mrb[0].mxu0 %v479
    %v2307 = vpop.f32.mrb[0].mxu0
    %v2308 = vadd.f32 1e-08, %v2307
    %v2309 = vpop.f32.mrb[0].mxu0
    %v2310 = vadd.f32 1e-08, %v2309
    %2311 = vdwg.mxu0
    %v2312 = vrsqrt.pop %v2308
    %v2313 = vrsqrt.pop %v2310
    %v2314 = vlaneseq
    %v2315 = vshrl.u32 %v2314, 7
    %v2316 = vsub.s32 0, %v2315
    %v2317 = vrot.slane %v2312, %v2316
    %v2318 = vlaneseq
    %v2319 = vshrl.u32 %v2318, 7
    %v2320 = vsub.s32 0, %v2319
    %v2321 = vrot.slane %v2313, %v2320
    %v2322 = vmul.f32 %v2225, %v2317
    %v2323 = vmul.f32 %v2226, %v2321
    %v2324 = vmul.f32 %v2227, %v2317
    %v2325 = vmul.f32 %v2228, %v2321
    %v2326 = vmul.f32 %v2229, %v2317
    %v2327 = vmul.f32 %v2230, %v2321
    %v2328 = vmul.f32 %v2231, %v2317
    %v2329 = vmul.f32 %v2232, %v2321
    %v2331 = vlaneseq
    %v2332 = vshrl.u32 %v2331, 7
    %v2333 = vsub.s32 0, %v2332
    %v2334 = vrot.slane %v1345, %v2333
    %v2335 = vlaneseq
    %v2336 = vshrl.u32 %v2335, 7
    %v2337 = vsub.s32 1, %v2336
    %v2338 = vrot.slane %v1345, %v2337
    %v2341 = vmul.f32 %v2322, %v2334
    %v2342 = vmul.f32 %v2323, %v2338
    %v2343 = vmul.f32 %v2324, %v2334
    %v2344 = vmul.f32 %v2325, %v2338
    %v2345 = vmul.f32 %v2326, %v2334
    %v2346 = vmul.f32 %v2327, %v2338
    %v2347 = vmul.f32 %v2328, %v2334
    %v2348 = vmul.f32 %v2329, %v2338
    %2357 = vrot.lane.b32.xlu0 %v2341, 127
    %v2358 = vpop.permute.xlu0 %2357
    %2359 = vrot.lane.b32.xlu0 %v2342, 127
    %v2360 = vpop.permute.xlu0 %2359
    %2361 = vrot.lane.b32.xlu0 %v2343, 127
    %v2362 = vpop.permute.xlu0 %2361
    %2363 = vrot.lane.b32.xlu0 %v2344, 127
    %v2364 = vpop.permute.xlu0 %2363
    %2365 = vrot.lane.b32.xlu0 %v2345, 127
    %v2366 = vpop.permute.xlu0 %2365
    %2367 = vrot.lane.b32.xlu0 %v2346, 127
    %v2368 = vpop.permute.xlu0 %2367
    %2369 = vrot.lane.b32.xlu0 %v2347, 127
    %v2370 = vpop.permute.xlu0 %2369
    %2371 = vrot.lane.b32.xlu0 %v2348, 127
    %v2372 = vpop.permute.xlu0 %2371
    %v2373 = vsel %vm672, %v663, %v2358
    %v2374 = vsel %vm672, %v2358, %v2360
    %v2375 = vsel %vm672, %v663, %v2362
    %v2376 = vsel %vm672, %v2362, %v2364
    %v2377 = vsel %vm672, %v663, %v2366
    %v2378 = vsel %vm672, %v2366, %v2368
    %v2379 = vsel %vm672, %v663, %v2370
    %v2380 = vsel %vm672, %v2370, %v2372
    %2381 = vrot.lane.b32.xlu0 %v2341, 126
    %v2382 = vpop.permute.xlu0 %2381
    %2383 = vrot.lane.b32.xlu0 %v2342, 126
    %v2384 = vpop.permute.xlu0 %2383
    %2385 = vrot.lane.b32.xlu0 %v2343, 126
    %v2386 = vpop.permute.xlu0 %2385
    %2387 = vrot.lane.b32.xlu0 %v2344, 126
    %v2388 = vpop.permute.xlu0 %2387
    %2389 = vrot.lane.b32.xlu0 %v2345, 126
    %v2390 = vpop.permute.xlu0 %2389
    %2391 = vrot.lane.b32.xlu0 %v2346, 126
    %v2392 = vpop.permute.xlu0 %2391
    %2393 = vrot.lane.b32.xlu0 %v2347, 126
    %v2394 = vpop.permute.xlu0 %2393
    %2395 = vrot.lane.b32.xlu0 %v2348, 126
    %v2396 = vpop.permute.xlu0 %2395
    %v2397 = vsel %vm687, %v678, %v2382
    %v2398 = vsel %vm687, %v2382, %v2384
    %v2399 = vsel %vm687, %v678, %v2386
    %v2400 = vsel %vm687, %v2386, %v2388
    %v2401 = vsel %vm687, %v678, %v2390
    %v2402 = vsel %vm687, %v2390, %v2392
    %v2403 = vsel %vm687, %v678, %v2394
    %v2404 = vsel %vm687, %v2394, %v2396
    %2405 = vrot.lane.b32.xlu0 %v2341, 118
    %v2406 = vpop.permute.xlu0 %2405
    %2407 = vrot.lane.b32.xlu0 %v2342, 118
    %v2408 = vpop.permute.xlu0 %2407
    %2409 = vrot.lane.b32.xlu0 %v2343, 118
    %v2410 = vpop.permute.xlu0 %2409
    %2411 = vrot.lane.b32.xlu0 %v2344, 118
    %v2412 = vpop.permute.xlu0 %2411
    %2413 = vrot.lane.b32.xlu0 %v2345, 118
    %v2414 = vpop.permute.xlu0 %2413
    %2415 = vrot.lane.b32.xlu0 %v2346, 118
    %v2416 = vpop.permute.xlu0 %2415
    %2417 = vrot.lane.b32.xlu0 %v2347, 118
    %v2418 = vpop.permute.xlu0 %2417
    %2419 = vrot.lane.b32.xlu0 %v2348, 118
    %v2420 = vpop.permute.xlu0 %2419
    %v2421 = vsel %vm1509, %v1492, %v2406
    %v2422 = vsel %vm1509, %v2406, %v2408
    %v2423 = vsel %vm1509, %v1492, %v2410
    %v2424 = vsel %vm1509, %v2410, %v2412
    %v2425 = vsel %vm1509, %v1492, %v2414
    %v2426 = vsel %vm1509, %v2414, %v2416
    %v2427 = vsel %vm1509, %v1492, %v2418
    %v2428 = vsel %vm1509, %v2418, %v2420
    %2429 = vrot.lane.b32.xlu0 %v2341, 117
    %v2430 = vpop.permute.xlu0 %2429
    %2431 = vrot.lane.b32.xlu0 %v2342, 117
    %v2432 = vpop.permute.xlu0 %2431
    %2433 = vrot.lane.b32.xlu0 %v2343, 117
    %v2434 = vpop.permute.xlu0 %2433
    %2435 = vrot.lane.b32.xlu0 %v2344, 117
    %v2436 = vpop.permute.xlu0 %2435
    %2437 = vrot.lane.b32.xlu0 %v2345, 117
    %v2438 = vpop.permute.xlu0 %2437
    %2439 = vrot.lane.b32.xlu0 %v2346, 117
    %v2440 = vpop.permute.xlu0 %2439
    %2441 = vrot.lane.b32.xlu0 %v2347, 117
    %v2442 = vpop.permute.xlu0 %2441
    %2443 = vrot.lane.b32.xlu0 %v2348, 117
    %v2444 = vpop.permute.xlu0 %2443
    %v2445 = vsel %vm1534, %v2430, %v2432
    %v2446 = vsel %vm1534, %v2434, %v2436
    %v2447 = vsel %vm1534, %v2438, %v2440
    %v2448 = vsel %vm1534, %v2442, %v2444
    %2449 = vrot.lane.b32.xlu0 %v2341, 116
    %v2450 = vpop.permute.xlu0 %2449
    %2451 = vrot.lane.b32.xlu0 %v2342, 116
    %v2452 = vpop.permute.xlu0 %2451
    %2453 = vrot.lane.b32.xlu0 %v2343, 116
    %v2454 = vpop.permute.xlu0 %2453
    %2455 = vrot.lane.b32.xlu0 %v2344, 116
    %v2456 = vpop.permute.xlu0 %2455
    %2457 = vrot.lane.b32.xlu0 %v2345, 116
    %v2458 = vpop.permute.xlu0 %2457
    %2459 = vrot.lane.b32.xlu0 %v2346, 116
    %v2460 = vpop.permute.xlu0 %2459
    %2461 = vrot.lane.b32.xlu0 %v2347, 116
    %v2462 = vpop.permute.xlu0 %2461
    %2463 = vrot.lane.b32.xlu0 %v2348, 116
    %v2464 = vpop.permute.xlu0 %2463
    %v2465 = vsel %vm740, %v2450, %v2452
    %v2466 = vsel %vm740, %v2452, %v733
    %v2467 = vsel %vm740, %v2454, %v2456
    %v2468 = vsel %vm740, %v2456, %v733
    %v2469 = vsel %vm740, %v2458, %v2460
    %v2470 = vsel %vm740, %v2460, %v733
    %v2471 = vsel %vm740, %v2462, %v2464
    %v2472 = vsel %vm740, %v2464, %v733
    %2473 = vrot.lane.b32.xlu0 %v2341, 108
    %v2474 = vpop.permute.xlu0 %2473
    %2475 = vrot.lane.b32.xlu0 %v2342, 108
    %v2476 = vpop.permute.xlu0 %2475
    %2477 = vrot.lane.b32.xlu0 %v2343, 108
    %v2478 = vpop.permute.xlu0 %2477
    %2479 = vrot.lane.b32.xlu0 %v2344, 108
    %v2480 = vpop.permute.xlu0 %2479
    %2481 = vrot.lane.b32.xlu0 %v2345, 108
    %v2482 = vpop.permute.xlu0 %2481
    %2483 = vrot.lane.b32.xlu0 %v2346, 108
    %v2484 = vpop.permute.xlu0 %2483
    %2485 = vrot.lane.b32.xlu0 %v2347, 108
    %v2486 = vpop.permute.xlu0 %2485
    %2487 = vrot.lane.b32.xlu0 %v2348, 108
    %v2488 = vpop.permute.xlu0 %2487
    %v2489 = vsel %vm1581, %v2474, %v2476
    %v2490 = vsel %vm1581, %v2476, %v1568
    %v2491 = vsel %vm1581, %v2478, %v2480
    %v2492 = vsel %vm1581, %v2480, %v1568
    %v2493 = vsel %vm1581, %v2482, %v2484
    %v2494 = vsel %vm1581, %v2484, %v1568
    %v2495 = vsel %vm1581, %v2486, %v2488
    %v2496 = vsel %vm1581, %v2488, %v1568
    %2497 = vrot.lane.b32.xlu0 %v2341, 107
    %v2498 = vpop.permute.xlu0 %2497
    %2499 = vrot.lane.b32.xlu0 %v2342, 107
    %v2500 = vpop.permute.xlu0 %2499
    %2501 = vrot.lane.b32.xlu0 %v2343, 107
    %v2502 = vpop.permute.xlu0 %2501
    %2503 = vrot.lane.b32.xlu0 %v2344, 107
    %v2504 = vpop.permute.xlu0 %2503
    %2505 = vrot.lane.b32.xlu0 %v2345, 107
    %v2506 = vpop.permute.xlu0 %2505
    %2507 = vrot.lane.b32.xlu0 %v2346, 107
    %v2508 = vpop.permute.xlu0 %2507
    %2509 = vrot.lane.b32.xlu0 %v2347, 107
    %v2510 = vpop.permute.xlu0 %2509
    %2511 = vrot.lane.b32.xlu0 %v2348, 107
    %v2512 = vpop.permute.xlu0 %2511
    %v2513 = vsel %vm1608, %v2498, %v2500
    %v2514 = vsel %vm1608, %v2500, %v1595
    %v2515 = vsel %vm1608, %v2502, %v2504
    %v2516 = vsel %vm1608, %v2504, %v1595
    %v2517 = vsel %vm1608, %v2506, %v2508
    %v2518 = vsel %vm1608, %v2508, %v1595
    %v2519 = vsel %vm1608, %v2510, %v2512
    %v2520 = vsel %vm1608, %v2512, %v1595
    %2521 = vrot.lane.b32.xlu0 %v2341, 106
    %v2522 = vpop.permute.xlu0 %2521
    %2523 = vrot.lane.b32.xlu0 %v2342, 106
    %v2524 = vpop.permute.xlu0 %2523
    %2525 = vrot.lane.b32.xlu0 %v2343, 106
    %v2526 = vpop.permute.xlu0 %2525
    %2527 = vrot.lane.b32.xlu0 %v2344, 106
    %v2528 = vpop.permute.xlu0 %2527
    %2529 = vrot.lane.b32.xlu0 %v2345, 106
    %v2530 = vpop.permute.xlu0 %2529
    %2531 = vrot.lane.b32.xlu0 %v2346, 106
    %v2532 = vpop.permute.xlu0 %2531
    %2533 = vrot.lane.b32.xlu0 %v2347, 106
    %v2534 = vpop.permute.xlu0 %2533
    %2535 = vrot.lane.b32.xlu0 %v2348, 106
    %v2536 = vpop.permute.xlu0 %2535
    %v2537 = vsel %vm1635, %v2522, %v2524
    %v2538 = vsel %vm1635, %v2524, %v1622
    %v2539 = vsel %vm1635, %v2526, %v2528
    %v2540 = vsel %vm1635, %v2528, %v1622
    %v2541 = vsel %vm1635, %v2530, %v2532
    %v2542 = vsel %vm1635, %v2532, %v1622
    %v2543 = vsel %vm1635, %v2534, %v2536
    %v2544 = vsel %vm1635, %v2536, %v1622
    %2546 = vset.pattern.permute.xlu0 0
    %2547 = vperm.xlu0 %2546, %v1341
    %v2548 = vpop.permute.xlu0 %2547
    %2551 = vset.pattern.permute.xlu0 0
    %2552 = vperm.xlu0 %2551, %v1342
    %v2553 = vpop.permute.xlu0 %2552
    %2556 = vset.pattern.permute.xlu0 0
    %2557 = vperm.xlu0 %2556, %v1343
    %v2558 = vpop.permute.xlu0 %2557
    %2561 = vset.pattern.permute.xlu0 0
    %2562 = vperm.xlu0 %2561, %v1344
    %v2563 = vpop.permute.xlu0 %2562
    %2565 = vrot.lane.b32.xlu0 %v2341, 11
    %v2566 = vpop.permute.xlu0 %2565
    %2567 = vrot.lane.b32.xlu0 %v2342, 11
    %v2568 = vpop.permute.xlu0 %2567
    %2569 = vrot.lane.b32.xlu0 %v2343, 11
    %v2570 = vpop.permute.xlu0 %2569
    %2571 = vrot.lane.b32.xlu0 %v2344, 11
    %v2572 = vpop.permute.xlu0 %2571
    %2573 = vrot.lane.b32.xlu0 %v2345, 11
    %v2574 = vpop.permute.xlu0 %2573
    %2575 = vrot.lane.b32.xlu0 %v2346, 11
    %v2576 = vpop.permute.xlu0 %2575
    %2577 = vrot.lane.b32.xlu0 %v2347, 11
    %v2578 = vpop.permute.xlu0 %2577
    %2579 = vrot.lane.b32.xlu0 %v2348, 11
    %v2580 = vpop.permute.xlu0 %2579
    %2581 = vrot.lane.b32.xlu0 %v2373, 11
    %v2582 = vpop.permute.xlu0 %2581
    %2583 = vrot.lane.b32.xlu0 %v2374, 11
    %v2584 = vpop.permute.xlu0 %2583
    %2585 = vrot.lane.b32.xlu0 %v2360, 11
    %v2586 = vpop.permute.xlu0 %2585
    %2587 = vrot.lane.b32.xlu0 %v2375, 11
    %v2588 = vpop.permute.xlu0 %2587
    %2589 = vrot.lane.b32.xlu0 %v2376, 11
    %v2590 = vpop.permute.xlu0 %2589
    %2591 = vrot.lane.b32.xlu0 %v2364, 11
    %v2592 = vpop.permute.xlu0 %2591
    %2593 = vrot.lane.b32.xlu0 %v2377, 11
    %v2594 = vpop.permute.xlu0 %2593
    %2595 = vrot.lane.b32.xlu0 %v2378, 11
    %v2596 = vpop.permute.xlu0 %2595
    %2597 = vrot.lane.b32.xlu0 %v2368, 11
    %v2598 = vpop.permute.xlu0 %2597
    %2599 = vrot.lane.b32.xlu0 %v2379, 11
    %v2600 = vpop.permute.xlu0 %2599
    %2601 = vrot.lane.b32.xlu0 %v2380, 11
    %v2602 = vpop.permute.xlu0 %2601
    %2603 = vrot.lane.b32.xlu0 %v2372, 11
    %v2604 = vpop.permute.xlu0 %2603
    %2605 = vrot.lane.b32.xlu0 %v2397, 11
    %v2606 = vpop.permute.xlu0 %2605
    %2607 = vrot.lane.b32.xlu0 %v2398, 11
    %v2608 = vpop.permute.xlu0 %2607
    %2609 = vrot.lane.b32.xlu0 %v2384, 11
    %v2610 = vpop.permute.xlu0 %2609
    %2611 = vrot.lane.b32.xlu0 %v2399, 11
    %v2612 = vpop.permute.xlu0 %2611
    %2613 = vrot.lane.b32.xlu0 %v2400, 11
    %v2614 = vpop.permute.xlu0 %2613
    %2615 = vrot.lane.b32.xlu0 %v2388, 11
    %v2616 = vpop.permute.xlu0 %2615
    %2617 = vrot.lane.b32.xlu0 %v2401, 11
    %v2618 = vpop.permute.xlu0 %2617
    %2619 = vrot.lane.b32.xlu0 %v2402, 11
    %v2620 = vpop.permute.xlu0 %2619
    %2621 = vrot.lane.b32.xlu0 %v2392, 11
    %v2622 = vpop.permute.xlu0 %2621
    %2623 = vrot.lane.b32.xlu0 %v2403, 11
    %v2624 = vpop.permute.xlu0 %2623
    %2625 = vrot.lane.b32.xlu0 %v2404, 11
    %v2626 = vpop.permute.xlu0 %2625
    %2627 = vrot.lane.b32.xlu0 %v2396, 11
    %v2628 = vpop.permute.xlu0 %2627
    %2629 = vrot.lane.b32.xlu0 %v2421, 11
    %v2630 = vpop.permute.xlu0 %2629
    %2631 = vrot.lane.b32.xlu0 %v2422, 11
    %v2632 = vpop.permute.xlu0 %2631
    %2633 = vrot.lane.b32.xlu0 %v2408, 11
    %v2634 = vpop.permute.xlu0 %2633
    %2635 = vrot.lane.b32.xlu0 %v2423, 11
    %v2636 = vpop.permute.xlu0 %2635
    %2637 = vrot.lane.b32.xlu0 %v2424, 11
    %v2638 = vpop.permute.xlu0 %2637
    %2639 = vrot.lane.b32.xlu0 %v2412, 11
    %v2640 = vpop.permute.xlu0 %2639
    %2641 = vrot.lane.b32.xlu0 %v2425, 11
    %v2642 = vpop.permute.xlu0 %2641
    %2643 = vrot.lane.b32.xlu0 %v2426, 11
    %v2644 = vpop.permute.xlu0 %2643
    %2645 = vrot.lane.b32.xlu0 %v2416, 11
    %v2646 = vpop.permute.xlu0 %2645
    %2647 = vrot.lane.b32.xlu0 %v2427, 11
    %v2648 = vpop.permute.xlu0 %2647
    %2649 = vrot.lane.b32.xlu0 %v2428, 11
    %v2650 = vpop.permute.xlu0 %2649
    %2651 = vrot.lane.b32.xlu0 %v2420, 11
    %v2652 = vpop.permute.xlu0 %2651
    %2653 = vrot.lane.b32.xlu0 %v2430, 11
    %v2654 = vpop.permute.xlu0 %2653
    %2655 = vrot.lane.b32.xlu0 %v2445, 11
    %v2656 = vpop.permute.xlu0 %2655
    %2657 = vrot.lane.b32.xlu0 %v2432, 11
    %v2658 = vpop.permute.xlu0 %2657
    %2659 = vrot.lane.b32.xlu0 %v2434, 11
    %v2660 = vpop.permute.xlu0 %2659
    %2661 = vrot.lane.b32.xlu0 %v2446, 11
    %v2662 = vpop.permute.xlu0 %2661
    %2663 = vrot.lane.b32.xlu0 %v2436, 11
    %v2664 = vpop.permute.xlu0 %2663
    %2665 = vrot.lane.b32.xlu0 %v2438, 11
    %v2666 = vpop.permute.xlu0 %2665
    %2667 = vrot.lane.b32.xlu0 %v2447, 11
    %v2668 = vpop.permute.xlu0 %2667
    %2669 = vrot.lane.b32.xlu0 %v2440, 11
    %v2670 = vpop.permute.xlu0 %2669
    %2671 = vrot.lane.b32.xlu0 %v2442, 11
    %v2672 = vpop.permute.xlu0 %2671
    %2673 = vrot.lane.b32.xlu0 %v2448, 11
    %v2674 = vpop.permute.xlu0 %2673
    %2675 = vrot.lane.b32.xlu0 %v2444, 11
    %v2676 = vpop.permute.xlu0 %2675
    %2677 = vrot.lane.b32.xlu0 %v2450, 11
    %v2678 = vpop.permute.xlu0 %2677
    %2679 = vrot.lane.b32.xlu0 %v2465, 11
    %v2680 = vpop.permute.xlu0 %2679
    %2681 = vrot.lane.b32.xlu0 %v2466, 11
    %v2682 = vpop.permute.xlu0 %2681
    %2683 = vrot.lane.b32.xlu0 %v2454, 11
    %v2684 = vpop.permute.xlu0 %2683
    %2685 = vrot.lane.b32.xlu0 %v2467, 11
    %v2686 = vpop.permute.xlu0 %2685
    %2687 = vrot.lane.b32.xlu0 %v2468, 11
    %v2688 = vpop.permute.xlu0 %2687
    %2689 = vrot.lane.b32.xlu0 %v2458, 11
    %v2690 = vpop.permute.xlu0 %2689
    %2691 = vrot.lane.b32.xlu0 %v2469, 11
    %v2692 = vpop.permute.xlu0 %2691
    %2693 = vrot.lane.b32.xlu0 %v2470, 11
    %v2694 = vpop.permute.xlu0 %2693
    %2695 = vrot.lane.b32.xlu0 %v2462, 11
    %v2696 = vpop.permute.xlu0 %2695
    %2697 = vrot.lane.b32.xlu0 %v2471, 11
    %v2698 = vpop.permute.xlu0 %2697
    %2699 = vrot.lane.b32.xlu0 %v2472, 11
    %v2700 = vpop.permute.xlu0 %2699
    %2701 = vrot.lane.b32.xlu0 %v2474, 11
    %v2702 = vpop.permute.xlu0 %2701
    %2703 = vrot.lane.b32.xlu0 %v2489, 11
    %v2704 = vpop.permute.xlu0 %2703
    %2705 = vrot.lane.b32.xlu0 %v2490, 11
    %v2706 = vpop.permute.xlu0 %2705
    %2707 = vrot.lane.b32.xlu0 %v2478, 11
    %v2708 = vpop.permute.xlu0 %2707
    %2709 = vrot.lane.b32.xlu0 %v2491, 11
    %v2710 = vpop.permute.xlu0 %2709
    %2711 = vrot.lane.b32.xlu0 %v2492, 11
    %v2712 = vpop.permute.xlu0 %2711
    %2713 = vrot.lane.b32.xlu0 %v2482, 11
    %v2714 = vpop.permute.xlu0 %2713
    %2715 = vrot.lane.b32.xlu0 %v2493, 11
    %v2716 = vpop.permute.xlu0 %2715
    %2717 = vrot.lane.b32.xlu0 %v2494, 11
    %v2718 = vpop.permute.xlu0 %2717
    %2719 = vrot.lane.b32.xlu0 %v2486, 11
    %v2720 = vpop.permute.xlu0 %2719
    %2721 = vrot.lane.b32.xlu0 %v2495, 11
    %v2722 = vpop.permute.xlu0 %2721
    %2723 = vrot.lane.b32.xlu0 %v2496, 11
    %v2724 = vpop.permute.xlu0 %2723
    %2725 = vrot.lane.b32.xlu0 %v2498, 11
    %v2726 = vpop.permute.xlu0 %2725
    %2727 = vrot.lane.b32.xlu0 %v2513, 11
    %v2728 = vpop.permute.xlu0 %2727
    %2729 = vrot.lane.b32.xlu0 %v2514, 11
    %v2730 = vpop.permute.xlu0 %2729
    %2731 = vrot.lane.b32.xlu0 %v2502, 11
    %v2732 = vpop.permute.xlu0 %2731
    %2733 = vrot.lane.b32.xlu0 %v2515, 11
    %v2734 = vpop.permute.xlu0 %2733
    %2735 = vrot.lane.b32.xlu0 %v2516, 11
    %v2736 = vpop.permute.xlu0 %2735
    %2737 = vrot.lane.b32.xlu0 %v2506, 11
    %v2738 = vpop.permute.xlu0 %2737
    %2739 = vrot.lane.b32.xlu0 %v2517, 11
    %v2740 = vpop.permute.xlu0 %2739
    %2741 = vrot.lane.b32.xlu0 %v2518, 11
    %v2742 = vpop.permute.xlu0 %2741
    %2743 = vrot.lane.b32.xlu0 %v2510, 11
    %v2744 = vpop.permute.xlu0 %2743
    %2745 = vrot.lane.b32.xlu0 %v2519, 11
    %v2746 = vpop.permute.xlu0 %2745
    %2747 = vrot.lane.b32.xlu0 %v2520, 11
    %v2748 = vpop.permute.xlu0 %2747
    %2749 = vrot.lane.b32.xlu0 %v2522, 11
    %v2750 = vpop.permute.xlu0 %2749
    %2751 = vrot.lane.b32.xlu0 %v2537, 11
    %v2752 = vpop.permute.xlu0 %2751
    %2753 = vrot.lane.b32.xlu0 %v2538, 11
    %v2754 = vpop.permute.xlu0 %2753
    %2755 = vrot.lane.b32.xlu0 %v2526, 11
    %v2756 = vpop.permute.xlu0 %2755
    %2757 = vrot.lane.b32.xlu0 %v2539, 11
    %v2758 = vpop.permute.xlu0 %2757
    %2759 = vrot.lane.b32.xlu0 %v2540, 11
    %v2760 = vpop.permute.xlu0 %2759
    %2761 = vrot.lane.b32.xlu0 %v2530, 11
    %v2762 = vpop.permute.xlu0 %2761
    %2763 = vrot.lane.b32.xlu0 %v2541, 11
    %v2764 = vpop.permute.xlu0 %2763
    %2765 = vrot.lane.b32.xlu0 %v2542, 11
    %v2766 = vpop.permute.xlu0 %2765
    %2767 = vrot.lane.b32.xlu0 %v2534, 11
    %v2768 = vpop.permute.xlu0 %2767
    %2769 = vrot.lane.b32.xlu0 %v2543, 11
    %v2770 = vpop.permute.xlu0 %2769
    %2771 = vrot.lane.b32.xlu0 %v2544, 11
    %v2772 = vpop.permute.xlu0 %2771
    %v2773 = vsel %vm1874, %v1665, %v2566
    %v2774 = vsel %vm1874, %v2566, %v2568
    %v2775 = vsel %vm1874, %v1665, %v2570
    %v2776 = vsel %vm1874, %v2570, %v2572
    %v2777 = vsel %vm1874, %v1665, %v2574
    %v2778 = vsel %vm1874, %v2574, %v2576
    %v2779 = vsel %vm1874, %v1665, %v2578
    %v2780 = vsel %vm1874, %v2578, %v2580
    %v2781 = vsel %vm1874, %v2582, %v2584
    %v2782 = vsel %vm1874, %v2584, %v2586
    %v2783 = vsel %vm1874, %v2588, %v2590
    %v2784 = vsel %vm1874, %v2590, %v2592
    %v2785 = vsel %vm1874, %v2594, %v2596
    %v2786 = vsel %vm1874, %v2596, %v2598
    %v2787 = vsel %vm1874, %v2600, %v2602
    %v2788 = vsel %vm1874, %v2602, %v2604
    %v2789 = vsel %vm1874, %v2606, %v2608
    %v2790 = vsel %vm1874, %v2608, %v2610
    %v2791 = vsel %vm1874, %v2612, %v2614
    %v2792 = vsel %vm1874, %v2614, %v2616
    %v2793 = vsel %vm1874, %v2618, %v2620
    %v2794 = vsel %vm1874, %v2620, %v2622
    %v2795 = vsel %vm1874, %v2624, %v2626
    %v2796 = vsel %vm1874, %v2626, %v2628
    %v2797 = vsel %vm1874, %v2630, %v2632
    %v2798 = vsel %vm1874, %v2632, %v2634
    %v2799 = vsel %vm1874, %v2636, %v2638
    %v2800 = vsel %vm1874, %v2638, %v2640
    %v2801 = vsel %vm1874, %v2642, %v2644
    %v2802 = vsel %vm1874, %v2644, %v2646
    %v2803 = vsel %vm1874, %v2648, %v2650
    %v2804 = vsel %vm1874, %v2650, %v2652
    %v2805 = vsel %vm1874, %v2654, %v2656
    %v2806 = vsel %vm1874, %v2656, %v2658
    %v2807 = vsel %vm1874, %v2660, %v2662
    %v2808 = vsel %vm1874, %v2662, %v2664
    %v2809 = vsel %vm1874, %v2666, %v2668
    %v2810 = vsel %vm1874, %v2668, %v2670
    %v2811 = vsel %vm1874, %v2672, %v2674
    %v2812 = vsel %vm1874, %v2674, %v2676
    %v2813 = vsel %vm1874, %v2678, %v2680
    %v2814 = vsel %vm1874, %v2680, %v2682
    %v2815 = vsel %vm1874, %v2684, %v2686
    %v2816 = vsel %vm1874, %v2686, %v2688
    %v2817 = vsel %vm1874, %v2690, %v2692
    %v2818 = vsel %vm1874, %v2692, %v2694
    %v2819 = vsel %vm1874, %v2696, %v2698
    %v2820 = vsel %vm1874, %v2698, %v2700
    %v2821 = vsel %vm1874, %v2702, %v2704
    %v2822 = vsel %vm1874, %v2704, %v2706
    %v2823 = vsel %vm1874, %v2708, %v2710
    %v2824 = vsel %vm1874, %v2710, %v2712
    %v2825 = vsel %vm1874, %v2714, %v2716
    %v2826 = vsel %vm1874, %v2716, %v2718
    %v2827 = vsel %vm1874, %v2720, %v2722
    %v2828 = vsel %vm1874, %v2722, %v2724
    %v2829 = vsel %vm1874, %v2726, %v2728
    %v2830 = vsel %vm1874, %v2728, %v2730
    %v2831 = vsel %vm1874, %v2732, %v2734
    %v2832 = vsel %vm1874, %v2734, %v2736
    %v2833 = vsel %vm1874, %v2738, %v2740
    %v2834 = vsel %vm1874, %v2740, %v2742
    %v2835 = vsel %vm1874, %v2744, %v2746
    %v2836 = vsel %vm1874, %v2746, %v2748
    %v2837 = vsel %vm1874, %v2750, %v2752
    %v2838 = vsel %vm1874, %v2752, %v2754
    %v2839 = vsel %vm1874, %v2756, %v2758
    %v2840 = vsel %vm1874, %v2758, %v2760
    %v2841 = vsel %vm1874, %v2762, %v2764
    %v2842 = vsel %vm1874, %v2764, %v2766
    %v2843 = vsel %vm1874, %v2768, %v2770
    %v2844 = vsel %vm1874, %v2770, %v2772
    %v2918 = vsel %vm477, %v1331, 0
    %v2921 = vsel %vm477, %v1334, 0
    %v2924 = vsel %vm477, %v1337, 0
    %v2927 = vsel %vm477, %v1340, 0
    %2929 = vmatprep.subr.mxu0 %v2774
    %2930 = vmatpush1.msra.mxu0 %v2773
    %2931 = vmatprep.subr.mxu0 %v2776
    %2932 = vmatpush1.msra.mxu0 %v2775
    %2933 = vmatprep.subr.mxu0 %v2778
    %2934 = vmatpush1.msra.mxu0 %v2777
    %2935 = vmatprep.subr.mxu0 %v2780
    %2936 = vmatpush1.msra.mxu0 %v2779
    %2937 = vmatprep.subr.mxu0 %v2782
    %2938 = vmatpush1.msra.mxu0 %v2781
    %2939 = vmatprep.subr.mxu0 %v2784
    %2940 = vmatpush1.msra.mxu0 %v2783
    %2941 = vmatprep.subr.mxu0 %v2786
    %2942 = vmatpush1.msra.mxu0 %v2785
    %2943 = vmatprep.subr.mxu0 %v2788
    %2944 = vmatpush1.msra.mxu0 %v2787
    %2945 = vmatprep.subr.mxu0 %v2790
    %2946 = vmatpush1.msra.mxu0 %v2789
    %2947 = vmatprep.subr.mxu0 %v2792
    %2948 = vmatpush1.msra.mxu0 %v2791
    %2949 = vmatprep.subr.mxu0 %v2794
    %2950 = vmatpush1.msra.mxu0 %v2793
    %2951 = vmatprep.subr.mxu0 %v2796
    %2952 = vmatpush1.msra.mxu0 %v2795
    %2953 = vmatprep.subr.mxu0 %v2798
    %2954 = vmatpush1.msra.mxu0 %v2797
    %2955 = vmatprep.subr.mxu0 %v2800
    %2956 = vmatpush1.msra.mxu0 %v2799
    %2957 = vmatprep.subr.mxu0 %v2802
    %2958 = vmatpush1.msra.mxu0 %v2801
    %2959 = vmatprep.subr.mxu0 %v2804
    %2960 = vmatpush1.msra.mxu0 %v2803
    %2961 = vmatprep.subr.mxu0 %v2806
    %2962 = vmatpush1.msra.mxu0 %v2805
    %2963 = vmatprep.subr.mxu0 %v2808
    %2964 = vmatpush1.msra.mxu0 %v2807
    %2965 = vmatprep.subr.mxu0 %v2810
    %2966 = vmatpush1.msra.mxu0 %v2809
    %2967 = vmatprep.subr.mxu0 %v2812
    %2968 = vmatpush1.msra.mxu0 %v2811
    %2969 = vmatprep.subr.mxu0 %v2814
    %2970 = vmatpush1.msra.mxu0 %v2813
    %2971 = vmatprep.subr.mxu0 %v2816
    %2972 = vmatpush1.msra.mxu0 %v2815
    %2973 = vmatprep.subr.mxu0 %v2818
    %2974 = vmatpush1.msra.mxu0 %v2817
    %2975 = vmatprep.subr.mxu0 %v2820
    %2976 = vmatpush1.msra.mxu0 %v2819
    %2977 = vmatprep.subr.mxu0 %v2822
    %2978 = vmatpush1.msra.mxu0 %v2821
    %2979 = vmatprep.subr.mxu0 %v2824
    %2980 = vmatpush1.msra.mxu0 %v2823
    %2981 = vmatprep.subr.mxu0 %v2826
    %2982 = vmatpush1.msra.mxu0 %v2825
    %2983 = vmatprep.subr.mxu0 %v2828
    %2984 = vmatpush1.msra.mxu0 %v2827
    %2985 = vmatprep.subr.mxu0 %v2830
    %2986 = vmatpush1.msra.mxu0 %v2829
    %2987 = vmatprep.subr.mxu0 %v2832
    %2988 = vmatpush1.msra.mxu0 %v2831
    %2989 = vmatprep.subr.mxu0 %v2834
    %2990 = vmatpush1.msra.mxu0 %v2833
    %2991 = vmatprep.subr.mxu0 %v2836
    %2992 = vmatpush1.msra.mxu0 %v2835
    %2993 = vmatprep.mubr.f32.mxu0 %v1330
    %2994 = vmatmul.mubr.f32.gmra.mrb[0].mxu0 %v1329
    %v2995 = vpop.f32.mrb[0].mxu0
    %v2996 = vadd.f32 %v2548, %v2995
    %v2997 = vpop.f32.mrb[0].mxu0
    %v2998 = vadd.f32 %v2548, %v2997
    %2999 = vmatprep.mubr.f32.mxu0 %v1333
    %3000 = vmatmul.mubr.f32.gmra.mrb[0].mxu0 %v1332
    %v3001 = vpop.f32.mrb[0].mxu0
    %v3002 = vadd.f32 %v2553, %v3001
    %v3003 = vpop.f32.mrb[0].mxu0
    %v3004 = vadd.f32 %v2553, %v3003
    %3005 = vmatprep.mubr.f32.mxu0 %v1336
    %3006 = vmatmul.mubr.f32.gmra.mrb[0].mxu0 %v1335
    %v3007 = vpop.f32.mrb[0].mxu0
    %v3008 = vadd.f32 %v2558, %v3007
    %v3009 = vpop.f32.mrb[0].mxu0
    %v3010 = vadd.f32 %v2558, %v3009
    %3011 = vmatprep.mubr.f32.mxu0 %v1339
    %3012 = vmatmul.mubr.f32.gmra.mrb[0].mxu0 %v1338
    %v3013 = vpop.f32.mrb[0].mxu0
    %v3014 = vadd.f32 %v2563, %v3013
    %v3015 = vpop.f32.mrb[0].mxu0
    %v3016 = vadd.f32 %v2563, %v3015
    %3017 = vdwg.mxu0
    %3018 = vmatprep.subr.mxu0 %v2838
    %3019 = vmatpush1.msra.mxu0 %v2837
    %3020 = vmatprep.subr.mxu0 %v2840
    %3021 = vmatpush1.msra.mxu0 %v2839
    %3022 = vmatprep.subr.mxu0 %v2842
    %3023 = vmatpush1.msra.mxu0 %v2841
    %3024 = vmatprep.subr.mxu0 %v2844
    %3025 = vmatpush1.msra.mxu0 %v2843
    %3026 = vmatprep.subr.mxu0 0.0
    %3027 = vmatpush1.msra.mxu0 0.0
    %3028 = vmatprep.subr.mxu0 0.0
    %3029 = vmatpush1.msra.mxu0 0.0
    %3030 = vmatprep.subr.mxu0 0.0
    %3031 = vmatpush1.msra.mxu0 0.0
    %3032 = vmatprep.subr.mxu0 0.0
    %3033 = vmatpush1.msra.mxu0 0.0
    %3034 = vmatprep.subr.mxu0 0.0
    %3035 = vmatpush1.msra.mxu0 0.0
    %3036 = vmatprep.subr.mxu0 0.0
    %3037 = vmatpush1.msra.mxu0 0.0
    %3038 = vmatprep.subr.mxu0 0.0
    %3039 = vmatpush1.msra.mxu0 0.0
    %3040 = vmatprep.subr.mxu0 0.0
    %3041 = vmatpush1.msra.mxu0 0.0
    %3042 = vmatprep.subr.mxu0 0.0
    %3043 = vmatpush1.msra.mxu0 0.0
    %3044 = vmatprep.subr.mxu0 0.0
    %3045 = vmatpush1.msra.mxu0 0.0
    %3046 = vmatprep.subr.mxu0 0.0
    %3047 = vmatpush1.msra.mxu0 0.0
    %3048 = vmatprep.subr.mxu0 0.0
    %3049 = vmatpush1.msra.mxu0 0.0
    %3050 = vmatprep.subr.mxu0 0.0
    %3051 = vmatpush1.msra.mxu0 0.0
    %3052 = vmatprep.subr.mxu0 0.0
    %3053 = vmatpush1.msra.mxu0 0.0
    %3054 = vmatprep.subr.mxu0 0.0
    %3055 = vmatpush1.msra.mxu0 0.0
    %3056 = vmatprep.subr.mxu0 0.0
    %3057 = vmatpush1.msra.mxu0 0.0
    %3058 = vmatprep.subr.mxu0 0.0
    %3059 = vmatpush1.msra.mxu0 0.0
    %3060 = vmatprep.subr.mxu0 0.0
    %3061 = vmatpush1.msra.mxu0 0.0
    %3062 = vmatprep.subr.mxu0 0.0
    %3063 = vmatpush1.msra.mxu0 0.0
    %3064 = vmatprep.subr.mxu0 0.0
    %3065 = vmatpush1.msra.mxu0 0.0
    %3066 = vmatprep.subr.mxu0 0.0
    %3067 = vmatpush1.msra.mxu0 0.0
    %3068 = vmatprep.subr.mxu0 0.0
    %3069 = vmatpush1.msra.mxu0 0.0
    %3070 = vmatprep.subr.mxu0 0.0
    %3071 = vmatpush1.msra.mxu0 0.0
    %3072 = vmatprep.subr.mxu0 0.0
    %3073 = vmatpush1.msra.mxu0 0.0
    %3074 = vmatprep.subr.mxu0 0.0
    %3075 = vmatpush1.msra.mxu0 0.0
    %3076 = vmatprep.subr.mxu0 0.0
    %3077 = vmatpush1.msra.mxu0 0.0
    %3078 = vmatprep.subr.mxu0 0.0
    %3079 = vmatpush1.msra.mxu0 0.0
    %3080 = vmatprep.subr.mxu0 0.0
    %3081 = vmatpush1.msra.mxu0 0.0
    %3082 = vmatprep.mubr.f32.mxu0 0.0
    %3083 = vmatmul.mubr.f32.gmra.mrb[0].mxu0 %v2918
    %v3084 = vpop.f32.mrb[0].mxu0
    %v3085 = vadd.f32 %v2996, %v3084
    %v3086 = vpop.f32.mrb[0].mxu0
    %v3087 = vadd.f32 %v2998, %v3086
    %3088 = vmatprep.mubr.f32.mxu0 0.0
    %3089 = vmatmul.mubr.f32.gmra.mrb[0].mxu0 %v2921
    %v3090 = vpop.f32.mrb[0].mxu0
    %v3091 = vadd.f32 %v3002, %v3090
    %v3092 = vpop.f32.mrb[0].mxu0
    %v3093 = vadd.f32 %v3004, %v3092
    %3094 = vmatprep.mubr.f32.mxu0 0.0
    %3095 = vmatmul.mubr.f32.gmra.mrb[0].mxu0 %v2924
    %v3096 = vpop.f32.mrb[0].mxu0
    %v3097 = vadd.f32 %v3008, %v3096
    %v3098 = vpop.f32.mrb[0].mxu0
    %v3099 = vadd.f32 %v3010, %v3098
    %3100 = vmatprep.mubr.f32.mxu0 0.0
    %3101 = vmatmul.mubr.f32.gmra.mrb[0].mxu0 %v2927
    %v3102 = vpop.f32.mrb[0].mxu0
    %v3103 = vadd.f32 %v3014, %v3102
    %v3104 = vpop.f32.mrb[0].mxu0
    %v3105 = vadd.f32 %v3016, %v3104
    %3106 = vdwg.mxu0
    %vm3107 = vcmp.gt.f32.partialorder %v3085, 0.0
    %vm3108 = vcmp.gt.f32.partialorder %v3087, 0.0
    %vm3109 = vcmp.gt.f32.partialorder %v3091, 0.0
    %vm3110 = vcmp.gt.f32.partialorder %v3093, 0.0
    %vm3111 = vcmp.gt.f32.partialorder %v3097, 0.0
    %vm3112 = vcmp.gt.f32.partialorder %v3099, 0.0
    %vm3113 = vcmp.gt.f32.partialorder %v3103, 0.0
    %vm3114 = vcmp.gt.f32.partialorder %v3105, 0.0
    %v3115 = vmul.f32 %v3085, 0.2
    %v3116 = vmul.f32 %v3087, 0.2
    %v3117 = vmul.f32 %v3091, 0.2
    %v3118 = vmul.f32 %v3093, 0.2
    %v3119 = vmul.f32 %v3097, 0.2
    %v3120 = vmul.f32 %v3099, 0.2
    %v3121 = vmul.f32 %v3103, 0.2
    %v3122 = vmul.f32 %v3105, 0.2
    %v3123 = vsel %vm3107, %v3085, %v3115
    %v3124 = vsel %vm3108, %v3087, %v3116
    %v3125 = vsel %vm3109, %v3091, %v3117
    %v3126 = vsel %vm3110, %v3093, %v3118
    %v3127 = vsel %vm3111, %v3097, %v3119
    %v3128 = vsel %vm3112, %v3099, %v3120
    %v3129 = vsel %vm3113, %v3103, %v3121
    %v3130 = vsel %vm3114, %v3105, %v3122
    %v3131 = vmul.f32 %v3123, %v3123
    %v3132 = vmul.f32 %v3124, %v3124
    %v3133 = vmul.f32 %v3125, %v3125
    %v3134 = vmul.f32 %v3126, %v3126
    %v3135 = vmul.f32 %v3127, %v3127
    %v3136 = vmul.f32 %v3128, %v3128
    %v3137 = vmul.f32 %v3129, %v3129
    %v3138 = vmul.f32 %v3130, %v3130
    %3139 = vmatprep.subr.mxu0 %v3132
    %3140 = vmatpush1.msra.mxu0 %v3131
    %3141 = vmatprep.subr.mxu0 %v3134
    %3142 = vmatpush1.msra.mxu0 %v3133
    %3143 = vmatprep.subr.mxu0 %v3136
    %3144 = vmatpush1.msra.mxu0 %v3135
    %3145 = vmatprep.subr.mxu0 %v3138
    %3146 = vmatpush1.msra.mxu0 %v3137
    %3147 = vmatprep.subr.mxu0 0.0
    %3148 = vmatpush1.msra.mxu0 0.0
    %3149 = vmatprep.subr.mxu0 0.0
    %3150 = vmatpush1.msra.mxu0 0.0
    %3151 = vmatprep.subr.mxu0 0.0
    %3152 = vmatpush1.msra.mxu0 0.0
    %3153 = vmatprep.subr.mxu0 0.0
    %3154 = vmatpush1.msra.mxu0 0.0
    %3155 = vmatprep.subr.mxu0 0.0
    %3156 = vmatpush1.msra.mxu0 0.0
    %3157 = vmatprep.subr.mxu0 0.0
    %3158 = vmatpush1.msra.mxu0 0.0
    %3159 = vmatprep.subr.mxu0 0.0
    %3160 = vmatpush1.msra.mxu0 0.0
    %3161 = vmatprep.subr.mxu0 0.0
    %3162 = vmatpush1.msra.mxu0 0.0
    %3163 = vmatprep.subr.mxu0 0.0
    %3164 = vmatpush1.msra.mxu0 0.0
    %3165 = vmatprep.subr.mxu0 0.0
    %3166 = vmatpush1.msra.mxu0 0.0
    %3167 = vmatprep.subr.mxu0 0.0
    %3168 = vmatpush1.msra.mxu0 0.0
    %3169 = vmatprep.subr.mxu0 0.0
    %3170 = vmatpush1.msra.mxu0 0.0
    %3171 = vmatprep.subr.mxu0 0.0
    %3172 = vmatpush1.msra.mxu0 0.0
    %3173 = vmatprep.subr.mxu0 0.0
    %3174 = vmatpush1.msra.mxu0 0.0
    %3175 = vmatprep.subr.mxu0 0.0
    %3176 = vmatpush1.msra.mxu0 0.0
    %3177 = vmatprep.subr.mxu0 0.0
    %3178 = vmatpush1.msra.mxu0 0.0
    %3179 = vmatprep.subr.mxu0 0.0
    %3180 = vmatpush1.msra.mxu0 0.0
    %3181 = vmatprep.subr.mxu0 0.0
    %3182 = vmatpush1.msra.mxu0 0.0
    %3183 = vmatprep.subr.mxu0 0.0
    %3184 = vmatpush1.msra.mxu0 0.0
    %3185 = vmatprep.subr.mxu0 0.0
    %3186 = vmatpush1.msra.mxu0 0.0
    %3187 = vmatprep.subr.mxu0 0.0
    %3188 = vmatpush1.msra.mxu0 0.0
    %3189 = vmatprep.subr.mxu0 0.0
    %3190 = vmatpush1.msra.mxu0 0.0
    %3191 = vmatprep.subr.mxu0 0.0
    %3192 = vmatpush1.msra.mxu0 0.0
    %3193 = vmatprep.subr.mxu0 0.0
    %3194 = vmatpush1.msra.mxu0 0.0
    %3195 = vmatprep.subr.mxu0 0.0
    %3196 = vmatpush1.msra.mxu0 0.0
    %3197 = vmatprep.subr.mxu0 0.0
    %3198 = vmatpush1.msra.mxu0 0.0
    %3199 = vmatprep.subr.mxu0 0.0
    %3200 = vmatpush1.msra.mxu0 0.0
    %3201 = vmatprep.subr.mxu0 0.0
    %3202 = vmatpush1.msra.mxu0 0.0
    %3203 = vmatprep.mubr.f32.mxu0 0.0
    %3204 = vmatmul.mubr.f32.gmra.mrb[0].mxu0 %v479
    %v3205 = vpop.f32.mrb[0].mxu0
    %v3206 = vadd.f32 1e-08, %v3205
    %v3207 = vpop.f32.mrb[0].mxu0
    %v3208 = vadd.f32 1e-08, %v3207
    %3209 = vdwg.mxu0
    %v3210 = vrsqrt.pop %v3206
    %v3211 = vrsqrt.pop %v3208
    %v3212 = vlaneseq
    %v3213 = vshrl.u32 %v3212, 7
    %v3214 = vsub.s32 0, %v3213
    %v3215 = vrot.slane %v3210, %v3214
    %v3216 = vlaneseq
    %v3217 = vshrl.u32 %v3216, 7
    %v3218 = vsub.s32 0, %v3217
    %v3219 = vrot.slane %v3211, %v3218
    %v3220 = vmul.f32 %v3123, %v3215
    %v3221 = vmul.f32 %v3124, %v3219
    %v3222 = vmul.f32 %v3125, %v3215
    %v3223 = vmul.f32 %v3126, %v3219
    %v3224 = vmul.f32 %v3127, %v3215
    %v3225 = vmul.f32 %v3128, %v3219
    %v3226 = vmul.f32 %v3129, %v3215
    %v3227 = vmul.f32 %v3130, %v3219
    %v3228 = vmul.f32 %v3220, %v2334
    %v3229 = vmul.f32 %v3221, %v2338
    %v3230 = vmul.f32 %v3222, %v2334
    %v3231 = vmul.f32 %v3223, %v2338
    %v3232 = vmul.f32 %v3224, %v2334
    %v3233 = vmul.f32 %v3225, %v2338
    %v3234 = vmul.f32 %v3226, %v2334
    %v3235 = vmul.f32 %v3227, %v2338
    %v3236 = vld [vmem:[%s14] sm:$0xff]
    %v3237 = vld [vmem:[%s14 + $0x8] sm:$0xff]
    %v3238 = vld [vmem:[%s14 + $0x10] sm:$0xff]
    %v3239 = vld [vmem:[%s14 + $0x18] sm:$0xff]
    %v3240 = vld [vmem:[%s14 + $0x20] sm:$0xff]
    %v3241 = vld [vmem:[%s14 + $0x28] sm:$0xff]
    %v3242 = vld [vmem:[%s14 + $0x30] sm:$0xff]
    %v3243 = vld [vmem:[%s14 + $0x38] sm:$0xff]
    %v3244 = vld [vmem:[%s14 + $0x40] sm:$0xff]
    %v3245 = vld [vmem:[%s14 + $0x48] sm:$0xff]
    %v3246 = vld [vmem:[%s14 + $0x50] sm:$0xff]
    %v3247 = vld [vmem:[%s14 + $0x58] sm:$0xff]
    %v3248 = vld [vmem:[%s14 + $0x60] sm:$0xff]
    %v3249 = vld [vmem:[%s14 + $0x68] sm:$0xff]
    %v3250 = vld [vmem:[%s14 + $0x70] sm:$0xff]
    %v3251 = vld [vmem:[%s14 + $0x78] sm:$0xff]
    %v3252 = vld [vmem:[%s14 + $0x80] sm:$0xff]
    %v3253 = vld [vmem:[%s14 + $0x88] sm:$0xff]
    %v3254 = vld [vmem:[%s14 + $0x90] sm:$0xff]
    %v3255 = vld [vmem:[%s14 + $0x98] sm:$0xff]
    %v3256 = vld [vmem:[%s14 + $0xa0] sm:$0xff]
    %v3257 = vld [vmem:[%s14 + $0xa8] sm:$0xff]
    %v3258 = vld [vmem:[%s14 + $0xb0] sm:$0xff]
    %v3259 = vld [vmem:[%s14 + $0xb8] sm:$0xff]
    %v3260 = vld [vmem:[%s14 + $0xc0] sm:$0xff]
    %v3261 = vld [vmem:[%s14 + $0xc8] sm:$0xff]
    %v3262 = vld [vmem:[%s14 + $0xd0] sm:$0xff]
    %v3263 = vld [vmem:[%s14 + $0xd8] sm:$0xff]
    %v3264 = vld [vmem:[%s14 + $0xe0] sm:$0xff]
    %v3265 = vld [vmem:[%s14 + $0xe8] sm:$0xff]
    %v3266 = vld [vmem:[%s14 + $0xf0] sm:$0xff]
    %v3267 = vld [vmem:[%s14 + $0xf8] sm:$0xff]
    %v3268 = vld [vmem:[%s14 + $0x100] sm:$0xff]
    %v3269 = vld [vmem:[%s14 + $0x108] sm:$0xff]
    %v3270 = vld [vmem:[%s14 + $0x110] sm:$0xff]
    %v3271 = vld [vmem:[%s14 + $0x118] sm:$0xff]
    %v3272 = vld [vmem:[%s14 + $0x120] sm:$0xff]
    %v3273 = vld [vmem:[%s14 + $0x128] sm:$0xff]
    %v3274 = vld [vmem:[%s14 + $0x130] sm:$0xff]
    %v3275 = vld [vmem:[%s14 + $0x138] sm:$0xff]
    %v3276 = vld [vmem:[%s14 + $0x140] sm:$0xff]
    %v3277 = vld [vmem:[%s14 + $0x148] sm:$0xff]
    %v3278 = vld [vmem:[%s14 + $0x150] sm:$0xff]
    %v3279 = vld [vmem:[%s14 + $0x158] sm:$0xff]
    %v3280 = vld [vmem:[%s14 + $0x160] sm:$0xff]
    %v3281 = vld [vmem:[%s14 + $0x168] sm:$0xff]
    %v3282 = vld [vmem:[%s14 + $0x170] sm:$0xff]
    %v3283 = vld [vmem:[%s14 + $0x178] sm:$0xff]
    %v3284 = vld [vmem:[%s14 + $0x180] sm:$0xff]
    %v3285 = vld [vmem:[%s14 + $0x188] sm:$0xff]
    %v3286 = vld [vmem:[%s14 + $0x190] sm:$0xff]
    %v3287 = vld [vmem:[%s14 + $0x198] sm:$0xff]
    %v3288 = vld [vmem:[%s14 + $0x1a0] sm:$0xff]
    %v3289 = vld [vmem:[%s14 + $0x1a8] sm:$0xff]
    %v3290 = vld [vmem:[%s14 + $0x1b0] sm:$0xff]
    %v3291 = vld [vmem:[%s14 + $0x1b8] sm:$0xff]
    %v3292 = vld [vmem:[%s14 + $0x1c0] sm:$0xff]
    %v3293 = vld [vmem:[%s14 + $0x1c8] sm:$0xff]
    %v3294 = vld [vmem:[%s14 + $0x1d0] sm:$0xff]
    %v3295 = vld [vmem:[%s14 + $0x1d8] sm:$0xff]
    %v3296 = vld [vmem:[%s14 + $0x1e0] sm:$0xff]
    %v3297 = vld [vmem:[%s14 + $0x1e8] sm:$0xff]
    %v3298 = vld [vmem:[%s14 + $0x1f0] sm:$0xff]
    %v3299 = vld [vmem:[%s14 + $0x1f8] sm:$0xff]
    %v3300 = vld [vmem:[%s14 + $0x200] sm:$0xff]
    %v3301 = vld [vmem:[%s14 + $0x208] sm:$0xff]
    %v3302 = vld [vmem:[%s14 + $0x210] sm:$0xff]
    %v3303 = vld [vmem:[%s14 + $0x218] sm:$0xff]
    %v3304 = vld [vmem:[%s14 + $0x220] sm:$0xff]
    %v3305 = vld [vmem:[%s14 + $0x228] sm:$0xff]
    %v3306 = vld [vmem:[%s14 + $0x230] sm:$0xff]
    %v3307 = vld [vmem:[%s14 + $0x238] sm:$0xff]
    %v3308 = vld [vmem:[%s14 + $0x240] sm:$0xff]
    %v3309 = vld [vmem:[%s14 + $0x248] sm:$0xff]
    %v3310 = vld [vmem:[%s14 + $0x250] sm:$0xff]
    %v3311 = vld [vmem:[%s14 + $0x258] sm:$0xff]
    %v3312 = vld [vmem:[%s14 + $0x260] sm:$0xff]
    %v3313 = vld [vmem:[%s14 + $0x268] sm:$0xff]
    %v3314 = vld [vmem:[%s14 + $0x270] sm:$0xff]
    %v3315 = vld [vmem:[%s14 + $0x278] sm:$0xff]
    %v3316 = vld [vmem:[%s14 + $0x280] sm:$0xff]
    %v3317 = vld [vmem:[%s14 + $0x288] sm:$0xff]
    %v3318 = vld [vmem:[%s14 + $0x290] sm:$0xff]
    %v3319 = vld [vmem:[%s14 + $0x298] sm:$0xff]
    %v3320 = vld [vmem:[%s14 + $0x2a0] sm:$0xff]
    %v3321 = vld [vmem:[%s14 + $0x2a8] sm:$0xff]
    %v3322 = vld [vmem:[%s14 + $0x2b0] sm:$0xff]
    %v3323 = vld [vmem:[%s14 + $0x2b8] sm:$0xff]
    %v3324 = vld [vmem:[%s14 + $0x2c0] sm:$0xff]
    %v3325 = vld [vmem:[%s14 + $0x2c8] sm:$0xff]
    %v3326 = vld [vmem:[%s14 + $0x2d0] sm:$0xff]
    %v3327 = vld [vmem:[%s14 + $0x2d8] sm:$0xff]
    %v3328 = vld [vmem:[%s14 + $0x2e0] sm:$0xff]
    %v3329 = vld [vmem:[%s14 + $0x2e8] sm:$0xff]
    %v3330 = vld [vmem:[%s14 + $0x2f0] sm:$0xff]
    %v3331 = vld [vmem:[%s14 + $0x2f8] sm:$0xff]
    %v3332 = vld [vmem:[%s14 + $0x300] sm:$0xff]
    %v3333 = vld [vmem:[%s14 + $0x308] sm:$0xff]
    %v3334 = vld [vmem:[%s14 + $0x310] sm:$0xff]
    %v3335 = vld [vmem:[%s14 + $0x318] sm:$0xff]
    %v3336 = vld [vmem:[%s14 + $0x320] sm:$0xff]
    %v3337 = vld [vmem:[%s14 + $0x328] sm:$0xff]
    %v3338 = vld [vmem:[%s14 + $0x330] sm:$0xff]
    %v3339 = vld [vmem:[%s14 + $0x338] sm:$0xff]
    %v3340 = vld [vmem:[%s14 + $0x340] sm:$0xff]
    %v3341 = vld [vmem:[%s14 + $0x348] sm:$0xff]
    %v3342 = vld [vmem:[%s14 + $0x350] sm:$0xff]
    %v3343 = vld [vmem:[%s14 + $0x358] sm:$0xff]
    %v3344 = vld [vmem:[%s14 + $0x360] sm:$0xff]
    %v3345 = vld [vmem:[%s14 + $0x368] sm:$0xff]
    %v3346 = vld [vmem:[%s14 + $0x370] sm:$0xff]
    %v3347 = vld [vmem:[%s14 + $0x378] sm:$0xff]
    %v3348 = vld [vmem:[%s14 + $0x380] sm:$0xff]
    %v3349 = vld [vmem:[%s14 + $0x388] sm:$0xff]
    %v3350 = vld [vmem:[%s14 + $0x390] sm:$0xff]
    %v3351 = vld [vmem:[%s14 + $0x398] sm:$0xff]
    %v3352 = vld [vmem:[%s14 + $0x3a0] sm:$0xff]
    %v3353 = vld [vmem:[%s14 + $0x3a8] sm:$0xff]
    %v3354 = vld [vmem:[%s14 + $0x3b0] sm:$0xff]
    %v3355 = vld [vmem:[%s14 + $0x3b8] sm:$0xff]
    %v3356 = vld [vmem:[%s14 + $0x3c0] sm:$0xff]
    %v3357 = vld [vmem:[%s14 + $0x3c8] sm:$0xff]
    %v3358 = vld [vmem:[%s14 + $0x3d0] sm:$0xff]
    %v3359 = vld [vmem:[%s14 + $0x3d8] sm:$0xff]
    %v3360 = vld [vmem:[%s14 + $0x3e0] sm:$0xff]
    %v3361 = vld [vmem:[%s14 + $0x3e8] sm:$0xff]
    %v3362 = vld [vmem:[%s14 + $0x3f0] sm:$0xff]
    %v3363 = vld [vmem:[%s14 + $0x3f8] sm:$0xff]
    %v3364 = vld [vmem:[%s14 + $0x400] sm:$0xff]
    %v3365 = vld [vmem:[%s14 + $0x408] sm:$0xff]
    %v3366 = vld [vmem:[%s14 + $0x410] sm:$0xff]
    %v3367 = vld [vmem:[%s14 + $0x418] sm:$0xff]
    %v3368 = vld [vmem:[%s14 + $0x420] sm:$0xff]
    %v3369 = vld [vmem:[%s14 + $0x428] sm:$0xff]
    %v3370 = vld [vmem:[%s14 + $0x430] sm:$0xff]
    %v3371 = vld [vmem:[%s14 + $0x438] sm:$0xff]
    %v3372 = vld [vmem:[%s14 + $0x440] sm:$0xff]
    %v3373 = vld [vmem:[%s14 + $0x448] sm:$0xff]
    %v3374 = vld [vmem:[%s14 + $0x450] sm:$0xff]
    %v3375 = vld [vmem:[%s14 + $0x458] sm:$0xff]
    %v3376 = vld [vmem:[%s14 + $0x460] sm:$0xff]
    %v3377 = vld [vmem:[%s14 + $0x468] sm:$0xff]
    %v3378 = vld [vmem:[%s14 + $0x470] sm:$0xff]
    %v3379 = vld [vmem:[%s14 + $0x478] sm:$0xff]
    %v3380 = vld [vmem:[%s14 + $0x480] sm:$0xff]
    %v3381 = vld [vmem:[%s14 + $0x488] sm:$0xff]
    %v3382 = vld [vmem:[%s14 + $0x490] sm:$0xff]
    %v3383 = vld [vmem:[%s14 + $0x498] sm:$0xff]
    %v3384 = vld [vmem:[%s14 + $0x4a0] sm:$0xff]
    %v3385 = vld [vmem:[%s14 + $0x4a8] sm:$0xff]
    %v3386 = vld [vmem:[%s14 + $0x4b0] sm:$0xff]
    %v3387 = vld [vmem:[%s14 + $0x4b8] sm:$0xff]
    %v3388 = vld [vmem:[%s14 + $0x4c0] sm:$0xff]
    %v3389 = vld [vmem:[%s14 + $0x4c8] sm:$0xff]
    %v3390 = vld [vmem:[%s14 + $0x4d0] sm:$0xff]
    %v3391 = vld [vmem:[%s14 + $0x4d8] sm:$0xff]
    %v3392 = vld [vmem:[%s14 + $0x4e0] sm:$0xff]
    %v3393 = vld [vmem:[%s14 + $0x4e8] sm:$0xff]
    %v3394 = vld [vmem:[%s14 + $0x4f0] sm:$0xff]
    %v3395 = vld [vmem:[%s14 + $0x4f8] sm:$0xff]
    %v3396 = vld [vmem:[%s14 + $0x500] sm:$0xff]
    %v3397 = vld [vmem:[%s14 + $0x508] sm:$0xff]
    %v3398 = vld [vmem:[%s14 + $0x510] sm:$0xff]
    %v3399 = vld [vmem:[%s14 + $0x518] sm:$0xff]
    %v3400 = vld [vmem:[%s14 + $0x520] sm:$0xff]
    %v3401 = vld [vmem:[%s14 + $0x528] sm:$0xff]
    %v3402 = vld [vmem:[%s14 + $0x530] sm:$0xff]
    %v3403 = vld [vmem:[%s14 + $0x538] sm:$0xff]
    %v3404 = vld [vmem:[%s14 + $0x540] sm:$0xff]
    %v3405 = vld [vmem:[%s14 + $0x548] sm:$0xff]
    %v3406 = vld [vmem:[%s14 + $0x550] sm:$0xff]
    %v3407 = vld [vmem:[%s14 + $0x558] sm:$0xff]
    %v3408 = vld [vmem:[%s14 + $0x560] sm:$0xff]
    %v3409 = vld [vmem:[%s14 + $0x568] sm:$0xff]
    %v3410 = vld [vmem:[%s14 + $0x570] sm:$0xff]
    %v3411 = vld [vmem:[%s14 + $0x578] sm:$0xff]
    %v3412 = vld [vmem:[%s14 + $0x580] sm:$0xff]
    %v3413 = vld [vmem:[%s14 + $0x588] sm:$0xff]
    %v3414 = vld [vmem:[%s14 + $0x590] sm:$0xff]
    %v3415 = vld [vmem:[%s14 + $0x598] sm:$0xff]
    %v3416 = vld [vmem:[%s14 + $0x5a0] sm:$0xff]
    %v3417 = vld [vmem:[%s14 + $0x5a8] sm:$0xff]
    %v3418 = vld [vmem:[%s14 + $0x5b0] sm:$0xff]
    %v3419 = vld [vmem:[%s14 + $0x5b8] sm:$0xff]
    %v3420 = vld [vmem:[%s14 + $0x5c0] sm:$0xff]
    %v3421 = vld [vmem:[%s14 + $0x5c8] sm:$0xff]
    %v3422 = vld [vmem:[%s14 + $0x5d0] sm:$0xff]
    %v3423 = vld [vmem:[%s14 + $0x5d8] sm:$0xff]
    %v3424 = vld [vmem:[%s14 + $0x5e0] sm:$0xff]
    %v3425 = vld [vmem:[%s14 + $0x5e8] sm:$0xff]
    %v3426 = vld [vmem:[%s14 + $0x5f0] sm:$0xff]
    %v3427 = vld [vmem:[%s14 + $0x5f8] sm:$0xff]
    %v3428 = vld [vmem:[%s15] sm:$0xff]
    %v3429 = vld [vmem:[%s15 + $0x8] sm:$0xff]
    %v3430 = vld [vmem:[%s15 + $0x10] sm:$0xff]
    %v3431 = vld [vmem:[%s15 + $0x18] sm:$0xff]
    %v3432 = vld [vmem:[%s15 + $0x20] sm:$0xff]
    %v3433 = vld [vmem:[%s15 + $0x28] sm:$0xff]
    %v3434 = vld [vmem:[%s16] sm:$0xff]
    %v3435 = vld [vmem:[%s16 + $0x8] sm:$0xff]
    %v3436 = vld [vmem:[%s17] sm:$0xff]
    %v3437 = vld [vmem:[%s17 + $0x8] sm:$0xff]
    %v3438 = vld [vmem:[%s17 + $0x10] sm:$0xff]
    %v3439 = vld [vmem:[%s17 + $0x18] sm:$0xff]
    %v3440 = vld [vmem:[%s18] sm:$0xff]
    %v3441 = vld [vmem:[%s18 + $0x8] sm:$0xff]
    %v3442 = vld [vmem:[#allocation11] sm:$0x3f]
    %3443 = vmatprep.subr.mxu0 %v3237
    %3444 = vmatpush1.msra.mxu0 %v3236
    %3445 = vmatprep.subr.mxu0 %v3243
    %3446 = vmatpush1.msra.mxu0 %v3242
    %3447 = vmatprep.subr.mxu0 %v3249
    %3448 = vmatpush1.msra.mxu0 %v3248
    %3449 = vmatprep.subr.mxu0 %v3255
    %3450 = vmatpush1.msra.mxu0 %v3254
    %3451 = vmatprep.subr.mxu0 %v3261
    %3452 = vmatpush1.msra.mxu0 %v3260
    %3453 = vmatprep.subr.mxu0 %v3267
    %3454 = vmatpush1.msra.mxu0 %v3266
    %3455 = vmatprep.subr.mxu0 %v3273
    %3456 = vmatpush1.msra.mxu0 %v3272
    %3457 = vmatprep.subr.mxu0 %v3279
    %3458 = vmatpush1.msra.mxu0 %v3278
    %3459 = vmatprep.subr.mxu0 %v3285
    %3460 = vmatpush1.msra.mxu0 %v3284
    %3461 = vmatprep.subr.mxu0 %v3291
    %3462 = vmatpush1.msra.mxu0 %v3290
    %3463 = vmatprep.subr.mxu0 %v3297
    %3464 = vmatpush1.msra.mxu0 %v3296
    %3465 = vmatprep.subr.mxu0 %v3303
    %3466 = vmatpush1.msra.mxu0 %v3302
    %3467 = vmatprep.subr.mxu0 %v3309
    %3468 = vmatpush1.msra.mxu0 %v3308
    %3469 = vmatprep.subr.mxu0 %v3315
    %3470 = vmatpush1.msra.mxu0 %v3314
    %3471 = vmatprep.subr.mxu0 %v3321
    %3472 = vmatpush1.msra.mxu0 %v3320
    %3473 = vmatprep.subr.mxu0 %v3327
    %3474 = vmatpush1.msra.mxu0 %v3326
    %3475 = vmatprep.subr.mxu0 %v3333
    %3476 = vmatpush1.msra.mxu0 %v3332
    %3477 = vmatprep.subr.mxu0 %v3339
    %3478 = vmatpush1.msra.mxu0 %v3338
    %3479 = vmatprep.subr.mxu0 %v3345
    %3480 = vmatpush1.msra.mxu0 %v3344
    %3481 = vmatprep.subr.mxu0 %v3351
    %3482 = vmatpush1.msra.mxu0 %v3350
    %3483 = vmatprep.subr.mxu0 %v3357
    %3484 = vmatpush1.msra.mxu0 %v3356
    %3485 = vmatprep.subr.mxu0 %v3363
    %3486 = vmatpush1.msra.mxu0 %v3362
    %3487 = vmatprep.subr.mxu0 %v3369
    %3488 = vmatpush1.msra.mxu0 %v3368
    %3489 = vmatprep.subr.mxu0 %v3375
    %3490 = vmatpush1.msra.mxu0 %v3374
    %3491 = vmatprep.subr.mxu0 %v3381
    %3492 = vmatpush1.msra.mxu0 %v3380
    %3493 = vmatprep.subr.mxu0 %v3387
    %3494 = vmatpush1.msra.mxu0 %v3386
    %3495 = vmatprep.subr.mxu0 %v3393
    %3496 = vmatpush1.msra.mxu0 %v3392
    %3497 = vmatprep.subr.mxu0 %v3399
    %3498 = vmatpush1.msra.mxu0 %v3398
    %3499 = vmatprep.subr.mxu0 %v3405
    %3500 = vmatpush1.msra.mxu0 %v3404
    %3501 = vmatprep.subr.mxu0 %v3411
    %3502 = vmatpush1.msra.mxu0 %v3410
    %3503 = vmatprep.subr.mxu0 %v3417
    %3504 = vmatpush1.msra.mxu0 %v3416
    %3505 = vmatprep.subr.mxu0 %v3423
    %3506 = vmatpush1.msra.mxu0 %v3422
    %3507 = vmatprep.mubr.f32.mxu0 %v3229
    %3508 = vmatmul.mubr.f32.gmra.mrb[0].mxu0 %v3228
    %v3509 = vpop.f32.mrb[0].mxu0
    %v3510 = vadd.f32 0.0, %v3509
    %v3511 = vpop.f32.mrb[0].mxu0
    %v3512 = vadd.f32 0.0, %v3511
    %3513 = vmatprep.mubr.f32.mxu0 %v3231
    %3514 = vmatmul.mubr.f32.gmra.mrb[0].mxu0 %v3230
    %v3515 = vpop.f32.mrb[0].mxu0
    %v3516 = vadd.f32 0.0, %v3515
    %v3517 = vpop.f32.mrb[0].mxu0
    %v3518 = vadd.f32 0.0, %v3517
    %3519 = vmatprep.mubr.f32.mxu0 %v3233
    %3520 = vmatmul.mubr.f32.gmra.mrb[0].mxu0 %v3232
    %v3521 = vpop.f32.mrb[0].mxu0
    %v3522 = vadd.f32 0.0, %v3521
    %v3523 = vpop.f32.mrb[0].mxu0
    %v3524 = vadd.f32 0.0, %v3523
    %3525 = vmatprep.mubr.f32.mxu0 %v3235
    %3526 = vmatmul.mubr.f32.gmra.mrb[0].mxu0 %v3234
    %v3527 = vpop.f32.mrb[0].mxu0
    %v3528 = vadd.f32 0.0, %v3527
    %v3529 = vpop.f32.mrb[0].mxu0
    %v3530 = vadd.f32 0.0, %v3529
    %3531 = vdwg.mxu0
    %3532 = vmatprep.subr.mxu0 %v3239
    %3533 = vmatpush1.msra.mxu0 %v3238
    %3534 = vmatprep.subr.mxu0 %v3245
    %3535 = vmatpush1.msra.mxu0 %v3244
    %3536 = vmatprep.subr.mxu0 %v3251
    %3537 = vmatpush1.msra.mxu0 %v3250
    %3538 = vmatprep.subr.mxu0 %v3257
    %3539 = vmatpush1.msra.mxu0 %v3256
    %3540 = vmatprep.subr.mxu0 %v3263
    %3541 = vmatpush1.msra.mxu0 %v3262
    %3542 = vmatprep.subr.mxu0 %v3269
    %3543 = vmatpush1.msra.mxu0 %v3268
    %3544 = vmatprep.subr.mxu0 %v3275
    %3545 = vmatpush1.msra.mxu0 %v3274
    %3546 = vmatprep.subr.mxu0 %v3281
    %3547 = vmatpush1.msra.mxu0 %v3280
    %3548 = vmatprep.subr.mxu0 %v3287
    %3549 = vmatpush1.msra.mxu0 %v3286
    %3550 = vmatprep.subr.mxu0 %v3293
    %3551 = vmatpush1.msra.mxu0 %v3292
    %3552 = vmatprep.subr.mxu0 %v3299
    %3553 = vmatpush1.msra.mxu0 %v3298
    %3554 = vmatprep.subr.mxu0 %v3305
    %3555 = vmatpush1.msra.mxu0 %v3304
    %3556 = vmatprep.subr.mxu0 %v3311
    %3557 = vmatpush1.msra.mxu0 %v3310
    %3558 = vmatprep.subr.mxu0 %v3317
    %3559 = vmatpush1.msra.mxu0 %v3316
    %3560 = vmatprep.subr.mxu0 %v3323
    %3561 = vmatpush1.msra.mxu0 %v3322
    %3562 = vmatprep.subr.mxu0 %v3329
    %3563 = vmatpush1.msra.mxu0 %v3328
    %3564 = vmatprep.subr.mxu0 %v3335
    %3565 = vmatpush1.msra.mxu0 %v3334
    %3566 = vmatprep.subr.mxu0 %v3341
    %3567 = vmatpush1.msra.mxu0 %v3340
    %3568 = vmatprep.subr.mxu0 %v3347
    %3569 = vmatpush1.msra.mxu0 %v3346
    %3570 = vmatprep.subr.mxu0 %v3353
    %3571 = vmatpush1.msra.mxu0 %v3352
    %3572 = vmatprep.subr.mxu0 %v3359
    %3573 = vmatpush1.msra.mxu0 %v3358
    %3574 = vmatprep.subr.mxu0 %v3365
    %3575 = vmatpush1.msra.mxu0 %v3364
    %3576 = vmatprep.subr.mxu0 %v3371
    %3577 = vmatpush1.msra.mxu0 %v3370
    %3578 = vmatprep.subr.mxu0 %v3377
    %3579 = vmatpush1.msra.mxu0 %v3376
    %3580 = vmatprep.subr.mxu0 %v3383
    %3581 = vmatpush1.msra.mxu0 %v3382
    %3582 = vmatprep.subr.mxu0 %v3389
    %3583 = vmatpush1.msra.mxu0 %v3388
    %3584 = vmatprep.subr.mxu0 %v3395
    %3585 = vmatpush1.msra.mxu0 %v3394
    %3586 = vmatprep.subr.mxu0 %v3401
    %3587 = vmatpush1.msra.mxu0 %v3400
    %3588 = vmatprep.subr.mxu0 %v3407
    %3589 = vmatpush1.msra.mxu0 %v3406
    %3590 = vmatprep.subr.mxu0 %v3413
    %3591 = vmatpush1.msra.mxu0 %v3412
    %3592 = vmatprep.subr.mxu0 %v3419
    %3593 = vmatpush1.msra.mxu0 %v3418
    %3594 = vmatprep.subr.mxu0 %v3425
    %3595 = vmatpush1.msra.mxu0 %v3424
    %3596 = vmatprep.mubr.f32.mxu0 %v3229
    %3597 = vmatmul.mubr.f32.gmra.mrb[0].mxu0 %v3228
    %v3598 = vpop.f32.mrb[0].mxu0
    %v3599 = vadd.f32 0.0, %v3598
    %v3600 = vpop.f32.mrb[0].mxu0
    %v3601 = vadd.f32 0.0, %v3600
    %3602 = vmatprep.mubr.f32.mxu0 %v3231
    %3603 = vmatmul.mubr.f32.gmra.mrb[0].mxu0 %v3230
    %v3604 = vpop.f32.mrb[0].mxu0
    %v3605 = vadd.f32 0.0, %v3604
    %v3606 = vpop.f32.mrb[0].mxu0
    %v3607 = vadd.f32 0.0, %v3606
    %3608 = vmatprep.mubr.f32.mxu0 %v3233
    %3609 = vmatmul.mubr.f32.gmra.mrb[0].mxu0 %v3232
    %v3610 = vpop.f32.mrb[0].mxu0
    %v3611 = vadd.f32 0.0, %v3610
    %v3612 = vpop.f32.mrb[0].mxu0
    %v3613 = vadd.f32 0.0, %v3612
    %3614 = vmatprep.mubr.f32.mxu0 %v3235
    %3615 = vmatmul.mubr.f32.gmra.mrb[0].mxu0 %v3234
    %v3616 = vpop.f32.mrb[0].mxu0
    %v3617 = vadd.f32 0.0, %v3616
    %v3618 = vpop.f32.mrb[0].mxu0
    %v3619 = vadd.f32 0.0, %v3618
    %3620 = vdwg.mxu0
    %3621 = vmatprep.subr.mxu0 %v3241
    %3622 = vmatpush1.msra.mxu0 %v3240
    %3623 = vmatprep.subr.mxu0 %v3247
    %3624 = vmatpush1.msra.mxu0 %v3246
    %3625 = vmatprep.subr.mxu0 %v3253
    %3626 = vmatpush1.msra.mxu0 %v3252
    %3627 = vmatprep.subr.mxu0 %v3259
    %3628 = vmatpush1.msra.mxu0 %v3258
    %3629 = vmatprep.subr.mxu0 %v3265
    %3630 = vmatpush1.msra.mxu0 %v3264
    %3631 = vmatprep.subr.mxu0 %v3271
    %3632 = vmatpush1.msra.mxu0 %v3270
    %3633 = vmatprep.subr.mxu0 %v3277
    %3634 = vmatpush1.msra.mxu0 %v3276
    %3635 = vmatprep.subr.mxu0 %v3283
    %3636 = vmatpush1.msra.mxu0 %v3282
    %3637 = vmatprep.subr.mxu0 %v3289
    %3638 = vmatpush1.msra.mxu0 %v3288
    %3639 = vmatprep.subr.mxu0 %v3295
    %3640 = vmatpush1.msra.mxu0 %v3294
    %3641 = vmatprep.subr.mxu0 %v3301
    %3642 = vmatpush1.msra.mxu0 %v3300
    %3643 = vmatprep.subr.mxu0 %v3307
    %3644 = vmatpush1.msra.mxu0 %v3306
    %3645 = vmatprep.subr.mxu0 %v3313
    %3646 = vmatpush1.msra.mxu0 %v3312
    %3647 = vmatprep.subr.mxu0 %v3319
    %3648 = vmatpush1.msra.mxu0 %v3318
    %3649 = vmatprep.subr.mxu0 %v3325
    %3650 = vmatpush1.msra.mxu0 %v3324
    %3651 = vmatprep.subr.mxu0 %v3331
    %3652 = vmatpush1.msra.mxu0 %v3330
    %3653 = vmatprep.subr.mxu0 %v3337
    %3654 = vmatpush1.msra.mxu0 %v3336
    %3655 = vmatprep.subr.mxu0 %v3343
    %3656 = vmatpush1.msra.mxu0 %v3342
    %3657 = vmatprep.subr.mxu0 %v3349
    %3658 = vmatpush1.msra.mxu0 %v3348
    %3659 = vmatprep.subr.mxu0 %v3355
    %3660 = vmatpush1.msra.mxu0 %v3354
    %3661 = vmatprep.subr.mxu0 %v3361
    %3662 = vmatpush1.msra.mxu0 %v3360
    %3663 = vmatprep.subr.mxu0 %v3367
    %3664 = vmatpush1.msra.mxu0 %v3366
    %3665 = vmatprep.subr.mxu0 %v3373
    %3666 = vmatpush1.msra.mxu0 %v3372
    %3667 = vmatprep.subr.mxu0 %v3379
    %3668 = vmatpush1.msra.mxu0 %v3378
    %3669 = vmatprep.subr.mxu0 %v3385
    %3670 = vmatpush1.msra.mxu0 %v3384
    %3671 = vmatprep.subr.mxu0 %v3391
    %3672 = vmatpush1.msra.mxu0 %v3390
    %3673 = vmatprep.subr.mxu0 %v3397
    %3674 = vmatpush1.msra.mxu0 %v3396
    %3675 = vmatprep.subr.mxu0 %v3403
    %3676 = vmatpush1.msra.mxu0 %v3402
    %3677 = vmatprep.subr.mxu0 %v3409
    %3678 = vmatpush1.msra.mxu0 %v3408
    %3679 = vmatprep.subr.mxu0 %v3415
    %3680 = vmatpush1.msra.mxu0 %v3414
    %3681 = vmatprep.subr.mxu0 %v3421
    %3682 = vmatpush1.msra.mxu0 %v3420
    %3683 = vmatprep.subr.mxu0 %v3427
    %3684 = vmatpush1.msra.mxu0 %v3426
    %3685 = vmatprep.mubr.f32.mxu0 %v3229
    %3686 = vmatmul.mubr.f32.gmra.mrb[0].mxu0 %v3228
    %v3687 = vpop.f32.mrb[0].mxu0
    %v3688 = vadd.f32 0.0, %v3687
    %v3689 = vpop.f32.mrb[0].mxu0
    %v3690 = vadd.f32 0.0, %v3689
    %3691 = vmatprep.mubr.f32.mxu0 %v3231
    %3692 = vmatmul.mubr.f32.gmra.mrb[0].mxu0 %v3230
    %v3693 = vpop.f32.mrb[0].mxu0
    %v3694 = vadd.f32 0.0, %v3693
    %v3695 = vpop.f32.mrb[0].mxu0
    %v3696 = vadd.f32 0.0, %v3695
    %3697 = vmatprep.mubr.f32.mxu0 %v3233
    %3698 = vmatmul.mubr.f32.gmra.mrb[0].mxu0 %v3232
    %v3699 = vpop.f32.mrb[0].mxu0
    %v3700 = vadd.f32 0.0, %v3699
    %v3701 = vpop.f32.mrb[0].mxu0
    %v3702 = vadd.f32 0.0, %v3701
    %3703 = vmatprep.mubr.f32.mxu0 %v3235
    %3704 = vmatmul.mubr.f32.gmra.mrb[0].mxu0 %v3234
    %v3705 = vpop.f32.mrb[0].mxu0
    %v3706 = vadd.f32 0.0, %v3705
    %v3707 = vpop.f32.mrb[0].mxu0
    %v3708 = vadd.f32 0.0, %v3707
    %3709 = vdwg.mxu0
    %3734 = vrot.lane.b32.xlu0 %v3510, 127
    %v3735 = vpop.permute.xlu0 %3734
    %3736 = vrot.lane.b32.xlu0 %v3512, 127
    %v3737 = vpop.permute.xlu0 %3736
    %3738 = vrot.lane.b32.xlu0 %v3599, 127
    %v3739 = vpop.permute.xlu0 %3738
    %3740 = vrot.lane.b32.xlu0 %v3601, 127
    %v3741 = vpop.permute.xlu0 %3740
    %3742 = vrot.lane.b32.xlu0 %v3688, 127
    %v3743 = vpop.permute.xlu0 %3742
    %3744 = vrot.lane.b32.xlu0 %v3690, 127
    %v3745 = vpop.permute.xlu0 %3744
    %3746 = vrot.lane.b32.xlu0 %v3516, 127
    %v3747 = vpop.permute.xlu0 %3746
    %3748 = vrot.lane.b32.xlu0 %v3518, 127
    %v3749 = vpop.permute.xlu0 %3748
    %3750 = vrot.lane.b32.xlu0 %v3605, 127
    %v3751 = vpop.permute.xlu0 %3750
    %3752 = vrot.lane.b32.xlu0 %v3607, 127
    %v3753 = vpop.permute.xlu0 %3752
    %3754 = vrot.lane.b32.xlu0 %v3694, 127
    %v3755 = vpop.permute.xlu0 %3754
    %3756 = vrot.lane.b32.xlu0 %v3696, 127
    %v3757 = vpop.permute.xlu0 %3756
    %3758 = vrot.lane.b32.xlu0 %v3522, 127
    %v3759 = vpop.permute.xlu0 %3758
    %3760 = vrot.lane.b32.xlu0 %v3524, 127
    %v3761 = vpop.permute.xlu0 %3760
    %3762 = vrot.lane.b32.xlu0 %v3611, 127
    %v3763 = vpop.permute.xlu0 %3762
    %3764 = vrot.lane.b32.xlu0 %v3613, 127
    %v3765 = vpop.permute.xlu0 %3764
    %3766 = vrot.lane.b32.xlu0 %v3700, 127
    %v3767 = vpop.permute.xlu0 %3766
    %3768 = vrot.lane.b32.xlu0 %v3702, 127
    %v3769 = vpop.permute.xlu0 %3768
    %3770 = vrot.lane.b32.xlu0 %v3528, 127
    %v3771 = vpop.permute.xlu0 %3770
    %3772 = vrot.lane.b32.xlu0 %v3530, 127
    %v3773 = vpop.permute.xlu0 %3772
    %3774 = vrot.lane.b32.xlu0 %v3617, 127
    %v3775 = vpop.permute.xlu0 %3774
    %3776 = vrot.lane.b32.xlu0 %v3619, 127
    %v3777 = vpop.permute.xlu0 %3776
    %3778 = vrot.lane.b32.xlu0 %v3706, 127
    %v3779 = vpop.permute.xlu0 %3778
    %3780 = vrot.lane.b32.xlu0 %v3708, 127
    %v3781 = vpop.permute.xlu0 %3780
    %v3782 = vsel %vm672, %v663, %v3735
    %v3783 = vsel %vm672, %v3735, %v3737
    %v3784 = vsel %vm672, %v3737, %v3739
    %v3785 = vsel %vm672, %v3739, %v3741
    %v3786 = vsel %vm672, %v3741, %v3743
    %v3787 = vsel %vm672, %v3743, %v3745
    %v3788 = vsel %vm672, %v663, %v3747
    %v3789 = vsel %vm672, %v3747, %v3749
    %v3790 = vsel %vm672, %v3749, %v3751
    %v3791 = vsel %vm672, %v3751, %v3753
    %v3792 = vsel %vm672, %v3753, %v3755
    %v3793 = vsel %vm672, %v3755, %v3757
    %v3794 = vsel %vm672, %v663, %v3759
    %v3795 = vsel %vm672, %v3759, %v3761
    %v3796 = vsel %vm672, %v3761, %v3763
    %v3797 = vsel %vm672, %v3763, %v3765
    %v3798 = vsel %vm672, %v3765, %v3767
    %v3799 = vsel %vm672, %v3767, %v3769
    %v3800 = vsel %vm672, %v663, %v3771
    %v3801 = vsel %vm672, %v3771, %v3773
    %v3802 = vsel %vm672, %v3773, %v3775
    %v3803 = vsel %vm672, %v3775, %v3777
    %v3804 = vsel %vm672, %v3777, %v3779
    %v3805 = vsel %vm672, %v3779, %v3781
    %3806 = vrot.lane.b32.xlu0 %v3510, 126
    %v3807 = vpop.permute.xlu0 %3806
    %3808 = vrot.lane.b32.xlu0 %v3512, 126
    %v3809 = vpop.permute.xlu0 %3808
    %3810 = vrot.lane.b32.xlu0 %v3599, 126
    %v3811 = vpop.permute.xlu0 %3810
    %3812 = vrot.lane.b32.xlu0 %v3601, 126
    %v3813 = vpop.permute.xlu0 %3812
    %3814 = vrot.lane.b32.xlu0 %v3688, 126
    %v3815 = vpop.permute.xlu0 %3814
    %3816 = vrot.lane.b32.xlu0 %v3690, 126
    %v3817 = vpop.permute.xlu0 %3816
    %3818 = vrot.lane.b32.xlu0 %v3516, 126
    %v3819 = vpop.permute.xlu0 %3818
    %3820 = vrot.lane.b32.xlu0 %v3518, 126
    %v3821 = vpop.permute.xlu0 %3820
    %3822 = vrot.lane.b32.xlu0 %v3605, 126
    %v3823 = vpop.permute.xlu0 %3822
    %3824 = vrot.lane.b32.xlu0 %v3607, 126
    %v3825 = vpop.permute.xlu0 %3824
    %3826 = vrot.lane.b32.xlu0 %v3694, 126
    %v3827 = vpop.permute.xlu0 %3826
    %3828 = vrot.lane.b32.xlu0 %v3696, 126
    %v3829 = vpop.permute.xlu0 %3828
    %3830 = vrot.lane.b32.xlu0 %v3522, 126
    %v3831 = vpop.permute.xlu0 %3830
    %3832 = vrot.lane.b32.xlu0 %v3524, 126
    %v3833 = vpop.permute.xlu0 %3832
    %3834 = vrot.lane.b32.xlu0 %v3611, 126
    %v3835 = vpop.permute.xlu0 %3834
    %3836 = vrot.lane.b32.xlu0 %v3613, 126
    %v3837 = vpop.permute.xlu0 %3836
    %3838 = vrot.lane.b32.xlu0 %v3700, 126
    %v3839 = vpop.permute.xlu0 %3838
    %3840 = vrot.lane.b32.xlu0 %v3702, 126
    %v3841 = vpop.permute.xlu0 %3840
    %3842 = vrot.lane.b32.xlu0 %v3528, 126
    %v3843 = vpop.permute.xlu0 %3842
    %3844 = vrot.lane.b32.xlu0 %v3530, 126
    %v3845 = vpop.permute.xlu0 %3844
    %3846 = vrot.lane.b32.xlu0 %v3617, 126
    %v3847 = vpop.permute.xlu0 %3846
    %3848 = vrot.lane.b32.xlu0 %v3619, 126
    %v3849 = vpop.permute.xlu0 %3848
    %3850 = vrot.lane.b32.xlu0 %v3706, 126
    %v3851 = vpop.permute.xlu0 %3850
    %3852 = vrot.lane.b32.xlu0 %v3708, 126
    %v3853 = vpop.permute.xlu0 %3852
    %v3854 = vsel %vm687, %v678, %v3807
    %v3855 = vsel %vm687, %v3807, %v3809
    %v3856 = vsel %vm687, %v3809, %v3811
    %v3857 = vsel %vm687, %v3811, %v3813
    %v3858 = vsel %vm687, %v3813, %v3815
    %v3859 = vsel %vm687, %v3815, %v3817
    %v3860 = vsel %vm687, %v678, %v3819
    %v3861 = vsel %vm687, %v3819, %v3821
    %v3862 = vsel %vm687, %v3821, %v3823
    %v3863 = vsel %vm687, %v3823, %v3825
    %v3864 = vsel %vm687, %v3825, %v3827
    %v3865 = vsel %vm687, %v3827, %v3829
    %v3866 = vsel %vm687, %v678, %v3831
    %v3867 = vsel %vm687, %v3831, %v3833
    %v3868 = vsel %vm687, %v3833, %v3835
    %v3869 = vsel %vm687, %v3835, %v3837
    %v3870 = vsel %vm687, %v3837, %v3839
    %v3871 = vsel %vm687, %v3839, %v3841
    %v3872 = vsel %vm687, %v678, %v3843
    %v3873 = vsel %vm687, %v3843, %v3845
    %v3874 = vsel %vm687, %v3845, %v3847
    %v3875 = vsel %vm687, %v3847, %v3849
    %v3876 = vsel %vm687, %v3849, %v3851
    %v3877 = vsel %vm687, %v3851, %v3853
    %3878 = vrot.lane.b32.xlu0 0.0, 110
    %v3879 = vpop.permute.xlu0 %3878
    %3880 = vrot.lane.b32.xlu0 %v3510, 110
    %v3881 = vpop.permute.xlu0 %3880
    %3882 = vrot.lane.b32.xlu0 %v3512, 110
    %v3883 = vpop.permute.xlu0 %3882
    %3884 = vrot.lane.b32.xlu0 %v3599, 110
    %v3885 = vpop.permute.xlu0 %3884
    %3886 = vrot.lane.b32.xlu0 %v3601, 110
    %v3887 = vpop.permute.xlu0 %3886
    %3888 = vrot.lane.b32.xlu0 %v3688, 110
    %v3889 = vpop.permute.xlu0 %3888
    %3890 = vrot.lane.b32.xlu0 %v3690, 110
    %v3891 = vpop.permute.xlu0 %3890
    %3892 = vrot.lane.b32.xlu0 %v3516, 110
    %v3893 = vpop.permute.xlu0 %3892
    %3894 = vrot.lane.b32.xlu0 %v3518, 110
    %v3895 = vpop.permute.xlu0 %3894
    %3896 = vrot.lane.b32.xlu0 %v3605, 110
    %v3897 = vpop.permute.xlu0 %3896
    %3898 = vrot.lane.b32.xlu0 %v3607, 110
    %v3899 = vpop.permute.xlu0 %3898
    %3900 = vrot.lane.b32.xlu0 %v3694, 110
    %v3901 = vpop.permute.xlu0 %3900
    %3902 = vrot.lane.b32.xlu0 %v3696, 110
    %v3903 = vpop.permute.xlu0 %3902
    %3904 = vrot.lane.b32.xlu0 %v3522, 110
    %v3905 = vpop.permute.xlu0 %3904
    %3906 = vrot.lane.b32.xlu0 %v3524, 110
    %v3907 = vpop.permute.xlu0 %3906
    %3908 = vrot.lane.b32.xlu0 %v3611, 110
    %v3909 = vpop.permute.xlu0 %3908
    %3910 = vrot.lane.b32.xlu0 %v3613, 110
    %v3911 = vpop.permute.xlu0 %3910
    %3912 = vrot.lane.b32.xlu0 %v3700, 110
    %v3913 = vpop.permute.xlu0 %3912
    %3914 = vrot.lane.b32.xlu0 %v3702, 110
    %v3915 = vpop.permute.xlu0 %3914
    %3916 = vrot.lane.b32.xlu0 %v3528, 110
    %v3917 = vpop.permute.xlu0 %3916
    %3918 = vrot.lane.b32.xlu0 %v3530, 110
    %v3919 = vpop.permute.xlu0 %3918
    %3920 = vrot.lane.b32.xlu0 %v3617, 110
    %v3921 = vpop.permute.xlu0 %3920
    %3922 = vrot.lane.b32.xlu0 %v3619, 110
    %v3923 = vpop.permute.xlu0 %3922
    %3924 = vrot.lane.b32.xlu0 %v3706, 110
    %v3925 = vpop.permute.xlu0 %3924
    %3926 = vrot.lane.b32.xlu0 %v3708, 110
    %v3927 = vpop.permute.xlu0 %3926
    %vm3928 = vcmask 900096
    %v3929 = vsel %vm3928, %v3879, %v3881
    %v3930 = vsel %vm3928, %v3881, %v3883
    %v3931 = vsel %vm3928, %v3883, %v3885
    %v3932 = vsel %vm3928, %v3885, %v3887
    %v3933 = vsel %vm3928, %v3887, %v3889
    %v3934 = vsel %vm3928, %v3889, %v3891
    %v3935 = vsel %vm3928, %v3879, %v3893
    %v3936 = vsel %vm3928, %v3893, %v3895
    %v3937 = vsel %vm3928, %v3895, %v3897
    %v3938 = vsel %vm3928, %v3897, %v3899
    %v3939 = vsel %vm3928, %v3899, %v3901
    %v3940 = vsel %vm3928, %v3901, %v3903
    %v3941 = vsel %vm3928, %v3879, %v3905
    %v3942 = vsel %vm3928, %v3905, %v3907
    %v3943 = vsel %vm3928, %v3907, %v3909
    %v3944 = vsel %vm3928, %v3909, %v3911
    %v3945 = vsel %vm3928, %v3911, %v3913
    %v3946 = vsel %vm3928, %v3913, %v3915
    %v3947 = vsel %vm3928, %v3879, %v3917
    %v3948 = vsel %vm3928, %v3917, %v3919
    %v3949 = vsel %vm3928, %v3919, %v3921
    %v3950 = vsel %vm3928, %v3921, %v3923
    %v3951 = vsel %vm3928, %v3923, %v3925
    %v3952 = vsel %vm3928, %v3925, %v3927
    %3953 = vrot.lane.b32.xlu0 %v3510, 109
    %v3954 = vpop.permute.xlu0 %3953
    %3955 = vrot.lane.b32.xlu0 %v3512, 109
    %v3956 = vpop.permute.xlu0 %3955
    %3957 = vrot.lane.b32.xlu0 %v3599, 109
    %v3958 = vpop.permute.xlu0 %3957
    %3959 = vrot.lane.b32.xlu0 %v3601, 109
    %v3960 = vpop.permute.xlu0 %3959
    %3961 = vrot.lane.b32.xlu0 %v3688, 109
    %v3962 = vpop.permute.xlu0 %3961
    %3963 = vrot.lane.b32.xlu0 %v3690, 109
    %v3964 = vpop.permute.xlu0 %3963
    %3965 = vrot.lane.b32.xlu0 %v3516, 109
    %v3966 = vpop.permute.xlu0 %3965
    %3967 = vrot.lane.b32.xlu0 %v3518, 109
    %v3968 = vpop.permute.xlu0 %3967
    %3969 = vrot.lane.b32.xlu0 %v3605, 109
    %v3970 = vpop.permute.xlu0 %3969
    %3971 = vrot.lane.b32.xlu0 %v3607, 109
    %v3972 = vpop.permute.xlu0 %3971
    %3973 = vrot.lane.b32.xlu0 %v3694, 109
    %v3974 = vpop.permute.xlu0 %3973
    %3975 = vrot.lane.b32.xlu0 %v3696, 109
    %v3976 = vpop.permute.xlu0 %3975
    %3977 = vrot.lane.b32.xlu0 %v3522, 109
    %v3978 = vpop.permute.xlu0 %3977
    %3979 = vrot.lane.b32.xlu0 %v3524, 109
    %v3980 = vpop.permute.xlu0 %3979
    %3981 = vrot.lane.b32.xlu0 %v3611, 109
    %v3982 = vpop.permute.xlu0 %3981
    %3983 = vrot.lane.b32.xlu0 %v3613, 109
    %v3984 = vpop.permute.xlu0 %3983
    %3985 = vrot.lane.b32.xlu0 %v3700, 109
    %v3986 = vpop.permute.xlu0 %3985
    %3987 = vrot.lane.b32.xlu0 %v3702, 109
    %v3988 = vpop.permute.xlu0 %3987
    %3989 = vrot.lane.b32.xlu0 %v3528, 109
    %v3990 = vpop.permute.xlu0 %3989
    %3991 = vrot.lane.b32.xlu0 %v3530, 109
    %v3992 = vpop.permute.xlu0 %3991
    %3993 = vrot.lane.b32.xlu0 %v3617, 109
    %v3994 = vpop.permute.xlu0 %3993
    %3995 = vrot.lane.b32.xlu0 %v3619, 109
    %v3996 = vpop.permute.xlu0 %3995
    %3997 = vrot.lane.b32.xlu0 %v3706, 109
    %v3998 = vpop.permute.xlu0 %3997
    %3999 = vrot.lane.b32.xlu0 %v3708, 109
    %v4000 = vpop.permute.xlu0 %3999
    %vm4001 = vcmask 891904
    %v4002 = vsel %vm4001, %v3954, %v3956
    %v4003 = vsel %vm4001, %v3956, %v3958
    %v4004 = vsel %vm4001, %v3958, %v3960
    %v4005 = vsel %vm4001, %v3960, %v3962
    %v4006 = vsel %vm4001, %v3962, %v3964
    %v4007 = vsel %vm4001, %v3966, %v3968
    %v4008 = vsel %vm4001, %v3968, %v3970
    %v4009 = vsel %vm4001, %v3970, %v3972
    %v4010 = vsel %vm4001, %v3972, %v3974
    %v4011 = vsel %vm4001, %v3974, %v3976
    %v4012 = vsel %vm4001, %v3978, %v3980
    %v4013 = vsel %vm4001, %v3980, %v3982
    %v4014 = vsel %vm4001, %v3982, %v3984
    %v4015 = vsel %vm4001, %v3984, %v3986
    %v4016 = vsel %vm4001, %v3986, %v3988
    %v4017 = vsel %vm4001, %v3990, %v3992
    %v4018 = vsel %vm4001, %v3992, %v3994
    %v4019 = vsel %vm4001, %v3994, %v3996
    %v4020 = vsel %vm4001, %v3996, %v3998
    %v4021 = vsel %vm4001, %v3998, %v4000
    %4022 = vrot.lane.b32.xlu0 %v3510, 108
    %v4023 = vpop.permute.xlu0 %4022
    %4024 = vrot.lane.b32.xlu0 %v3512, 108
    %v4025 = vpop.permute.xlu0 %4024
    %4026 = vrot.lane.b32.xlu0 %v3599, 108
    %v4027 = vpop.permute.xlu0 %4026
    %4028 = vrot.lane.b32.xlu0 %v3601, 108
    %v4029 = vpop.permute.xlu0 %4028
    %4030 = vrot.lane.b32.xlu0 %v3688, 108
    %v4031 = vpop.permute.xlu0 %4030
    %4032 = vrot.lane.b32.xlu0 %v3690, 108
    %v4033 = vpop.permute.xlu0 %4032
    %4034 = vrot.lane.b32.xlu0 %v3516, 108
    %v4035 = vpop.permute.xlu0 %4034
    %4036 = vrot.lane.b32.xlu0 %v3518, 108
    %v4037 = vpop.permute.xlu0 %4036
    %4038 = vrot.lane.b32.xlu0 %v3605, 108
    %v4039 = vpop.permute.xlu0 %4038
    %4040 = vrot.lane.b32.xlu0 %v3607, 108
    %v4041 = vpop.permute.xlu0 %4040
    %4042 = vrot.lane.b32.xlu0 %v3694, 108
    %v4043 = vpop.permute.xlu0 %4042
    %4044 = vrot.lane.b32.xlu0 %v3696, 108
    %v4045 = vpop.permute.xlu0 %4044
    %4046 = vrot.lane.b32.xlu0 %v3522, 108
    %v4047 = vpop.permute.xlu0 %4046
    %4048 = vrot.lane.b32.xlu0 %v3524, 108
    %v4049 = vpop.permute.xlu0 %4048
    %4050 = vrot.lane.b32.xlu0 %v3611, 108
    %v4051 = vpop.permute.xlu0 %4050
    %4052 = vrot.lane.b32.xlu0 %v3613, 108
    %v4053 = vpop.permute.xlu0 %4052
    %4054 = vrot.lane.b32.xlu0 %v3700, 108
    %v4055 = vpop.permute.xlu0 %4054
    %4056 = vrot.lane.b32.xlu0 %v3702, 108
    %v4057 = vpop.permute.xlu0 %4056
    %4058 = vrot.lane.b32.xlu0 %v3528, 108
    %v4059 = vpop.permute.xlu0 %4058
    %4060 = vrot.lane.b32.xlu0 %v3530, 108
    %v4061 = vpop.permute.xlu0 %4060
    %4062 = vrot.lane.b32.xlu0 %v3617, 108
    %v4063 = vpop.permute.xlu0 %4062
    %4064 = vrot.lane.b32.xlu0 %v3619, 108
    %v4065 = vpop.permute.xlu0 %4064
    %4066 = vrot.lane.b32.xlu0 %v3706, 108
    %v4067 = vpop.permute.xlu0 %4066
    %4068 = vrot.lane.b32.xlu0 %v3708, 108
    %v4069 = vpop.permute.xlu0 %4068
    %v4070 = vsel %vm1581, %v4023, %v4025
    %v4071 = vsel %vm1581, %v4025, %v4027
    %v4072 = vsel %vm1581, %v4027, %v4029
    %v4073 = vsel %vm1581, %v4029, %v4031
    %v4074 = vsel %vm1581, %v4031, %v4033
    %v4075 = vsel %vm1581, %v4033, %v1568
    %v4076 = vsel %vm1581, %v4035, %v4037
    %v4077 = vsel %vm1581, %v4037, %v4039
    %v4078 = vsel %vm1581, %v4039, %v4041
    %v4079 = vsel %vm1581, %v4041, %v4043
    %v4080 = vsel %vm1581, %v4043, %v4045
    %v4081 = vsel %vm1581, %v4045, %v1568
    %v4082 = vsel %vm1581, %v4047, %v4049
    %v4083 = vsel %vm1581, %v4049, %v4051
    %v4084 = vsel %vm1581, %v4051, %v4053
    %v4085 = vsel %vm1581, %v4053, %v4055
    %v4086 = vsel %vm1581, %v4055, %v4057
    %v4087 = vsel %vm1581, %v4057, %v1568
    %v4088 = vsel %vm1581, %v4059, %v4061
    %v4089 = vsel %vm1581, %v4061, %v4063
    %v4090 = vsel %vm1581, %v4063, %v4065
    %v4091 = vsel %vm1581, %v4065, %v4067
    %v4092 = vsel %vm1581, %v4067, %v4069
    %v4093 = vsel %vm1581, %v4069, %v1568
    %4094 = vrot.lane.b32.xlu0 %v3510, 92
    %v4095 = vpop.permute.xlu0 %4094
    %4096 = vrot.lane.b32.xlu0 %v3512, 92
    %v4097 = vpop.permute.xlu0 %4096
    %4098 = vrot.lane.b32.xlu0 %v3599, 92
    %v4099 = vpop.permute.xlu0 %4098
    %4100 = vrot.lane.b32.xlu0 %v3601, 92
    %v4101 = vpop.permute.xlu0 %4100
    %4102 = vrot.lane.b32.xlu0 %v3688, 92
    %v4103 = vpop.permute.xlu0 %4102
    %4104 = vrot.lane.b32.xlu0 %v3690, 92
    %v4105 = vpop.permute.xlu0 %4104
    %4106 = vrot.lane.b32.xlu0 0.0, 92
    %v4107 = vpop.permute.xlu0 %4106
    %4108 = vrot.lane.b32.xlu0 %v3516, 92
    %v4109 = vpop.permute.xlu0 %4108
    %4110 = vrot.lane.b32.xlu0 %v3518, 92
    %v4111 = vpop.permute.xlu0 %4110
    %4112 = vrot.lane.b32.xlu0 %v3605, 92
    %v4113 = vpop.permute.xlu0 %4112
    %4114 = vrot.lane.b32.xlu0 %v3607, 92
    %v4115 = vpop.permute.xlu0 %4114
    %4116 = vrot.lane.b32.xlu0 %v3694, 92
    %v4117 = vpop.permute.xlu0 %4116
    %4118 = vrot.lane.b32.xlu0 %v3696, 92
    %v4119 = vpop.permute.xlu0 %4118
    %4120 = vrot.lane.b32.xlu0 %v3522, 92
    %v4121 = vpop.permute.xlu0 %4120
    %4122 = vrot.lane.b32.xlu0 %v3524, 92
    %v4123 = vpop.permute.xlu0 %4122
    %4124 = vrot.lane.b32.xlu0 %v3611, 92
    %v4125 = vpop.permute.xlu0 %4124
    %4126 = vrot.lane.b32.xlu0 %v3613, 92
    %v4127 = vpop.permute.xlu0 %4126
    %4128 = vrot.lane.b32.xlu0 %v3700, 92
    %v4129 = vpop.permute.xlu0 %4128
    %4130 = vrot.lane.b32.xlu0 %v3702, 92
    %v4131 = vpop.permute.xlu0 %4130
    %4132 = vrot.lane.b32.xlu0 %v3528, 92
    %v4133 = vpop.permute.xlu0 %4132
    %4134 = vrot.lane.b32.xlu0 %v3530, 92
    %v4135 = vpop.permute.xlu0 %4134
    %4136 = vrot.lane.b32.xlu0 %v3617, 92
    %v4137 = vpop.permute.xlu0 %4136
    %4138 = vrot.lane.b32.xlu0 %v3619, 92
    %v4139 = vpop.permute.xlu0 %4138
    %4140 = vrot.lane.b32.xlu0 %v3706, 92
    %v4141 = vpop.permute.xlu0 %4140
    %4142 = vrot.lane.b32.xlu0 %v3708, 92
    %v4143 = vpop.permute.xlu0 %4142
    %vm4144 = vcmask 752640
    %v4145 = vsel %vm4144, %v4095, %v4097
    %v4146 = vsel %vm4144, %v4097, %v4099
    %v4147 = vsel %vm4144, %v4099, %v4101
    %v4148 = vsel %vm4144, %v4101, %v4103
    %v4149 = vsel %vm4144, %v4103, %v4105
    %v4150 = vsel %vm4144, %v4105, %v4107
    %v4151 = vsel %vm4144, %v4109, %v4111
    %v4152 = vsel %vm4144, %v4111, %v4113
    %v4153 = vsel %vm4144, %v4113, %v4115
    %v4154 = vsel %vm4144, %v4115, %v4117
    %v4155 = vsel %vm4144, %v4117, %v4119
    %v4156 = vsel %vm4144, %v4119, %v4107
    %v4157 = vsel %vm4144, %v4121, %v4123
    %v4158 = vsel %vm4144, %v4123, %v4125
    %v4159 = vsel %vm4144, %v4125, %v4127
    %v4160 = vsel %vm4144, %v4127, %v4129
    %v4161 = vsel %vm4144, %v4129, %v4131
    %v4162 = vsel %vm4144, %v4131, %v4107
    %v4163 = vsel %vm4144, %v4133, %v4135
    %v4164 = vsel %vm4144, %v4135, %v4137
    %v4165 = vsel %vm4144, %v4137, %v4139
    %v4166 = vsel %vm4144, %v4139, %v4141
    %v4167 = vsel %vm4144, %v4141, %v4143
    %v4168 = vsel %vm4144, %v4143, %v4107
    %4169 = vrot.lane.b32.xlu0 %v3510, 91
    %v4170 = vpop.permute.xlu0 %4169
    %4171 = vrot.lane.b32.xlu0 %v3512, 91
    %v4172 = vpop.permute.xlu0 %4171
    %4173 = vrot.lane.b32.xlu0 %v3599, 91
    %v4174 = vpop.permute.xlu0 %4173
    %4175 = vrot.lane.b32.xlu0 %v3601, 91
    %v4176 = vpop.permute.xlu0 %4175
    %4177 = vrot.lane.b32.xlu0 %v3688, 91
    %v4178 = vpop.permute.xlu0 %4177
    %4179 = vrot.lane.b32.xlu0 %v3690, 91
    %v4180 = vpop.permute.xlu0 %4179
    %4181 = vrot.lane.b32.xlu0 0.0, 91
    %v4182 = vpop.permute.xlu0 %4181
    %4183 = vrot.lane.b32.xlu0 %v3516, 91
    %v4184 = vpop.permute.xlu0 %4183
    %4185 = vrot.lane.b32.xlu0 %v3518, 91
    %v4186 = vpop.permute.xlu0 %4185
    %4187 = vrot.lane.b32.xlu0 %v3605, 91
    %v4188 = vpop.permute.xlu0 %4187
    %4189 = vrot.lane.b32.xlu0 %v3607, 91
    %v4190 = vpop.permute.xlu0 %4189
    %4191 = vrot.lane.b32.xlu0 %v3694, 91
    %v4192 = vpop.permute.xlu0 %4191
    %4193 = vrot.lane.b32.xlu0 %v3696, 91
    %v4194 = vpop.permute.xlu0 %4193
    %4195 = vrot.lane.b32.xlu0 %v3522, 91
    %v4196 = vpop.permute.xlu0 %4195
    %4197 = vrot.lane.b32.xlu0 %v3524, 91
    %v4198 = vpop.permute.xlu0 %4197
    %4199 = vrot.lane.b32.xlu0 %v3611, 91
    %v4200 = vpop.permute.xlu0 %4199
    %4201 = vrot.lane.b32.xlu0 %v3613, 91
    %v4202 = vpop.permute.xlu0 %4201
    %4203 = vrot.lane.b32.xlu0 %v3700, 91
    %v4204 = vpop.permute.xlu0 %4203
    %4205 = vrot.lane.b32.xlu0 %v3702, 91
    %v4206 = vpop.permute.xlu0 %4205
    %4207 = vrot.lane.b32.xlu0 %v3528, 91
    %v4208 = vpop.permute.xlu0 %4207
    %4209 = vrot.lane.b32.xlu0 %v3530, 91
    %v4210 = vpop.permute.xlu0 %4209
    %4211 = vrot.lane.b32.xlu0 %v3617, 91
    %v4212 = vpop.permute.xlu0 %4211
    %4213 = vrot.lane.b32.xlu0 %v3619, 91
    %v4214 = vpop.permute.xlu0 %4213
    %4215 = vrot.lane.b32.xlu0 %v3706, 91
    %v4216 = vpop.permute.xlu0 %4215
    %4217 = vrot.lane.b32.xlu0 %v3708, 91
    %v4218 = vpop.permute.xlu0 %4217
    %vm4219 = vcmask 744448
    %v4220 = vsel %vm4219, %v4170, %v4172
    %v4221 = vsel %vm4219, %v4172, %v4174
    %v4222 = vsel %vm4219, %v4174, %v4176
    %v4223 = vsel %vm4219, %v4176, %v4178
    %v4224 = vsel %vm4219, %v4178, %v4180
    %v4225 = vsel %vm4219, %v4180, %v4182
    %v4226 = vsel %vm4219, %v4184, %v4186
    %v4227 = vsel %vm4219, %v4186, %v4188
    %v4228 = vsel %vm4219, %v4188, %v4190
    %v4229 = vsel %vm4219, %v4190, %v4192
    %v4230 = vsel %vm4219, %v4192, %v4194
    %v4231 = vsel %vm4219, %v4194, %v4182
    %v4232 = vsel %vm4219, %v4196, %v4198
    %v4233 = vsel %vm4219, %v4198, %v4200
    %v4234 = vsel %vm4219, %v4200, %v4202
    %v4235 = vsel %vm4219, %v4202, %v4204
    %v4236 = vsel %vm4219, %v4204, %v4206
    %v4237 = vsel %vm4219, %v4206, %v4182
    %v4238 = vsel %vm4219, %v4208, %v4210
    %v4239 = vsel %vm4219, %v4210, %v4212
    %v4240 = vsel %vm4219, %v4212, %v4214
    %v4241 = vsel %vm4219, %v4214, %v4216
    %v4242 = vsel %vm4219, %v4216, %v4218
    %v4243 = vsel %vm4219, %v4218, %v4182
    %4244 = vrot.lane.b32.xlu0 %v3510, 90
    %v4245 = vpop.permute.xlu0 %4244
    %4246 = vrot.lane.b32.xlu0 %v3512, 90
    %v4247 = vpop.permute.xlu0 %4246
    %4248 = vrot.lane.b32.xlu0 %v3599, 90
    %v4249 = vpop.permute.xlu0 %4248
    %4250 = vrot.lane.b32.xlu0 %v3601, 90
    %v4251 = vpop.permute.xlu0 %4250
    %4252 = vrot.lane.b32.xlu0 %v3688, 90
    %v4253 = vpop.permute.xlu0 %4252
    %4254 = vrot.lane.b32.xlu0 %v3690, 90
    %v4255 = vpop.permute.xlu0 %4254
    %4256 = vrot.lane.b32.xlu0 0.0, 90
    %v4257 = vpop.permute.xlu0 %4256
    %4258 = vrot.lane.b32.xlu0 %v3516, 90
    %v4259 = vpop.permute.xlu0 %4258
    %4260 = vrot.lane.b32.xlu0 %v3518, 90
    %v4261 = vpop.permute.xlu0 %4260
    %4262 = vrot.lane.b32.xlu0 %v3605, 90
    %v4263 = vpop.permute.xlu0 %4262
    %4264 = vrot.lane.b32.xlu0 %v3607, 90
    %v4265 = vpop.permute.xlu0 %4264
    %4266 = vrot.lane.b32.xlu0 %v3694, 90
    %v4267 = vpop.permute.xlu0 %4266
    %4268 = vrot.lane.b32.xlu0 %v3696, 90
    %v4269 = vpop.permute.xlu0 %4268
    %4270 = vrot.lane.b32.xlu0 %v3522, 90
    %v4271 = vpop.permute.xlu0 %4270
    %4272 = vrot.lane.b32.xlu0 %v3524, 90
    %v4273 = vpop.permute.xlu0 %4272
    %4274 = vrot.lane.b32.xlu0 %v3611, 90
    %v4275 = vpop.permute.xlu0 %4274
    %4276 = vrot.lane.b32.xlu0 %v3613, 90
    %v4277 = vpop.permute.xlu0 %4276
    %4278 = vrot.lane.b32.xlu0 %v3700, 90
    %v4279 = vpop.permute.xlu0 %4278
    %4280 = vrot.lane.b32.xlu0 %v3702, 90
    %v4281 = vpop.permute.xlu0 %4280
    %4282 = vrot.lane.b32.xlu0 %v3528, 90
    %v4283 = vpop.permute.xlu0 %4282
    %4284 = vrot.lane.b32.xlu0 %v3530, 90
    %v4285 = vpop.permute.xlu0 %4284
    %4286 = vrot.lane.b32.xlu0 %v3617, 90
    %v4287 = vpop.permute.xlu0 %4286
    %4288 = vrot.lane.b32.xlu0 %v3619, 90
    %v4289 = vpop.permute.xlu0 %4288
    %4290 = vrot.lane.b32.xlu0 %v3706, 90
    %v4291 = vpop.permute.xlu0 %4290
    %4292 = vrot.lane.b32.xlu0 %v3708, 90
    %v4293 = vpop.permute.xlu0 %4292
    %vm4294 = vcmask 736256
    %v4295 = vsel %vm4294, %v4245, %v4247
    %v4296 = vsel %vm4294, %v4247, %v4249
    %v4297 = vsel %vm4294, %v4249, %v4251
    %v4298 = vsel %vm4294, %v4251, %v4253
    %v4299 = vsel %vm4294, %v4253, %v4255
    %v4300 = vsel %vm4294, %v4255, %v4257
    %v4301 = vsel %vm4294, %v4259, %v4261
    %v4302 = vsel %vm4294, %v4261, %v4263
    %v4303 = vsel %vm4294, %v4263, %v4265
    %v4304 = vsel %vm4294, %v4265, %v4267
    %v4305 = vsel %vm4294, %v4267, %v4269
    %v4306 = vsel %vm4294, %v4269, %v4257
    %v4307 = vsel %vm4294, %v4271, %v4273
    %v4308 = vsel %vm4294, %v4273, %v4275
    %v4309 = vsel %vm4294, %v4275, %v4277
    %v4310 = vsel %vm4294, %v4277, %v4279
    %v4311 = vsel %vm4294, %v4279, %v4281
    %v4312 = vsel %vm4294, %v4281, %v4257
    %v4313 = vsel %vm4294, %v4283, %v4285
    %v4314 = vsel %vm4294, %v4285, %v4287
    %v4315 = vsel %vm4294, %v4287, %v4289
    %v4316 = vsel %vm4294, %v4289, %v4291
    %v4317 = vsel %vm4294, %v4291, %v4293
    %v4318 = vsel %vm4294, %v4293, %v4257
    %4320 = vset.pattern.permute.xlu0 0
    %4321 = vperm.xlu0 %4320, %v3434
    %v4322 = vpop.permute.xlu0 %4321
    %4325 = vset.pattern.permute.xlu0 0
    %4326 = vperm.xlu0 %4325, %v3435
    %v4327 = vpop.permute.xlu0 %4326
    %4329 = vrot.lane.b32.xlu0 0.0, 19
    %v4330 = vpop.permute.xlu0 %4329
    %4331 = vrot.lane.b32.xlu0 %v3510, 19
    %v4332 = vpop.permute.xlu0 %4331
    %4333 = vrot.lane.b32.xlu0 %v3512, 19
    %v4334 = vpop.permute.xlu0 %4333
    %4335 = vrot.lane.b32.xlu0 %v3599, 19
    %v4336 = vpop.permute.xlu0 %4335
    %4337 = vrot.lane.b32.xlu0 %v3601, 19
    %v4338 = vpop.permute.xlu0 %4337
    %4339 = vrot.lane.b32.xlu0 %v3688, 19
    %v4340 = vpop.permute.xlu0 %4339
    %4341 = vrot.lane.b32.xlu0 %v3690, 19
    %v4342 = vpop.permute.xlu0 %4341
    %4343 = vrot.lane.b32.xlu0 %v3516, 19
    %v4344 = vpop.permute.xlu0 %4343
    %4345 = vrot.lane.b32.xlu0 %v3518, 19
    %v4346 = vpop.permute.xlu0 %4345
    %4347 = vrot.lane.b32.xlu0 %v3605, 19
    %v4348 = vpop.permute.xlu0 %4347
    %4349 = vrot.lane.b32.xlu0 %v3607, 19
    %v4350 = vpop.permute.xlu0 %4349
    %4351 = vrot.lane.b32.xlu0 %v3694, 19
    %v4352 = vpop.permute.xlu0 %4351
    %4353 = vrot.lane.b32.xlu0 %v3696, 19
    %v4354 = vpop.permute.xlu0 %4353
    %4355 = vrot.lane.b32.xlu0 %v3522, 19
    %v4356 = vpop.permute.xlu0 %4355
    %4357 = vrot.lane.b32.xlu0 %v3524, 19
    %v4358 = vpop.permute.xlu0 %4357
    %4359 = vrot.lane.b32.xlu0 %v3611, 19
    %v4360 = vpop.permute.xlu0 %4359
    %4361 = vrot.lane.b32.xlu0 %v3613, 19
    %v4362 = vpop.permute.xlu0 %4361
    %4363 = vrot.lane.b32.xlu0 %v3700, 19
    %v4364 = vpop.permute.xlu0 %4363
    %4365 = vrot.lane.b32.xlu0 %v3702, 19
    %v4366 = vpop.permute.xlu0 %4365
    %4367 = vrot.lane.b32.xlu0 %v3528, 19
    %v4368 = vpop.permute.xlu0 %4367
    %4369 = vrot.lane.b32.xlu0 %v3530, 19
    %v4370 = vpop.permute.xlu0 %4369
    %4371 = vrot.lane.b32.xlu0 %v3617, 19
    %v4372 = vpop.permute.xlu0 %4371
    %4373 = vrot.lane.b32.xlu0 %v3619, 19
    %v4374 = vpop.permute.xlu0 %4373
    %4375 = vrot.lane.b32.xlu0 %v3706, 19
    %v4376 = vpop.permute.xlu0 %4375
    %4377 = vrot.lane.b32.xlu0 %v3708, 19
    %v4378 = vpop.permute.xlu0 %4377
    %4379 = vrot.lane.b32.xlu0 %v3782, 19
    %v4380 = vpop.permute.xlu0 %4379
    %4381 = vrot.lane.b32.xlu0 %v3783, 19
    %v4382 = vpop.permute.xlu0 %4381
    %4383 = vrot.lane.b32.xlu0 %v3784, 19
    %v4384 = vpop.permute.xlu0 %4383
    %4385 = vrot.lane.b32.xlu0 %v3785, 19
    %v4386 = vpop.permute.xlu0 %4385
    %4387 = vrot.lane.b32.xlu0 %v3786, 19
    %v4388 = vpop.permute.xlu0 %4387
    %4389 = vrot.lane.b32.xlu0 %v3787, 19
    %v4390 = vpop.permute.xlu0 %4389
    %4391 = vrot.lane.b32.xlu0 %v3745, 19
    %v4392 = vpop.permute.xlu0 %4391
    %4393 = vrot.lane.b32.xlu0 %v3788, 19
    %v4394 = vpop.permute.xlu0 %4393
    %4395 = vrot.lane.b32.xlu0 %v3789, 19
    %v4396 = vpop.permute.xlu0 %4395
    %4397 = vrot.lane.b32.xlu0 %v3790, 19
    %v4398 = vpop.permute.xlu0 %4397
    %4399 = vrot.lane.b32.xlu0 %v3791, 19
    %v4400 = vpop.permute.xlu0 %4399
    %4401 = vrot.lane.b32.xlu0 %v3792, 19
    %v4402 = vpop.permute.xlu0 %4401
    %4403 = vrot.lane.b32.xlu0 %v3793, 19
    %v4404 = vpop.permute.xlu0 %4403
    %4405 = vrot.lane.b32.xlu0 %v3757, 19
    %v4406 = vpop.permute.xlu0 %4405
    %4407 = vrot.lane.b32.xlu0 %v3794, 19
    %v4408 = vpop.permute.xlu0 %4407
    %4409 = vrot.lane.b32.xlu0 %v3795, 19
    %v4410 = vpop.permute.xlu0 %4409
    %4411 = vrot.lane.b32.xlu0 %v3796, 19
    %v4412 = vpop.permute.xlu0 %4411
    %4413 = vrot.lane.b32.xlu0 %v3797, 19
    %v4414 = vpop.permute.xlu0 %4413
    %4415 = vrot.lane.b32.xlu0 %v3798, 19
    %v4416 = vpop.permute.xlu0 %4415
    %4417 = vrot.lane.b32.xlu0 %v3799, 19
    %v4418 = vpop.permute.xlu0 %4417
    %4419 = vrot.lane.b32.xlu0 %v3769, 19
    %v4420 = vpop.permute.xlu0 %4419
    %4421 = vrot.lane.b32.xlu0 %v3800, 19
    %v4422 = vpop.permute.xlu0 %4421
    %4423 = vrot.lane.b32.xlu0 %v3801, 19
    %v4424 = vpop.permute.xlu0 %4423
    %4425 = vrot.lane.b32.xlu0 %v3802, 19
    %v4426 = vpop.permute.xlu0 %4425
    %4427 = vrot.lane.b32.xlu0 %v3803, 19
    %v4428 = vpop.permute.xlu0 %4427
    %4429 = vrot.lane.b32.xlu0 %v3804, 19
    %v4430 = vpop.permute.xlu0 %4429
    %4431 = vrot.lane.b32.xlu0 %v3805, 19
    %v4432 = vpop.permute.xlu0 %4431
    %4433 = vrot.lane.b32.xlu0 %v3781, 19
    %v4434 = vpop.permute.xlu0 %4433
    %4435 = vrot.lane.b32.xlu0 %v3854, 19
    %v4436 = vpop.permute.xlu0 %4435
    %4437 = vrot.lane.b32.xlu0 %v3855, 19
    %v4438 = vpop.permute.xlu0 %4437
    %4439 = vrot.lane.b32.xlu0 %v3856, 19
    %v4440 = vpop.permute.xlu0 %4439
    %4441 = vrot.lane.b32.xlu0 %v3857, 19
    %v4442 = vpop.permute.xlu0 %4441
    %4443 = vrot.lane.b32.xlu0 %v3858, 19
    %v4444 = vpop.permute.xlu0 %4443
    %4445 = vrot.lane.b32.xlu0 %v3859, 19
    %v4446 = vpop.permute.xlu0 %4445
    %4447 = vrot.lane.b32.xlu0 %v3817, 19
    %v4448 = vpop.permute.xlu0 %4447
    %4449 = vrot.lane.b32.xlu0 %v3860, 19
    %v4450 = vpop.permute.xlu0 %4449
    %4451 = vrot.lane.b32.xlu0 %v3861, 19
    %v4452 = vpop.permute.xlu0 %4451
    %4453 = vrot.lane.b32.xlu0 %v3862, 19
    %v4454 = vpop.permute.xlu0 %4453
    %4455 = vrot.lane.b32.xlu0 %v3863, 19
    %v4456 = vpop.permute.xlu0 %4455
    %4457 = vrot.lane.b32.xlu0 %v3864, 19
    %v4458 = vpop.permute.xlu0 %4457
    %4459 = vrot.lane.b32.xlu0 %v3865, 19
    %v4460 = vpop.permute.xlu0 %4459
    %4461 = vrot.lane.b32.xlu0 %v3829, 19
    %v4462 = vpop.permute.xlu0 %4461
    %4463 = vrot.lane.b32.xlu0 %v3866, 19
    %v4464 = vpop.permute.xlu0 %4463
    %4465 = vrot.lane.b32.xlu0 %v3867, 19
    %v4466 = vpop.permute.xlu0 %4465
    %4467 = vrot.lane.b32.xlu0 %v3868, 19
    %v4468 = vpop.permute.xlu0 %4467
    %4469 = vrot.lane.b32.xlu0 %v3869, 19
    %v4470 = vpop.permute.xlu0 %4469
    %4471 = vrot.lane.b32.xlu0 %v3870, 19
    %v4472 = vpop.permute.xlu0 %4471
    %4473 = vrot.lane.b32.xlu0 %v3871, 19
    %v4474 = vpop.permute.xlu0 %4473
    %4475 = vrot.lane.b32.xlu0 %v3841, 19
    %v4476 = vpop.permute.xlu0 %4475
    %4477 = vrot.lane.b32.xlu0 %v3872, 19
    %v4478 = vpop.permute.xlu0 %4477
    %4479 = vrot.lane.b32.xlu0 %v3873, 19
    %v4480 = vpop.permute.xlu0 %4479
    %4481 = vrot.lane.b32.xlu0 %v3874, 19
    %v4482 = vpop.permute.xlu0 %4481
    %4483 = vrot.lane.b32.xlu0 %v3875, 19
    %v4484 = vpop.permute.xlu0 %4483
    %4485 = vrot.lane.b32.xlu0 %v3876, 19
    %v4486 = vpop.permute.xlu0 %4485
    %4487 = vrot.lane.b32.xlu0 %v3877, 19
    %v4488 = vpop.permute.xlu0 %4487
    %4489 = vrot.lane.b32.xlu0 %v3853, 19
    %v4490 = vpop.permute.xlu0 %4489
    %4491 = vrot.lane.b32.xlu0 %v3929, 19
    %v4492 = vpop.permute.xlu0 %4491
    %4493 = vrot.lane.b32.xlu0 %v3930, 19
    %v4494 = vpop.permute.xlu0 %4493
    %4495 = vrot.lane.b32.xlu0 %v3931, 19
    %v4496 = vpop.permute.xlu0 %4495
    %4497 = vrot.lane.b32.xlu0 %v3932, 19
    %v4498 = vpop.permute.xlu0 %4497
    %4499 = vrot.lane.b32.xlu0 %v3933, 19
    %v4500 = vpop.permute.xlu0 %4499
    %4501 = vrot.lane.b32.xlu0 %v3934, 19
    %v4502 = vpop.permute.xlu0 %4501
    %4503 = vrot.lane.b32.xlu0 %v3891, 19
    %v4504 = vpop.permute.xlu0 %4503
    %4505 = vrot.lane.b32.xlu0 %v3935, 19
    %v4506 = vpop.permute.xlu0 %4505
    %4507 = vrot.lane.b32.xlu0 %v3936, 19
    %v4508 = vpop.permute.xlu0 %4507
    %4509 = vrot.lane.b32.xlu0 %v3937, 19
    %v4510 = vpop.permute.xlu0 %4509
    %4511 = vrot.lane.b32.xlu0 %v3938, 19
    %v4512 = vpop.permute.xlu0 %4511
    %4513 = vrot.lane.b32.xlu0 %v3939, 19
    %v4514 = vpop.permute.xlu0 %4513
    %4515 = vrot.lane.b32.xlu0 %v3940, 19
    %v4516 = vpop.permute.xlu0 %4515
    %4517 = vrot.lane.b32.xlu0 %v3903, 19
    %v4518 = vpop.permute.xlu0 %4517
    %4519 = vrot.lane.b32.xlu0 %v3941, 19
    %v4520 = vpop.permute.xlu0 %4519
    %4521 = vrot.lane.b32.xlu0 %v3942, 19
    %v4522 = vpop.permute.xlu0 %4521
    %4523 = vrot.lane.b32.xlu0 %v3943, 19
    %v4524 = vpop.permute.xlu0 %4523
    %4525 = vrot.lane.b32.xlu0 %v3944, 19
    %v4526 = vpop.permute.xlu0 %4525
    %4527 = vrot.lane.b32.xlu0 %v3945, 19
    %v4528 = vpop.permute.xlu0 %4527
    %4529 = vrot.lane.b32.xlu0 %v3946, 19
    %v4530 = vpop.permute.xlu0 %4529
    %4531 = vrot.lane.b32.xlu0 %v3915, 19
    %v4532 = vpop.permute.xlu0 %4531
    %4533 = vrot.lane.b32.xlu0 %v3947, 19
    %v4534 = vpop.permute.xlu0 %4533
    %4535 = vrot.lane.b32.xlu0 %v3948, 19
    %v4536 = vpop.permute.xlu0 %4535
    %4537 = vrot.lane.b32.xlu0 %v3949, 19
    %v4538 = vpop.permute.xlu0 %4537
    %4539 = vrot.lane.b32.xlu0 %v3950, 19
    %v4540 = vpop.permute.xlu0 %4539
    %4541 = vrot.lane.b32.xlu0 %v3951, 19
    %v4542 = vpop.permute.xlu0 %4541
    %4543 = vrot.lane.b32.xlu0 %v3952, 19
    %v4544 = vpop.permute.xlu0 %4543
    %4545 = vrot.lane.b32.xlu0 %v3927, 19
    %v4546 = vpop.permute.xlu0 %4545
    %4547 = vrot.lane.b32.xlu0 %v3954, 19
    %v4548 = vpop.permute.xlu0 %4547
    %4549 = vrot.lane.b32.xlu0 %v4002, 19
    %v4550 = vpop.permute.xlu0 %4549
    %4551 = vrot.lane.b32.xlu0 %v4003, 19
    %v4552 = vpop.permute.xlu0 %4551
    %4553 = vrot.lane.b32.xlu0 %v4004, 19
    %v4554 = vpop.permute.xlu0 %4553
    %4555 = vrot.lane.b32.xlu0 %v4005, 19
    %v4556 = vpop.permute.xlu0 %4555
    %4557 = vrot.lane.b32.xlu0 %v4006, 19
    %v4558 = vpop.permute.xlu0 %4557
    %4559 = vrot.lane.b32.xlu0 %v3964, 19
    %v4560 = vpop.permute.xlu0 %4559
    %4561 = vrot.lane.b32.xlu0 %v3966, 19
    %v4562 = vpop.permute.xlu0 %4561
    %4563 = vrot.lane.b32.xlu0 %v4007, 19
    %v4564 = vpop.permute.xlu0 %4563
    %4565 = vrot.lane.b32.xlu0 %v4008, 19
    %v4566 = vpop.permute.xlu0 %4565
    %4567 = vrot.lane.b32.xlu0 %v4009, 19
    %v4568 = vpop.permute.xlu0 %4567
    %4569 = vrot.lane.b32.xlu0 %v4010, 19
    %v4570 = vpop.permute.xlu0 %4569
    %4571 = vrot.lane.b32.xlu0 %v4011, 19
    %v4572 = vpop.permute.xlu0 %4571
    %4573 = vrot.lane.b32.xlu0 %v3976, 19
    %v4574 = vpop.permute.xlu0 %4573
    %4575 = vrot.lane.b32.xlu0 %v3978, 19
    %v4576 = vpop.permute.xlu0 %4575
    %4577 = vrot.lane.b32.xlu0 %v4012, 19
    %v4578 = vpop.permute.xlu0 %4577
    %4579 = vrot.lane.b32.xlu0 %v4013, 19
    %v4580 = vpop.permute.xlu0 %4579
    %4581 = vrot.lane.b32.xlu0 %v4014, 19
    %v4582 = vpop.permute.xlu0 %4581
    %4583 = vrot.lane.b32.xlu0 %v4015, 19
    %v4584 = vpop.permute.xlu0 %4583
    %4585 = vrot.lane.b32.xlu0 %v4016, 19
    %v4586 = vpop.permute.xlu0 %4585
    %4587 = vrot.lane.b32.xlu0 %v3988, 19
    %v4588 = vpop.permute.xlu0 %4587
    %4589 = vrot.lane.b32.xlu0 %v3990, 19
    %v4590 = vpop.permute.xlu0 %4589
    %4591 = vrot.lane.b32.xlu0 %v4017, 19
    %v4592 = vpop.permute.xlu0 %4591
    %4593 = vrot.lane.b32.xlu0 %v4018, 19
    %v4594 = vpop.permute.xlu0 %4593
    %4595 = vrot.lane.b32.xlu0 %v4019, 19
    %v4596 = vpop.permute.xlu0 %4595
    %4597 = vrot.lane.b32.xlu0 %v4020, 19
    %v4598 = vpop.permute.xlu0 %4597
    %4599 = vrot.lane.b32.xlu0 %v4021, 19
    %v4600 = vpop.permute.xlu0 %4599
    %4601 = vrot.lane.b32.xlu0 %v4000, 19
    %v4602 = vpop.permute.xlu0 %4601
    %4603 = vrot.lane.b32.xlu0 %v4023, 19
    %v4604 = vpop.permute.xlu0 %4603
    %4605 = vrot.lane.b32.xlu0 %v4070, 19
    %v4606 = vpop.permute.xlu0 %4605
    %4607 = vrot.lane.b32.xlu0 %v4071, 19
    %v4608 = vpop.permute.xlu0 %4607
    %4609 = vrot.lane.b32.xlu0 %v4072, 19
    %v4610 = vpop.permute.xlu0 %4609
    %4611 = vrot.lane.b32.xlu0 %v4073, 19
    %v4612 = vpop.permute.xlu0 %4611
    %4613 = vrot.lane.b32.xlu0 %v4074, 19
    %v4614 = vpop.permute.xlu0 %4613
    %4615 = vrot.lane.b32.xlu0 %v4075, 19
    %v4616 = vpop.permute.xlu0 %4615
    %4617 = vrot.lane.b32.xlu0 %v4035, 19
    %v4618 = vpop.permute.xlu0 %4617
    %4619 = vrot.lane.b32.xlu0 %v4076, 19
    %v4620 = vpop.permute.xlu0 %4619
    %4621 = vrot.lane.b32.xlu0 %v4077, 19
    %v4622 = vpop.permute.xlu0 %4621
    %4623 = vrot.lane.b32.xlu0 %v4078, 19
    %v4624 = vpop.permute.xlu0 %4623
    %4625 = vrot.lane.b32.xlu0 %v4079, 19
    %v4626 = vpop.permute.xlu0 %4625
    %4627 = vrot.lane.b32.xlu0 %v4080, 19
    %v4628 = vpop.permute.xlu0 %4627
    %4629 = vrot.lane.b32.xlu0 %v4081, 19
    %v4630 = vpop.permute.xlu0 %4629
    %4631 = vrot.lane.b32.xlu0 %v4047, 19
    %v4632 = vpop.permute.xlu0 %4631
    %4633 = vrot.lane.b32.xlu0 %v4082, 19
    %v4634 = vpop.permute.xlu0 %4633
    %4635 = vrot.lane.b32.xlu0 %v4083, 19
    %v4636 = vpop.permute.xlu0 %4635
    %4637 = vrot.lane.b32.xlu0 %v4084, 19
    %v4638 = vpop.permute.xlu0 %4637
    %4639 = vrot.lane.b32.xlu0 %v4085, 19
    %v4640 = vpop.permute.xlu0 %4639
    %4641 = vrot.lane.b32.xlu0 %v4086, 19
    %v4642 = vpop.permute.xlu0 %4641
    %4643 = vrot.lane.b32.xlu0 %v4087, 19
    %v4644 = vpop.permute.xlu0 %4643
    %4645 = vrot.lane.b32.xlu0 %v4059, 19
    %v4646 = vpop.permute.xlu0 %4645
    %4647 = vrot.lane.b32.xlu0 %v4088, 19
    %v4648 = vpop.permute.xlu0 %4647
    %4649 = vrot.lane.b32.xlu0 %v4089, 19
    %v4650 = vpop.permute.xlu0 %4649
    %4651 = vrot.lane.b32.xlu0 %v4090, 19
    %v4652 = vpop.permute.xlu0 %4651
    %4653 = vrot.lane.b32.xlu0 %v4091, 19
    %v4654 = vpop.permute.xlu0 %4653
    %4655 = vrot.lane.b32.xlu0 %v4092, 19
    %v4656 = vpop.permute.xlu0 %4655
    %4657 = vrot.lane.b32.xlu0 %v4093, 19
    %v4658 = vpop.permute.xlu0 %4657
    %4659 = vrot.lane.b32.xlu0 %v4095, 19
    %v4660 = vpop.permute.xlu0 %4659
    %4661 = vrot.lane.b32.xlu0 %v4145, 19
    %v4662 = vpop.permute.xlu0 %4661
    %4663 = vrot.lane.b32.xlu0 %v4146, 19
    %v4664 = vpop.permute.xlu0 %4663
    %4665 = vrot.lane.b32.xlu0 %v4147, 19
    %v4666 = vpop.permute.xlu0 %4665
    %4667 = vrot.lane.b32.xlu0 %v4148, 19
    %v4668 = vpop.permute.xlu0 %4667
    %4669 = vrot.lane.b32.xlu0 %v4149, 19
    %v4670 = vpop.permute.xlu0 %4669
    %4671 = vrot.lane.b32.xlu0 %v4150, 19
    %v4672 = vpop.permute.xlu0 %4671
    %4673 = vrot.lane.b32.xlu0 %v4109, 19
    %v4674 = vpop.permute.xlu0 %4673
    %4675 = vrot.lane.b32.xlu0 %v4151, 19
    %v4676 = vpop.permute.xlu0 %4675
    %4677 = vrot.lane.b32.xlu0 %v4152, 19
    %v4678 = vpop.permute.xlu0 %4677
    %4679 = vrot.lane.b32.xlu0 %v4153, 19
    %v4680 = vpop.permute.xlu0 %4679
    %4681 = vrot.lane.b32.xlu0 %v4154, 19
    %v4682 = vpop.permute.xlu0 %4681
    %4683 = vrot.lane.b32.xlu0 %v4155, 19
    %v4684 = vpop.permute.xlu0 %4683
    %4685 = vrot.lane.b32.xlu0 %v4156, 19
    %v4686 = vpop.permute.xlu0 %4685
    %4687 = vrot.lane.b32.xlu0 %v4121, 19
    %v4688 = vpop.permute.xlu0 %4687
    %4689 = vrot.lane.b32.xlu0 %v4157, 19
    %v4690 = vpop.permute.xlu0 %4689
    %4691 = vrot.lane.b32.xlu0 %v4158, 19
    %v4692 = vpop.permute.xlu0 %4691
    %4693 = vrot.lane.b32.xlu0 %v4159, 19
    %v4694 = vpop.permute.xlu0 %4693
    %4695 = vrot.lane.b32.xlu0 %v4160, 19
    %v4696 = vpop.permute.xlu0 %4695
    %4697 = vrot.lane.b32.xlu0 %v4161, 19
    %v4698 = vpop.permute.xlu0 %4697
    %4699 = vrot.lane.b32.xlu0 %v4162, 19
    %v4700 = vpop.permute.xlu0 %4699
    %4701 = vrot.lane.b32.xlu0 %v4133, 19
    %v4702 = vpop.permute.xlu0 %4701
    %4703 = vrot.lane.b32.xlu0 %v4163, 19
    %v4704 = vpop.permute.xlu0 %4703
    %4705 = vrot.lane.b32.xlu0 %v4164, 19
    %v4706 = vpop.permute.xlu0 %4705
    %4707 = vrot.lane.b32.xlu0 %v4165, 19
    %v4708 = vpop.permute.xlu0 %4707
    %4709 = vrot.lane.b32.xlu0 %v4166, 19
    %v4710 = vpop.permute.xlu0 %4709
    %4711 = vrot.lane.b32.xlu0 %v4167, 19
    %v4712 = vpop.permute.xlu0 %4711
    %4713 = vrot.lane.b32.xlu0 %v4168, 19
    %v4714 = vpop.permute.xlu0 %4713
    %4715 = vrot.lane.b32.xlu0 %v4170, 19
    %v4716 = vpop.permute.xlu0 %4715
    %4717 = vrot.lane.b32.xlu0 %v4220, 19
    %v4718 = vpop.permute.xlu0 %4717
    %4719 = vrot.lane.b32.xlu0 %v4221, 19
    %v4720 = vpop.permute.xlu0 %4719
    %4721 = vrot.lane.b32.xlu0 %v4222, 19
    %v4722 = vpop.permute.xlu0 %4721
    %4723 = vrot.lane.b32.xlu0 %v4223, 19
    %v4724 = vpop.permute.xlu0 %4723
    %4725 = vrot.lane.b32.xlu0 %v4224, 19
    %v4726 = vpop.permute.xlu0 %4725
    %4727 = vrot.lane.b32.xlu0 %v4225, 19
    %v4728 = vpop.permute.xlu0 %4727
    %4729 = vrot.lane.b32.xlu0 %v4184, 19
    %v4730 = vpop.permute.xlu0 %4729
    %4731 = vrot.lane.b32.xlu0 %v4226, 19
    %v4732 = vpop.permute.xlu0 %4731
    %4733 = vrot.lane.b32.xlu0 %v4227, 19
    %v4734 = vpop.permute.xlu0 %4733
    %4735 = vrot.lane.b32.xlu0 %v4228, 19
    %v4736 = vpop.permute.xlu0 %4735
    %4737 = vrot.lane.b32.xlu0 %v4229, 19
    %v4738 = vpop.permute.xlu0 %4737
    %4739 = vrot.lane.b32.xlu0 %v4230, 19
    %v4740 = vpop.permute.xlu0 %4739
    %4741 = vrot.lane.b32.xlu0 %v4231, 19
    %v4742 = vpop.permute.xlu0 %4741
    %4743 = vrot.lane.b32.xlu0 %v4196, 19
    %v4744 = vpop.permute.xlu0 %4743
    %4745 = vrot.lane.b32.xlu0 %v4232, 19
    %v4746 = vpop.permute.xlu0 %4745
    %4747 = vrot.lane.b32.xlu0 %v4233, 19
    %v4748 = vpop.permute.xlu0 %4747
    %4749 = vrot.lane.b32.xlu0 %v4234, 19
    %v4750 = vpop.permute.xlu0 %4749
    %4751 = vrot.lane.b32.xlu0 %v4235, 19
    %v4752 = vpop.permute.xlu0 %4751
    %4753 = vrot.lane.b32.xlu0 %v4236, 19
    %v4754 = vpop.permute.xlu0 %4753
    %4755 = vrot.lane.b32.xlu0 %v4237, 19
    %v4756 = vpop.permute.xlu0 %4755
    %4757 = vrot.lane.b32.xlu0 %v4208, 19
    %v4758 = vpop.permute.xlu0 %4757
    %4759 = vrot.lane.b32.xlu0 %v4238, 19
    %v4760 = vpop.permute.xlu0 %4759
    %4761 = vrot.lane.b32.xlu0 %v4239, 19
    %v4762 = vpop.permute.xlu0 %4761
    %4763 = vrot.lane.b32.xlu0 %v4240, 19
    %v4764 = vpop.permute.xlu0 %4763
    %4765 = vrot.lane.b32.xlu0 %v4241, 19
    %v4766 = vpop.permute.xlu0 %4765
    %4767 = vrot.lane.b32.xlu0 %v4242, 19
    %v4768 = vpop.permute.xlu0 %4767
    %4769 = vrot.lane.b32.xlu0 %v4243, 19
    %v4770 = vpop.permute.xlu0 %4769
    %4771 = vrot.lane.b32.xlu0 %v4245, 19
    %v4772 = vpop.permute.xlu0 %4771
    %4773 = vrot.lane.b32.xlu0 %v4295, 19
    %v4774 = vpop.permute.xlu0 %4773
    %4775 = vrot.lane.b32.xlu0 %v4296, 19
    %v4776 = vpop.permute.xlu0 %4775
    %4777 = vrot.lane.b32.xlu0 %v4297, 19
    %v4778 = vpop.permute.xlu0 %4777
    %4779 = vrot.lane.b32.xlu0 %v4298, 19
    %v4780 = vpop.permute.xlu0 %4779
    %4781 = vrot.lane.b32.xlu0 %v4299, 19
    %v4782 = vpop.permute.xlu0 %4781
    %4783 = vrot.lane.b32.xlu0 %v4300, 19
    %v4784 = vpop.permute.xlu0 %4783
    %4785 = vrot.lane.b32.xlu0 %v4259, 19
    %v4786 = vpop.permute.xlu0 %4785
    %4787 = vrot.lane.b32.xlu0 %v4301, 19
    %v4788 = vpop.permute.xlu0 %4787
    %4789 = vrot.lane.b32.xlu0 %v4302, 19
    %v4790 = vpop.permute.xlu0 %4789
    %4791 = vrot.lane.b32.xlu0 %v4303, 19
    %v4792 = vpop.permute.xlu0 %4791
    %4793 = vrot.lane.b32.xlu0 %v4304, 19
    %v4794 = vpop.permute.xlu0 %4793
    %4795 = vrot.lane.b32.xlu0 %v4305, 19
    %v4796 = vpop.permute.xlu0 %4795
    %4797 = vrot.lane.b32.xlu0 %v4306, 19
    %v4798 = vpop.permute.xlu0 %4797
    %4799 = vrot.lane.b32.xlu0 %v4271, 19
    %v4800 = vpop.permute.xlu0 %4799
    %4801 = vrot.lane.b32.xlu0 %v4307, 19
    %v4802 = vpop.permute.xlu0 %4801
    %4803 = vrot.lane.b32.xlu0 %v4308, 19
    %v4804 = vpop.permute.xlu0 %4803
    %4805 = vrot.lane.b32.xlu0 %v4309, 19
    %v4806 = vpop.permute.xlu0 %4805
    %4807 = vrot.lane.b32.xlu0 %v4310, 19
    %v4808 = vpop.permute.xlu0 %4807
    %4809 = vrot.lane.b32.xlu0 %v4311, 19
    %v4810 = vpop.permute.xlu0 %4809
    %4811 = vrot.lane.b32.xlu0 %v4312, 19
    %v4812 = vpop.permute.xlu0 %4811
    %4813 = vrot.lane.b32.xlu0 %v4283, 19
    %v4814 = vpop.permute.xlu0 %4813
    %4815 = vrot.lane.b32.xlu0 %v4313, 19
    %v4816 = vpop.permute.xlu0 %4815
    %4817 = vrot.lane.b32.xlu0 %v4314, 19
    %v4818 = vpop.permute.xlu0 %4817
    %4819 = vrot.lane.b32.xlu0 %v4315, 19
    %v4820 = vpop.permute.xlu0 %4819
    %4821 = vrot.lane.b32.xlu0 %v4316, 19
    %v4822 = vpop.permute.xlu0 %4821
    %4823 = vrot.lane.b32.xlu0 %v4317, 19
    %v4824 = vpop.permute.xlu0 %4823
    %4825 = vrot.lane.b32.xlu0 %v4318, 19
    %v4826 = vpop.permute.xlu0 %4825
    %vm4827 = vcmask 154624
    %v4828 = vsel %vm4827, %v4330, %v4332
    %v4829 = vsel %vm4827, %v4332, %v4334
    %v4830 = vsel %vm4827, %v4334, %v4336
    %v4831 = vsel %vm4827, %v4336, %v4338
    %v4832 = vsel %vm4827, %v4338, %v4340
    %v4833 = vsel %vm4827, %v4340, %v4342
    %v4834 = vsel %vm4827, %v4330, %v4344
    %v4835 = vsel %vm4827, %v4344, %v4346
    %v4836 = vsel %vm4827, %v4346, %v4348
    %v4837 = vsel %vm4827, %v4348, %v4350
    %v4838 = vsel %vm4827, %v4350, %v4352
    %v4839 = vsel %vm4827, %v4352, %v4354
    %v4840 = vsel %vm4827, %v4330, %v4356
    %v4841 = vsel %vm4827, %v4356, %v4358
    %v4842 = vsel %vm4827, %v4358, %v4360
    %v4843 = vsel %vm4827, %v4360, %v4362
    %v4844 = vsel %vm4827, %v4362, %v4364
    %v4845 = vsel %vm4827, %v4364, %v4366
    %v4846 = vsel %vm4827, %v4330, %v4368
    %v4847 = vsel %vm4827, %v4368, %v4370
    %v4848 = vsel %vm4827, %v4370, %v4372
    %v4849 = vsel %vm4827, %v4372, %v4374
    %v4850 = vsel %vm4827, %v4374, %v4376
    %v4851 = vsel %vm4827, %v4376, %v4378
    %v4852 = vsel %vm4827, %v4380, %v4382
    %v4853 = vsel %vm4827, %v4382, %v4384
    %v4854 = vsel %vm4827, %v4384, %v4386
    %v4855 = vsel %vm4827, %v4386, %v4388
    %v4856 = vsel %vm4827, %v4388, %v4390
    %v4857 = vsel %vm4827, %v4390, %v4392
    %v4858 = vsel %vm4827, %v4394, %v4396
    %v4859 = vsel %vm4827, %v4396, %v4398
    %v4860 = vsel %vm4827, %v4398, %v4400
    %v4861 = vsel %vm4827, %v4400, %v4402
    %v4862 = vsel %vm4827, %v4402, %v4404
    %v4863 = vsel %vm4827, %v4404, %v4406
    %v4864 = vsel %vm4827, %v4408, %v4410
    %v4865 = vsel %vm4827, %v4410, %v4412
    %v4866 = vsel %vm4827, %v4412, %v4414
    %v4867 = vsel %vm4827, %v4414, %v4416
    %v4868 = vsel %vm4827, %v4416, %v4418
    %v4869 = vsel %vm4827, %v4418, %v4420
    %v4870 = vsel %vm4827, %v4422, %v4424
    %v4871 = vsel %vm4827, %v4424, %v4426
    %v4872 = vsel %vm4827, %v4426, %v4428
    %v4873 = vsel %vm4827, %v4428, %v4430
    %v4874 = vsel %vm4827, %v4430, %v4432
    %v4875 = vsel %vm4827, %v4432, %v4434
    %v4876 = vsel %vm4827, %v4436, %v4438
    %v4877 = vsel %vm4827, %v4438, %v4440
    %v4878 = vsel %vm4827, %v4440, %v4442
    %v4879 = vsel %vm4827, %v4442, %v4444
    %v4880 = vsel %vm4827, %v4444, %v4446
    %v4881 = vsel %vm4827, %v4446, %v4448
    %v4882 = vsel %vm4827, %v4450, %v4452
    %v4883 = vsel %vm4827, %v4452, %v4454
    %v4884 = vsel %vm4827, %v4454, %v4456
    %v4885 = vsel %vm4827, %v4456, %v4458
    %v4886 = vsel %vm4827, %v4458, %v4460
    %v4887 = vsel %vm4827, %v4460, %v4462
    %v4888 = vsel %vm4827, %v4464, %v4466
    %v4889 = vsel %vm4827, %v4466, %v4468
    %v4890 = vsel %vm4827, %v4468, %v4470
    %v4891 = vsel %vm4827, %v4470, %v4472
    %v4892 = vsel %vm4827, %v4472, %v4474
    %v4893 = vsel %vm4827, %v4474, %v4476
    %v4894 = vsel %vm4827, %v4478, %v4480
    %v4895 = vsel %vm4827, %v4480, %v4482
    %v4896 = vsel %vm4827, %v4482, %v4484
    %v4897 = vsel %vm4827, %v4484, %v4486
    %v4898 = vsel %vm4827, %v4486, %v4488
    %v4899 = vsel %vm4827, %v4488, %v4490
    %v4900 = vsel %vm4827, %v4492, %v4494
    %v4901 = vsel %vm4827, %v4494, %v4496
    %v4902 = vsel %vm4827, %v4496, %v4498
    %v4903 = vsel %vm4827, %v4498, %v4500
    %v4904 = vsel %vm4827, %v4500, %v4502
    %v4905 = vsel %vm4827, %v4502, %v4504
    %v4906 = vsel %vm4827, %v4506, %v4508
    %v4907 = vsel %vm4827, %v4508, %v4510
    %v4908 = vsel %vm4827, %v4510, %v4512
    %v4909 = vsel %vm4827, %v4512, %v4514
    %v4910 = vsel %vm4827, %v4514, %v4516
    %v4911 = vsel %vm4827, %v4516, %v4518
    %v4912 = vsel %vm4827, %v4520, %v4522
    %v4913 = vsel %vm4827, %v4522, %v4524
    %v4914 = vsel %vm4827, %v4524, %v4526
    %v4915 = vsel %vm4827, %v4526, %v4528
    %v4916 = vsel %vm4827, %v4528, %v4530
    %v4917 = vsel %vm4827, %v4530, %v4532
    %v4918 = vsel %vm4827, %v4534, %v4536
    %v4919 = vsel %vm4827, %v4536, %v4538
    %v4920 = vsel %vm4827, %v4538, %v4540
    %v4921 = vsel %vm4827, %v4540, %v4542
    %v4922 = vsel %vm4827, %v4542, %v4544
    %v4923 = vsel %vm4827, %v4544, %v4546
    %v4924 = vsel %vm4827, %v4548, %v4550
    %v4925 = vsel %vm4827, %v4550, %v4552
    %v4926 = vsel %vm4827, %v4552, %v4554
    %v4927 = vsel %vm4827, %v4554, %v4556
    %v4928 = vsel %vm4827, %v4556, %v4558
    %v4929 = vsel %vm4827, %v4558, %v4560
    %v4930 = vsel %vm4827, %v4562, %v4564
    %v4931 = vsel %vm4827, %v4564, %v4566
    %v4932 = vsel %vm4827, %v4566, %v4568
    %v4933 = vsel %vm4827, %v4568, %v4570
    %v4934 = vsel %vm4827, %v4570, %v4572
    %v4935 = vsel %vm4827, %v4572, %v4574
    %v4936 = vsel %vm4827, %v4576, %v4578
    %v4937 = vsel %vm4827, %v4578, %v4580
    %v4938 = vsel %vm4827, %v4580, %v4582
    %v4939 = vsel %vm4827, %v4582, %v4584
    %v4940 = vsel %vm4827, %v4584, %v4586
    %v4941 = vsel %vm4827, %v4586, %v4588
    %v4942 = vsel %vm4827, %v4590, %v4592
    %v4943 = vsel %vm4827, %v4592, %v4594
    %v4944 = vsel %vm4827, %v4594, %v4596
    %v4945 = vsel %vm4827, %v4596, %v4598
    %v4946 = vsel %vm4827, %v4598, %v4600
    %v4947 = vsel %vm4827, %v4600, %v4602
    %v4948 = vsel %vm4827, %v4604, %v4606
    %v4949 = vsel %vm4827, %v4606, %v4608
    %v4950 = vsel %vm4827, %v4608, %v4610
    %v4951 = vsel %vm4827, %v4610, %v4612
    %v4952 = vsel %vm4827, %v4612, %v4614
    %v4953 = vsel %vm4827, %v4614, %v4616
    %v4954 = vsel %vm4827, %v4618, %v4620
    %v4955 = vsel %vm4827, %v4620, %v4622
    %v4956 = vsel %vm4827, %v4622, %v4624
    %v4957 = vsel %vm4827, %v4624, %v4626
    %v4958 = vsel %vm4827, %v4626, %v4628
    %v4959 = vsel %vm4827, %v4628, %v4630
    %v4960 = vsel %vm4827, %v4632, %v4634
    %v4961 = vsel %vm4827, %v4634, %v4636
    %v4962 = vsel %vm4827, %v4636, %v4638
    %v4963 = vsel %vm4827, %v4638, %v4640
    %v4964 = vsel %vm4827, %v4640, %v4642
    %v4965 = vsel %vm4827, %v4642, %v4644
    %v4966 = vsel %vm4827, %v4646, %v4648
    %v4967 = vsel %vm4827, %v4648, %v4650
    %v4968 = vsel %vm4827, %v4650, %v4652
    %v4969 = vsel %vm4827, %v4652, %v4654
    %v4970 = vsel %vm4827, %v4654, %v4656
    %v4971 = vsel %vm4827, %v4656, %v4658
    %v4972 = vsel %vm4827, %v4660, %v4662
    %v4973 = vsel %vm4827, %v4662, %v4664
    %v4974 = vsel %vm4827, %v4664, %v4666
    %v4975 = vsel %vm4827, %v4666, %v4668
    %v4976 = vsel %vm4827, %v4668, %v4670
    %v4977 = vsel %vm4827, %v4670, %v4672
    %v4978 = vsel %vm4827, %v4674, %v4676
    %v4979 = vsel %vm4827, %v4676, %v4678
    %v4980 = vsel %vm4827, %v4678, %v4680
    %v4981 = vsel %vm4827, %v4680, %v4682
    %v4982 = vsel %vm4827, %v4682, %v4684
    %v4983 = vsel %vm4827, %v4684, %v4686
    %v4984 = vsel %vm4827, %v4688, %v4690
    %v4985 = vsel %vm4827, %v4690, %v4692
    %v4986 = vsel %vm4827, %v4692, %v4694
    %v4987 = vsel %vm4827, %v4694, %v4696
    %v4988 = vsel %vm4827, %v4696, %v4698
    %v4989 = vsel %vm4827, %v4698, %v4700
    %v4990 = vsel %vm4827, %v4702, %v4704
    %v4991 = vsel %vm4827, %v4704, %v4706
    %v4992 = vsel %vm4827, %v4706, %v4708
    %v4993 = vsel %vm4827, %v4708, %v4710
    %v4994 = vsel %vm4827, %v4710, %v4712
    %v4995 = vsel %vm4827, %v4712, %v4714
    %v4996 = vsel %vm4827, %v4716, %v4718
    %v4997 = vsel %vm4827, %v4718, %v4720
    %v4998 = vsel %vm4827, %v4720, %v4722
    %v4999 = vsel %vm4827, %v4722, %v4724
    %v5000 = vsel %vm4827, %v4724, %v4726
    %v5001 = vsel %vm4827, %v4726, %v4728
    %v5002 = vsel %vm4827, %v4730, %v4732
    %v5003 = vsel %vm4827, %v4732, %v4734
    %v5004 = vsel %vm4827, %v4734, %v4736
    %v5005 = vsel %vm4827, %v4736, %v4738
    %v5006 = vsel %vm4827, %v4738, %v4740
    %v5007 = vsel %vm4827, %v4740, %v4742
    %v5008 = vsel %vm4827, %v4744, %v4746
    %v5009 = vsel %vm4827, %v4746, %v4748
    %v5010 = vsel %vm4827, %v4748, %v4750
    %v5011 = vsel %vm4827, %v4750, %v4752
    %v5012 = vsel %vm4827, %v4752, %v4754
    %v5013 = vsel %vm4827, %v4754, %v4756
    %v5014 = vsel %vm4827, %v4758, %v4760
    %v5015 = vsel %vm4827, %v4760, %v4762
    %v5016 = vsel %vm4827, %v4762, %v4764
    %v5017 = vsel %vm4827, %v4764, %v4766
    %v5018 = vsel %vm4827, %v4766, %v4768
    %v5019 = vsel %vm4827, %v4768, %v4770
    %v5020 = vsel %vm4827, %v4772, %v4774
    %v5021 = vsel %vm4827, %v4774, %v4776
    %v5022 = vsel %vm4827, %v4776, %v4778
    %v5023 = vsel %vm4827, %v4778, %v4780
    %v5024 = vsel %vm4827, %v4780, %v4782
    %v5025 = vsel %vm4827, %v4782, %v4784
    %v5026 = vsel %vm4827, %v4786, %v4788
    %v5027 = vsel %vm4827, %v4788, %v4790
    %v5028 = vsel %vm4827, %v4790, %v4792
    %v5029 = vsel %vm4827, %v4792, %v4794
    %v5030 = vsel %vm4827, %v4794, %v4796
    %v5031 = vsel %vm4827, %v4796, %v4798
    %v5032 = vsel %vm4827, %v4800, %v4802
    %v5033 = vsel %vm4827, %v4802, %v4804
    %v5034 = vsel %vm4827, %v4804, %v4806
    %v5035 = vsel %vm4827, %v4806, %v4808
    %v5036 = vsel %vm4827, %v4808, %v4810
    %v5037 = vsel %vm4827, %v4810, %v4812
    %v5038 = vsel %vm4827, %v4814, %v4816
    %v5039 = vsel %vm4827, %v4816, %v4818
    %v5040 = vsel %vm4827, %v4818, %v4820
    %v5041 = vsel %vm4827, %v4820, %v4822
    %v5042 = vsel %vm4827, %v4822, %v4824
    %v5043 = vsel %vm4827, %v4824, %v4826
    %v5261 = vsel %vm477, %v3430, 0
    %v5264 = vsel %vm477, %v3433, 0
    %5266 = vmatprep.subr.mxu0 %v4829
    %5267 = vmatpush1.msra.mxu0 %v4828
    %5268 = vmatprep.subr.mxu0 %v4835
    %5269 = vmatpush1.msra.mxu0 %v4834
    %5270 = vmatprep.subr.mxu0 %v4841
    %5271 = vmatpush1.msra.mxu0 %v4840
    %5272 = vmatprep.subr.mxu0 %v4847
    %5273 = vmatpush1.msra.mxu0 %v4846
    %5274 = vmatprep.subr.mxu0 %v4853
    %5275 = vmatpush1.msra.mxu0 %v4852
    %5276 = vmatprep.subr.mxu0 %v4859
    %5277 = vmatpush1.msra.mxu0 %v4858
    %5278 = vmatprep.subr.mxu0 %v4865
    %5279 = vmatpush1.msra.mxu0 %v4864
    %5280 = vmatprep.subr.mxu0 %v4871
    %5281 = vmatpush1.msra.mxu0 %v4870
    %5282 = vmatprep.subr.mxu0 %v4877
    %5283 = vmatpush1.msra.mxu0 %v4876
    %5284 = vmatprep.subr.mxu0 %v4883
    %5285 = vmatpush1.msra.mxu0 %v4882
    %5286 = vmatprep.subr.mxu0 %v4889
    %5287 = vmatpush1.msra.mxu0 %v4888
    %5288 = vmatprep.subr.mxu0 %v4895
    %5289 = vmatpush1.msra.mxu0 %v4894
    %5290 = vmatprep.subr.mxu0 %v4901
    %5291 = vmatpush1.msra.mxu0 %v4900
    %5292 = vmatprep.subr.mxu0 %v4907
    %5293 = vmatpush1.msra.mxu0 %v4906
    %5294 = vmatprep.subr.mxu0 %v4913
    %5295 = vmatpush1.msra.mxu0 %v4912
    %5296 = vmatprep.subr.mxu0 %v4919
    %5297 = vmatpush1.msra.mxu0 %v4918
    %5298 = vmatprep.subr.mxu0 %v4925
    %5299 = vmatpush1.msra.mxu0 %v4924
    %5300 = vmatprep.subr.mxu0 %v4931
    %5301 = vmatpush1.msra.mxu0 %v4930
    %5302 = vmatprep.subr.mxu0 %v4937
    %5303 = vmatpush1.msra.mxu0 %v4936
    %5304 = vmatprep.subr.mxu0 %v4943
    %5305 = vmatpush1.msra.mxu0 %v4942
    %5306 = vmatprep.subr.mxu0 %v4949
    %5307 = vmatpush1.msra.mxu0 %v4948
    %5308 = vmatprep.subr.mxu0 %v4955
    %5309 = vmatpush1.msra.mxu0 %v4954
    %5310 = vmatprep.subr.mxu0 %v4961
    %5311 = vmatpush1.msra.mxu0 %v4960
    %5312 = vmatprep.subr.mxu0 %v4967
    %5313 = vmatpush1.msra.mxu0 %v4966
    %5314 = vmatprep.subr.mxu0 %v4973
    %5315 = vmatpush1.msra.mxu0 %v4972
    %5316 = vmatprep.subr.mxu0 %v4979
    %5317 = vmatpush1.msra.mxu0 %v4978
    %5318 = vmatprep.subr.mxu0 %v4985
    %5319 = vmatpush1.msra.mxu0 %v4984
    %5320 = vmatprep.subr.mxu0 %v4991
    %5321 = vmatpush1.msra.mxu0 %v4990
    %5322 = vmatprep.subr.mxu0 %v4997
    %5323 = vmatpush1.msra.mxu0 %v4996
    %5324 = vmatprep.subr.mxu0 %v5003
    %5325 = vmatpush1.msra.mxu0 %v5002
    %5326 = vmatprep.subr.mxu0 %v5009
    %5327 = vmatpush1.msra.mxu0 %v5008
    %5328 = vmatprep.subr.mxu0 %v5015
    %5329 = vmatpush1.msra.mxu0 %v5014
    %5330 = vmatprep.mubr.f32.mxu0 %v3429
    %5331 = vmatmul.mubr.f32.gmra.mrb[0].mxu0 %v3428
    %v5332 = vpop.f32.mrb[0].mxu0
    %v5333 = vadd.f32 %v4322, %v5332
    %v5334 = vpop.f32.mrb[0].mxu0
    %v5335 = vadd.f32 %v4322, %v5334
    %5336 = vmatprep.mubr.f32.mxu0 %v3432
    %5337 = vmatmul.mubr.f32.gmra.mrb[0].mxu0 %v3431
    %v5338 = vpop.f32.mrb[0].mxu0
    %v5339 = vadd.f32 %v4327, %v5338
    %v5340 = vpop.f32.mrb[0].mxu0
    %v5341 = vadd.f32 %v4327, %v5340
    %5342 = vdwg.mxu0
    %5343 = vmatprep.subr.mxu0 %v5021
    %5344 = vmatpush1.msra.mxu0 %v5020
    %5345 = vmatprep.subr.mxu0 %v5027
    %5346 = vmatpush1.msra.mxu0 %v5026
    %5347 = vmatprep.subr.mxu0 %v5033
    %5348 = vmatpush1.msra.mxu0 %v5032
    %5349 = vmatprep.subr.mxu0 %v5039
    %5350 = vmatpush1.msra.mxu0 %v5038
    %5351 = vmatprep.subr.mxu0 0.0
    %5352 = vmatpush1.msra.mxu0 0.0
    %5353 = vmatprep.subr.mxu0 0.0
    %5354 = vmatpush1.msra.mxu0 0.0
    %5355 = vmatprep.subr.mxu0 0.0
    %5356 = vmatpush1.msra.mxu0 0.0
    %5357 = vmatprep.subr.mxu0 0.0
    %5358 = vmatpush1.msra.mxu0 0.0
    %5359 = vmatprep.subr.mxu0 0.0
    %5360 = vmatpush1.msra.mxu0 0.0
    %5361 = vmatprep.subr.mxu0 0.0
    %5362 = vmatpush1.msra.mxu0 0.0
    %5363 = vmatprep.subr.mxu0 0.0
    %5364 = vmatpush1.msra.mxu0 0.0
    %5365 = vmatprep.subr.mxu0 0.0
    %5366 = vmatpush1.msra.mxu0 0.0
    %5367 = vmatprep.subr.mxu0 0.0
    %5368 = vmatpush1.msra.mxu0 0.0
    %5369 = vmatprep.subr.mxu0 0.0
    %5370 = vmatpush1.msra.mxu0 0.0
    %5371 = vmatprep.subr.mxu0 0.0
    %5372 = vmatpush1.msra.mxu0 0.0
    %5373 = vmatprep.subr.mxu0 0.0
    %5374 = vmatpush1.msra.mxu0 0.0
    %5375 = vmatprep.subr.mxu0 0.0
    %5376 = vmatpush1.msra.mxu0 0.0
    %5377 = vmatprep.subr.mxu0 0.0
    %5378 = vmatpush1.msra.mxu0 0.0
    %5379 = vmatprep.subr.mxu0 0.0
    %5380 = vmatpush1.msra.mxu0 0.0
    %5381 = vmatprep.subr.mxu0 0.0
    %5382 = vmatpush1.msra.mxu0 0.0
    %5383 = vmatprep.subr.mxu0 0.0
    %5384 = vmatpush1.msra.mxu0 0.0
    %5385 = vmatprep.subr.mxu0 0.0
    %5386 = vmatpush1.msra.mxu0 0.0
    %5387 = vmatprep.subr.mxu0 0.0
    %5388 = vmatpush1.msra.mxu0 0.0
    %5389 = vmatprep.subr.mxu0 0.0
    %5390 = vmatpush1.msra.mxu0 0.0
    %5391 = vmatprep.subr.mxu0 0.0
    %5392 = vmatpush1.msra.mxu0 0.0
    %5393 = vmatprep.subr.mxu0 0.0
    %5394 = vmatpush1.msra.mxu0 0.0
    %5395 = vmatprep.subr.mxu0 0.0
    %5396 = vmatpush1.msra.mxu0 0.0
    %5397 = vmatprep.subr.mxu0 0.0
    %5398 = vmatpush1.msra.mxu0 0.0
    %5399 = vmatprep.subr.mxu0 0.0
    %5400 = vmatpush1.msra.mxu0 0.0
    %5401 = vmatprep.subr.mxu0 0.0
    %5402 = vmatpush1.msra.mxu0 0.0
    %5403 = vmatprep.subr.mxu0 0.0
    %5404 = vmatpush1.msra.mxu0 0.0
    %5405 = vmatprep.subr.mxu0 0.0
    %5406 = vmatpush1.msra.mxu0 0.0
    %5407 = vmatprep.mubr.f32.mxu0 0.0
    %5408 = vmatmul.mubr.f32.gmra.mrb[0].mxu0 %v5261
    %v5409 = vpop.f32.mrb[0].mxu0
    %v5410 = vadd.f32 %v5333, %v5409
    %v5411 = vpop.f32.mrb[0].mxu0
    %v5412 = vadd.f32 %v5335, %v5411
    %5413 = vmatprep.mubr.f32.mxu0 0.0
    %5414 = vmatmul.mubr.f32.gmra.mrb[0].mxu0 %v5264
    %v5415 = vpop.f32.mrb[0].mxu0
    %v5416 = vadd.f32 %v5339, %v5415
    %v5417 = vpop.f32.mrb[0].mxu0
    %v5418 = vadd.f32 %v5341, %v5417
    %5419 = vdwg.mxu0
    %5420 = vmatprep.subr.mxu0 %v4831
    %5421 = vmatpush1.msra.mxu0 %v4830
    %5422 = vmatprep.subr.mxu0 %v4837
    %5423 = vmatpush1.msra.mxu0 %v4836
    %5424 = vmatprep.subr.mxu0 %v4843
    %5425 = vmatpush1.msra.mxu0 %v4842
    %5426 = vmatprep.subr.mxu0 %v4849
    %5427 = vmatpush1.msra.mxu0 %v4848
    %5428 = vmatprep.subr.mxu0 %v4855
    %5429 = vmatpush1.msra.mxu0 %v4854
    %5430 = vmatprep.subr.mxu0 %v4861
    %5431 = vmatpush1.msra.mxu0 %v4860
    %5432 = vmatprep.subr.mxu0 %v4867
    %5433 = vmatpush1.msra.mxu0 %v4866
    %5434 = vmatprep.subr.mxu0 %v4873
    %5435 = vmatpush1.msra.mxu0 %v4872
    %5436 = vmatprep.subr.mxu0 %v4879
    %5437 = vmatpush1.msra.mxu0 %v4878
    %5438 = vmatprep.subr.mxu0 %v4885
    %5439 = vmatpush1.msra.mxu0 %v4884
    %5440 = vmatprep.subr.mxu0 %v4891
    %5441 = vmatpush1.msra.mxu0 %v4890
    %5442 = vmatprep.subr.mxu0 %v4897
    %5443 = vmatpush1.msra.mxu0 %v4896
    %5444 = vmatprep.subr.mxu0 %v4903
    %5445 = vmatpush1.msra.mxu0 %v4902
    %5446 = vmatprep.subr.mxu0 %v4909
    %5447 = vmatpush1.msra.mxu0 %v4908
    %5448 = vmatprep.subr.mxu0 %v4915
    %5449 = vmatpush1.msra.mxu0 %v4914
    %5450 = vmatprep.subr.mxu0 %v4921
    %5451 = vmatpush1.msra.mxu0 %v4920
    %5452 = vmatprep.subr.mxu0 %v4927
    %5453 = vmatpush1.msra.mxu0 %v4926
    %5454 = vmatprep.subr.mxu0 %v4933
    %5455 = vmatpush1.msra.mxu0 %v4932
    %5456 = vmatprep.subr.mxu0 %v4939
    %5457 = vmatpush1.msra.mxu0 %v4938
    %5458 = vmatprep.subr.mxu0 %v4945
    %5459 = vmatpush1.msra.mxu0 %v4944
    %5460 = vmatprep.subr.mxu0 %v4951
    %5461 = vmatpush1.msra.mxu0 %v4950
    %5462 = vmatprep.subr.mxu0 %v4957
    %5463 = vmatpush1.msra.mxu0 %v4956
    %5464 = vmatprep.subr.mxu0 %v4963
    %5465 = vmatpush1.msra.mxu0 %v4962
    %5466 = vmatprep.subr.mxu0 %v4969
    %5467 = vmatpush1.msra.mxu0 %v4968
    %5468 = vmatprep.subr.mxu0 %v4975
    %5469 = vmatpush1.msra.mxu0 %v4974
    %5470 = vmatprep.subr.mxu0 %v4981
    %5471 = vmatpush1.msra.mxu0 %v4980
    %5472 = vmatprep.subr.mxu0 %v4987
    %5473 = vmatpush1.msra.mxu0 %v4986
    %5474 = vmatprep.subr.mxu0 %v4993
    %5475 = vmatpush1.msra.mxu0 %v4992
    %5476 = vmatprep.subr.mxu0 %v4999
    %5477 = vmatpush1.msra.mxu0 %v4998
    %5478 = vmatprep.subr.mxu0 %v5005
    %5479 = vmatpush1.msra.mxu0 %v5004
    %5480 = vmatprep.subr.mxu0 %v5011
    %5481 = vmatpush1.msra.mxu0 %v5010
    %5482 = vmatprep.subr.mxu0 %v5017
    %5483 = vmatpush1.msra.mxu0 %v5016
    %5484 = vmatprep.mubr.f32.mxu0 %v3429
    %5485 = vmatmul.mubr.f32.gmra.mrb[0].mxu0 %v3428
    %v5486 = vpop.f32.mrb[0].mxu0
    %v5487 = vadd.f32 %v4322, %v5486
    %v5488 = vpop.f32.mrb[0].mxu0
    %v5489 = vadd.f32 %v4322, %v5488
    %5490 = vmatprep.mubr.f32.mxu0 %v3432
    %5491 = vmatmul.mubr.f32.gmra.mrb[0].mxu0 %v3431
    %v5492 = vpop.f32.mrb[0].mxu0
    %v5493 = vadd.f32 %v4327, %v5492
    %v5494 = vpop.f32.mrb[0].mxu0
    %v5495 = vadd.f32 %v4327, %v5494
    %5496 = vdwg.mxu0
    %5497 = vmatprep.subr.mxu0 %v5023
    %5498 = vmatpush1.msra.mxu0 %v5022
    %5499 = vmatprep.subr.mxu0 %v5029
    %5500 = vmatpush1.msra.mxu0 %v5028
    %5501 = vmatprep.subr.mxu0 %v5035
    %5502 = vmatpush1.msra.mxu0 %v5034
    %5503 = vmatprep.subr.mxu0 %v5041
    %5504 = vmatpush1.msra.mxu0 %v5040
    %5505 = vmatprep.subr.mxu0 0.0
    %5506 = vmatpush1.msra.mxu0 0.0
    %5507 = vmatprep.subr.mxu0 0.0
    %5508 = vmatpush1.msra.mxu0 0.0
    %5509 = vmatprep.subr.mxu0 0.0
    %5510 = vmatpush1.msra.mxu0 0.0
    %5511 = vmatprep.subr.mxu0 0.0
    %5512 = vmatpush1.msra.mxu0 0.0
    %5513 = vmatprep.subr.mxu0 0.0
    %5514 = vmatpush1.msra.mxu0 0.0
    %5515 = vmatprep.subr.mxu0 0.0
    %5516 = vmatpush1.msra.mxu0 0.0
    %5517 = vmatprep.subr.mxu0 0.0
    %5518 = vmatpush1.msra.mxu0 0.0
    %5519 = vmatprep.subr.mxu0 0.0
    %5520 = vmatpush1.msra.mxu0 0.0
    %5521 = vmatprep.subr.mxu0 0.0
    %5522 = vmatpush1.msra.mxu0 0.0
    %5523 = vmatprep.subr.mxu0 0.0
    %5524 = vmatpush1.msra.mxu0 0.0
    %5525 = vmatprep.subr.mxu0 0.0
    %5526 = vmatpush1.msra.mxu0 0.0
    %5527 = vmatprep.subr.mxu0 0.0
    %5528 = vmatpush1.msra.mxu0 0.0
    %5529 = vmatprep.subr.mxu0 0.0
    %5530 = vmatpush1.msra.mxu0 0.0
    %5531 = vmatprep.subr.mxu0 0.0
    %5532 = vmatpush1.msra.mxu0 0.0
    %5533 = vmatprep.subr.mxu0 0.0
    %5534 = vmatpush1.msra.mxu0 0.0
    %5535 = vmatprep.subr.mxu0 0.0
    %5536 = vmatpush1.msra.mxu0 0.0
    %5537 = vmatprep.subr.mxu0 0.0
    %5538 = vmatpush1.msra.mxu0 0.0
    %5539 = vmatprep.subr.mxu0 0.0
    %5540 = vmatpush1.msra.mxu0 0.0
    %5541 = vmatprep.subr.mxu0 0.0
    %5542 = vmatpush1.msra.mxu0 0.0
    %5543 = vmatprep.subr.mxu0 0.0
    %5544 = vmatpush1.msra.mxu0 0.0
    %5545 = vmatprep.subr.mxu0 0.0
    %5546 = vmatpush1.msra.mxu0 0.0
    %5547 = vmatprep.subr.mxu0 0.0
    %5548 = vmatpush1.msra.mxu0 0.0
    %5549 = vmatprep.subr.mxu0 0.0
    %5550 = vmatpush1.msra.mxu0 0.0
    %5551 = vmatprep.subr.mxu0 0.0
    %5552 = vmatpush1.msra.mxu0 0.0
    %5553 = vmatprep.subr.mxu0 0.0
    %5554 = vmatpush1.msra.mxu0 0.0
    %5555 = vmatprep.subr.mxu0 0.0
    %5556 = vmatpush1.msra.mxu0 0.0
    %5557 = vmatprep.subr.mxu0 0.0
    %5558 = vmatpush1.msra.mxu0 0.0
    %5559 = vmatprep.subr.mxu0 0.0
    %5560 = vmatpush1.msra.mxu0 0.0
    %5561 = vmatprep.mubr.f32.mxu0 0.0
    %5562 = vmatmul.mubr.f32.gmra.mrb[0].mxu0 %v5261
    %v5563 = vpop.f32.mrb[0].mxu0
    %v5564 = vadd.f32 %v5487, %v5563
    %v5565 = vpop.f32.mrb[0].mxu0
    %v5566 = vadd.f32 %v5489, %v5565
    %5567 = vmatprep.mubr.f32.mxu0 0.0
    %5568 = vmatmul.mubr.f32.gmra.mrb[0].mxu0 %v5264
    %v5569 = vpop.f32.mrb[0].mxu0
    %v5570 = vadd.f32 %v5493, %v5569
    %v5571 = vpop.f32.mrb[0].mxu0
    %v5572 = vadd.f32 %v5495, %v5571
    %5573 = vdwg.mxu0
    %5574 = vmatprep.subr.mxu0 %v4833
    %5575 = vmatpush1.msra.mxu0 %v4832
    %5576 = vmatprep.subr.mxu0 %v4839
    %5577 = vmatpush1.msra.mxu0 %v4838
    %5578 = vmatprep.subr.mxu0 %v4845
    %5579 = vmatpush1.msra.mxu0 %v4844
    %5580 = vmatprep.subr.mxu0 %v4851
    %5581 = vmatpush1.msra.mxu0 %v4850
    %5582 = vmatprep.subr.mxu0 %v4857
    %5583 = vmatpush1.msra.mxu0 %v4856
    %5584 = vmatprep.subr.mxu0 %v4863
    %5585 = vmatpush1.msra.mxu0 %v4862
    %5586 = vmatprep.subr.mxu0 %v4869
    %5587 = vmatpush1.msra.mxu0 %v4868
    %5588 = vmatprep.subr.mxu0 %v4875
    %5589 = vmatpush1.msra.mxu0 %v4874
    %5590 = vmatprep.subr.mxu0 %v4881
    %5591 = vmatpush1.msra.mxu0 %v4880
    %5592 = vmatprep.subr.mxu0 %v4887
    %5593 = vmatpush1.msra.mxu0 %v4886
    %5594 = vmatprep.subr.mxu0 %v4893
    %5595 = vmatpush1.msra.mxu0 %v4892
    %5596 = vmatprep.subr.mxu0 %v4899
    %5597 = vmatpush1.msra.mxu0 %v4898
    %5598 = vmatprep.subr.mxu0 %v4905
    %5599 = vmatpush1.msra.mxu0 %v4904
    %5600 = vmatprep.subr.mxu0 %v4911
    %5601 = vmatpush1.msra.mxu0 %v4910
    %5602 = vmatprep.subr.mxu0 %v4917
    %5603 = vmatpush1.msra.mxu0 %v4916
    %5604 = vmatprep.subr.mxu0 %v4923
    %5605 = vmatpush1.msra.mxu0 %v4922
    %5606 = vmatprep.subr.mxu0 %v4929
    %5607 = vmatpush1.msra.mxu0 %v4928
    %5608 = vmatprep.subr.mxu0 %v4935
    %5609 = vmatpush1.msra.mxu0 %v4934
    %5610 = vmatprep.subr.mxu0 %v4941
    %5611 = vmatpush1.msra.mxu0 %v4940
    %5612 = vmatprep.subr.mxu0 %v4947
    %5613 = vmatpush1.msra.mxu0 %v4946
    %5614 = vmatprep.subr.mxu0 %v4953
    %5615 = vmatpush1.msra.mxu0 %v4952
    %5616 = vmatprep.subr.mxu0 %v4959
    %5617 = vmatpush1.msra.mxu0 %v4958
    %5618 = vmatprep.subr.mxu0 %v4965
    %5619 = vmatpush1.msra.mxu0 %v4964
    %5620 = vmatprep.subr.mxu0 %v4971
    %5621 = vmatpush1.msra.mxu0 %v4970
    %5622 = vmatprep.subr.mxu0 %v4977
    %5623 = vmatpush1.msra.mxu0 %v4976
    %5624 = vmatprep.subr.mxu0 %v4983
    %5625 = vmatpush1.msra.mxu0 %v4982
    %5626 = vmatprep.subr.mxu0 %v4989
    %5627 = vmatpush1.msra.mxu0 %v4988
    %5628 = vmatprep.subr.mxu0 %v4995
    %5629 = vmatpush1.msra.mxu0 %v4994
    %5630 = vmatprep.subr.mxu0 %v5001
    %5631 = vmatpush1.msra.mxu0 %v5000
    %5632 = vmatprep.subr.mxu0 %v5007
    %5633 = vmatpush1.msra.mxu0 %v5006
    %5634 = vmatprep.subr.mxu0 %v5013
    %5635 = vmatpush1.msra.mxu0 %v5012
    %5636 = vmatprep.subr.mxu0 %v5019
    %5637 = vmatpush1.msra.mxu0 %v5018
    %5638 = vmatprep.mubr.f32.mxu0 %v3429
    %5639 = vmatmul.mubr.f32.gmra.mrb[0].mxu0 %v3428
    %v5640 = vpop.f32.mrb[0].mxu0
    %v5641 = vadd.f32 %v4322, %v5640
    %v5642 = vpop.f32.mrb[0].mxu0
    %v5643 = vadd.f32 %v4322, %v5642
    %5644 = vmatprep.mubr.f32.mxu0 %v3432
    %5645 = vmatmul.mubr.f32.gmra.mrb[0].mxu0 %v3431
    %v5646 = vpop.f32.mrb[0].mxu0
    %v5647 = vadd.f32 %v4327, %v5646
    %v5648 = vpop.f32.mrb[0].mxu0
    %v5649 = vadd.f32 %v4327, %v5648
    %5650 = vdwg.mxu0
    %5651 = vmatprep.subr.mxu0 %v5025
    %5652 = vmatpush1.msra.mxu0 %v5024
    %5653 = vmatprep.subr.mxu0 %v5031
    %5654 = vmatpush1.msra.mxu0 %v5030
    %5655 = vmatprep.subr.mxu0 %v5037
    %5656 = vmatpush1.msra.mxu0 %v5036
    %5657 = vmatprep.subr.mxu0 %v5043
    %5658 = vmatpush1.msra.mxu0 %v5042
    %5659 = vmatprep.subr.mxu0 0.0
    %5660 = vmatpush1.msra.mxu0 0.0
    %5661 = vmatprep.subr.mxu0 0.0
    %5662 = vmatpush1.msra.mxu0 0.0
    %5663 = vmatprep.subr.mxu0 0.0
    %5664 = vmatpush1.msra.mxu0 0.0
    %5665 = vmatprep.subr.mxu0 0.0
    %5666 = vmatpush1.msra.mxu0 0.0
    %5667 = vmatprep.subr.mxu0 0.0
    %5668 = vmatpush1.msra.mxu0 0.0
    %5669 = vmatprep.subr.mxu0 0.0
    %5670 = vmatpush1.msra.mxu0 0.0
    %5671 = vmatprep.subr.mxu0 0.0
    %5672 = vmatpush1.msra.mxu0 0.0
    %5673 = vmatprep.subr.mxu0 0.0
    %5674 = vmatpush1.msra.mxu0 0.0
    %5675 = vmatprep.subr.mxu0 0.0
    %5676 = vmatpush1.msra.mxu0 0.0
    %5677 = vmatprep.subr.mxu0 0.0
    %5678 = vmatpush1.msra.mxu0 0.0
    %5679 = vmatprep.subr.mxu0 0.0
    %5680 = vmatpush1.msra.mxu0 0.0
    %5681 = vmatprep.subr.mxu0 0.0
    %5682 = vmatpush1.msra.mxu0 0.0
    %5683 = vmatprep.subr.mxu0 0.0
    %5684 = vmatpush1.msra.mxu0 0.0
    %5685 = vmatprep.subr.mxu0 0.0
    %5686 = vmatpush1.msra.mxu0 0.0
    %5687 = vmatprep.subr.mxu0 0.0
    %5688 = vmatpush1.msra.mxu0 0.0
    %5689 = vmatprep.subr.mxu0 0.0
    %5690 = vmatpush1.msra.mxu0 0.0
    %5691 = vmatprep.subr.mxu0 0.0
    %5692 = vmatpush1.msra.mxu0 0.0
    %5693 = vmatprep.subr.mxu0 0.0
    %5694 = vmatpush1.msra.mxu0 0.0
    %5695 = vmatprep.subr.mxu0 0.0
    %5696 = vmatpush1.msra.mxu0 0.0
    %5697 = vmatprep.subr.mxu0 0.0
    %5698 = vmatpush1.msra.mxu0 0.0
    %5699 = vmatprep.subr.mxu0 0.0
    %5700 = vmatpush1.msra.mxu0 0.0
    %5701 = vmatprep.subr.mxu0 0.0
    %5702 = vmatpush1.msra.mxu0 0.0
    %5703 = vmatprep.subr.mxu0 0.0
    %5704 = vmatpush1.msra.mxu0 0.0
    %5705 = vmatprep.subr.mxu0 0.0
    %5706 = vmatpush1.msra.mxu0 0.0
    %5707 = vmatprep.subr.mxu0 0.0
    %5708 = vmatpush1.msra.mxu0 0.0
    %5709 = vmatprep.subr.mxu0 0.0
    %5710 = vmatpush1.msra.mxu0 0.0
    %5711 = vmatprep.subr.mxu0 0.0
    %5712 = vmatpush1.msra.mxu0 0.0
    %5713 = vmatprep.subr.mxu0 0.0
    %5714 = vmatpush1.msra.mxu0 0.0
    %5715 = vmatprep.mubr.f32.mxu0 0.0
    %5716 = vmatmul.mubr.f32.gmra.mrb[0].mxu0 %v5261
    %v5717 = vpop.f32.mrb[0].mxu0
    %v5718 = vadd.f32 %v5641, %v5717
    %v5719 = vpop.f32.mrb[0].mxu0
    %v5720 = vadd.f32 %v5643, %v5719
    %5721 = vmatprep.mubr.f32.mxu0 0.0
    %5722 = vmatmul.mubr.f32.gmra.mrb[0].mxu0 %v5264
    %v5723 = vpop.f32.mrb[0].mxu0
    %v5724 = vadd.f32 %v5647, %v5723
    %v5725 = vpop.f32.mrb[0].mxu0
    %v5726 = vadd.f32 %v5649, %v5725
    %5727 = vdwg.mxu0
    %vm5728 = vcmp.gt.f32.partialorder %v5410, 0.0
    %vm5729 = vcmp.gt.f32.partialorder %v5412, 0.0
    %vm5730 = vcmp.gt.f32.partialorder %v5564, 0.0
    %vm5731 = vcmp.gt.f32.partialorder %v5566, 0.0
    %vm5732 = vcmp.gt.f32.partialorder %v5718, 0.0
    %vm5733 = vcmp.gt.f32.partialorder %v5720, 0.0
    %vm5734 = vcmp.gt.f32.partialorder %v5416, 0.0
    %vm5735 = vcmp.gt.f32.partialorder %v5418, 0.0
    %vm5736 = vcmp.gt.f32.partialorder %v5570, 0.0
    %vm5737 = vcmp.gt.f32.partialorder %v5572, 0.0
    %vm5738 = vcmp.gt.f32.partialorder %v5724, 0.0
    %vm5739 = vcmp.gt.f32.partialorder %v5726, 0.0
    %v5740 = vmul.f32 %v5410, 0.2
    %v5741 = vmul.f32 %v5412, 0.2
    %v5742 = vmul.f32 %v5564, 0.2
    %v5743 = vmul.f32 %v5566, 0.2
    %v5744 = vmul.f32 %v5718, 0.2
    %v5745 = vmul.f32 %v5720, 0.2
    %v5746 = vmul.f32 %v5416, 0.2
    %v5747 = vmul.f32 %v5418, 0.2
    %v5748 = vmul.f32 %v5570, 0.2
    %v5749 = vmul.f32 %v5572, 0.2
    %v5750 = vmul.f32 %v5724, 0.2
    %v5751 = vmul.f32 %v5726, 0.2
    %v5752 = vsel %vm5728, %v5410, %v5740
    %v5753 = vsel %vm5729, %v5412, %v5741
    %v5754 = vsel %vm5730, %v5564, %v5742
    %v5755 = vsel %vm5731, %v5566, %v5743
    %v5756 = vsel %vm5732, %v5718, %v5744
    %v5757 = vsel %vm5733, %v5720, %v5745
    %v5758 = vsel %vm5734, %v5416, %v5746
    %v5759 = vsel %vm5735, %v5418, %v5747
    %v5760 = vsel %vm5736, %v5570, %v5748
    %v5761 = vsel %vm5737, %v5572, %v5749
    %v5762 = vsel %vm5738, %v5724, %v5750
    %v5763 = vsel %vm5739, %v5726, %v5751
    %v5764 = vmul.f32 %v5752, %v5752
    %v5765 = vmul.f32 %v5753, %v5753
    %v5766 = vmul.f32 %v5754, %v5754
    %v5767 = vmul.f32 %v5755, %v5755
    %v5768 = vmul.f32 %v5756, %v5756
    %v5769 = vmul.f32 %v5757, %v5757
    %v5770 = vmul.f32 %v5758, %v5758
    %v5771 = vmul.f32 %v5759, %v5759
    %v5772 = vmul.f32 %v5760, %v5760
    %v5773 = vmul.f32 %v5761, %v5761
    %v5774 = vmul.f32 %v5762, %v5762
    %v5775 = vmul.f32 %v5763, %v5763
    %vm5776 = vcmask 130048
    %v5778 = vsel %vm5776, 0.0625, 0
    %5780 = vmatprep.subr.mxu0 %v5765
    %5781 = vmatpush1.msra.mxu0 %v5764
    %5782 = vmatprep.subr.mxu0 %v5771
    %5783 = vmatpush1.msra.mxu0 %v5770
    %5784 = vmatprep.subr.mxu0 0.0
    %5785 = vmatpush1.msra.mxu0 0.0
    %5786 = vmatprep.subr.mxu0 0.0
    %5787 = vmatpush1.msra.mxu0 0.0
    %5788 = vmatprep.subr.mxu0 0.0
    %5789 = vmatpush1.msra.mxu0 0.0
    %5790 = vmatprep.subr.mxu0 0.0
    %5791 = vmatpush1.msra.mxu0 0.0
    %5792 = vmatprep.subr.mxu0 0.0
    %5793 = vmatpush1.msra.mxu0 0.0
    %5794 = vmatprep.subr.mxu0 0.0
    %5795 = vmatpush1.msra.mxu0 0.0
    %5796 = vmatprep.subr.mxu0 0.0
    %5797 = vmatpush1.msra.mxu0 0.0
    %5798 = vmatprep.subr.mxu0 0.0
    %5799 = vmatpush1.msra.mxu0 0.0
    %5800 = vmatprep.subr.mxu0 0.0
    %5801 = vmatpush1.msra.mxu0 0.0
    %5802 = vmatprep.subr.mxu0 0.0
    %5803 = vmatpush1.msra.mxu0 0.0
    %5804 = vmatprep.subr.mxu0 0.0
    %5805 = vmatpush1.msra.mxu0 0.0
    %5806 = vmatprep.subr.mxu0 0.0
    %5807 = vmatpush1.msra.mxu0 0.0
    %5808 = vmatprep.subr.mxu0 0.0
    %5809 = vmatpush1.msra.mxu0 0.0
    %5810 = vmatprep.subr.mxu0 0.0
    %5811 = vmatpush1.msra.mxu0 0.0
    %5812 = vmatprep.subr.mxu0 0.0
    %5813 = vmatpush1.msra.mxu0 0.0
    %5814 = vmatprep.subr.mxu0 0.0
    %5815 = vmatpush1.msra.mxu0 0.0
    %5816 = vmatprep.subr.mxu0 0.0
    %5817 = vmatpush1.msra.mxu0 0.0
    %5818 = vmatprep.subr.mxu0 0.0
    %5819 = vmatpush1.msra.mxu0 0.0
    %5820 = vmatprep.subr.mxu0 0.0
    %5821 = vmatpush1.msra.mxu0 0.0
    %5822 = vmatprep.subr.mxu0 0.0
    %5823 = vmatpush1.msra.mxu0 0.0
    %5824 = vmatprep.subr.mxu0 0.0
    %5825 = vmatpush1.msra.mxu0 0.0
    %5826 = vmatprep.subr.mxu0 0.0
    %5827 = vmatpush1.msra.mxu0 0.0
    %5828 = vmatprep.subr.mxu0 0.0
    %5829 = vmatpush1.msra.mxu0 0.0
    %5830 = vmatprep.subr.mxu0 0.0
    %5831 = vmatpush1.msra.mxu0 0.0
    %5832 = vmatprep.subr.mxu0 0.0
    %5833 = vmatpush1.msra.mxu0 0.0
    %5834 = vmatprep.subr.mxu0 0.0
    %5835 = vmatpush1.msra.mxu0 0.0
    %5836 = vmatprep.subr.mxu0 0.0
    %5837 = vmatpush1.msra.mxu0 0.0
    %5838 = vmatprep.subr.mxu0 0.0
    %5839 = vmatpush1.msra.mxu0 0.0
    %5840 = vmatprep.subr.mxu0 0.0
    %5841 = vmatpush1.msra.mxu0 0.0
    %5842 = vmatprep.subr.mxu0 0.0
    %5843 = vmatpush1.msra.mxu0 0.0
    %5844 = vmatprep.mubr.f32.mxu0 0.0
    %5845 = vmatmul.mubr.f32.gmra.mrb[0].mxu0 %v5778
    %v5846 = vpop.f32.mrb[0].mxu0
    %v5847 = vadd.f32 1e-08, %v5846
    %v5848 = vpop.f32.mrb[0].mxu0
    %v5849 = vadd.f32 1e-08, %v5848
    %5850 = vdwg.mxu0
    %5851 = vmatprep.subr.mxu0 %v5767
    %5852 = vmatpush1.msra.mxu0 %v5766
    %5853 = vmatprep.subr.mxu0 %v5773
    %5854 = vmatpush1.msra.mxu0 %v5772
    %5855 = vmatprep.subr.mxu0 0.0
    %5856 = vmatpush1.msra.mxu0 0.0
    %5857 = vmatprep.subr.mxu0 0.0
    %5858 = vmatpush1.msra.mxu0 0.0
    %5859 = vmatprep.subr.mxu0 0.0
    %5860 = vmatpush1.msra.mxu0 0.0
    %5861 = vmatprep.subr.mxu0 0.0
    %5862 = vmatpush1.msra.mxu0 0.0
    %5863 = vmatprep.subr.mxu0 0.0
    %5864 = vmatpush1.msra.mxu0 0.0
    %5865 = vmatprep.subr.mxu0 0.0
    %5866 = vmatpush1.msra.mxu0 0.0
    %5867 = vmatprep.subr.mxu0 0.0
    %5868 = vmatpush1.msra.mxu0 0.0
    %5869 = vmatprep.subr.mxu0 0.0
    %5870 = vmatpush1.msra.mxu0 0.0
    %5871 = vmatprep.subr.mxu0 0.0
    %5872 = vmatpush1.msra.mxu0 0.0
    %5873 = vmatprep.subr.mxu0 0.0
    %5874 = vmatpush1.msra.mxu0 0.0
    %5875 = vmatprep.subr.mxu0 0.0
    %5876 = vmatpush1.msra.mxu0 0.0
    %5877 = vmatprep.subr.mxu0 0.0
    %5878 = vmatpush1.msra.mxu0 0.0
    %5879 = vmatprep.subr.mxu0 0.0
    %5880 = vmatpush1.msra.mxu0 0.0
    %5881 = vmatprep.subr.mxu0 0.0
    %5882 = vmatpush1.msra.mxu0 0.0
    %5883 = vmatprep.subr.mxu0 0.0
    %5884 = vmatpush1.msra.mxu0 0.0
    %5885 = vmatprep.subr.mxu0 0.0
    %5886 = vmatpush1.msra.mxu0 0.0
    %5887 = vmatprep.subr.mxu0 0.0
    %5888 = vmatpush1.msra.mxu0 0.0
    %5889 = vmatprep.subr.mxu0 0.0
    %5890 = vmatpush1.msra.mxu0 0.0
    %5891 = vmatprep.subr.mxu0 0.0
    %5892 = vmatpush1.msra.mxu0 0.0
    %5893 = vmatprep.subr.mxu0 0.0
    %5894 = vmatpush1.msra.mxu0 0.0
    %5895 = vmatprep.subr.mxu0 0.0
    %5896 = vmatpush1.msra.mxu0 0.0
    %5897 = vmatprep.subr.mxu0 0.0
    %5898 = vmatpush1.msra.mxu0 0.0
    %5899 = vmatprep.subr.mxu0 0.0
    %5900 = vmatpush1.msra.mxu0 0.0
    %5901 = vmatprep.subr.mxu0 0.0
    %5902 = vmatpush1.msra.mxu0 0.0
    %5903 = vmatprep.subr.mxu0 0.0
    %5904 = vmatpush1.msra.mxu0 0.0
    %5905 = vmatprep.subr.mxu0 0.0
    %5906 = vmatpush1.msra.mxu0 0.0
    %5907 = vmatprep.subr.mxu0 0.0
    %5908 = vmatpush1.msra.mxu0 0.0
    %5909 = vmatprep.subr.mxu0 0.0
    %5910 = vmatpush1.msra.mxu0 0.0
    %5911 = vmatprep.subr.mxu0 0.0
    %5912 = vmatpush1.msra.mxu0 0.0
    %5913 = vmatprep.subr.mxu0 0.0
    %5914 = vmatpush1.msra.mxu0 0.0
    %5915 = vmatprep.mubr.f32.mxu0 0.0
    %5916 = vmatmul.mubr.f32.gmra.mrb[0].mxu0 %v5778
    %v5917 = vpop.f32.mrb[0].mxu0
    %v5918 = vadd.f32 1e-08, %v5917
    %v5919 = vpop.f32.mrb[0].mxu0
    %v5920 = vadd.f32 1e-08, %v5919
    %5921 = vdwg.mxu0
    %5922 = vmatprep.subr.mxu0 %v5769
    %5923 = vmatpush1.msra.mxu0 %v5768
    %5924 = vmatprep.subr.mxu0 %v5775
    %5925 = vmatpush1.msra.mxu0 %v5774
    %5926 = vmatprep.subr.mxu0 0.0
    %5927 = vmatpush1.msra.mxu0 0.0
    %5928 = vmatprep.subr.mxu0 0.0
    %5929 = vmatpush1.msra.mxu0 0.0
    %5930 = vmatprep.subr.mxu0 0.0
    %5931 = vmatpush1.msra.mxu0 0.0
    %5932 = vmatprep.subr.mxu0 0.0
    %5933 = vmatpush1.msra.mxu0 0.0
    %5934 = vmatprep.subr.mxu0 0.0
    %5935 = vmatpush1.msra.mxu0 0.0
    %5936 = vmatprep.subr.mxu0 0.0
    %5937 = vmatpush1.msra.mxu0 0.0
    %5938 = vmatprep.subr.mxu0 0.0
    %5939 = vmatpush1.msra.mxu0 0.0
    %5940 = vmatprep.subr.mxu0 0.0
    %5941 = vmatpush1.msra.mxu0 0.0
    %5942 = vmatprep.subr.mxu0 0.0
    %5943 = vmatpush1.msra.mxu0 0.0
    %5944 = vmatprep.subr.mxu0 0.0
    %5945 = vmatpush1.msra.mxu0 0.0
    %5946 = vmatprep.subr.mxu0 0.0
    %5947 = vmatpush1.msra.mxu0 0.0
    %5948 = vmatprep.subr.mxu0 0.0
    %5949 = vmatpush1.msra.mxu0 0.0
    %5950 = vmatprep.subr.mxu0 0.0
    %5951 = vmatpush1.msra.mxu0 0.0
    %5952 = vmatprep.subr.mxu0 0.0
    %5953 = vmatpush1.msra.mxu0 0.0
    %5954 = vmatprep.subr.mxu0 0.0
    %5955 = vmatpush1.msra.mxu0 0.0
    %5956 = vmatprep.subr.mxu0 0.0
    %5957 = vmatpush1.msra.mxu0 0.0
    %5958 = vmatprep.subr.mxu0 0.0
    %5959 = vmatpush1.msra.mxu0 0.0
    %5960 = vmatprep.subr.mxu0 0.0
    %5961 = vmatpush1.msra.mxu0 0.0
    %5962 = vmatprep.subr.mxu0 0.0
    %5963 = vmatpush1.msra.mxu0 0.0
    %5964 = vmatprep.subr.mxu0 0.0
    %5965 = vmatpush1.msra.mxu0 0.0
    %5966 = vmatprep.subr.mxu0 0.0
    %5967 = vmatpush1.msra.mxu0 0.0
    %5968 = vmatprep.subr.mxu0 0.0
    %5969 = vmatpush1.msra.mxu0 0.0
    %5970 = vmatprep.subr.mxu0 0.0
    %5971 = vmatpush1.msra.mxu0 0.0
    %5972 = vmatprep.subr.mxu0 0.0
    %5973 = vmatpush1.msra.mxu0 0.0
    %5974 = vmatprep.subr.mxu0 0.0
    %5975 = vmatpush1.msra.mxu0 0.0
    %5976 = vmatprep.subr.mxu0 0.0
    %5977 = vmatpush1.msra.mxu0 0.0
    %5978 = vmatprep.subr.mxu0 0.0
    %5979 = vmatpush1.msra.mxu0 0.0
    %5980 = vmatprep.subr.mxu0 0.0
    %5981 = vmatpush1.msra.mxu0 0.0
    %5982 = vmatprep.subr.mxu0 0.0
    %5983 = vmatpush1.msra.mxu0 0.0
    %5984 = vmatprep.subr.mxu0 0.0
    %5985 = vmatpush1.msra.mxu0 0.0
    %5986 = vmatprep.mubr.f32.mxu0 0.0
    %5987 = vmatmul.mubr.f32.gmra.mrb[0].mxu0 %v5778
    %v5988 = vpop.f32.mrb[0].mxu0
    %v5989 = vadd.f32 1e-08, %v5988
    %v5990 = vpop.f32.mrb[0].mxu0
    %v5991 = vadd.f32 1e-08, %v5990
    %5992 = vdwg.mxu0
    %v5993 = vrsqrt.pop %v5847
    %v5994 = vrsqrt.pop %v5849
    %v5995 = vrsqrt.pop %v5918
    %v5996 = vrsqrt.pop %v5920
    %v5997 = vrsqrt.pop %v5989
    %v5998 = vrsqrt.pop %v5991
    %v5999 = vlaneseq
    %v6000 = vshrl.u32 %v5999, 7
    %v6001 = vsub.s32 0, %v6000
    %v6002 = vrot.slane %v5993, %v6001
    %v6003 = vlaneseq
    %v6004 = vshrl.u32 %v6003, 7
    %v6005 = vsub.s32 0, %v6004
    %v6006 = vrot.slane %v5994, %v6005
    %v6007 = vlaneseq
    %v6008 = vshrl.u32 %v6007, 7
    %v6009 = vsub.s32 0, %v6008
    %v6010 = vrot.slane %v5995, %v6009
    %v6011 = vlaneseq
    %v6012 = vshrl.u32 %v6011, 7
    %v6013 = vsub.s32 0, %v6012
    %v6014 = vrot.slane %v5996, %v6013
    %v6015 = vlaneseq
    %v6016 = vshrl.u32 %v6015, 7
    %v6017 = vsub.s32 0, %v6016
    %v6018 = vrot.slane %v5997, %v6017
    %v6019 = vlaneseq
    %v6020 = vshrl.u32 %v6019, 7
    %v6021 = vsub.s32 0, %v6020
    %v6022 = vrot.slane %v5998, %v6021
    %v6023 = vmul.f32 %v5752, %v6002
    %v6024 = vmul.f32 %v5753, %v6006
    %v6025 = vmul.f32 %v5754, %v6010
    %v6026 = vmul.f32 %v5755, %v6014
    %v6027 = vmul.f32 %v5756, %v6018
    %v6028 = vmul.f32 %v5757, %v6022
    %v6029 = vmul.f32 %v5758, %v6002
    %v6030 = vmul.f32 %v5759, %v6006
    %v6031 = vmul.f32 %v5760, %v6010
    %v6032 = vmul.f32 %v5761, %v6014
    %v6033 = vmul.f32 %v5762, %v6018
    %v6034 = vmul.f32 %v5763, %v6022
    %v6036 = vlaneseq
    %v6037 = vshrl.u32 %v6036, 7
    %v6038 = vsub.s32 0, %v6037
    %v6039 = vrot.slane %v3442, %v6038
    %v6040 = vlaneseq
    %v6041 = vshrl.u32 %v6040, 7
    %v6042 = vsub.s32 1, %v6041
    %v6043 = vrot.slane %v3442, %v6042
    %v6044 = vlaneseq
    %v6045 = vshrl.u32 %v6044, 7
    %v6046 = vsub.s32 2, %v6045
    %v6047 = vrot.slane %v3442, %v6046
    %v6048 = vlaneseq
    %v6049 = vshrl.u32 %v6048, 7
    %v6050 = vsub.s32 3, %v6049
    %v6051 = vrot.slane %v3442, %v6050
    %v6052 = vlaneseq
    %v6053 = vshrl.u32 %v6052, 7
    %v6054 = vsub.s32 4, %v6053
    %v6055 = vrot.slane %v3442, %v6054
    %v6056 = vlaneseq
    %v6057 = vshrl.u32 %v6056, 7
    %v6058 = vsub.s32 5, %v6057
    %v6059 = vrot.slane %v3442, %v6058
    %v6066 = vmul.f32 %v6023, %v6039
    %v6067 = vmul.f32 %v6024, %v6043
    %v6068 = vmul.f32 %v6025, %v6047
    %v6069 = vmul.f32 %v6026, %v6051
    %v6070 = vmul.f32 %v6027, %v6055
    %v6071 = vmul.f32 %v6028, %v6059
    %v6072 = vmul.f32 %v6029, %v6039
    %v6073 = vmul.f32 %v6030, %v6043
    %v6074 = vmul.f32 %v6031, %v6047
    %v6075 = vmul.f32 %v6032, %v6051
    %v6076 = vmul.f32 %v6033, %v6055
    %v6077 = vmul.f32 %v6034, %v6059
    %6090 = vrot.lane.b32.xlu0 %v6066, 127
    %v6091 = vpop.permute.xlu0 %6090
    %6092 = vrot.lane.b32.xlu0 %v6067, 127
    %v6093 = vpop.permute.xlu0 %6092
    %6094 = vrot.lane.b32.xlu0 %v6068, 127
    %v6095 = vpop.permute.xlu0 %6094
    %6096 = vrot.lane.b32.xlu0 %v6069, 127
    %v6097 = vpop.permute.xlu0 %6096
    %6098 = vrot.lane.b32.xlu0 %v6070, 127
    %v6099 = vpop.permute.xlu0 %6098
    %6100 = vrot.lane.b32.xlu0 %v6071, 127
    %v6101 = vpop.permute.xlu0 %6100
    %6102 = vrot.lane.b32.xlu0 %v6072, 127
    %v6103 = vpop.permute.xlu0 %6102
    %6104 = vrot.lane.b32.xlu0 %v6073, 127
    %v6105 = vpop.permute.xlu0 %6104
    %6106 = vrot.lane.b32.xlu0 %v6074, 127
    %v6107 = vpop.permute.xlu0 %6106
    %6108 = vrot.lane.b32.xlu0 %v6075, 127
    %v6109 = vpop.permute.xlu0 %6108
    %6110 = vrot.lane.b32.xlu0 %v6076, 127
    %v6111 = vpop.permute.xlu0 %6110
    %6112 = vrot.lane.b32.xlu0 %v6077, 127
    %v6113 = vpop.permute.xlu0 %6112
    %v6114 = vsel %vm672, %v663, %v6091
    %v6115 = vsel %vm672, %v6091, %v6093
    %v6116 = vsel %vm672, %v6093, %v6095
    %v6117 = vsel %vm672, %v6095, %v6097
    %v6118 = vsel %vm672, %v6097, %v6099
    %v6119 = vsel %vm672, %v6099, %v6101
    %v6120 = vsel %vm672, %v663, %v6103
    %v6121 = vsel %vm672, %v6103, %v6105
    %v6122 = vsel %vm672, %v6105, %v6107
    %v6123 = vsel %vm672, %v6107, %v6109
    %v6124 = vsel %vm672, %v6109, %v6111
    %v6125 = vsel %vm672, %v6111, %v6113
    %6126 = vrot.lane.b32.xlu0 %v6066, 126
    %v6127 = vpop.permute.xlu0 %6126
    %6128 = vrot.lane.b32.xlu0 %v6067, 126
    %v6129 = vpop.permute.xlu0 %6128
    %6130 = vrot.lane.b32.xlu0 %v6068, 126
    %v6131 = vpop.permute.xlu0 %6130
    %6132 = vrot.lane.b32.xlu0 %v6069, 126
    %v6133 = vpop.permute.xlu0 %6132
    %6134 = vrot.lane.b32.xlu0 %v6070, 126
    %v6135 = vpop.permute.xlu0 %6134
    %6136 = vrot.lane.b32.xlu0 %v6071, 126
    %v6137 = vpop.permute.xlu0 %6136
    %6138 = vrot.lane.b32.xlu0 %v6072, 126
    %v6139 = vpop.permute.xlu0 %6138
    %6140 = vrot.lane.b32.xlu0 %v6073, 126
    %v6141 = vpop.permute.xlu0 %6140
    %6142 = vrot.lane.b32.xlu0 %v6074, 126
    %v6143 = vpop.permute.xlu0 %6142
    %6144 = vrot.lane.b32.xlu0 %v6075, 126
    %v6145 = vpop.permute.xlu0 %6144
    %6146 = vrot.lane.b32.xlu0 %v6076, 126
    %v6147 = vpop.permute.xlu0 %6146
    %6148 = vrot.lane.b32.xlu0 %v6077, 126
    %v6149 = vpop.permute.xlu0 %6148
    %v6150 = vsel %vm687, %v678, %v6127
    %v6151 = vsel %vm687, %v6127, %v6129
    %v6152 = vsel %vm687, %v6129, %v6131
    %v6153 = vsel %vm687, %v6131, %v6133
    %v6154 = vsel %vm687, %v6133, %v6135
    %v6155 = vsel %vm687, %v6135, %v6137
    %v6156 = vsel %vm687, %v678, %v6139
    %v6157 = vsel %vm687, %v6139, %v6141
    %v6158 = vsel %vm687, %v6141, %v6143
    %v6159 = vsel %vm687, %v6143, %v6145
    %v6160 = vsel %vm687, %v6145, %v6147
    %v6161 = vsel %vm687, %v6147, %v6149
    %6162 = vrot.lane.b32.xlu0 %v6066, 110
    %v6163 = vpop.permute.xlu0 %6162
    %6164 = vrot.lane.b32.xlu0 %v6067, 110
    %v6165 = vpop.permute.xlu0 %6164
    %6166 = vrot.lane.b32.xlu0 %v6068, 110
    %v6167 = vpop.permute.xlu0 %6166
    %6168 = vrot.lane.b32.xlu0 %v6069, 110
    %v6169 = vpop.permute.xlu0 %6168
    %6170 = vrot.lane.b32.xlu0 %v6070, 110
    %v6171 = vpop.permute.xlu0 %6170
    %6172 = vrot.lane.b32.xlu0 %v6071, 110
    %v6173 = vpop.permute.xlu0 %6172
    %6174 = vrot.lane.b32.xlu0 %v6072, 110
    %v6175 = vpop.permute.xlu0 %6174
    %6176 = vrot.lane.b32.xlu0 %v6073, 110
    %v6177 = vpop.permute.xlu0 %6176
    %6178 = vrot.lane.b32.xlu0 %v6074, 110
    %v6179 = vpop.permute.xlu0 %6178
    %6180 = vrot.lane.b32.xlu0 %v6075, 110
    %v6181 = vpop.permute.xlu0 %6180
    %6182 = vrot.lane.b32.xlu0 %v6076, 110
    %v6183 = vpop.permute.xlu0 %6182
    %6184 = vrot.lane.b32.xlu0 %v6077, 110
    %v6185 = vpop.permute.xlu0 %6184
    %v6186 = vsel %vm3928, %v3879, %v6163
    %v6187 = vsel %vm3928, %v6163, %v6165
    %v6188 = vsel %vm3928, %v6165, %v6167
    %v6189 = vsel %vm3928, %v6167, %v6169
    %v6190 = vsel %vm3928, %v6169, %v6171
    %v6191 = vsel %vm3928, %v6171, %v6173
    %v6192 = vsel %vm3928, %v3879, %v6175
    %v6193 = vsel %vm3928, %v6175, %v6177
    %v6194 = vsel %vm3928, %v6177, %v6179
    %v6195 = vsel %vm3928, %v6179, %v6181
    %v6196 = vsel %vm3928, %v6181, %v6183
    %v6197 = vsel %vm3928, %v6183, %v6185
    %6198 = vrot.lane.b32.xlu0 %v6066, 109
    %v6199 = vpop.permute.xlu0 %6198
    %6200 = vrot.lane.b32.xlu0 %v6067, 109
    %v6201 = vpop.permute.xlu0 %6200
    %6202 = vrot.lane.b32.xlu0 %v6068, 109
    %v6203 = vpop.permute.xlu0 %6202
    %6204 = vrot.lane.b32.xlu0 %v6069, 109
    %v6205 = vpop.permute.xlu0 %6204
    %6206 = vrot.lane.b32.xlu0 %v6070, 109
    %v6207 = vpop.permute.xlu0 %6206
    %6208 = vrot.lane.b32.xlu0 %v6071, 109
    %v6209 = vpop.permute.xlu0 %6208
    %6210 = vrot.lane.b32.xlu0 %v6072, 109
    %v6211 = vpop.permute.xlu0 %6210
    %6212 = vrot.lane.b32.xlu0 %v6073, 109
    %v6213 = vpop.permute.xlu0 %6212
    %6214 = vrot.lane.b32.xlu0 %v6074, 109
    %v6215 = vpop.permute.xlu0 %6214
    %6216 = vrot.lane.b32.xlu0 %v6075, 109
    %v6217 = vpop.permute.xlu0 %6216
    %6218 = vrot.lane.b32.xlu0 %v6076, 109
    %v6219 = vpop.permute.xlu0 %6218
    %6220 = vrot.lane.b32.xlu0 %v6077, 109
    %v6221 = vpop.permute.xlu0 %6220
    %v6222 = vsel %vm4001, %v6199, %v6201
    %v6223 = vsel %vm4001, %v6201, %v6203
    %v6224 = vsel %vm4001, %v6203, %v6205
    %v6225 = vsel %vm4001, %v6205, %v6207
    %v6226 = vsel %vm4001, %v6207, %v6209
    %v6227 = vsel %vm4001, %v6211, %v6213
    %v6228 = vsel %vm4001, %v6213, %v6215
    %v6229 = vsel %vm4001, %v6215, %v6217
    %v6230 = vsel %vm4001, %v6217, %v6219
    %v6231 = vsel %vm4001, %v6219, %v6221
    %6232 = vrot.lane.b32.xlu0 %v6066, 108
    %v6233 = vpop.permute.xlu0 %6232
    %6234 = vrot.lane.b32.xlu0 %v6067, 108
    %v6235 = vpop.permute.xlu0 %6234
    %6236 = vrot.lane.b32.xlu0 %v6068, 108
    %v6237 = vpop.permute.xlu0 %6236
    %6238 = vrot.lane.b32.xlu0 %v6069, 108
    %v6239 = vpop.permute.xlu0 %6238
    %6240 = vrot.lane.b32.xlu0 %v6070, 108
    %v6241 = vpop.permute.xlu0 %6240
    %6242 = vrot.lane.b32.xlu0 %v6071, 108
    %v6243 = vpop.permute.xlu0 %6242
    %6244 = vrot.lane.b32.xlu0 %v6072, 108
    %v6245 = vpop.permute.xlu0 %6244
    %6246 = vrot.lane.b32.xlu0 %v6073, 108
    %v6247 = vpop.permute.xlu0 %6246
    %6248 = vrot.lane.b32.xlu0 %v6074, 108
    %v6249 = vpop.permute.xlu0 %6248
    %6250 = vrot.lane.b32.xlu0 %v6075, 108
    %v6251 = vpop.permute.xlu0 %6250
    %6252 = vrot.lane.b32.xlu0 %v6076, 108
    %v6253 = vpop.permute.xlu0 %6252
    %6254 = vrot.lane.b32.xlu0 %v6077, 108
    %v6255 = vpop.permute.xlu0 %6254
    %v6256 = vsel %vm1581, %v6233, %v6235
    %v6257 = vsel %vm1581, %v6235, %v6237
    %v6258 = vsel %vm1581, %v6237, %v6239
    %v6259 = vsel %vm1581, %v6239, %v6241
    %v6260 = vsel %vm1581, %v6241, %v6243
    %v6261 = vsel %vm1581, %v6243, %v1568
    %v6262 = vsel %vm1581, %v6245, %v6247
    %v6263 = vsel %vm1581, %v6247, %v6249
    %v6264 = vsel %vm1581, %v6249, %v6251
    %v6265 = vsel %vm1581, %v6251, %v6253
    %v6266 = vsel %vm1581, %v6253, %v6255
    %v6267 = vsel %vm1581, %v6255, %v1568
    %6268 = vrot.lane.b32.xlu0 %v6066, 92
    %v6269 = vpop.permute.xlu0 %6268
    %6270 = vrot.lane.b32.xlu0 %v6067, 92
    %v6271 = vpop.permute.xlu0 %6270
    %6272 = vrot.lane.b32.xlu0 %v6068, 92
    %v6273 = vpop.permute.xlu0 %6272
    %6274 = vrot.lane.b32.xlu0 %v6069, 92
    %v6275 = vpop.permute.xlu0 %6274
    %6276 = vrot.lane.b32.xlu0 %v6070, 92
    %v6277 = vpop.permute.xlu0 %6276
    %6278 = vrot.lane.b32.xlu0 %v6071, 92
    %v6279 = vpop.permute.xlu0 %6278
    %6280 = vrot.lane.b32.xlu0 %v6072, 92
    %v6281 = vpop.permute.xlu0 %6280
    %6282 = vrot.lane.b32.xlu0 %v6073, 92
    %v6283 = vpop.permute.xlu0 %6282
    %6284 = vrot.lane.b32.xlu0 %v6074, 92
    %v6285 = vpop.permute.xlu0 %6284
    %6286 = vrot.lane.b32.xlu0 %v6075, 92
    %v6287 = vpop.permute.xlu0 %6286
    %6288 = vrot.lane.b32.xlu0 %v6076, 92
    %v6289 = vpop.permute.xlu0 %6288
    %6290 = vrot.lane.b32.xlu0 %v6077, 92
    %v6291 = vpop.permute.xlu0 %6290
    %v6292 = vsel %vm4144, %v6269, %v6271
    %v6293 = vsel %vm4144, %v6271, %v6273
    %v6294 = vsel %vm4144, %v6273, %v6275
    %v6295 = vsel %vm4144, %v6275, %v6277
    %v6296 = vsel %vm4144, %v6277, %v6279
    %v6297 = vsel %vm4144, %v6279, %v4107
    %v6298 = vsel %vm4144, %v6281, %v6283
    %v6299 = vsel %vm4144, %v6283, %v6285
    %v6300 = vsel %vm4144, %v6285, %v6287
    %v6301 = vsel %vm4144, %v6287, %v6289
    %v6302 = vsel %vm4144, %v6289, %v6291
    %v6303 = vsel %vm4144, %v6291, %v4107
    %6304 = vrot.lane.b32.xlu0 %v6066, 91
    %v6305 = vpop.permute.xlu0 %6304
    %6306 = vrot.lane.b32.xlu0 %v6067, 91
    %v6307 = vpop.permute.xlu0 %6306
    %6308 = vrot.lane.b32.xlu0 %v6068, 91
    %v6309 = vpop.permute.xlu0 %6308
    %6310 = vrot.lane.b32.xlu0 %v6069, 91
    %v6311 = vpop.permute.xlu0 %6310
    %6312 = vrot.lane.b32.xlu0 %v6070, 91
    %v6313 = vpop.permute.xlu0 %6312
    %6314 = vrot.lane.b32.xlu0 %v6071, 91
    %v6315 = vpop.permute.xlu0 %6314
    %6316 = vrot.lane.b32.xlu0 %v6072, 91
    %v6317 = vpop.permute.xlu0 %6316
    %6318 = vrot.lane.b32.xlu0 %v6073, 91
    %v6319 = vpop.permute.xlu0 %6318
    %6320 = vrot.lane.b32.xlu0 %v6074, 91
    %v6321 = vpop.permute.xlu0 %6320
    %6322 = vrot.lane.b32.xlu0 %v6075, 91
    %v6323 = vpop.permute.xlu0 %6322
    %6324 = vrot.lane.b32.xlu0 %v6076, 91
    %v6325 = vpop.permute.xlu0 %6324
    %6326 = vrot.lane.b32.xlu0 %v6077, 91
    %v6327 = vpop.permute.xlu0 %6326
    %v6328 = vsel %vm4219, %v6305, %v6307
    %v6329 = vsel %vm4219, %v6307, %v6309
    %v6330 = vsel %vm4219, %v6309, %v6311
    %v6331 = vsel %vm4219, %v6311, %v6313
    %v6332 = vsel %vm4219, %v6313, %v6315
    %v6333 = vsel %vm4219, %v6315, %v4182
    %v6334 = vsel %vm4219, %v6317, %v6319
    %v6335 = vsel %vm4219, %v6319, %v6321
    %v6336 = vsel %vm4219, %v6321, %v6323
    %v6337 = vsel %vm4219, %v6323, %v6325
    %v6338 = vsel %vm4219, %v6325, %v6327
    %v6339 = vsel %vm4219, %v6327, %v4182
    %6340 = vrot.lane.b32.xlu0 %v6066, 90
    %v6341 = vpop.permute.xlu0 %6340
    %6342 = vrot.lane.b32.xlu0 %v6067, 90
    %v6343 = vpop.permute.xlu0 %6342
    %6344 = vrot.lane.b32.xlu0 %v6068, 90
    %v6345 = vpop.permute.xlu0 %6344
    %6346 = vrot.lane.b32.xlu0 %v6069, 90
    %v6347 = vpop.permute.xlu0 %6346
    %6348 = vrot.lane.b32.xlu0 %v6070, 90
    %v6349 = vpop.permute.xlu0 %6348
    %6350 = vrot.lane.b32.xlu0 %v6071, 90
    %v6351 = vpop.permute.xlu0 %6350
    %6352 = vrot.lane.b32.xlu0 %v6072, 90
    %v6353 = vpop.permute.xlu0 %6352
    %6354 = vrot.lane.b32.xlu0 %v6073, 90
    %v6355 = vpop.permute.xlu0 %6354
    %6356 = vrot.lane.b32.xlu0 %v6074, 90
    %v6357 = vpop.permute.xlu0 %6356
    %6358 = vrot.lane.b32.xlu0 %v6075, 90
    %v6359 = vpop.permute.xlu0 %6358
    %6360 = vrot.lane.b32.xlu0 %v6076, 90
    %v6361 = vpop.permute.xlu0 %6360
    %6362 = vrot.lane.b32.xlu0 %v6077, 90
    %v6363 = vpop.permute.xlu0 %6362
    %v6364 = vsel %vm4294, %v6341, %v6343
    %v6365 = vsel %vm4294, %v6343, %v6345
    %v6366 = vsel %vm4294, %v6345, %v6347
    %v6367 = vsel %vm4294, %v6347, %v6349
    %v6368 = vsel %vm4294, %v6349, %v6351
    %v6369 = vsel %vm4294, %v6351, %v4257
    %v6370 = vsel %vm4294, %v6353, %v6355
    %v6371 = vsel %vm4294, %v6355, %v6357
    %v6372 = vsel %vm4294, %v6357, %v6359
    %v6373 = vsel %vm4294, %v6359, %v6361
    %v6374 = vsel %vm4294, %v6361, %v6363
    %v6375 = vsel %vm4294, %v6363, %v4257
    %6377 = vset.pattern.permute.xlu0 0
    %6378 = vperm.xlu0 %6377, %v3440
    %v6379 = vpop.permute.xlu0 %6378
    %6382 = vset.pattern.permute.xlu0 0
    %6383 = vperm.xlu0 %6382, %v3441
    %v6384 = vpop.permute.xlu0 %6383
    %6386 = vrot.lane.b32.xlu0 %v6066, 19
    %v6387 = vpop.permute.xlu0 %6386
    %6388 = vrot.lane.b32.xlu0 %v6067, 19
    %v6389 = vpop.permute.xlu0 %6388
    %6390 = vrot.lane.b32.xlu0 %v6068, 19
    %v6391 = vpop.permute.xlu0 %6390
    %6392 = vrot.lane.b32.xlu0 %v6069, 19
    %v6393 = vpop.permute.xlu0 %6392
    %6394 = vrot.lane.b32.xlu0 %v6070, 19
    %v6395 = vpop.permute.xlu0 %6394
    %6396 = vrot.lane.b32.xlu0 %v6071, 19
    %v6397 = vpop.permute.xlu0 %6396
    %6398 = vrot.lane.b32.xlu0 %v6072, 19
    %v6399 = vpop.permute.xlu0 %6398
    %6400 = vrot.lane.b32.xlu0 %v6073, 19
    %v6401 = vpop.permute.xlu0 %6400
    %6402 = vrot.lane.b32.xlu0 %v6074, 19
    %v6403 = vpop.permute.xlu0 %6402
    %6404 = vrot.lane.b32.xlu0 %v6075, 19
    %v6405 = vpop.permute.xlu0 %6404
    %6406 = vrot.lane.b32.xlu0 %v6076, 19
    %v6407 = vpop.permute.xlu0 %6406
    %6408 = vrot.lane.b32.xlu0 %v6077, 19
    %v6409 = vpop.permute.xlu0 %6408
    %6410 = vrot.lane.b32.xlu0 %v6114, 19
    %v6411 = vpop.permute.xlu0 %6410
    %6412 = vrot.lane.b32.xlu0 %v6115, 19
    %v6413 = vpop.permute.xlu0 %6412
    %6414 = vrot.lane.b32.xlu0 %v6116, 19
    %v6415 = vpop.permute.xlu0 %6414
    %6416 = vrot.lane.b32.xlu0 %v6117, 19
    %v6417 = vpop.permute.xlu0 %6416
    %6418 = vrot.lane.b32.xlu0 %v6118, 19
    %v6419 = vpop.permute.xlu0 %6418
    %6420 = vrot.lane.b32.xlu0 %v6119, 19
    %v6421 = vpop.permute.xlu0 %6420
    %6422 = vrot.lane.b32.xlu0 %v6101, 19
    %v6423 = vpop.permute.xlu0 %6422
    %6424 = vrot.lane.b32.xlu0 %v6120, 19
    %v6425 = vpop.permute.xlu0 %6424
    %6426 = vrot.lane.b32.xlu0 %v6121, 19
    %v6427 = vpop.permute.xlu0 %6426
    %6428 = vrot.lane.b32.xlu0 %v6122, 19
    %v6429 = vpop.permute.xlu0 %6428
    %6430 = vrot.lane.b32.xlu0 %v6123, 19
    %v6431 = vpop.permute.xlu0 %6430
    %6432 = vrot.lane.b32.xlu0 %v6124, 19
    %v6433 = vpop.permute.xlu0 %6432
    %6434 = vrot.lane.b32.xlu0 %v6125, 19
    %v6435 = vpop.permute.xlu0 %6434
    %6436 = vrot.lane.b32.xlu0 %v6113, 19
    %v6437 = vpop.permute.xlu0 %6436
    %6438 = vrot.lane.b32.xlu0 %v6150, 19
    %v6439 = vpop.permute.xlu0 %6438
    %6440 = vrot.lane.b32.xlu0 %v6151, 19
    %v6441 = vpop.permute.xlu0 %6440
    %6442 = vrot.lane.b32.xlu0 %v6152, 19
    %v6443 = vpop.permute.xlu0 %6442
    %6444 = vrot.lane.b32.xlu0 %v6153, 19
    %v6445 = vpop.permute.xlu0 %6444
    %6446 = vrot.lane.b32.xlu0 %v6154, 19
    %v6447 = vpop.permute.xlu0 %6446
    %6448 = vrot.lane.b32.xlu0 %v6155, 19
    %v6449 = vpop.permute.xlu0 %6448
    %6450 = vrot.lane.b32.xlu0 %v6137, 19
    %v6451 = vpop.permute.xlu0 %6450
    %6452 = vrot.lane.b32.xlu0 %v6156, 19
    %v6453 = vpop.permute.xlu0 %6452
    %6454 = vrot.lane.b32.xlu0 %v6157, 19
    %v6455 = vpop.permute.xlu0 %6454
    %6456 = vrot.lane.b32.xlu0 %v6158, 19
    %v6457 = vpop.permute.xlu0 %6456
    %6458 = vrot.lane.b32.xlu0 %v6159, 19
    %v6459 = vpop.permute.xlu0 %6458
    %6460 = vrot.lane.b32.xlu0 %v6160, 19
    %v6461 = vpop.permute.xlu0 %6460
    %6462 = vrot.lane.b32.xlu0 %v6161, 19
    %v6463 = vpop.permute.xlu0 %6462
    %6464 = vrot.lane.b32.xlu0 %v6149, 19
    %v6465 = vpop.permute.xlu0 %6464
    %6466 = vrot.lane.b32.xlu0 %v6186, 19
    %v6467 = vpop.permute.xlu0 %6466
    %6468 = vrot.lane.b32.xlu0 %v6187, 19
    %v6469 = vpop.permute.xlu0 %6468
    %6470 = vrot.lane.b32.xlu0 %v6188, 19
    %v6471 = vpop.permute.xlu0 %6470
    %6472 = vrot.lane.b32.xlu0 %v6189, 19
    %v6473 = vpop.permute.xlu0 %6472
    %6474 = vrot.lane.b32.xlu0 %v6190, 19
    %v6475 = vpop.permute.xlu0 %6474
    %6476 = vrot.lane.b32.xlu0 %v6191, 19
    %v6477 = vpop.permute.xlu0 %6476
    %6478 = vrot.lane.b32.xlu0 %v6173, 19
    %v6479 = vpop.permute.xlu0 %6478
    %6480 = vrot.lane.b32.xlu0 %v6192, 19
    %v6481 = vpop.permute.xlu0 %6480
    %6482 = vrot.lane.b32.xlu0 %v6193, 19
    %v6483 = vpop.permute.xlu0 %6482
    %6484 = vrot.lane.b32.xlu0 %v6194, 19
    %v6485 = vpop.permute.xlu0 %6484
    %6486 = vrot.lane.b32.xlu0 %v6195, 19
    %v6487 = vpop.permute.xlu0 %6486
    %6488 = vrot.lane.b32.xlu0 %v6196, 19
    %v6489 = vpop.permute.xlu0 %6488
    %6490 = vrot.lane.b32.xlu0 %v6197, 19
    %v6491 = vpop.permute.xlu0 %6490
    %6492 = vrot.lane.b32.xlu0 %v6185, 19
    %v6493 = vpop.permute.xlu0 %6492
    %6494 = vrot.lane.b32.xlu0 %v6199, 19
    %v6495 = vpop.permute.xlu0 %6494
    %6496 = vrot.lane.b32.xlu0 %v6222, 19
    %v6497 = vpop.permute.xlu0 %6496
    %6498 = vrot.lane.b32.xlu0 %v6223, 19
    %v6499 = vpop.permute.xlu0 %6498
    %6500 = vrot.lane.b32.xlu0 %v6224, 19
    %v6501 = vpop.permute.xlu0 %6500
    %6502 = vrot.lane.b32.xlu0 %v6225, 19
    %v6503 = vpop.permute.xlu0 %6502
    %6504 = vrot.lane.b32.xlu0 %v6226, 19
    %v6505 = vpop.permute.xlu0 %6504
    %6506 = vrot.lane.b32.xlu0 %v6209, 19
    %v6507 = vpop.permute.xlu0 %6506
    %6508 = vrot.lane.b32.xlu0 %v6211, 19
    %v6509 = vpop.permute.xlu0 %6508
    %6510 = vrot.lane.b32.xlu0 %v6227, 19
    %v6511 = vpop.permute.xlu0 %6510
    %6512 = vrot.lane.b32.xlu0 %v6228, 19
    %v6513 = vpop.permute.xlu0 %6512
    %6514 = vrot.lane.b32.xlu0 %v6229, 19
    %v6515 = vpop.permute.xlu0 %6514
    %6516 = vrot.lane.b32.xlu0 %v6230, 19
    %v6517 = vpop.permute.xlu0 %6516
    %6518 = vrot.lane.b32.xlu0 %v6231, 19
    %v6519 = vpop.permute.xlu0 %6518
    %6520 = vrot.lane.b32.xlu0 %v6221, 19
    %v6521 = vpop.permute.xlu0 %6520
    %6522 = vrot.lane.b32.xlu0 %v6233, 19
    %v6523 = vpop.permute.xlu0 %6522
    %6524 = vrot.lane.b32.xlu0 %v6256, 19
    %v6525 = vpop.permute.xlu0 %6524
    %6526 = vrot.lane.b32.xlu0 %v6257, 19
    %v6527 = vpop.permute.xlu0 %6526
    %6528 = vrot.lane.b32.xlu0 %v6258, 19
    %v6529 = vpop.permute.xlu0 %6528
    %6530 = vrot.lane.b32.xlu0 %v6259, 19
    %v6531 = vpop.permute.xlu0 %6530
    %6532 = vrot.lane.b32.xlu0 %v6260, 19
    %v6533 = vpop.permute.xlu0 %6532
    %6534 = vrot.lane.b32.xlu0 %v6261, 19
    %v6535 = vpop.permute.xlu0 %6534
    %6536 = vrot.lane.b32.xlu0 %v6245, 19
    %v6537 = vpop.permute.xlu0 %6536
    %6538 = vrot.lane.b32.xlu0 %v6262, 19
    %v6539 = vpop.permute.xlu0 %6538
    %6540 = vrot.lane.b32.xlu0 %v6263, 19
    %v6541 = vpop.permute.xlu0 %6540
    %6542 = vrot.lane.b32.xlu0 %v6264, 19
    %v6543 = vpop.permute.xlu0 %6542
    %6544 = vrot.lane.b32.xlu0 %v6265, 19
    %v6545 = vpop.permute.xlu0 %6544
    %6546 = vrot.lane.b32.xlu0 %v6266, 19
    %v6547 = vpop.permute.xlu0 %6546
    %6548 = vrot.lane.b32.xlu0 %v6267, 19
    %v6549 = vpop.permute.xlu0 %6548
    %6550 = vrot.lane.b32.xlu0 %v6269, 19
    %v6551 = vpop.permute.xlu0 %6550
    %6552 = vrot.lane.b32.xlu0 %v6292, 19
    %v6553 = vpop.permute.xlu0 %6552
    %6554 = vrot.lane.b32.xlu0 %v6293, 19
    %v6555 = vpop.permute.xlu0 %6554
    %6556 = vrot.lane.b32.xlu0 %v6294, 19
    %v6557 = vpop.permute.xlu0 %6556
    %6558 = vrot.lane.b32.xlu0 %v6295, 19
    %v6559 = vpop.permute.xlu0 %6558
    %6560 = vrot.lane.b32.xlu0 %v6296, 19
    %v6561 = vpop.permute.xlu0 %6560
    %6562 = vrot.lane.b32.xlu0 %v6297, 19
    %v6563 = vpop.permute.xlu0 %6562
    %6564 = vrot.lane.b32.xlu0 %v6281, 19
    %v6565 = vpop.permute.xlu0 %6564
    %6566 = vrot.lane.b32.xlu0 %v6298, 19
    %v6567 = vpop.permute.xlu0 %6566
    %6568 = vrot.lane.b32.xlu0 %v6299, 19
    %v6569 = vpop.permute.xlu0 %6568
    %6570 = vrot.lane.b32.xlu0 %v6300, 19
    %v6571 = vpop.permute.xlu0 %6570
    %6572 = vrot.lane.b32.xlu0 %v6301, 19
    %v6573 = vpop.permute.xlu0 %6572
    %6574 = vrot.lane.b32.xlu0 %v6302, 19
    %v6575 = vpop.permute.xlu0 %6574
    %6576 = vrot.lane.b32.xlu0 %v6303, 19
    %v6577 = vpop.permute.xlu0 %6576
    %6578 = vrot.lane.b32.xlu0 %v6305, 19
    %v6579 = vpop.permute.xlu0 %6578
    %6580 = vrot.lane.b32.xlu0 %v6328, 19
    %v6581 = vpop.permute.xlu0 %6580
    %6582 = vrot.lane.b32.xlu0 %v6329, 19
    %v6583 = vpop.permute.xlu0 %6582
    %6584 = vrot.lane.b32.xlu0 %v6330, 19
    %v6585 = vpop.permute.xlu0 %6584
    %6586 = vrot.lane.b32.xlu0 %v6331, 19
    %v6587 = vpop.permute.xlu0 %6586
    %6588 = vrot.lane.b32.xlu0 %v6332, 19
    %v6589 = vpop.permute.xlu0 %6588
    %6590 = vrot.lane.b32.xlu0 %v6333, 19
    %v6591 = vpop.permute.xlu0 %6590
    %6592 = vrot.lane.b32.xlu0 %v6317, 19
    %v6593 = vpop.permute.xlu0 %6592
    %6594 = vrot.lane.b32.xlu0 %v6334, 19
    %v6595 = vpop.permute.xlu0 %6594
    %6596 = vrot.lane.b32.xlu0 %v6335, 19
    %v6597 = vpop.permute.xlu0 %6596
    %6598 = vrot.lane.b32.xlu0 %v6336, 19
    %v6599 = vpop.permute.xlu0 %6598
    %6600 = vrot.lane.b32.xlu0 %v6337, 19
    %v6601 = vpop.permute.xlu0 %6600
    %6602 = vrot.lane.b32.xlu0 %v6338, 19
    %v6603 = vpop.permute.xlu0 %6602
    %6604 = vrot.lane.b32.xlu0 %v6339, 19
    %v6605 = vpop.permute.xlu0 %6604
    %6606 = vrot.lane.b32.xlu0 %v6341, 19
    %v6607 = vpop.permute.xlu0 %6606
    %6608 = vrot.lane.b32.xlu0 %v6364, 19
    %v6609 = vpop.permute.xlu0 %6608
    %6610 = vrot.lane.b32.xlu0 %v6365, 19
    %v6611 = vpop.permute.xlu0 %6610
    %6612 = vrot.lane.b32.xlu0 %v6366, 19
    %v6613 = vpop.permute.xlu0 %6612
    %6614 = vrot.lane.b32.xlu0 %v6367, 19
    %v6615 = vpop.permute.xlu0 %6614
    %6616 = vrot.lane.b32.xlu0 %v6368, 19
    %v6617 = vpop.permute.xlu0 %6616
    %6618 = vrot.lane.b32.xlu0 %v6369, 19
    %v6619 = vpop.permute.xlu0 %6618
    %6620 = vrot.lane.b32.xlu0 %v6353, 19
    %v6621 = vpop.permute.xlu0 %6620
    %6622 = vrot.lane.b32.xlu0 %v6370, 19
    %v6623 = vpop.permute.xlu0 %6622
    %6624 = vrot.lane.b32.xlu0 %v6371, 19
    %v6625 = vpop.permute.xlu0 %6624
    %6626 = vrot.lane.b32.xlu0 %v6372, 19
    %v6627 = vpop.permute.xlu0 %6626
    %6628 = vrot.lane.b32.xlu0 %v6373, 19
    %v6629 = vpop.permute.xlu0 %6628
    %6630 = vrot.lane.b32.xlu0 %v6374, 19
    %v6631 = vpop.permute.xlu0 %6630
    %6632 = vrot.lane.b32.xlu0 %v6375, 19
    %v6633 = vpop.permute.xlu0 %6632
    %v6634 = vsel %vm4827, %v4330, %v6387
    %v6635 = vsel %vm4827, %v6387, %v6389
    %v6636 = vsel %vm4827, %v6389, %v6391
    %v6637 = vsel %vm4827, %v6391, %v6393
    %v6638 = vsel %vm4827, %v6393, %v6395
    %v6639 = vsel %vm4827, %v6395, %v6397
    %v6640 = vsel %vm4827, %v4330, %v6399
    %v6641 = vsel %vm4827, %v6399, %v6401
    %v6642 = vsel %vm4827, %v6401, %v6403
    %v6643 = vsel %vm4827, %v6403, %v6405
    %v6644 = vsel %vm4827, %v6405, %v6407
    %v6645 = vsel %vm4827, %v6407, %v6409
    %v6646 = vsel %vm4827, %v6411, %v6413
    %v6647 = vsel %vm4827, %v6413, %v6415
    %v6648 = vsel %vm4827, %v6415, %v6417
    %v6649 = vsel %vm4827, %v6417, %v6419
    %v6650 = vsel %vm4827, %v6419, %v6421
    %v6651 = vsel %vm4827, %v6421, %v6423
    %v6652 = vsel %vm4827, %v6425, %v6427
    %v6653 = vsel %vm4827, %v6427, %v6429
    %v6654 = vsel %vm4827, %v6429, %v6431
    %v6655 = vsel %vm4827, %v6431, %v6433
    %v6656 = vsel %vm4827, %v6433, %v6435
    %v6657 = vsel %vm4827, %v6435, %v6437
    %v6658 = vsel %vm4827, %v6439, %v6441
    %v6659 = vsel %vm4827, %v6441, %v6443
    %v6660 = vsel %vm4827, %v6443, %v6445
    %v6661 = vsel %vm4827, %v6445, %v6447
    %v6662 = vsel %vm4827, %v6447, %v6449
    %v6663 = vsel %vm4827, %v6449, %v6451
    %v6664 = vsel %vm4827, %v6453, %v6455
    %v6665 = vsel %vm4827, %v6455, %v6457
    %v6666 = vsel %vm4827, %v6457, %v6459
    %v6667 = vsel %vm4827, %v6459, %v6461
    %v6668 = vsel %vm4827, %v6461, %v6463
    %v6669 = vsel %vm4827, %v6463, %v6465
    %v6670 = vsel %vm4827, %v6467, %v6469
    %v6671 = vsel %vm4827, %v6469, %v6471
    %v6672 = vsel %vm4827, %v6471, %v6473
    %v6673 = vsel %vm4827, %v6473, %v6475
    %v6674 = vsel %vm4827, %v6475, %v6477
    %v6675 = vsel %vm4827, %v6477, %v6479
    %v6676 = vsel %vm4827, %v6481, %v6483
    %v6677 = vsel %vm4827, %v6483, %v6485
    %v6678 = vsel %vm4827, %v6485, %v6487
    %v6679 = vsel %vm4827, %v6487, %v6489
    %v6680 = vsel %vm4827, %v6489, %v6491
    %v6681 = vsel %vm4827, %v6491, %v6493
    %v6682 = vsel %vm4827, %v6495, %v6497
    %v6683 = vsel %vm4827, %v6497, %v6499
    %v6684 = vsel %vm4827, %v6499, %v6501
    %v6685 = vsel %vm4827, %v6501, %v6503
    %v6686 = vsel %vm4827, %v6503, %v6505
    %v6687 = vsel %vm4827, %v6505, %v6507
    %v6688 = vsel %vm4827, %v6509, %v6511
    %v6689 = vsel %vm4827, %v6511, %v6513
    %v6690 = vsel %vm4827, %v6513, %v6515
    %v6691 = vsel %vm4827, %v6515, %v6517
    %v6692 = vsel %vm4827, %v6517, %v6519
    %v6693 = vsel %vm4827, %v6519, %v6521
    %v6694 = vsel %vm4827, %v6523, %v6525
    %v6695 = vsel %vm4827, %v6525, %v6527
    %v6696 = vsel %vm4827, %v6527, %v6529
    %v6697 = vsel %vm4827, %v6529, %v6531
    %v6698 = vsel %vm4827, %v6531, %v6533
    %v6699 = vsel %vm4827, %v6533, %v6535
    %v6700 = vsel %vm4827, %v6537, %v6539
    %v6701 = vsel %vm4827, %v6539, %v6541
    %v6702 = vsel %vm4827, %v6541, %v6543
    %v6703 = vsel %vm4827, %v6543, %v6545
    %v6704 = vsel %vm4827, %v6545, %v6547
    %v6705 = vsel %vm4827, %v6547, %v6549
    %v6706 = vsel %vm4827, %v6551, %v6553
    %v6707 = vsel %vm4827, %v6553, %v6555
    %v6708 = vsel %vm4827, %v6555, %v6557
    %v6709 = vsel %vm4827, %v6557, %v6559
    %v6710 = vsel %vm4827, %v6559, %v6561
    %v6711 = vsel %vm4827, %v6561, %v6563
    %v6712 = vsel %vm4827, %v6565, %v6567
    %v6713 = vsel %vm4827, %v6567, %v6569
    %v6714 = vsel %vm4827, %v6569, %v6571
    %v6715 = vsel %vm4827, %v6571, %v6573
    %v6716 = vsel %vm4827, %v6573, %v6575
    %v6717 = vsel %vm4827, %v6575, %v6577
    %v6718 = vsel %vm4827, %v6579, %v6581
    %v6719 = vsel %vm4827, %v6581, %v6583
    %v6720 = vsel %vm4827, %v6583, %v6585
    %v6721 = vsel %vm4827, %v6585, %v6587
    %v6722 = vsel %vm4827, %v6587, %v6589
    %v6723 = vsel %vm4827, %v6589, %v6591
    %v6724 = vsel %vm4827, %v6593, %v6595
    %v6725 = vsel %vm4827, %v6595, %v6597
    %v6726 = vsel %vm4827, %v6597, %v6599
    %v6727 = vsel %vm4827, %v6599, %v6601
    %v6728 = vsel %vm4827, %v6601, %v6603
    %v6729 = vsel %vm4827, %v6603, %v6605
    %v6730 = vsel %vm4827, %v6607, %v6609
    %v6731 = vsel %vm4827, %v6609, %v6611
    %v6732 = vsel %vm4827, %v6611, %v6613
    %v6733 = vsel %vm4827, %v6613, %v6615
    %v6734 = vsel %vm4827, %v6615, %v6617
    %v6735 = vsel %vm4827, %v6617, %v6619
    %v6736 = vsel %vm4827, %v6621, %v6623
    %v6737 = vsel %vm4827, %v6623, %v6625
    %v6738 = vsel %vm4827, %v6625, %v6627
    %v6739 = vsel %vm4827, %v6627, %v6629
    %v6740 = vsel %vm4827, %v6629, %v6631
    %v6741 = vsel %vm4827, %v6631, %v6633
    %v6851 = vsel %vm5776, %v3437, 0
    %v6854 = vsel %vm5776, %v3439, 0
    %6856 = vmatprep.subr.mxu0 %v6635
    %6857 = vmatpush1.msra.mxu0 %v6634
    %6858 = vmatprep.subr.mxu0 %v6641
    %6859 = vmatpush1.msra.mxu0 %v6640
    %6860 = vmatprep.subr.mxu0 %v6647
    %6861 = vmatpush1.msra.mxu0 %v6646
    %6862 = vmatprep.subr.mxu0 %v6653
    %6863 = vmatpush1.msra.mxu0 %v6652
    %6864 = vmatprep.subr.mxu0 %v6659
    %6865 = vmatpush1.msra.mxu0 %v6658
    %6866 = vmatprep.subr.mxu0 %v6665
    %6867 = vmatpush1.msra.mxu0 %v6664
    %6868 = vmatprep.subr.mxu0 %v6671
    %6869 = vmatpush1.msra.mxu0 %v6670
    %6870 = vmatprep.subr.mxu0 %v6677
    %6871 = vmatpush1.msra.mxu0 %v6676
    %6872 = vmatprep.subr.mxu0 %v6683
    %6873 = vmatpush1.msra.mxu0 %v6682
    %6874 = vmatprep.subr.mxu0 %v6689
    %6875 = vmatpush1.msra.mxu0 %v6688
    %6876 = vmatprep.subr.mxu0 %v6695
    %6877 = vmatpush1.msra.mxu0 %v6694
    %6878 = vmatprep.subr.mxu0 %v6701
    %6879 = vmatpush1.msra.mxu0 %v6700
    %6880 = vmatprep.subr.mxu0 %v6707
    %6881 = vmatpush1.msra.mxu0 %v6706
    %6882 = vmatprep.subr.mxu0 %v6713
    %6883 = vmatpush1.msra.mxu0 %v6712
    %6884 = vmatprep.subr.mxu0 %v6719
    %6885 = vmatpush1.msra.mxu0 %v6718
    %6886 = vmatprep.subr.mxu0 %v6725
    %6887 = vmatpush1.msra.mxu0 %v6724
    %6888 = vmatprep.subr.mxu0 %v6731
    %6889 = vmatpush1.msra.mxu0 %v6730
    %6890 = vmatprep.subr.mxu0 %v6737
    %6891 = vmatpush1.msra.mxu0 %v6736
    %6892 = vmatprep.subr.mxu0 0.0
    %6893 = vmatpush1.msra.mxu0 0.0
    %6894 = vmatprep.subr.mxu0 0.0
    %6895 = vmatpush1.msra.mxu0 0.0
    %6896 = vmatprep.subr.mxu0 0.0
    %6897 = vmatpush1.msra.mxu0 0.0
    %6898 = vmatprep.subr.mxu0 0.0
    %6899 = vmatpush1.msra.mxu0 0.0
    %6900 = vmatprep.subr.mxu0 0.0
    %6901 = vmatpush1.msra.mxu0 0.0
    %6902 = vmatprep.subr.mxu0 0.0
    %6903 = vmatpush1.msra.mxu0 0.0
    %6904 = vmatprep.subr.mxu0 0.0
    %6905 = vmatpush1.msra.mxu0 0.0
    %6906 = vmatprep.subr.mxu0 0.0
    %6907 = vmatpush1.msra.mxu0 0.0
    %6908 = vmatprep.subr.mxu0 0.0
    %6909 = vmatpush1.msra.mxu0 0.0
    %6910 = vmatprep.subr.mxu0 0.0
    %6911 = vmatpush1.msra.mxu0 0.0
    %6912 = vmatprep.subr.mxu0 0.0
    %6913 = vmatpush1.msra.mxu0 0.0
    %6914 = vmatprep.subr.mxu0 0.0
    %6915 = vmatpush1.msra.mxu0 0.0
    %6916 = vmatprep.subr.mxu0 0.0
    %6917 = vmatpush1.msra.mxu0 0.0
    %6918 = vmatprep.subr.mxu0 0.0
    %6919 = vmatpush1.msra.mxu0 0.0
    %6920 = vmatprep.mubr.f32.mxu0 %v6851
    %6921 = vmatmul.mubr.f32.gmra.mrb[0].mxu0 %v3436
    %v6922 = vpop.f32.mrb[0].mxu0
    %v6923 = vadd.f32 %v6379, %v6922
    %v6924 = vpop.f32.mrb[0].mxu0
    %v6925 = vadd.f32 %v6379, %v6924
    %6926 = vmatprep.mubr.f32.mxu0 %v6854
    %6927 = vmatmul.mubr.f32.gmra.mrb[0].mxu0 %v3438
    %v6928 = vpop.f32.mrb[0].mxu0
    %v6929 = vadd.f32 %v6384, %v6928
    %v6930 = vpop.f32.mrb[0].mxu0
    %v6931 = vadd.f32 %v6384, %v6930
    %6932 = vdwg.mxu0
    %6933 = vmatprep.subr.mxu0 %v6637
    %6934 = vmatpush1.msra.mxu0 %v6636
    %6935 = vmatprep.subr.mxu0 %v6643
    %6936 = vmatpush1.msra.mxu0 %v6642
    %6937 = vmatprep.subr.mxu0 %v6649
    %6938 = vmatpush1.msra.mxu0 %v6648
    %6939 = vmatprep.subr.mxu0 %v6655
    %6940 = vmatpush1.msra.mxu0 %v6654
    %6941 = vmatprep.subr.mxu0 %v6661
    %6942 = vmatpush1.msra.mxu0 %v6660
    %6943 = vmatprep.subr.mxu0 %v6667
    %6944 = vmatpush1.msra.mxu0 %v6666
    %6945 = vmatprep.subr.mxu0 %v6673
    %6946 = vmatpush1.msra.mxu0 %v6672
    %6947 = vmatprep.subr.mxu0 %v6679
    %6948 = vmatpush1.msra.mxu0 %v6678
    %6949 = vmatprep.subr.mxu0 %v6685
    %6950 = vmatpush1.msra.mxu0 %v6684
    %6951 = vmatprep.subr.mxu0 %v6691
    %6952 = vmatpush1.msra.mxu0 %v6690
    %6953 = vmatprep.subr.mxu0 %v6697
    %6954 = vmatpush1.msra.mxu0 %v6696
    %6955 = vmatprep.subr.mxu0 %v6703
    %6956 = vmatpush1.msra.mxu0 %v6702
    %6957 = vmatprep.subr.mxu0 %v6709
    %6958 = vmatpush1.msra.mxu0 %v6708
    %6959 = vmatprep.subr.mxu0 %v6715
    %6960 = vmatpush1.msra.mxu0 %v6714
    %6961 = vmatprep.subr.mxu0 %v6721
    %6962 = vmatpush1.msra.mxu0 %v6720
    %6963 = vmatprep.subr.mxu0 %v6727
    %6964 = vmatpush1.msra.mxu0 %v6726
    %6965 = vmatprep.subr.mxu0 %v6733
    %6966 = vmatpush1.msra.mxu0 %v6732
    %6967 = vmatprep.subr.mxu0 %v6739
    %6968 = vmatpush1.msra.mxu0 %v6738
    %6969 = vmatprep.subr.mxu0 0.0
    %6970 = vmatpush1.msra.mxu0 0.0
    %6971 = vmatprep.subr.mxu0 0.0
    %6972 = vmatpush1.msra.mxu0 0.0
    %6973 = vmatprep.subr.mxu0 0.0
    %6974 = vmatpush1.msra.mxu0 0.0
    %6975 = vmatprep.subr.mxu0 0.0
    %6976 = vmatpush1.msra.mxu0 0.0
    %6977 = vmatprep.subr.mxu0 0.0
    %6978 = vmatpush1.msra.mxu0 0.0
    %6979 = vmatprep.subr.mxu0 0.0
    %6980 = vmatpush1.msra.mxu0 0.0
    %6981 = vmatprep.subr.mxu0 0.0
    %6982 = vmatpush1.msra.mxu0 0.0
    %6983 = vmatprep.subr.mxu0 0.0
    %6984 = vmatpush1.msra.mxu0 0.0
    %6985 = vmatprep.subr.mxu0 0.0
    %6986 = vmatpush1.msra.mxu0 0.0
    %6987 = vmatprep.subr.mxu0 0.0
    %6988 = vmatpush1.msra.mxu0 0.0
    %6989 = vmatprep.subr.mxu0 0.0
    %6990 = vmatpush1.msra.mxu0 0.0
    %6991 = vmatprep.subr.mxu0 0.0
    %6992 = vmatpush1.msra.mxu0 0.0
    %6993 = vmatprep.subr.mxu0 0.0
    %6994 = vmatpush1.msra.mxu0 0.0
    %6995 = vmatprep.subr.mxu0 0.0
    %6996 = vmatpush1.msra.mxu0 0.0
    %6997 = vmatprep.mubr.f32.mxu0 %v6851
    %6998 = vmatmul.mubr.f32.gmra.mrb[0].mxu0 %v3436
    %v6999 = vpop.f32.mrb[0].mxu0
    %v7000 = vadd.f32 %v6379, %v6999
    %v7001 = vpop.f32.mrb[0].mxu0
    %v7002 = vadd.f32 %v6379, %v7001
    %7003 = vmatprep.mubr.f32.mxu0 %v6854
    %7004 = vmatmul.mubr.f32.gmra.mrb[0].mxu0 %v3438
    %v7005 = vpop.f32.mrb[0].mxu0
    %v7006 = vadd.f32 %v6384, %v7005
    %v7007 = vpop.f32.mrb[0].mxu0
    %v7008 = vadd.f32 %v6384, %v7007
    %7009 = vdwg.mxu0
    %7010 = vmatprep.subr.mxu0 %v6639
    %7011 = vmatpush1.msra.mxu0 %v6638
    %7012 = vmatprep.subr.mxu0 %v6645
    %7013 = vmatpush1.msra.mxu0 %v6644
    %7014 = vmatprep.subr.mxu0 %v6651
    %7015 = vmatpush1.msra.mxu0 %v6650
    %7016 = vmatprep.subr.mxu0 %v6657
    %7017 = vmatpush1.msra.mxu0 %v6656
    %7018 = vmatprep.subr.mxu0 %v6663
    %7019 = vmatpush1.msra.mxu0 %v6662
    %7020 = vmatprep.subr.mxu0 %v6669
    %7021 = vmatpush1.msra.mxu0 %v6668
    %7022 = vmatprep.subr.mxu0 %v6675
    %7023 = vmatpush1.msra.mxu0 %v6674
    %7024 = vmatprep.subr.mxu0 %v6681
    %7025 = vmatpush1.msra.mxu0 %v6680
    %7026 = vmatprep.subr.mxu0 %v6687
    %7027 = vmatpush1.msra.mxu0 %v6686
    %7028 = vmatprep.subr.mxu0 %v6693
    %7029 = vmatpush1.msra.mxu0 %v6692
    %7030 = vmatprep.subr.mxu0 %v6699
    %7031 = vmatpush1.msra.mxu0 %v6698
    %7032 = vmatprep.subr.mxu0 %v6705
    %7033 = vmatpush1.msra.mxu0 %v6704
    %7034 = vmatprep.subr.mxu0 %v6711
    %7035 = vmatpush1.msra.mxu0 %v6710
    %7036 = vmatprep.subr.mxu0 %v6717
    %7037 = vmatpush1.msra.mxu0 %v6716
    %7038 = vmatprep.subr.mxu0 %v6723
    %7039 = vmatpush1.msra.mxu0 %v6722
    %7040 = vmatprep.subr.mxu0 %v6729
    %7041 = vmatpush1.msra.mxu0 %v6728
    %7042 = vmatprep.subr.mxu0 %v6735
    %7043 = vmatpush1.msra.mxu0 %v6734
    %7044 = vmatprep.subr.mxu0 %v6741
    %7045 = vmatpush1.msra.mxu0 %v6740
    %7046 = vmatprep.subr.mxu0 0.0
    %7047 = vmatpush1.msra.mxu0 0.0
    %7048 = vmatprep.subr.mxu0 0.0
    %7049 = vmatpush1.msra.mxu0 0.0
    %7050 = vmatprep.subr.mxu0 0.0
    %7051 = vmatpush1.msra.mxu0 0.0
    %7052 = vmatprep.subr.mxu0 0.0
    %7053 = vmatpush1.msra.mxu0 0.0
    %7054 = vmatprep.subr.mxu0 0.0
    %7055 = vmatpush1.msra.mxu0 0.0
    %7056 = vmatprep.subr.mxu0 0.0
    %7057 = vmatpush1.msra.mxu0 0.0
    %7058 = vmatprep.subr.mxu0 0.0
    %7059 = vmatpush1.msra.mxu0 0.0
    %7060 = vmatprep.subr.mxu0 0.0
    %7061 = vmatpush1.msra.mxu0 0.0
    %7062 = vmatprep.subr.mxu0 0.0
    %7063 = vmatpush1.msra.mxu0 0.0
    %7064 = vmatprep.subr.mxu0 0.0
    %7065 = vmatpush1.msra.mxu0 0.0
    %7066 = vmatprep.subr.mxu0 0.0
    %7067 = vmatpush1.msra.mxu0 0.0
    %7068 = vmatprep.subr.mxu0 0.0
    %7069 = vmatpush1.msra.mxu0 0.0
    %7070 = vmatprep.subr.mxu0 0.0
    %7071 = vmatpush1.msra.mxu0 0.0
    %7072 = vmatprep.subr.mxu0 0.0
    %7073 = vmatpush1.msra.mxu0 0.0
    %7074 = vmatprep.mubr.f32.mxu0 %v6851
    %7075 = vmatmul.mubr.f32.gmra.mrb[0].mxu0 %v3436
    %v7076 = vpop.f32.mrb[0].mxu0
    %v7077 = vadd.f32 %v6379, %v7076
    %v7078 = vpop.f32.mrb[0].mxu0
    %v7079 = vadd.f32 %v6379, %v7078
    %7080 = vmatprep.mubr.f32.mxu0 %v6854
    %7081 = vmatmul.mubr.f32.gmra.mrb[0].mxu0 %v3438
    %v7082 = vpop.f32.mrb[0].mxu0
    %v7083 = vadd.f32 %v6384, %v7082
    %v7084 = vpop.f32.mrb[0].mxu0
    %v7085 = vadd.f32 %v6384, %v7084
    %7086 = vdwg.mxu0
    %vm7087 = vcmp.gt.f32.partialorder %v6923, 0.0
    %vm7088 = vcmp.gt.f32.partialorder %v6925, 0.0
    %vm7089 = vcmp.gt.f32.partialorder %v7000, 0.0
    %vm7090 = vcmp.gt.f32.partialorder %v7002, 0.0
    %vm7091 = vcmp.gt.f32.partialorder %v7077, 0.0
    %vm7092 = vcmp.gt.f32.partialorder %v7079, 0.0
    %vm7093 = vcmp.gt.f32.partialorder %v6929, 0.0
    %vm7094 = vcmp.gt.f32.partialorder %v6931, 0.0
    %vm7095 = vcmp.gt.f32.partialorder %v7006, 0.0
    %vm7096 = vcmp.gt.f32.partialorder %v7008, 0.0
    %vm7097 = vcmp.gt.f32.partialorder %v7083, 0.0
    %vm7098 = vcmp.gt.f32.partialorder %v7085, 0.0
    %v7099 = vmul.f32 %v6923, 0.2
    %v7100 = vmul.f32 %v6925, 0.2
    %v7101 = vmul.f32 %v7000, 0.2
    %v7102 = vmul.f32 %v7002, 0.2
    %v7103 = vmul.f32 %v7077, 0.2
    %v7104 = vmul.f32 %v7079, 0.2
    %v7105 = vmul.f32 %v6929, 0.2
    %v7106 = vmul.f32 %v6931, 0.2
    %v7107 = vmul.f32 %v7006, 0.2
    %v7108 = vmul.f32 %v7008, 0.2
    %v7109 = vmul.f32 %v7083, 0.2
    %v7110 = vmul.f32 %v7085, 0.2
    %v7111 = vsel %vm7087, %v6923, %v7099
    %v7112 = vsel %vm7088, %v6925, %v7100
    %v7113 = vsel %vm7089, %v7000, %v7101
    %v7114 = vsel %vm7090, %v7002, %v7102
    %v7115 = vsel %vm7091, %v7077, %v7103
    %v7116 = vsel %vm7092, %v7079, %v7104
    %v7117 = vsel %vm7093, %v6929, %v7105
    %v7118 = vsel %vm7094, %v6931, %v7106
    %v7119 = vsel %vm7095, %v7006, %v7107
    %v7120 = vsel %vm7096, %v7008, %v7108
    %v7121 = vsel %vm7097, %v7083, %v7109
    %v7122 = vsel %vm7098, %v7085, %v7110
    %v7123 = vmul.f32 %v7111, %v7111
    %v7124 = vmul.f32 %v7112, %v7112
    %v7125 = vmul.f32 %v7113, %v7113
    %v7126 = vmul.f32 %v7114, %v7114
    %v7127 = vmul.f32 %v7115, %v7115
    %v7128 = vmul.f32 %v7116, %v7116
    %v7129 = vmul.f32 %v7117, %v7117
    %v7130 = vmul.f32 %v7118, %v7118
    %v7131 = vmul.f32 %v7119, %v7119
    %v7132 = vmul.f32 %v7120, %v7120
    %v7133 = vmul.f32 %v7121, %v7121
    %v7134 = vmul.f32 %v7122, %v7122
    %7135 = vmatprep.subr.mxu0 %v7124
    %7136 = vmatpush1.msra.mxu0 %v7123
    %7137 = vmatprep.subr.mxu0 %v7130
    %7138 = vmatpush1.msra.mxu0 %v7129
    %7139 = vmatprep.subr.mxu0 0.0
    %7140 = vmatpush1.msra.mxu0 0.0
    %7141 = vmatprep.subr.mxu0 0.0
    %7142 = vmatpush1.msra.mxu0 0.0
    %7143 = vmatprep.subr.mxu0 0.0
    %7144 = vmatpush1.msra.mxu0 0.0
    %7145 = vmatprep.subr.mxu0 0.0
    %7146 = vmatpush1.msra.mxu0 0.0
    %7147 = vmatprep.subr.mxu0 0.0
    %7148 = vmatpush1.msra.mxu0 0.0
    %7149 = vmatprep.subr.mxu0 0.0
    %7150 = vmatpush1.msra.mxu0 0.0
    %7151 = vmatprep.subr.mxu0 0.0
    %7152 = vmatpush1.msra.mxu0 0.0
    %7153 = vmatprep.subr.mxu0 0.0
    %7154 = vmatpush1.msra.mxu0 0.0
    %7155 = vmatprep.subr.mxu0 0.0
    %7156 = vmatpush1.msra.mxu0 0.0
    %7157 = vmatprep.subr.mxu0 0.0
    %7158 = vmatpush1.msra.mxu0 0.0
    %7159 = vmatprep.subr.mxu0 0.0
    %7160 = vmatpush1.msra.mxu0 0.0
    %7161 = vmatprep.subr.mxu0 0.0
    %7162 = vmatpush1.msra.mxu0 0.0
    %7163 = vmatprep.subr.mxu0 0.0
    %7164 = vmatpush1.msra.mxu0 0.0
    %7165 = vmatprep.subr.mxu0 0.0
    %7166 = vmatpush1.msra.mxu0 0.0
    %7167 = vmatprep.subr.mxu0 0.0
    %7168 = vmatpush1.msra.mxu0 0.0
    %7169 = vmatprep.subr.mxu0 0.0
    %7170 = vmatpush1.msra.mxu0 0.0
    %7171 = vmatprep.subr.mxu0 0.0
    %7172 = vmatpush1.msra.mxu0 0.0
    %7173 = vmatprep.subr.mxu0 0.0
    %7174 = vmatpush1.msra.mxu0 0.0
    %7175 = vmatprep.subr.mxu0 0.0
    %7176 = vmatpush1.msra.mxu0 0.0
    %7177 = vmatprep.subr.mxu0 0.0
    %7178 = vmatpush1.msra.mxu0 0.0
    %7179 = vmatprep.subr.mxu0 0.0
    %7180 = vmatpush1.msra.mxu0 0.0
    %7181 = vmatprep.subr.mxu0 0.0
    %7182 = vmatpush1.msra.mxu0 0.0
    %7183 = vmatprep.subr.mxu0 0.0
    %7184 = vmatpush1.msra.mxu0 0.0
    %7185 = vmatprep.subr.mxu0 0.0
    %7186 = vmatpush1.msra.mxu0 0.0
    %7187 = vmatprep.subr.mxu0 0.0
    %7188 = vmatpush1.msra.mxu0 0.0
    %7189 = vmatprep.subr.mxu0 0.0
    %7190 = vmatpush1.msra.mxu0 0.0
    %7191 = vmatprep.subr.mxu0 0.0
    %7192 = vmatpush1.msra.mxu0 0.0
    %7193 = vmatprep.subr.mxu0 0.0
    %7194 = vmatpush1.msra.mxu0 0.0
    %7195 = vmatprep.subr.mxu0 0.0
    %7196 = vmatpush1.msra.mxu0 0.0
    %7197 = vmatprep.subr.mxu0 0.0
    %7198 = vmatpush1.msra.mxu0 0.0
    %7199 = vmatprep.mubr.f32.mxu0 0.0
    %7200 = vmatmul.mubr.f32.gmra.mrb[0].mxu0 %v5778
    %v7201 = vpop.f32.mrb[0].mxu0
    %v7202 = vadd.f32 1e-08, %v7201
    %v7203 = vpop.f32.mrb[0].mxu0
    %v7204 = vadd.f32 1e-08, %v7203
    %7205 = vdwg.mxu0
    %7206 = vmatprep.subr.mxu0 %v7126
    %7207 = vmatpush1.msra.mxu0 %v7125
    %7208 = vmatprep.subr.mxu0 %v7132
    %7209 = vmatpush1.msra.mxu0 %v7131
    %7210 = vmatprep.subr.mxu0 0.0
    %7211 = vmatpush1.msra.mxu0 0.0
    %7212 = vmatprep.subr.mxu0 0.0
    %7213 = vmatpush1.msra.mxu0 0.0
    %7214 = vmatprep.subr.mxu0 0.0
    %7215 = vmatpush1.msra.mxu0 0.0
    %7216 = vmatprep.subr.mxu0 0.0
    %7217 = vmatpush1.msra.mxu0 0.0
    %7218 = vmatprep.subr.mxu0 0.0
    %7219 = vmatpush1.msra.mxu0 0.0
    %7220 = vmatprep.subr.mxu0 0.0
    %7221 = vmatpush1.msra.mxu0 0.0
    %7222 = vmatprep.subr.mxu0 0.0
    %7223 = vmatpush1.msra.mxu0 0.0
    %7224 = vmatprep.subr.mxu0 0.0
    %7225 = vmatpush1.msra.mxu0 0.0
    %7226 = vmatprep.subr.mxu0 0.0
    %7227 = vmatpush1.msra.mxu0 0.0
    %7228 = vmatprep.subr.mxu0 0.0
    %7229 = vmatpush1.msra.mxu0 0.0
    %7230 = vmatprep.subr.mxu0 0.0
    %7231 = vmatpush1.msra.mxu0 0.0
    %7232 = vmatprep.subr.mxu0 0.0
    %7233 = vmatpush1.msra.mxu0 0.0
    %7234 = vmatprep.subr.mxu0 0.0
    %7235 = vmatpush1.msra.mxu0 0.0
    %7236 = vmatprep.subr.mxu0 0.0
    %7237 = vmatpush1.msra.mxu0 0.0
    %7238 = vmatprep.subr.mxu0 0.0
    %7239 = vmatpush1.msra.mxu0 0.0
    %7240 = vmatprep.subr.mxu0 0.0
    %7241 = vmatpush1.msra.mxu0 0.0
    %7242 = vmatprep.subr.mxu0 0.0
    %7243 = vmatpush1.msra.mxu0 0.0
    %7244 = vmatprep.subr.mxu0 0.0
    %7245 = vmatpush1.msra.mxu0 0.0
    %7246 = vmatprep.subr.mxu0 0.0
    %7247 = vmatpush1.msra.mxu0 0.0
    %7248 = vmatprep.subr.mxu0 0.0
    %7249 = vmatpush1.msra.mxu0 0.0
    %7250 = vmatprep.subr.mxu0 0.0
    %7251 = vmatpush1.msra.mxu0 0.0
    %7252 = vmatprep.subr.mxu0 0.0
    %7253 = vmatpush1.msra.mxu0 0.0
    %7254 = vmatprep.subr.mxu0 0.0
    %7255 = vmatpush1.msra.mxu0 0.0
    %7256 = vmatprep.subr.mxu0 0.0
    %7257 = vmatpush1.msra.mxu0 0.0
    %7258 = vmatprep.subr.mxu0 0.0
    %7259 = vmatpush1.msra.mxu0 0.0
    %7260 = vmatprep.subr.mxu0 0.0
    %7261 = vmatpush1.msra.mxu0 0.0
    %7262 = vmatprep.subr.mxu0 0.0
    %7263 = vmatpush1.msra.mxu0 0.0
    %7264 = vmatprep.subr.mxu0 0.0
    %7265 = vmatpush1.msra.mxu0 0.0
    %7266 = vmatprep.subr.mxu0 0.0
    %7267 = vmatpush1.msra.mxu0 0.0
    %7268 = vmatprep.subr.mxu0 0.0
    %7269 = vmatpush1.msra.mxu0 0.0
    %7270 = vmatprep.mubr.f32.mxu0 0.0
    %7271 = vmatmul.mubr.f32.gmra.mrb[0].mxu0 %v5778
    %v7272 = vpop.f32.mrb[0].mxu0
    %v7273 = vadd.f32 1e-08, %v7272
    %v7274 = vpop.f32.mrb[0].mxu0
    %v7275 = vadd.f32 1e-08, %v7274
    %7276 = vdwg.mxu0
    %7277 = vmatprep.subr.mxu0 %v7128
    %7278 = vmatpush1.msra.mxu0 %v7127
    %7279 = vmatprep.subr.mxu0 %v7134
    %7280 = vmatpush1.msra.mxu0 %v7133
    %7281 = vmatprep.subr.mxu0 0.0
    %7282 = vmatpush1.msra.mxu0 0.0
    %7283 = vmatprep.subr.mxu0 0.0
    %7284 = vmatpush1.msra.mxu0 0.0
    %7285 = vmatprep.subr.mxu0 0.0
    %7286 = vmatpush1.msra.mxu0 0.0
    %7287 = vmatprep.subr.mxu0 0.0
    %7288 = vmatpush1.msra.mxu0 0.0
    %7289 = vmatprep.subr.mxu0 0.0
    %7290 = vmatpush1.msra.mxu0 0.0
    %7291 = vmatprep.subr.mxu0 0.0
    %7292 = vmatpush1.msra.mxu0 0.0
    %7293 = vmatprep.subr.mxu0 0.0
    %7294 = vmatpush1.msra.mxu0 0.0
    %7295 = vmatprep.subr.mxu0 0.0
    %7296 = vmatpush1.msra.mxu0 0.0
    %7297 = vmatprep.subr.mxu0 0.0
    %7298 = vmatpush1.msra.mxu0 0.0
    %7299 = vmatprep.subr.mxu0 0.0
    %7300 = vmatpush1.msra.mxu0 0.0
    %7301 = vmatprep.subr.mxu0 0.0
    %7302 = vmatpush1.msra.mxu0 0.0
    %7303 = vmatprep.subr.mxu0 0.0
    %7304 = vmatpush1.msra.mxu0 0.0
    %7305 = vmatprep.subr.mxu0 0.0
    %7306 = vmatpush1.msra.mxu0 0.0
    %7307 = vmatprep.subr.mxu0 0.0
    %7308 = vmatpush1.msra.mxu0 0.0
    %7309 = vmatprep.subr.mxu0 0.0
    %7310 = vmatpush1.msra.mxu0 0.0
    %7311 = vmatprep.subr.mxu0 0.0
    %7312 = vmatpush1.msra.mxu0 0.0
    %7313 = vmatprep.subr.mxu0 0.0
    %7314 = vmatpush1.msra.mxu0 0.0
    %7315 = vmatprep.subr.mxu0 0.0
    %7316 = vmatpush1.msra.mxu0 0.0
    %7317 = vmatprep.subr.mxu0 0.0
    %7318 = vmatpush1.msra.mxu0 0.0
    %7319 = vmatprep.subr.mxu0 0.0
    %7320 = vmatpush1.msra.mxu0 0.0
    %7321 = vmatprep.subr.mxu0 0.0
    %7322 = vmatpush1.msra.mxu0 0.0
    %7323 = vmatprep.subr.mxu0 0.0
    %7324 = vmatpush1.msra.mxu0 0.0
    %7325 = vmatprep.subr.mxu0 0.0
    %7326 = vmatpush1.msra.mxu0 0.0
    %7327 = vmatprep.subr.mxu0 0.0
    %7328 = vmatpush1.msra.mxu0 0.0
    %7329 = vmatprep.subr.mxu0 0.0
    %7330 = vmatpush1.msra.mxu0 0.0
    %7331 = vmatprep.subr.mxu0 0.0
    %7332 = vmatpush1.msra.mxu0 0.0
    %7333 = vmatprep.subr.mxu0 0.0
    %7334 = vmatpush1.msra.mxu0 0.0
    %7335 = vmatprep.subr.mxu0 0.0
    %7336 = vmatpush1.msra.mxu0 0.0
    %7337 = vmatprep.subr.mxu0 0.0
    %7338 = vmatpush1.msra.mxu0 0.0
    %7339 = vmatprep.subr.mxu0 0.0
    %7340 = vmatpush1.msra.mxu0 0.0
    %7341 = vmatprep.mubr.f32.mxu0 0.0
    %7342 = vmatmul.mubr.f32.gmra.mrb[0].mxu0 %v5778
    %v7343 = vpop.f32.mrb[0].mxu0
    %v7344 = vadd.f32 1e-08, %v7343
    %v7345 = vpop.f32.mrb[0].mxu0
    %v7346 = vadd.f32 1e-08, %v7345
    %7347 = vdwg.mxu0
    %v7348 = vrsqrt.pop %v7202
    %v7349 = vrsqrt.pop %v7204
    %v7350 = vrsqrt.pop %v7273
    %v7351 = vrsqrt.pop %v7275
    %v7352 = vrsqrt.pop %v7344
    %v7353 = vrsqrt.pop %v7346
    %v7354 = vlaneseq
    %v7355 = vshrl.u32 %v7354, 7
    %v7356 = vsub.s32 0, %v7355
    %v7357 = vrot.slane %v7348, %v7356
    %v7358 = vlaneseq
    %v7359 = vshrl.u32 %v7358, 7
    %v7360 = vsub.s32 0, %v7359
    %v7361 = vrot.slane %v7349, %v7360
    %v7362 = vlaneseq
    %v7363 = vshrl.u32 %v7362, 7
    %v7364 = vsub.s32 0, %v7363
    %v7365 = vrot.slane %v7350, %v7364
    %v7366 = vlaneseq
    %v7367 = vshrl.u32 %v7366, 7
    %v7368 = vsub.s32 0, %v7367
    %v7369 = vrot.slane %v7351, %v7368
    %v7370 = vlaneseq
    %v7371 = vshrl.u32 %v7370, 7
    %v7372 = vsub.s32 0, %v7371
    %v7373 = vrot.slane %v7352, %v7372
    %v7374 = vlaneseq
    %v7375 = vshrl.u32 %v7374, 7
    %v7376 = vsub.s32 0, %v7375
    %v7377 = vrot.slane %v7353, %v7376
    %v7378 = vmul.f32 %v7111, %v7357
    %v7379 = vmul.f32 %v7112, %v7361
    %v7380 = vmul.f32 %v7113, %v7365
    %v7381 = vmul.f32 %v7114, %v7369
    %v7382 = vmul.f32 %v7115, %v7373
    %v7383 = vmul.f32 %v7116, %v7377
    %v7384 = vmul.f32 %v7117, %v7357
    %v7385 = vmul.f32 %v7118, %v7361
    %v7386 = vmul.f32 %v7119, %v7365
    %v7387 = vmul.f32 %v7120, %v7369
    %v7388 = vmul.f32 %v7121, %v7373
    %v7389 = vmul.f32 %v7122, %v7377
    %v7390 = vmul.f32 %v7378, %v6039
    %v7391 = vmul.f32 %v7379, %v6043
    %v7392 = vmul.f32 %v7380, %v6047
    %v7393 = vmul.f32 %v7381, %v6051
    %v7394 = vmul.f32 %v7382, %v6055
    %v7395 = vmul.f32 %v7383, %v6059
    %v7396 = vmul.f32 %v7384, %v6039
    %v7397 = vmul.f32 %v7385, %v6043
    %v7398 = vmul.f32 %v7386, %v6047
    %v7399 = vmul.f32 %v7387, %v6051
    %v7400 = vmul.f32 %v7388, %v6055
    %v7401 = vmul.f32 %v7389, %v6059
    %v7402 = vld [vmem:[%s20] sm:$0xff]
    %v7403 = vld [vmem:[%s21] sm:$0xff]
    %v7404 = vld [vmem:[#allocation13] sm:$0xff]
    %v7405 = vld [vmem:[%s23] sm:$0xff]
    %7407 = vset.pattern.permute.xlu0 0
    %7408 = vperm.xlu0 %7407, %v7403
    %v7409 = vpop.permute.xlu0 %7408
    %v7412 = vsel %vm477, %v7402, 0
    %7414 = vmatprep.subr.mxu0 %v3512
    %7415 = vmatpush1.msra.mxu0 %v3510
    %7416 = vmatprep.subr.mxu0 %v3518
    %7417 = vmatpush1.msra.mxu0 %v3516
    %7418 = vmatprep.subr.mxu0 %v3524
    %7419 = vmatpush1.msra.mxu0 %v3522
    %7420 = vmatprep.subr.mxu0 %v3530
    %7421 = vmatpush1.msra.mxu0 %v3528
    %7422 = vmatprep.subr.mxu0 0.0
    %7423 = vmatpush1.msra.mxu0 0.0
    %7424 = vmatprep.subr.mxu0 0.0
    %7425 = vmatpush1.msra.mxu0 0.0
    %7426 = vmatprep.subr.mxu0 0.0
    %7427 = vmatpush1.msra.mxu0 0.0
    %7428 = vmatprep.subr.mxu0 0.0
    %7429 = vmatpush1.msra.mxu0 0.0
    %7430 = vmatprep.subr.mxu0 0.0
    %7431 = vmatpush1.msra.mxu0 0.0
    %7432 = vmatprep.subr.mxu0 0.0
    %7433 = vmatpush1.msra.mxu0 0.0
    %7434 = vmatprep.subr.mxu0 0.0
    %7435 = vmatpush1.msra.mxu0 0.0
    %7436 = vmatprep.subr.mxu0 0.0
    %7437 = vmatpush1.msra.mxu0 0.0
    %7438 = vmatprep.subr.mxu0 0.0
    %7439 = vmatpush1.msra.mxu0 0.0
    %7440 = vmatprep.subr.mxu0 0.0
    %7441 = vmatpush1.msra.mxu0 0.0
    %7442 = vmatprep.subr.mxu0 0.0
    %7443 = vmatpush1.msra.mxu0 0.0
    %7444 = vmatprep.subr.mxu0 0.0
    %7445 = vmatpush1.msra.mxu0 0.0
    %7446 = vmatprep.subr.mxu0 0.0
    %7447 = vmatpush1.msra.mxu0 0.0
    %7448 = vmatprep.subr.mxu0 0.0
    %7449 = vmatpush1.msra.mxu0 0.0
    %7450 = vmatprep.subr.mxu0 0.0
    %7451 = vmatpush1.msra.mxu0 0.0
    %7452 = vmatprep.subr.mxu0 0.0
    %7453 = vmatpush1.msra.mxu0 0.0
    %7454 = vmatprep.subr.mxu0 0.0
    %7455 = vmatpush1.msra.mxu0 0.0
    %7456 = vmatprep.subr.mxu0 0.0
    %7457 = vmatpush1.msra.mxu0 0.0
    %7458 = vmatprep.subr.mxu0 0.0
    %7459 = vmatpush1.msra.mxu0 0.0
    %7460 = vmatprep.subr.mxu0 0.0
    %7461 = vmatpush1.msra.mxu0 0.0
    %7462 = vmatprep.subr.mxu0 0.0
    %7463 = vmatpush1.msra.mxu0 0.0
    %7464 = vmatprep.subr.mxu0 0.0
    %7465 = vmatpush1.msra.mxu0 0.0
    %7466 = vmatprep.subr.mxu0 0.0
    %7467 = vmatpush1.msra.mxu0 0.0
    %7468 = vmatprep.subr.mxu0 0.0
    %7469 = vmatpush1.msra.mxu0 0.0
    %7470 = vmatprep.subr.mxu0 0.0
    %7471 = vmatpush1.msra.mxu0 0.0
    %7472 = vmatprep.subr.mxu0 0.0
    %7473 = vmatpush1.msra.mxu0 0.0
    %7474 = vmatprep.subr.mxu0 0.0
    %7475 = vmatpush1.msra.mxu0 0.0
    %7476 = vmatprep.subr.mxu0 0.0
    %7477 = vmatpush1.msra.mxu0 0.0
    %7478 = vmatprep.mubr.f32.mxu0 0.0
    %7479 = vmatmul.mubr.f32.gmra.mrb[0].mxu0 %v7412
    %v7480 = vpop.f32.mrb[0].mxu0
    %v7481 = vadd.f32 %v7409, %v7480
    %v7482 = vpop.f32.mrb[0].mxu0
    %v7483 = vadd.f32 %v7409, %v7482
    %7484 = vdwg.mxu0
    %7485 = vmatprep.subr.mxu0 %v3601
    %7486 = vmatpush1.msra.mxu0 %v3599
    %7487 = vmatprep.subr.mxu0 %v3607
    %7488 = vmatpush1.msra.mxu0 %v3605
    %7489 = vmatprep.subr.mxu0 %v3613
    %7490 = vmatpush1.msra.mxu0 %v3611
    %7491 = vmatprep.subr.mxu0 %v3619
    %7492 = vmatpush1.msra.mxu0 %v3617
    %7493 = vmatprep.subr.mxu0 0.0
    %7494 = vmatpush1.msra.mxu0 0.0
    %7495 = vmatprep.subr.mxu0 0.0
    %7496 = vmatpush1.msra.mxu0 0.0
    %7497 = vmatprep.subr.mxu0 0.0
    %7498 = vmatpush1.msra.mxu0 0.0
    %7499 = vmatprep.subr.mxu0 0.0
    %7500 = vmatpush1.msra.mxu0 0.0
    %7501 = vmatprep.subr.mxu0 0.0
    %7502 = vmatpush1.msra.mxu0 0.0
    %7503 = vmatprep.subr.mxu0 0.0
    %7504 = vmatpush1.msra.mxu0 0.0
    %7505 = vmatprep.subr.mxu0 0.0
    %7506 = vmatpush1.msra.mxu0 0.0
    %7507 = vmatprep.subr.mxu0 0.0
    %7508 = vmatpush1.msra.mxu0 0.0
    %7509 = vmatprep.subr.mxu0 0.0
    %7510 = vmatpush1.msra.mxu0 0.0
    %7511 = vmatprep.subr.mxu0 0.0
    %7512 = vmatpush1.msra.mxu0 0.0
    %7513 = vmatprep.subr.mxu0 0.0
    %7514 = vmatpush1.msra.mxu0 0.0
    %7515 = vmatprep.subr.mxu0 0.0
    %7516 = vmatpush1.msra.mxu0 0.0
    %7517 = vmatprep.subr.mxu0 0.0
    %7518 = vmatpush1.msra.mxu0 0.0
    %7519 = vmatprep.subr.mxu0 0.0
    %7520 = vmatpush1.msra.mxu0 0.0
    %7521 = vmatprep.subr.mxu0 0.0
    %7522 = vmatpush1.msra.mxu0 0.0
    %7523 = vmatprep.subr.mxu0 0.0
    %7524 = vmatpush1.msra.mxu0 0.0
    %7525 = vmatprep.subr.mxu0 0.0
    %7526 = vmatpush1.msra.mxu0 0.0
    %7527 = vmatprep.subr.mxu0 0.0
    %7528 = vmatpush1.msra.mxu0 0.0
    %7529 = vmatprep.subr.mxu0 0.0
    %7530 = vmatpush1.msra.mxu0 0.0
    %7531 = vmatprep.subr.mxu0 0.0
    %7532 = vmatpush1.msra.mxu0 0.0
    %7533 = vmatprep.subr.mxu0 0.0
    %7534 = vmatpush1.msra.mxu0 0.0
    %7535 = vmatprep.subr.mxu0 0.0
    %7536 = vmatpush1.msra.mxu0 0.0
    %7537 = vmatprep.subr.mxu0 0.0
    %7538 = vmatpush1.msra.mxu0 0.0
    %7539 = vmatprep.subr.mxu0 0.0
    %7540 = vmatpush1.msra.mxu0 0.0
    %7541 = vmatprep.subr.mxu0 0.0
    %7542 = vmatpush1.msra.mxu0 0.0
    %7543 = vmatprep.subr.mxu0 0.0
    %7544 = vmatpush1.msra.mxu0 0.0
    %7545 = vmatprep.subr.mxu0 0.0
    %7546 = vmatpush1.msra.mxu0 0.0
    %7547 = vmatprep.subr.mxu0 0.0
    %7548 = vmatpush1.msra.mxu0 0.0
    %7549 = vmatprep.mubr.f32.mxu0 0.0
    %7550 = vmatmul.mubr.f32.gmra.mrb[0].mxu0 %v7412
    %v7551 = vpop.f32.mrb[0].mxu0
    %v7552 = vadd.f32 %v7409, %v7551
    %v7553 = vpop.f32.mrb[0].mxu0
    %v7554 = vadd.f32 %v7409, %v7553
    %7555 = vdwg.mxu0
    %7556 = vmatprep.subr.mxu0 %v3690
    %7557 = vmatpush1.msra.mxu0 %v3688
    %7558 = vmatprep.subr.mxu0 %v3696
    %7559 = vmatpush1.msra.mxu0 %v3694
    %7560 = vmatprep.subr.mxu0 %v3702
    %7561 = vmatpush1.msra.mxu0 %v3700
    %7562 = vmatprep.subr.mxu0 %v3708
    %7563 = vmatpush1.msra.mxu0 %v3706
    %7564 = vmatprep.subr.mxu0 0.0
    %7565 = vmatpush1.msra.mxu0 0.0
    %7566 = vmatprep.subr.mxu0 0.0
    %7567 = vmatpush1.msra.mxu0 0.0
    %7568 = vmatprep.subr.mxu0 0.0
    %7569 = vmatpush1.msra.mxu0 0.0
    %7570 = vmatprep.subr.mxu0 0.0
    %7571 = vmatpush1.msra.mxu0 0.0
    %7572 = vmatprep.subr.mxu0 0.0
    %7573 = vmatpush1.msra.mxu0 0.0
    %7574 = vmatprep.subr.mxu0 0.0
    %7575 = vmatpush1.msra.mxu0 0.0
    %7576 = vmatprep.subr.mxu0 0.0
    %7577 = vmatpush1.msra.mxu0 0.0
    %7578 = vmatprep.subr.mxu0 0.0
    %7579 = vmatpush1.msra.mxu0 0.0
    %7580 = vmatprep.subr.mxu0 0.0
    %7581 = vmatpush1.msra.mxu0 0.0
    %7582 = vmatprep.subr.mxu0 0.0
    %7583 = vmatpush1.msra.mxu0 0.0
    %7584 = vmatprep.subr.mxu0 0.0
    %7585 = vmatpush1.msra.mxu0 0.0
    %7586 = vmatprep.subr.mxu0 0.0
    %7587 = vmatpush1.msra.mxu0 0.0
    %7588 = vmatprep.subr.mxu0 0.0
    %7589 = vmatpush1.msra.mxu0 0.0
    %7590 = vmatprep.subr.mxu0 0.0
    %7591 = vmatpush1.msra.mxu0 0.0
    %7592 = vmatprep.subr.mxu0 0.0
    %7593 = vmatpush1.msra.mxu0 0.0
    %7594 = vmatprep.subr.mxu0 0.0
    %7595 = vmatpush1.msra.mxu0 0.0
    %7596 = vmatprep.subr.mxu0 0.0
    %7597 = vmatpush1.msra.mxu0 0.0
    %7598 = vmatprep.subr.mxu0 0.0
    %7599 = vmatpush1.msra.mxu0 0.0
    %7600 = vmatprep.subr.mxu0 0.0
    %7601 = vmatpush1.msra.mxu0 0.0
    %7602 = vmatprep.subr.mxu0 0.0
    %7603 = vmatpush1.msra.mxu0 0.0
    %7604 = vmatprep.subr.mxu0 0.0
    %7605 = vmatpush1.msra.mxu0 0.0
    %7606 = vmatprep.subr.mxu0 0.0
    %7607 = vmatpush1.msra.mxu0 0.0
    %7608 = vmatprep.subr.mxu0 0.0
    %7609 = vmatpush1.msra.mxu0 0.0
    %7610 = vmatprep.subr.mxu0 0.0
    %7611 = vmatpush1.msra.mxu0 0.0
    %7612 = vmatprep.subr.mxu0 0.0
    %7613 = vmatpush1.msra.mxu0 0.0
    %7614 = vmatprep.subr.mxu0 0.0
    %7615 = vmatpush1.msra.mxu0 0.0
    %7616 = vmatprep.subr.mxu0 0.0
    %7617 = vmatpush1.msra.mxu0 0.0
    %7618 = vmatprep.subr.mxu0 0.0
    %7619 = vmatpush1.msra.mxu0 0.0
    %7620 = vmatprep.mubr.f32.mxu0 0.0
    %7621 = vmatmul.mubr.f32.gmra.mrb[0].mxu0 %v7412
    %v7622 = vpop.f32.mrb[0].mxu0
    %v7623 = vadd.f32 %v7409, %v7622
    %v7624 = vpop.f32.mrb[0].mxu0
    %v7625 = vadd.f32 %v7409, %v7624
    %7626 = vdwg.mxu0
    %7628 = vset.pattern.permute.xlu0 0
    %7629 = vperm.xlu0 %7628, %v7405
    %v7630 = vpop.permute.xlu0 %7629
    %v7633 = vsel %vm5776, %v7404, 0
    %7635 = vmatprep.subr.mxu0 %v7391
    %7636 = vmatpush1.msra.mxu0 %v7390
    %7637 = vmatprep.subr.mxu0 %v7397
    %7638 = vmatpush1.msra.mxu0 %v7396
    %7639 = vmatprep.subr.mxu0 0.0
    %7640 = vmatpush1.msra.mxu0 0.0
    %7641 = vmatprep.subr.mxu0 0.0
    %7642 = vmatpush1.msra.mxu0 0.0
    %7643 = vmatprep.subr.mxu0 0.0
    %7644 = vmatpush1.msra.mxu0 0.0
    %7645 = vmatprep.subr.mxu0 0.0
    %7646 = vmatpush1.msra.mxu0 0.0
    %7647 = vmatprep.subr.mxu0 0.0
    %7648 = vmatpush1.msra.mxu0 0.0
    %7649 = vmatprep.subr.mxu0 0.0
    %7650 = vmatpush1.msra.mxu0 0.0
    %7651 = vmatprep.subr.mxu0 0.0
    %7652 = vmatpush1.msra.mxu0 0.0
    %7653 = vmatprep.subr.mxu0 0.0
    %7654 = vmatpush1.msra.mxu0 0.0
    %7655 = vmatprep.subr.mxu0 0.0
    %7656 = vmatpush1.msra.mxu0 0.0
    %7657 = vmatprep.subr.mxu0 0.0
    %7658 = vmatpush1.msra.mxu0 0.0
    %7659 = vmatprep.subr.mxu0 0.0
    %7660 = vmatpush1.msra.mxu0 0.0
    %7661 = vmatprep.subr.mxu0 0.0
    %7662 = vmatpush1.msra.mxu0 0.0
    %7663 = vmatprep.subr.mxu0 0.0
    %7664 = vmatpush1.msra.mxu0 0.0
    %7665 = vmatprep.subr.mxu0 0.0
    %7666 = vmatpush1.msra.mxu0 0.0
    %7667 = vmatprep.subr.mxu0 0.0
    %7668 = vmatpush1.msra.mxu0 0.0
    %7669 = vmatprep.subr.mxu0 0.0
    %7670 = vmatpush1.msra.mxu0 0.0
    %7671 = vmatprep.subr.mxu0 0.0
    %7672 = vmatpush1.msra.mxu0 0.0
    %7673 = vmatprep.subr.mxu0 0.0
    %7674 = vmatpush1.msra.mxu0 0.0
    %7675 = vmatprep.subr.mxu0 0.0
    %7676 = vmatpush1.msra.mxu0 0.0
    %7677 = vmatprep.subr.mxu0 0.0
    %7678 = vmatpush1.msra.mxu0 0.0
    %7679 = vmatprep.subr.mxu0 0.0
    %7680 = vmatpush1.msra.mxu0 0.0
    %7681 = vmatprep.subr.mxu0 0.0
    %7682 = vmatpush1.msra.mxu0 0.0
    %7683 = vmatprep.subr.mxu0 0.0
    %7684 = vmatpush1.msra.mxu0 0.0
    %7685 = vmatprep.subr.mxu0 0.0
    %7686 = vmatpush1.msra.mxu0 0.0
    %7687 = vmatprep.subr.mxu0 0.0
    %7688 = vmatpush1.msra.mxu0 0.0
    %7689 = vmatprep.subr.mxu0 0.0
    %7690 = vmatpush1.msra.mxu0 0.0
    %7691 = vmatprep.subr.mxu0 0.0
    %7692 = vmatpush1.msra.mxu0 0.0
    %7693 = vmatprep.subr.mxu0 0.0
    %7694 = vmatpush1.msra.mxu0 0.0
    %7695 = vmatprep.subr.mxu0 0.0
    %7696 = vmatpush1.msra.mxu0 0.0
    %7697 = vmatprep.subr.mxu0 0.0
    %7698 = vmatpush1.msra.mxu0 0.0
    %7699 = vmatprep.mubr.f32.mxu0 0.0
    %7700 = vmatmul.mubr.f32.gmra.mrb[0].mxu0 %v7633
    %v7701 = vpop.f32.mrb[0].mxu0
    %v7702 = vadd.f32 %v7630, %v7701
    %v7703 = vpop.f32.mrb[0].mxu0
    %v7704 = vadd.f32 %v7630, %v7703
    %7705 = vdwg.mxu0
    %7706 = vmatprep.subr.mxu0 %v7393
    %7707 = vmatpush1.msra.mxu0 %v7392
    %7708 = vmatprep.subr.mxu0 %v7399
    %7709 = vmatpush1.msra.mxu0 %v7398
    %7710 = vmatprep.subr.mxu0 0.0
    %7711 = vmatpush1.msra.mxu0 0.0
    %7712 = vmatprep.subr.mxu0 0.0
    %7713 = vmatpush1.msra.mxu0 0.0
    %7714 = vmatprep.subr.mxu0 0.0
    %7715 = vmatpush1.msra.mxu0 0.0
    %7716 = vmatprep.subr.mxu0 0.0
    %7717 = vmatpush1.msra.mxu0 0.0
    %7718 = vmatprep.subr.mxu0 0.0
    %7719 = vmatpush1.msra.mxu0 0.0
    %7720 = vmatprep.subr.mxu0 0.0
    %7721 = vmatpush1.msra.mxu0 0.0
    %7722 = vmatprep.subr.mxu0 0.0
    %7723 = vmatpush1.msra.mxu0 0.0
    %7724 = vmatprep.subr.mxu0 0.0
    %7725 = vmatpush1.msra.mxu0 0.0
    %7726 = vmatprep.subr.mxu0 0.0
    %7727 = vmatpush1.msra.mxu0 0.0
    %7728 = vmatprep.subr.mxu0 0.0
    %7729 = vmatpush1.msra.mxu0 0.0
    %7730 = vmatprep.subr.mxu0 0.0
    %7731 = vmatpush1.msra.mxu0 0.0
    %7732 = vmatprep.subr.mxu0 0.0
    %7733 = vmatpush1.msra.mxu0 0.0
    %7734 = vmatprep.subr.mxu0 0.0
    %7735 = vmatpush1.msra.mxu0 0.0
    %7736 = vmatprep.subr.mxu0 0.0
    %7737 = vmatpush1.msra.mxu0 0.0
    %7738 = vmatprep.subr.mxu0 0.0
    %7739 = vmatpush1.msra.mxu0 0.0
    %7740 = vmatprep.subr.mxu0 0.0
    %7741 = vmatpush1.msra.mxu0 0.0
    %7742 = vmatprep.subr.mxu0 0.0
    %7743 = vmatpush1.msra.mxu0 0.0
    %7744 = vmatprep.subr.mxu0 0.0
    %7745 = vmatpush1.msra.mxu0 0.0
    %7746 = vmatprep.subr.mxu0 0.0
    %7747 = vmatpush1.msra.mxu0 0.0
    %7748 = vmatprep.subr.mxu0 0.0
    %7749 = vmatpush1.msra.mxu0 0.0
    %7750 = vmatprep.subr.mxu0 0.0
    %7751 = vmatpush1.msra.mxu0 0.0
    %7752 = vmatprep.subr.mxu0 0.0
    %7753 = vmatpush1.msra.mxu0 0.0
    %7754 = vmatprep.subr.mxu0 0.0
    %7755 = vmatpush1.msra.mxu0 0.0
    %7756 = vmatprep.subr.mxu0 0.0
    %7757 = vmatpush1.msra.mxu0 0.0
    %7758 = vmatprep.subr.mxu0 0.0
    %7759 = vmatpush1.msra.mxu0 0.0
    %7760 = vmatprep.subr.mxu0 0.0
    %7761 = vmatpush1.msra.mxu0 0.0
    %7762 = vmatprep.subr.mxu0 0.0
    %7763 = vmatpush1.msra.mxu0 0.0
    %7764 = vmatprep.subr.mxu0 0.0
    %7765 = vmatpush1.msra.mxu0 0.0
    %7766 = vmatprep.subr.mxu0 0.0
    %7767 = vmatpush1.msra.mxu0 0.0
    %7768 = vmatprep.subr.mxu0 0.0
    %7769 = vmatpush1.msra.mxu0 0.0
    %7770 = vmatprep.mubr.f32.mxu0 0.0
    %7771 = vmatmul.mubr.f32.gmra.mrb[0].mxu0 %v7633
    %v7772 = vpop.f32.mrb[0].mxu0
    %v7773 = vadd.f32 %v7630, %v7772
    %v7774 = vpop.f32.mrb[0].mxu0
    %v7775 = vadd.f32 %v7630, %v7774
    %7776 = vdwg.mxu0
    %7777 = vmatprep.subr.mxu0 %v7395
    %7778 = vmatpush1.msra.mxu0 %v7394
    %7779 = vmatprep.subr.mxu0 %v7401
    %7780 = vmatpush1.msra.mxu0 %v7400
    %7781 = vmatprep.subr.mxu0 0.0
    %7782 = vmatpush1.msra.mxu0 0.0
    %7783 = vmatprep.subr.mxu0 0.0
    %7784 = vmatpush1.msra.mxu0 0.0
    %7785 = vmatprep.subr.mxu0 0.0
    %7786 = vmatpush1.msra.mxu0 0.0
    %7787 = vmatprep.subr.mxu0 0.0
    %7788 = vmatpush1.msra.mxu0 0.0
    %7789 = vmatprep.subr.mxu0 0.0
    %7790 = vmatpush1.msra.mxu0 0.0
    %7791 = vmatprep.subr.mxu0 0.0
    %7792 = vmatpush1.msra.mxu0 0.0
    %7793 = vmatprep.subr.mxu0 0.0
    %7794 = vmatpush1.msra.mxu0 0.0
    %7795 = vmatprep.subr.mxu0 0.0
    %7796 = vmatpush1.msra.mxu0 0.0
    %7797 = vmatprep.subr.mxu0 0.0
    %7798 = vmatpush1.msra.mxu0 0.0
    %7799 = vmatprep.subr.mxu0 0.0
    %7800 = vmatpush1.msra.mxu0 0.0
    %7801 = vmatprep.subr.mxu0 0.0
    %7802 = vmatpush1.msra.mxu0 0.0
    %7803 = vmatprep.subr.mxu0 0.0
    %7804 = vmatpush1.msra.mxu0 0.0
    %7805 = vmatprep.subr.mxu0 0.0
    %7806 = vmatpush1.msra.mxu0 0.0
    %7807 = vmatprep.subr.mxu0 0.0
    %7808 = vmatpush1.msra.mxu0 0.0
    %7809 = vmatprep.subr.mxu0 0.0
    %7810 = vmatpush1.msra.mxu0 0.0
    %7811 = vmatprep.subr.mxu0 0.0
    %7812 = vmatpush1.msra.mxu0 0.0
    %7813 = vmatprep.subr.mxu0 0.0
    %7814 = vmatpush1.msra.mxu0 0.0
    %7815 = vmatprep.subr.mxu0 0.0
    %7816 = vmatpush1.msra.mxu0 0.0
    %7817 = vmatprep.subr.mxu0 0.0
    %7818 = vmatpush1.msra.mxu0 0.0
    %7819 = vmatprep.subr.mxu0 0.0
    %7820 = vmatpush1.msra.mxu0 0.0
    %7821 = vmatprep.subr.mxu0 0.0
    %7822 = vmatpush1.msra.mxu0 0.0
    %7823 = vmatprep.subr.mxu0 0.0
    %7824 = vmatpush1.msra.mxu0 0.0
    %7825 = vmatprep.subr.mxu0 0.0
    %7826 = vmatpush1.msra.mxu0 0.0
    %7827 = vmatprep.subr.mxu0 0.0
    %7828 = vmatpush1.msra.mxu0 0.0
    %7829 = vmatprep.subr.mxu0 0.0
    %7830 = vmatpush1.msra.mxu0 0.0
    %7831 = vmatprep.subr.mxu0 0.0
    %7832 = vmatpush1.msra.mxu0 0.0
    %7833 = vmatprep.subr.mxu0 0.0
    %7834 = vmatpush1.msra.mxu0 0.0
    %7835 = vmatprep.subr.mxu0 0.0
    %7836 = vmatpush1.msra.mxu0 0.0
    %7837 = vmatprep.subr.mxu0 0.0
    %7838 = vmatpush1.msra.mxu0 0.0
    %7839 = vmatprep.subr.mxu0 0.0
    %7840 = vmatpush1.msra.mxu0 0.0
    %7841 = vmatprep.mubr.f32.mxu0 0.0
    %7842 = vmatmul.mubr.f32.gmra.mrb[0].mxu0 %v7633
    %v7843 = vpop.f32.mrb[0].mxu0
    %v7844 = vadd.f32 %v7630, %v7843
    %v7845 = vpop.f32.mrb[0].mxu0
    %v7846 = vadd.f32 %v7630, %v7845
    %7847 = vdwg.mxu0
    %v7848 = vstv %s165
    %v7849 = vmul.f32 %v7848, %v7702
    %v7850 = vmul.f32 %v7848, %v7704
    %v7851 = vmul.f32 %v7848, %v7773
    %v7852 = vmul.f32 %v7848, %v7775
    %v7853 = vmul.f32 %v7848, %v7844
    %v7854 = vmul.f32 %v7848, %v7846
    %s7855 = ssub.f32 1.0, %s165
    %v7856 = vstv %s7855
    %v7857 = vmul.f32 %v7856, %v7481
    %v7858 = vmul.f32 %v7856, %v7483
    %v7859 = vmul.f32 %v7856, %v7552
    %v7860 = vmul.f32 %v7856, %v7554
    %v7861 = vmul.f32 %v7856, %v7623
    %v7862 = vmul.f32 %v7856, %v7625
    %v7863 = vadd.f32 %v7849, %v7857
    %v7864 = vadd.f32 %v7850, %v7858
    %v7865 = vadd.f32 %v7851, %v7859
    %v7866 = vadd.f32 %v7852, %v7860
    %v7867 = vadd.f32 %v7853, %v7861
    %v7868 = vadd.f32 %v7854, %v7862
    %v7869 = vtanh.pop %v7863
    %v7870 = vtanh.pop %v7864
    %v7871 = vtanh.pop %v7865
    %v7872 = vtanh.pop %v7866
    %v7873 = vtanh.pop %v7867
    %v7874 = vtanh.pop %v7868
    %7875 = vst [vmem:[%s24] sm:$0xff] %v7869
    %7876 = vst [vmem:[%s24 + $0x8] sm:$0xff] %v7870
    %7877 = vst [vmem:[%s24 + $0x10] sm:$0xff] %v7871
    %7878 = vst [vmem:[%s24 + $0x18] sm:$0xff] %v7872
    %7879 = vst [vmem:[%s24 + $0x20] sm:$0xff] %v7873
    %7880 = vst [vmem:[%s24 + $0x28] sm:$0xff] %v7874
    // Predicated region
    $region126: #{generator_forward.1} parent=1 // pred_check
      _
    $region127: #{generator_forward.1} parent=1 // pred_check_branch
      %7882 = sbr.rel (0) target = $region129
    $region128: #{generator_forward.1} parent=1 // pred_region
      _
    $region129: #{generator_forward.1} parent=1 // pred_fallthru
      _
    // Predicated region
    $region130: #{generator_forward.1} parent=1 // pred_check
      _
    $region131: #{generator_forward.1} parent=1 // pred_check_branch
      %7884 = sbr.rel (0) target = $region133
    $region132: #{generator_forward.1} parent=1 // pred_region
      _
    $region133: #{generator_forward.1} parent=1 // pred_fallthru
      _
    %7885 = vsyncpa [#allocation4], 1
    %7886 = vsyncpa [#allocation6], 1
    %7887 = vsyncpa [#allocation9], 1
    %7888 = vsyncpa [#allocation12], 1

</llo_original>
